<compile_context>
chip_gen: v7x
topology: tpu7x:2x2x1
jax: 0.10.0
libtpu: 0.0.40
codegen_flags: <defaults>
</compile_context>

<pallas_src>
import functools

import jax
import jax.numpy as jnp
from jax.experimental import pallas as pl
from jax.experimental.pallas import tpu as pltpu

LANE = 128


def _round_up(x, m):
    return (x + m - 1) // m * m


# ----------------------------- Pallas kernels ------------------------------ #
def _matmul_bias_kernel(a_ref, b_ref, bias_ref, o_ref, *, apply_relu):
    """o = relu?(a @ b + bias).  a:(tm,K) bf16, b:(K,N) bf16, bias:(1,N) f32."""
    acc = jnp.dot(a_ref[...], b_ref[...], preferred_element_type=jnp.float32)
    acc = acc + bias_ref[...]
    if apply_relu:
        acc = jnp.maximum(acc, 0.0)
    o_ref[...] = acc.astype(o_ref.dtype)


def _mlp_head_kernel(x_ref, w1_ref, b1_ref, w2_ref, b2_ref, o_ref):
    """Fused dense->ReLU->out: o = (relu(x@w1+b1)) @ w2 + b2."""
    h = jnp.dot(x_ref[...], w1_ref[...], preferred_element_type=jnp.float32)
    h = jnp.maximum(h + b1_ref[...], 0.0).astype(w2_ref.dtype)
    o = jnp.dot(h, w2_ref[...], preferred_element_type=jnp.float32)
    o_ref[...] = (o + b2_ref[...]).astype(o_ref.dtype)


# ------------------------------ wrappers ----------------------------------- #
def pallas_linear(a, w_t, bias2d, *, apply_relu, out_dtype=jnp.float32, tm=256):
    """a:(M,K) bf16, w_t:(K,Npad) bf16, bias2d:(1,Npad) f32 -> (M,Npad).

    M is tiled with a "parallel" grid; the weight/bias blocks are grid
    invariant so they stay resident in VMEM.  N is always a multiple of 128.
    """
    m, k = a.shape
    k2, n = w_t.shape
    assert k == k2, (k, k2)
    tm = min(tm, _round_up(m, 8))
    m_pad = _round_up(m, tm)
    if m_pad != m:
        a = jnp.pad(a, ((0, m_pad - m), (0, 0)))
    out = pl.pallas_call(
        functools.partial(_matmul_bias_kernel, apply_relu=apply_relu),
        grid=(m_pad // tm,),
        in_specs=[
            pl.BlockSpec((tm, k), lambda i: (i, 0)),
            pl.BlockSpec((k, n), lambda i: (0, 0)),
            pl.BlockSpec((1, n), lambda i: (0, 0)),
        ],
        out_specs=pl.BlockSpec((tm, n), lambda i: (i, 0)),
        out_shape=jax.ShapeDtypeStruct((m_pad, n), out_dtype),
        compiler_params=pltpu.CompilerParams(
            dimension_semantics=("parallel",),
            vmem_limit_bytes=32 * 1024 * 1024,
        ),
    )(a, w_t, bias2d)
    return out[:m] if m_pad != m else out


def pallas_mlp_head(x, w1, b1, w2, b2):
    """Fused dense+out.  x:(B,4096) bf16 -> (B, A_pad) f32.  B is tiny, so a
    single whole-array VMEM block (everything < 5 MiB in bf16)."""
    m, _ = x.shape
    n2 = w2.shape[1]
    m_pad = _round_up(m, 8)
    if m_pad != m:
        x = jnp.pad(x, ((0, m_pad - m), (0, 0)))
    vm = pl.BlockSpec(memory_space=pltpu.MemorySpace.VMEM)
    out = pl.pallas_call(
        _mlp_head_kernel,
        out_shape=jax.ShapeDtypeStruct((m_pad, n2), jnp.float32),
        in_specs=[vm] * 5,
        out_specs=vm,
        compiler_params=pltpu.CompilerParams(vmem_limit_bytes=32 * 1024 * 1024),
    )(x, w1, b1, w2, b2)
    return out[:m] if m_pad != m else out


# ------------------------------ JAX glue ----------------------------------- #
# TODO(synk): stream shifted input windows into the kernel (grid reduction over
# kh*kw with an accumulator, P3 pattern) instead of materializing im2col in HBM.
def _im2col_nhwc(x, k, s):
    """x: (B, H, W, C) -> (B*Ho*Wo, k*k*C) with (kh, kw, Cin) feature order."""
    b, h, w, c = x.shape
    ho = (h - k) // s + 1
    wo = (w - k) // s + 1
    cols = []
    for i in range(k):
        for j in range(k):
            cols.append(
                x[:, i : i + s * (ho - 1) + 1 : s, j : j + s * (wo - 1) + 1 : s, :]
            )
    p = jnp.concatenate(cols, axis=-1)            # (B, Ho, Wo, k*k*C)
    return p.reshape(b * ho * wo, k * k * c), ho, wo


def _conv2d_relu_nhwc(x, w_t, bias2d, *, k, s, cout):
    """NHWC valid conv + ReLU via im2col + Pallas matmul; stays NHWC/bf16."""
    b = x.shape[0]
    cols, ho, wo = _im2col_nhwc(x, k, s)                       # (B*Ho*Wo, k*k*Cin)
    y = pallas_linear(cols, w_t, bias2d, apply_relu=True,
                      out_dtype=jnp.bfloat16)                  # (B*Ho*Wo, 128)
    return y[:, :cout].reshape(b, ho, wo, cout)                # NHWC, bf16


# --------------------------- parameter setup ------------------------------- #
def init_estimator_params(key, in_channels, num_actions):
    """PyTorch-layout params, PyTorch-default-style uniform(-1/sqrt(fan_in))."""
    def _uniform(key, shape, fan_in):
        bound = 1.0 / jnp.sqrt(jnp.float32(fan_in))
        return jax.random.uniform(key, shape, jnp.float32, -bound, bound)

    keys = jax.random.split(key, 10)
    p = {}
    p["conv1_w"] = _uniform(keys[0], (32, in_channels, 8, 8), in_channels * 8 * 8)
    p["conv1_b"] = _uniform(keys[1], (32,), in_channels * 8 * 8)
    p["conv2_w"] = _uniform(keys[2], (64, 32, 4, 4), 32 * 4 * 4)
    p["conv2_b"] = _uniform(keys[3], (64,), 32 * 4 * 4)
    p["conv3_w"] = _uniform(keys[4], (64, 64, 3, 3), 64 * 3 * 3)
    p["conv3_b"] = _uniform(keys[5], (64,), 64 * 3 * 3)
    p["dense_w"] = _uniform(keys[6], (512, 64 * 8 * 8), 64 * 8 * 8)
    p["dense_b"] = _uniform(keys[7], (512,), 64 * 8 * 8)
    p["out_w"] = _uniform(keys[8], (num_actions, 512), 512)
    p["out_b"] = _uniform(keys[9], (num_actions,), 512)
    return p


def prepare_params(raw, num_actions):
    """One-time re-layout: conv w -> (kh*kw*Cin, Cout_pad) bf16, dense/out ->
    (K, N) bf16, N padded to 128, biases -> (1, N_pad) f32."""
    def conv_w(w):
        cout = w.shape[0]
        wt = jnp.transpose(w, (2, 3, 1, 0)).reshape(-1, cout)   # (kh*kw*Cin, Cout)
        return jnp.pad(wt, ((0, 0), (0, _round_up(cout, LANE) - cout))
                       ).astype(jnp.bfloat16)

    def bias2d(b):
        n = b.shape[0]
        return jnp.pad(b, (0, _round_up(n, LANE) - n)).reshape(1, -1).astype(jnp.float32)

    p = {}
    p["conv1_w"], p["conv1_b"] = conv_w(raw["conv1_w"]), bias2d(raw["conv1_b"])
    p["conv2_w"], p["conv2_b"] = conv_w(raw["conv2_w"]), bias2d(raw["conv2_b"])
    p["conv3_w"], p["conv3_b"] = conv_w(raw["conv3_w"]), bias2d(raw["conv3_b"])
    # dense: PyTorch columns are (C,H,W) flatten of NCHW; we flatten NHWC (H,W,C),
    # so permute the input rows once here.
    dw = raw["dense_w"].reshape(512, 64, 8, 8).transpose(0, 2, 3, 1).reshape(512, -1)
    p["dense_w"] = dw.T.astype(jnp.bfloat16)                   # (4096, 512)
    p["dense_b"] = raw["dense_b"].reshape(1, 512).astype(jnp.float32)
    a_pad = _round_up(num_actions, LANE)
    p["out_w"] = jnp.pad(raw["out_w"].T,
                         ((0, 0), (0, a_pad - num_actions))).astype(jnp.bfloat16)
    p["out_b"] = jnp.pad(raw["out_b"], (0, a_pad - num_actions)
                         ).reshape(1, a_pad).astype(jnp.float32)
    return p


# ------------------------------- forward ------------------------------------ #
def estimator_forward(params, x, num_actions):
    """x: (B, in_channels, 92, 92) f32 -> (B, num_actions) f32."""
    b = x.shape[0]
    x = jnp.transpose(x, (0, 2, 3, 1)).astype(jnp.bfloat16)    # single NCHW->NHWC
    x = _conv2d_relu_nhwc(x, params["conv1_w"], params["conv1_b"], k=8, s=4, cout=32)
    x = _conv2d_relu_nhwc(x, params["conv2_w"], params["conv2_b"], k=4, s=2, cout=64)
    x = _conv2d_relu_nhwc(x, params["conv3_w"], params["conv3_b"], k=3, s=1, cout=64)
    x = x.reshape(b, -1)                                       # (B, 4096) in (H,W,C)
    out = pallas_mlp_head(x, params["dense_w"], params["dense_b"],
                          params["out_w"], params["out_b"])    # (B, 128) f32
    return out[:, :num_actions]


if __name__ == "__main__":
    batch = 2
    in_channels = 4
    spatial = 92          # yields 8x8 conv3 output -> matches Linear(64*8*8, 512)
    num_actions = 6

    key = jax.random.PRNGKey(0)
    k_params, k_x = jax.random.split(key)
    raw_params = init_estimator_params(k_params, in_channels, num_actions)
    params = prepare_params(raw_params, num_actions)
    x = jax.random.uniform(k_x, (batch, in_channels, spatial, spatial), jnp.float32)

    forward = jax.jit(lambda p, xx: estimator_forward(p, xx, num_actions))
    out = forward(params, x)
    out = jax.block_until_ready(out)

    assert out.shape == (batch, num_actions), out.shape
    assert bool(jnp.all(jnp.isfinite(out)))
    print("KERNEL_OK")
</pallas_src>

<mosaic_0001>
module attributes {stable_mosaic.version = 11 : i64} {
  func.func @_matmul_bias_kernel(%arg0: i32, %arg1: memref<256x256xbf16, #tpu.memory_space<vmem>>, %arg2: memref<256x128xbf16, #tpu.memory_space<vmem>>, %arg3: memref<1x128xf32, #tpu.memory_space<vmem>>, %arg4: memref<256x128xbf16, #tpu.memory_space<vmem>>) attributes {dimension_semantics = [#tpu.dimension_semantics<parallel>], iteration_bounds = array<i64: 4>, scalar_prefetch = 0 : i64, scratch_operands = 0 : i64, tpu.core_type = #tpu.core_type<tc>, window_params = [{transform_indices = @transform_0, window_bounds = array<i64: 256, 256>}, {pipeline_mode = #tpu.pipeline_mode<synchronous>, transform_indices = @transform_1, window_bounds = array<i64: 256, 128>}, {pipeline_mode = #tpu.pipeline_mode<synchronous>, transform_indices = @transform_2, window_bounds = array<i64: 1, 128>}, {transform_indices = @transform_3, window_bounds = array<i64: 256, 128>}]} {
    %c0 = arith.constant 0 : index
    %c0_0 = arith.constant 0 : index
    %0 = vector.load %arg1[%c0, %c0_0] : memref<256x256xbf16, #tpu.memory_space<vmem>>, vector<256x256xbf16>
    %c0_1 = arith.constant 0 : index
    %c0_2 = arith.constant 0 : index
    %1 = vector.load %arg2[%c0_1, %c0_2] : memref<256x128xbf16, #tpu.memory_space<vmem>>, vector<256x128xbf16>
    %cst = arith.constant dense<0.000000e+00> : vector<256x128xf32>
    %2 = tpu.matmul %0, %1, %cst {dimension_numbers = #tpu.dot_dimension_numbers<[1], [0], [0], [1], [0, 0, 1, 1], [], []>} : vector<256x256xbf16>, vector<256x128xbf16>, vector<256x128xf32> -> vector<256x128xf32>
    %c0_3 = arith.constant 0 : index
    %c0_4 = arith.constant 0 : index
    %3 = vector.load %arg3[%c0_3, %c0_4] : memref<1x128xf32, #tpu.memory_space<vmem>>, vector<1x128xf32>
    %4 = vector.broadcast %3 : vector<1x128xf32> to vector<256x128xf32>
    %5 = arith.addf %2, %4 : vector<256x128xf32>
    %cst_5 = arith.constant 0.000000e+00 : f32
    %6 = vector.broadcast %cst_5 : f32 to vector<256x128xf32>
    %7 = arith.maximumf %5, %6 : vector<256x128xf32>
    %8 = arith.truncf %7 : vector<256x128xf32> to vector<256x128xbf16>
    %c0_6 = arith.constant 0 : index
    %c0_7 = arith.constant 0 : index
    %9 = vector.load %arg4[%c0_6, %c0_7] : memref<256x128xbf16, #tpu.memory_space<vmem>>, vector<256x128xbf16>
    tpu.vector_store %arg4[%c0_6, %c0_7], %8 {strides = array<i32>} : memref<256x128xbf16, #tpu.memory_space<vmem>>, vector<256x128xbf16>,
    return
  }
  func.func @transform_0(%arg0: i32) -> (i32, i32) {
    %c0_i32 = arith.constant 0 : i32
    %c0_i32_0 = arith.constant 0 : i32
    return %arg0, %c0_i32 : i32, i32
  }
  func.func @transform_1(%arg0: i32) -> (i32, i32) {
    %c0_i32 = arith.constant 0 : i32
    %c0_i32_0 = arith.constant 0 : i32
    %c0_i32_1 = arith.constant 0 : i32
    return %c0_i32, %c0_i32_0 : i32, i32
  }
  func.func @transform_2(%arg0: i32) -> (i32, i32) {
    %c0_i32 = arith.constant 0 : i32
    %c0_i32_0 = arith.constant 0 : i32
    %c0_i32_1 = arith.constant 0 : i32
    return %c0_i32, %c0_i32_0 : i32, i32
  }
  func.func @transform_3(%arg0: i32) -> (i32, i32) {
    %c0_i32 = arith.constant 0 : i32
    %c0_i32_0 = arith.constant 0 : i32
    return %arg0, %c0_i32 : i32, i32
  }
}

module attributes {stable_mosaic.version = 11 : i64} {
  func.func @_matmul_bias_kernel(%arg0: i32, %arg1: memref<200x512xbf16, #tpu.memory_space<vmem>>, %arg2: memref<512x128xbf16, #tpu.memory_space<vmem>>, %arg3: memref<1x128xf32, #tpu.memory_space<vmem>>, %arg4: memref<200x128xbf16, #tpu.memory_space<vmem>>) attributes {dimension_semantics = [#tpu.dimension_semantics<parallel>], iteration_bounds = array<i64: 1>, scalar_prefetch = 0 : i64, scratch_operands = 0 : i64, tpu.core_type = #tpu.core_type<tc>, window_params = [{transform_indices = @transform_0, window_bounds = array<i64: 200, 512>}, {pipeline_mode = #tpu.pipeline_mode<synchronous>, transform_indices = @transform_1, window_bounds = array<i64: 512, 128>}, {pipeline_mode = #tpu.pipeline_mode<synchronous>, transform_indices = @transform_2, window_bounds = array<i64: 1, 128>}, {transform_indices = @transform_3, window_bounds = array<i64: 200, 128>}]} {
    %c0 = arith.constant 0 : index
    %c0_0 = arith.constant 0 : index
    %0 = vector.load %arg1[%c0, %c0_0] : memref<200x512xbf16, #tpu.memory_space<vmem>>, vector<200x512xbf16>
    %c0_1 = arith.constant 0 : index
    %c0_2 = arith.constant 0 : index
    %1 = vector.load %arg2[%c0_1, %c0_2] : memref<512x128xbf16, #tpu.memory_space<vmem>>, vector<512x128xbf16>
    %cst = arith.constant dense<0.000000e+00> : vector<200x128xf32>
    %2 = tpu.matmul %0, %1, %cst {dimension_numbers = #tpu.dot_dimension_numbers<[1], [0], [0], [1], [0, 0, 1, 1], [], []>} : vector<200x512xbf16>, vector<512x128xbf16>, vector<200x128xf32> -> vector<200x128xf32>
    %c0_3 = arith.constant 0 : index
    %c0_4 = arith.constant 0 : index
    %3 = vector.load %arg3[%c0_3, %c0_4] : memref<1x128xf32, #tpu.memory_space<vmem>>, vector<1x128xf32>
    %4 = vector.broadcast %3 : vector<1x128xf32> to vector<200x128xf32>
    %5 = arith.addf %2, %4 : vector<200x128xf32>
    %cst_5 = arith.constant 0.000000e+00 : f32
    %6 = vector.broadcast %cst_5 : f32 to vector<200x128xf32>
    %7 = arith.maximumf %5, %6 : vector<200x128xf32>
    %8 = arith.truncf %7 : vector<200x128xf32> to vector<200x128xbf16>
    %c0_6 = arith.constant 0 : index
    %c0_7 = arith.constant 0 : index
    %9 = vector.load %arg4[%c0_6, %c0_7] : memref<200x128xbf16, #tpu.memory_space<vmem>>, vector<200x128xbf16>
    tpu.vector_store %arg4[%c0_6, %c0_7], %8 {strides = array<i32>} : memref<200x128xbf16, #tpu.memory_space<vmem>>, vector<200x128xbf16>,
    return
  }
  func.func @transform_0(%arg0: i32) -> (i32, i32) {
    %c0_i32 = arith.constant 0 : i32
    %c0_i32_0 = arith.constant 0 : i32
    return %arg0, %c0_i32 : i32, i32
  }
  func.func @transform_1(%arg0: i32) -> (i32, i32) {
    %c0_i32 = arith.constant 0 : i32
    %c0_i32_0 = arith.constant 0 : i32
    %c0_i32_1 = arith.constant 0 : i32
    return %c0_i32, %c0_i32_0 : i32, i32
  }
  func.func @transform_2(%arg0: i32) -> (i32, i32) {
    %c0_i32 = arith.constant 0 : i32
    %c0_i32_0 = arith.constant 0 : i32
    %c0_i32_1 = arith.constant 0 : i32
    return %c0_i32, %c0_i32_0 : i32, i32
  }
  func.func @transform_3(%arg0: i32) -> (i32, i32) {
    %c0_i32 = arith.constant 0 : i32
    %c0_i32_0 = arith.constant 0 : i32
    return %arg0, %c0_i32 : i32, i32
  }
}

module attributes {stable_mosaic.version = 11 : i64} {
  func.func @_matmul_bias_kernel(%arg0: i32, %arg1: memref<128x576xbf16, #tpu.memory_space<vmem>>, %arg2: memref<576x128xbf16, #tpu.memory_space<vmem>>, %arg3: memref<1x128xf32, #tpu.memory_space<vmem>>, %arg4: memref<128x128xbf16, #tpu.memory_space<vmem>>) attributes {dimension_semantics = [#tpu.dimension_semantics<parallel>], iteration_bounds = array<i64: 1>, scalar_prefetch = 0 : i64, scratch_operands = 0 : i64, tpu.core_type = #tpu.core_type<tc>, window_params = [{transform_indices = @transform_0, window_bounds = array<i64: 128, 576>}, {pipeline_mode = #tpu.pipeline_mode<synchronous>, transform_indices = @transform_1, window_bounds = array<i64: 576, 128>}, {pipeline_mode = #tpu.pipeline_mode<synchronous>, transform_indices = @transform_2, window_bounds = array<i64: 1, 128>}, {transform_indices = @transform_3, window_bounds = array<i64: 128, 128>}]} {
    %c0 = arith.constant 0 : index
    %c0_0 = arith.constant 0 : index
    %0 = vector.load %arg1[%c0, %c0_0] : memref<128x576xbf16, #tpu.memory_space<vmem>>, vector<128x576xbf16>
    %c0_1 = arith.constant 0 : index
    %c0_2 = arith.constant 0 : index
    %1 = vector.load %arg2[%c0_1, %c0_2] : memref<576x128xbf16, #tpu.memory_space<vmem>>, vector<576x128xbf16>
    %cst = arith.constant dense<0.000000e+00> : vector<128x128xf32>
    %2 = tpu.matmul %0, %1, %cst {dimension_numbers = #tpu.dot_dimension_numbers<[1], [0], [0], [1], [0, 0, 1, 1], [], []>} : vector<128x576xbf16>, vector<576x128xbf16>, vector<128x128xf32> -> vector<128x128xf32>
    %c0_3 = arith.constant 0 : index
    %c0_4 = arith.constant 0 : index
    %3 = vector.load %arg3[%c0_3, %c0_4] : memref<1x128xf32, #tpu.memory_space<vmem>>, vector<1x128xf32>
    %4 = vector.broadcast %3 : vector<1x128xf32> to vector<128x128xf32>
    %5 = arith.addf %2, %4 : vector<128x128xf32>
    %cst_5 = arith.constant 0.000000e+00 : f32
    %6 = vector.broadcast %cst_5 : f32 to vector<128x128xf32>
    %7 = arith.maximumf %5, %6 : vector<128x128xf32>
    %8 = arith.truncf %7 : vector<128x128xf32> to vector<128x128xbf16>
    %c0_6 = arith.constant 0 : index
    %c0_7 = arith.constant 0 : index
    %9 = vector.load %arg4[%c0_6, %c0_7] : memref<128x128xbf16, #tpu.memory_space<vmem>>, vector<128x128xbf16>
    tpu.vector_store %arg4[%c0_6, %c0_7], %8 {strides = array<i32>} : memref<128x128xbf16, #tpu.memory_space<vmem>>, vector<128x128xbf16>,
    return
  }
  func.func @transform_0(%arg0: i32) -> (i32, i32) {
    %c0_i32 = arith.constant 0 : i32
    %c0_i32_0 = arith.constant 0 : i32
    return %arg0, %c0_i32 : i32, i32
  }
  func.func @transform_1(%arg0: i32) -> (i32, i32) {
    %c0_i32 = arith.constant 0 : i32
    %c0_i32_0 = arith.constant 0 : i32
    %c0_i32_1 = arith.constant 0 : i32
    return %c0_i32, %c0_i32_0 : i32, i32
  }
  func.func @transform_2(%arg0: i32) -> (i32, i32) {
    %c0_i32 = arith.constant 0 : i32
    %c0_i32_0 = arith.constant 0 : i32
    %c0_i32_1 = arith.constant 0 : i32
    return %c0_i32, %c0_i32_0 : i32, i32
  }
  func.func @transform_3(%arg0: i32) -> (i32, i32) {
    %c0_i32 = arith.constant 0 : i32
    %c0_i32_0 = arith.constant 0 : i32
    return %arg0, %c0_i32 : i32, i32
  }
}

module attributes {stable_mosaic.version = 11 : i64} {
  func.func @_mlp_head_kernel(%arg0: memref<8x4096xbf16, #tpu.memory_space<vmem>>, %arg1: memref<4096x512xbf16, #tpu.memory_space<vmem>>, %arg2: memref<1x512xf32, #tpu.memory_space<vmem>>, %arg3: memref<512x128xbf16, #tpu.memory_space<vmem>>, %arg4: memref<1x128xf32, #tpu.memory_space<vmem>>, %arg5: memref<8x128xf32, #tpu.memory_space<vmem>>) attributes {dimension_semantics = [], scalar_prefetch = 0 : i64, scratch_operands = 0 : i64, tpu.core_type = #tpu.core_type<tc>} {
    %c0 = arith.constant 0 : index
    %c0_0 = arith.constant 0 : index
    %0 = vector.load %arg0[%c0, %c0_0] : memref<8x4096xbf16, #tpu.memory_space<vmem>>, vector<8x4096xbf16>
    %c0_1 = arith.constant 0 : index
    %c0_2 = arith.constant 0 : index
    %1 = vector.load %arg1[%c0_1, %c0_2] : memref<4096x512xbf16, #tpu.memory_space<vmem>>, vector<4096x512xbf16>
    %cst = arith.constant dense<0.000000e+00> : vector<8x512xf32>
    %2 = tpu.matmul %0, %1, %cst {dimension_numbers = #tpu.dot_dimension_numbers<[1], [0], [0], [1], [0, 0, 1, 1], [], []>} : vector<8x4096xbf16>, vector<4096x512xbf16>, vector<8x512xf32> -> vector<8x512xf32>
    %c0_3 = arith.constant 0 : index
    %c0_4 = arith.constant 0 : index
    %3 = vector.load %arg2[%c0_3, %c0_4] : memref<1x512xf32, #tpu.memory_space<vmem>>, vector<1x512xf32>
    %4 = vector.broadcast %3 : vector<1x512xf32> to vector<8x512xf32>
    %5 = arith.addf %2, %4 : vector<8x512xf32>
    %cst_5 = arith.constant 0.000000e+00 : f32
    %6 = vector.broadcast %cst_5 : f32 to vector<8x512xf32>
    %7 = arith.maximumf %5, %6 : vector<8x512xf32>
    %8 = arith.truncf %7 : vector<8x512xf32> to vector<8x512xbf16>
    %c0_6 = arith.constant 0 : index
    %c0_7 = arith.constant 0 : index
    %9 = vector.load %arg3[%c0_6, %c0_7] : memref<512x128xbf16, #tpu.memory_space<vmem>>, vector<512x128xbf16>
    %cst_8 = arith.constant dense<0.000000e+00> : vector<8x128xf32>
    %10 = tpu.matmul %8, %9, %cst_8 {dimension_numbers = #tpu.dot_dimension_numbers<[1], [0], [0], [1], [0, 0, 1, 1], [], []>} : vector<8x512xbf16>, vector<512x128xbf16>, vector<8x128xf32> -> vector<8x128xf32>
    %c0_9 = arith.constant 0 : index
    %c0_10 = arith.constant 0 : index
    %11 = vector.load %arg4[%c0_9, %c0_10] : memref<1x128xf32, #tpu.memory_space<vmem>>, vector<1x128xf32>
    %12 = vector.broadcast %11 : vector<1x128xf32> to vector<8x128xf32>
    %13 = arith.addf %10, %12 : vector<8x128xf32>
    %c0_11 = arith.constant 0 : index
    %c0_12 = arith.constant 0 : index
    %14 = vector.load %arg5[%c0_11, %c0_12] : memref<8x128xf32, #tpu.memory_space<vmem>>, vector<8x128xf32>
    tpu.vector_store %arg5[%c0_11, %c0_12], %13 {strides = array<i32>} : memref<8x128xf32, #tpu.memory_space<vmem>>, vector<8x128xf32>,
    return
  }
}

</mosaic_0001>

<llo_original>
// kernel: _lambda_.4
$region0: #{_lambda_.4}
  #allocation0 [shape = 'u32[]', space=smem, size = 0x4, offset = 0x4, fixed_abs, tag = 'smem constant byte address 0x4 - core index']
  #allocation1 [shape = 'u32[144,128]{1,0:T(1,128)}', space=vmem, size = 0x12000, scoped, tag = 'internal scratch']
  %s0 = inlined_call_operand.vmem [shape: bf16[1024,256], index: 0, kind: input, shape index: {}]
  %s1 = inlined_call_operand.vmem [shape: bf16[256,128], index: 1, kind: input, shape index: {}]
  %s2 = inlined_call_operand.vmem [shape: f32[1,128], index: 2, kind: input, shape index: {}]
  %s3 = inlined_call_operand.vmem [shape: bf16[1024,128], index: 3, kind: output, shape index: {}]
  %s4 = sld [smem:[#allocation0]]
  $region45: #{_lambda_.4} parent=0
    _
  %s6 = ssub.s32 1, %s4
  %s7 = scalar_select 0, %s6, %s4
  loop: start=0, step=1, limit=6
  $region2: #{_lambda_.4} parent=0 // loop_pre_header
    _
  $region3: #{_lambda_.4} parent=0 // loop_header
    %s9 = sphi 0, %s13
    %p10 = scmp.ge.s32.totalorder %s9, 6
    %s19 = sphi 0, %s21
    %s22 = sphi 0, %s19
    %s23 = sphi 0, %s22
    %s39 = sphi 0, %s23
    %s43 = sphi 0, %s43
    %s45 = sphi 0, %s43
    %s46 = sphi 0, %s45
    %s60 = sphi 0, %s46
    %s64 = sphi 0, %s64
    %s66 = sphi 0, %s64
    %s67 = sphi 0, %s66
    %s81 = sphi 0, %s67
    %s87 = sphi 0, %s89
    %s90 = sphi 0, %s87
    %s91 = sphi 0, %s90
    %s107 = sphi 0, %s91
  $region4: #{_lambda_.4} parent=0 // loop_header_branch
    %12 = sbr.rel (%p10) target = $region8
  $region5: #{_lambda_.4} parent=0 // loop_body
    %s14 = ssub.s32 %s9, 1
    %s15 = ssub.s32 %s9, 2
    %s16 = sadd.s32 %s9, 1
    %s17 = ssub.s32 %s9, %s16
    %p18 = scmp.eq.s32.totalorder %s17, 0
    %s20 = sadd.s32 %s19, 1
    %s21 = scalar_select %p18, %s19, %s20
    %p24 = pneg %p18
    %p25 = scmp.eq.s32.totalorder %s9, 3
    %p26 = por %p24, %p25
    %p27 = scmp.ne.s32.totalorder %s19, %s22
    %p28 = scmp.eq.s32.totalorder %s9, 0
    %p29 = por %p27, %p28
    %p30 = scmp.ne.s32.totalorder %s19, %s22
    %p31 = scmp.eq.s32.totalorder %s14, 3
    %p32 = por %p30, %p31
    %p33 = scmp.ne.s32.totalorder %s22, %s23
    %p34 = scmp.eq.s32.totalorder %s14, 0
    %p35 = por %p33, %p34
    %p36 = scmp.ne.s32.totalorder %s22, %s23
    %p37 = scmp.eq.s32.totalorder %s15, 3
    %p38 = por %p36, %p37
    %p40 = scmp.ne.s32.totalorder %s23, %s39
    %p41 = scmp.eq.s32.totalorder %s15, 0
    %p42 = por %p40, %p41
    %s44 = sadd.s32 %s43, 1
    %p47 = scmp.eq.s32.totalorder %s9, 3
    %p48 = scmp.ne.s32.totalorder %s43, %s45
    %p49 = scmp.eq.s32.totalorder %s9, 0
    %p50 = por %p48, %p49
    %p51 = scmp.ne.s32.totalorder %s43, %s45
    %p52 = scmp.eq.s32.totalorder %s14, 3
    %p53 = por %p51, %p52
    %p54 = scmp.ne.s32.totalorder %s45, %s46
    %p55 = scmp.eq.s32.totalorder %s14, 0
    %p56 = por %p54, %p55
    %p57 = scmp.ne.s32.totalorder %s45, %s46
    %p58 = scmp.eq.s32.totalorder %s15, 3
    %p59 = por %p57, %p58
    %p61 = scmp.ne.s32.totalorder %s46, %s60
    %p62 = scmp.eq.s32.totalorder %s15, 0
    %p63 = por %p61, %p62
    %s65 = sadd.s32 %s64, 1
    %p68 = scmp.eq.s32.totalorder %s9, 3
    %p69 = scmp.ne.s32.totalorder %s64, %s66
    %p70 = scmp.eq.s32.totalorder %s9, 0
    %p71 = por %p69, %p70
    %p72 = scmp.ne.s32.totalorder %s64, %s66
    %p73 = scmp.eq.s32.totalorder %s14, 3
    %p74 = por %p72, %p73
    %p75 = scmp.ne.s32.totalorder %s66, %s67
    %p76 = scmp.eq.s32.totalorder %s14, 0
    %p77 = por %p75, %p76
    %p78 = scmp.ne.s32.totalorder %s66, %s67
    %p79 = scmp.eq.s32.totalorder %s15, 3
    %p80 = por %p78, %p79
    %p82 = scmp.ne.s32.totalorder %s67, %s81
    %p83 = scmp.eq.s32.totalorder %s15, 0
    %p84 = por %p82, %p83
    %s85 = ssub.s32 %s9, %s16
    %p86 = scmp.eq.s32.totalorder %s85, 0
    %s88 = sadd.s32 %s87, 1
    %s89 = scalar_select %p86, %s87, %s88
    %p92 = pneg %p86
    %p93 = scmp.eq.s32.totalorder %s9, 3
    %p94 = por %p92, %p93
    %p95 = scmp.ne.s32.totalorder %s87, %s90
    %p96 = scmp.eq.s32.totalorder %s9, 0
    %p97 = por %p95, %p96
    %p98 = scmp.ne.s32.totalorder %s87, %s90
    %p99 = scmp.eq.s32.totalorder %s14, 3
    %p100 = por %p98, %p99
    %p101 = scmp.ne.s32.totalorder %s90, %s91
    %p102 = scmp.eq.s32.totalorder %s14, 0
    %p103 = por %p101, %p102
    %p104 = scmp.ne.s32.totalorder %s90, %s91
    %p105 = scmp.eq.s32.totalorder %s15, 3
    %p106 = por %p104, %p105
    %p108 = scmp.ne.s32.totalorder %s91, %s107
    %p109 = scmp.eq.s32.totalorder %s15, 0
    %p110 = por %p108, %p109
    %p111 = scmp.le.s32.totalorder 1, %s9
    %p112 = scmp.lt.s32.totalorder %s9, 5
    %p113 = pnand %p111, %p112
    %p114 = pneg %p113
    // Predicated region
    $region9: #{_lambda_.4} parent=5 // pred_check
      _
    $region10: #{_lambda_.4} parent=5 // pred_check_branch
      %116 = sbr.rel (%p113) target = $region12
    $region11: #{_lambda_.4} parent=5 // pred_region
      %s117 = ssub.s32 %s9, 1
      // Predicated region
      $region13: #{_lambda_.4} parent=11 // pred_check
        %p118 = pneg %p56
      $region14: #{_lambda_.4} parent=11 // pred_check_branch
        %120 = sbr.rel (%p118) target = $region16
      $region15: #{_lambda_.4} parent=11 // pred_region
        _
      $region16: #{_lambda_.4} parent=11 // pred_fallthru
        _
      // Predicated region
      $region17: #{_lambda_.4} parent=11 // pred_check
        %p121 = pneg %p77
      $region18: #{_lambda_.4} parent=11 // pred_check_branch
        %123 = sbr.rel (%p121) target = $region20
      $region19: #{_lambda_.4} parent=11 // pred_region
        _
      $region20: #{_lambda_.4} parent=11 // pred_fallthru
        _
    $region12: #{_lambda_.4} parent=5 // pred_fallthru
      _
    %p124 = scmp.lt.s32.totalorder %s9, 4
    // Predicated region
    $region21: #{_lambda_.4} parent=5 // pred_check
      %p125 = pneg %p124
    $region22: #{_lambda_.4} parent=5 // pred_check_branch
      %127 = sbr.rel (%p125) target = $region24
    $region23: #{_lambda_.4} parent=5 // pred_region
      // Predicated region
      $region25: #{_lambda_.4} parent=23 // pred_check
        %p128 = pneg %p29
      $region26: #{_lambda_.4} parent=23 // pred_check_branch
        %130 = sbr.rel (%p128) target = $region28
      $region27: #{_lambda_.4} parent=23 // pred_region
        %s131 = smul.u32 32, %s9
        %p132 = scmp.lt.s32.totalorder %s131, 127
        %s133 = scalar_select %p132, %s131, 127
        %s134 = smul.addr %s133, 2
        %s135 = smul.addr %s134, 4
        %s136 = scalar_lea.vmem %s0, %s135
        %s137 = smul.u32 32, %s9
      $region28: #{_lambda_.4} parent=23 // pred_fallthru
        _
    $region24: #{_lambda_.4} parent=5 // pred_fallthru
      _
    %p138 = scmp.le.s32.totalorder 1, %s9
    %p139 = scmp.lt.s32.totalorder %s9, 5
    %p140 = pnand %p138, %p139
    %p141 = pneg %p140
    // Predicated region
    $region29: #{_lambda_.4} parent=5 // pred_check
      _
    $region30: #{_lambda_.4} parent=5 // pred_check_branch
      %143 = sbr.rel (%p140) target = $region32
    $region31: #{_lambda_.4} parent=5 // pred_region
      %s144 = ssub.s32 %s9, 1
      %s145 = smul.u32 32, %s14
      %p146 = scmp.lt.s32.totalorder %s145, 127
      %s147 = scalar_select %p146, %s145, 127
      %s148 = smul.addr %s147, 2
      %s149 = smul.addr %s148, 4
      %s150 = scalar_lea.vmem %s0, %s149
      %p151 = pneg %p35
      %p152 = pneg %p32
      %p153 = pneg %p56
      %p154 = pneg %p53
      %p155 = pneg %p77
      %p156 = pneg %p74
      %p157 = pneg %p103
      %p158 = pneg %p100
      %s159 = smul.u32 32, %s14
      %p160 = scmp.lt.s32.totalorder %s159, 127
      %s161 = scalar_select %p160, %s159, 127
      %s162 = smul.addr %s161, 4
      %s163 = scalar_lea.vmem %s3, %s162
      %s164 = smul.u32 32, %s14
      %p165 = scmp.lt.s32.totalorder %s164, 127
      %s166 = scalar_select %p165, %s164, 127
      %s167 = smul.addr %s166, 2
      %s168 = smul.addr %s167, 4
      %s169 = scalar_lea.vmem %s0, %s168
      %s170 = smul.u32 32, %s14
      %s171 = smul.u32 32, %s14
      %p172 = scmp.lt.s32.totalorder %s171, 127
      %s173 = scalar_select %p172, %s171, 127
      %s174 = smul.addr %s173, 4
      %s175 = scalar_lea.vmem %s3, %s174
      %s176 = smul.u32 32, %s14
      %v178 = vld [vmem:[%s169] sm:$0xff]
      %v179 = vld [vmem:[%s169 + $0x8] sm:$0xff]
      %v180 = vld [vmem:[%s169 + $0x10] sm:$0xff]
      %v181 = vld [vmem:[%s169 + $0x18] sm:$0xff]
      %v182 = vld [vmem:[%s169 + $0x20] sm:$0xff]
      %v183 = vld [vmem:[%s169 + $0x28] sm:$0xff]
      %v184 = vld [vmem:[%s169 + $0x30] sm:$0xff]
      %v185 = vld [vmem:[%s169 + $0x38] sm:$0xff]
      %v186 = vld [vmem:[%s169 + $0x40] sm:$0xff]
      %v187 = vld [vmem:[%s169 + $0x48] sm:$0xff]
      %v188 = vld [vmem:[%s169 + $0x50] sm:$0xff]
      %v189 = vld [vmem:[%s169 + $0x58] sm:$0xff]
      %v190 = vld [vmem:[%s169 + $0x60] sm:$0xff]
      %v191 = vld [vmem:[%s169 + $0x68] sm:$0xff]
      %v192 = vld [vmem:[%s169 + $0x70] sm:$0xff]
      %v193 = vld [vmem:[%s169 + $0x78] sm:$0xff]
      %v194 = vld [vmem:[%s169 + $0x80] sm:$0xff]
      %v195 = vld [vmem:[%s169 + $0x88] sm:$0xff]
      %v196 = vld [vmem:[%s169 + $0x90] sm:$0xff]
      %v197 = vld [vmem:[%s169 + $0x98] sm:$0xff]
      %v198 = vld [vmem:[%s169 + $0xa0] sm:$0xff]
      %v199 = vld [vmem:[%s169 + $0xa8] sm:$0xff]
      %v200 = vld [vmem:[%s169 + $0xb0] sm:$0xff]
      %v201 = vld [vmem:[%s169 + $0xb8] sm:$0xff]
      %v202 = vld [vmem:[%s169 + $0xc0] sm:$0xff]
      %v203 = vld [vmem:[%s169 + $0xc8] sm:$0xff]
      %v204 = vld [vmem:[%s169 + $0xd0] sm:$0xff]
      %v205 = vld [vmem:[%s169 + $0xd8] sm:$0xff]
      %v206 = vld [vmem:[%s169 + $0xe0] sm:$0xff]
      %v207 = vld [vmem:[%s169 + $0xe8] sm:$0xff]
      %v208 = vld [vmem:[%s169 + $0xf0] sm:$0xff]
      %v209 = vld [vmem:[%s169 + $0xf8] sm:$0xff]
      %v210 = vld [vmem:[%s1] sm:$0xf]
      %v211 = vld [vmem:[%s1 + $0x4] sm:$0xf]
      %v212 = vld [vmem:[%s1 + $0x8] sm:$0xf]
      %v213 = vld [vmem:[%s1 + $0xc] sm:$0xf]
      %v214 = vld [vmem:[%s1 + $0x10] sm:$0xf]
      %v215 = vld [vmem:[%s1 + $0x14] sm:$0xf]
      %v216 = vld [vmem:[%s1 + $0x18] sm:$0xf]
      %v217 = vld [vmem:[%s1 + $0x1c] sm:$0xf]
      %v218 = vld [vmem:[%s1 + $0x20] sm:$0xf]
      %v219 = vld [vmem:[%s1 + $0x24] sm:$0xf]
      %v220 = vld [vmem:[%s1 + $0x28] sm:$0xf]
      %v221 = vld [vmem:[%s1 + $0x2c] sm:$0xf]
      %v222 = vld [vmem:[%s1 + $0x30] sm:$0xf]
      %v223 = vld [vmem:[%s1 + $0x34] sm:$0xf]
      %v224 = vld [vmem:[%s1 + $0x38] sm:$0xf]
      %v225 = vld [vmem:[%s1 + $0x3c] sm:$0xf]
      %v226 = vld [vmem:[%s1 + $0x40] sm:$0xf]
      %v227 = vld [vmem:[%s1 + $0x44] sm:$0xf]
      %v228 = vld [vmem:[%s1 + $0x48] sm:$0xf]
      %v229 = vld [vmem:[%s1 + $0x4c] sm:$0xf]
      %v230 = vld [vmem:[%s1 + $0x50] sm:$0xf]
      %v231 = vld [vmem:[%s1 + $0x54] sm:$0xf]
      %v232 = vld [vmem:[%s1 + $0x58] sm:$0xf]
      %v233 = vld [vmem:[%s1 + $0x5c] sm:$0xf]
      %v234 = vld [vmem:[%s1 + $0x60] sm:$0xf]
      %v235 = vld [vmem:[%s1 + $0x64] sm:$0xf]
      %v236 = vld [vmem:[%s1 + $0x68] sm:$0xf]
      %v237 = vld [vmem:[%s1 + $0x6c] sm:$0xf]
      %v238 = vld [vmem:[%s1 + $0x70] sm:$0xf]
      %v239 = vld [vmem:[%s1 + $0x74] sm:$0xf]
      %v240 = vld [vmem:[%s1 + $0x78] sm:$0xf]
      %v241 = vld [vmem:[%s1 + $0x7c] sm:$0xf]
      %v242 = vld [vmem:[%s2] sm:$0x1]
      %v244 = vlaneseq
      %v245 = vshrl.u32 %v244, 7
      %v246 = vsub.s32 0, %v245
      %v247 = vrot.slane %v242, %v246
      %v281 = vunpack.c.l.b16 %v178
      %v282 = vunpack.c.h.b16 %v178
      %v283 = vunpack.c.l.b16 %v179
      %v284 = vunpack.c.h.b16 %v179
      %v285 = vunpack.c.l.b16 %v180
      %v286 = vunpack.c.h.b16 %v180
      %v287 = vunpack.c.l.b16 %v181
      %v288 = vunpack.c.h.b16 %v181
      %v289 = vunpack.c.l.b16 %v182
      %v290 = vunpack.c.h.b16 %v182
      %v291 = vunpack.c.l.b16 %v183
      %v292 = vunpack.c.h.b16 %v183
      %v293 = vunpack.c.l.b16 %v184
      %v294 = vunpack.c.h.b16 %v184
      %v295 = vunpack.c.l.b16 %v185
      %v296 = vunpack.c.h.b16 %v185
      %v297 = vunpack.c.l.b16 %v186
      %v298 = vunpack.c.h.b16 %v186
      %v299 = vunpack.c.l.b16 %v187
      %v300 = vunpack.c.h.b16 %v187
      %v301 = vunpack.c.l.b16 %v188
      %v302 = vunpack.c.h.b16 %v188
      %v303 = vunpack.c.l.b16 %v189
      %v304 = vunpack.c.h.b16 %v189
      %v305 = vunpack.c.l.b16 %v190
      %v306 = vunpack.c.h.b16 %v190
      %v307 = vunpack.c.l.b16 %v191
      %v308 = vunpack.c.h.b16 %v191
      %v309 = vunpack.c.l.b16 %v192
      %v310 = vunpack.c.h.b16 %v192
      %v311 = vunpack.c.l.b16 %v193
      %v312 = vunpack.c.h.b16 %v193
      %v313 = vunpack.c.l.b16 %v194
      %v314 = vunpack.c.h.b16 %v194
      %v315 = vunpack.c.l.b16 %v195
      %v316 = vunpack.c.h.b16 %v195
      %v317 = vunpack.c.l.b16 %v196
      %v318 = vunpack.c.h.b16 %v196
      %v319 = vunpack.c.l.b16 %v197
      %v320 = vunpack.c.h.b16 %v197
      %v321 = vunpack.c.l.b16 %v198
      %v322 = vunpack.c.h.b16 %v198
      %v323 = vunpack.c.l.b16 %v199
      %v324 = vunpack.c.h.b16 %v199
      %v325 = vunpack.c.l.b16 %v200
      %v326 = vunpack.c.h.b16 %v200
      %v327 = vunpack.c.l.b16 %v201
      %v328 = vunpack.c.h.b16 %v201
      %v329 = vunpack.c.l.b16 %v202
      %v330 = vunpack.c.h.b16 %v202
      %v331 = vunpack.c.l.b16 %v203
      %v332 = vunpack.c.h.b16 %v203
      %v333 = vunpack.c.l.b16 %v204
      %v334 = vunpack.c.h.b16 %v204
      %v335 = vunpack.c.l.b16 %v205
      %v336 = vunpack.c.h.b16 %v205
      %v337 = vunpack.c.l.b16 %v206
      %v338 = vunpack.c.h.b16 %v206
      %v339 = vunpack.c.l.b16 %v207
      %v340 = vunpack.c.h.b16 %v207
      %v341 = vunpack.c.l.b16 %v208
      %v342 = vunpack.c.h.b16 %v208
      %v343 = vunpack.c.l.b16 %v209
      %v344 = vunpack.c.h.b16 %v209
      %v345 = vpack.c.b16 %v283, %v281
      %v346 = vpack.c.b16 %v284, %v282
      %v347 = vpack.c.b16 %v287, %v285
      %v348 = vpack.c.b16 %v288, %v286
      %v349 = vpack.c.b16 %v291, %v289
      %v350 = vpack.c.b16 %v292, %v290
      %v351 = vpack.c.b16 %v295, %v293
      %v352 = vpack.c.b16 %v296, %v294
      %v353 = vpack.c.b16 %v299, %v297
      %v354 = vpack.c.b16 %v300, %v298
      %v355 = vpack.c.b16 %v303, %v301
      %v356 = vpack.c.b16 %v304, %v302
      %v357 = vpack.c.b16 %v307, %v305
      %v358 = vpack.c.b16 %v308, %v306
      %v359 = vpack.c.b16 %v311, %v309
      %v360 = vpack.c.b16 %v312, %v310
      %v361 = vpack.c.b16 %v315, %v313
      %v362 = vpack.c.b16 %v316, %v314
      %v363 = vpack.c.b16 %v319, %v317
      %v364 = vpack.c.b16 %v320, %v318
      %v365 = vpack.c.b16 %v323, %v321
      %v366 = vpack.c.b16 %v324, %v322
      %v367 = vpack.c.b16 %v327, %v325
      %v368 = vpack.c.b16 %v328, %v326
      %v369 = vpack.c.b16 %v331, %v329
      %v370 = vpack.c.b16 %v332, %v330
      %v371 = vpack.c.b16 %v335, %v333
      %v372 = vpack.c.b16 %v336, %v334
      %v373 = vpack.c.b16 %v339, %v337
      %v374 = vpack.c.b16 %v340, %v338
      %v375 = vpack.c.b16 %v343, %v341
      %v376 = vpack.c.b16 %v344, %v342
      %v441 = vunpack.c.l.b16 %v210
      %v442 = vunpack.c.l.b16 %v211
      %v443 = vunpack.c.l.b16 %v212
      %v444 = vunpack.c.l.b16 %v213
      %v445 = vunpack.c.l.b16 %v214
      %v446 = vunpack.c.l.b16 %v215
      %v447 = vunpack.c.l.b16 %v216
      %v448 = vunpack.c.l.b16 %v217
      %v449 = vunpack.c.l.b16 %v218
      %v450 = vunpack.c.l.b16 %v219
      %v451 = vunpack.c.l.b16 %v220
      %v452 = vunpack.c.l.b16 %v221
      %v453 = vunpack.c.l.b16 %v222
      %v454 = vunpack.c.l.b16 %v223
      %v455 = vunpack.c.l.b16 %v224
      %v456 = vunpack.c.l.b16 %v225
      %v457 = vunpack.c.l.b16 %v226
      %v458 = vunpack.c.l.b16 %v227
      %v459 = vunpack.c.l.b16 %v228
      %v460 = vunpack.c.l.b16 %v229
      %v461 = vunpack.c.l.b16 %v230
      %v462 = vunpack.c.l.b16 %v231
      %v463 = vunpack.c.l.b16 %v232
      %v464 = vunpack.c.l.b16 %v233
      %v465 = vunpack.c.l.b16 %v234
      %v466 = vunpack.c.l.b16 %v235
      %v467 = vunpack.c.l.b16 %v236
      %v468 = vunpack.c.l.b16 %v237
      %v469 = vunpack.c.l.b16 %v238
      %v470 = vunpack.c.l.b16 %v239
      %v471 = vunpack.c.l.b16 %v240
      %v472 = vunpack.c.l.b16 %v241
      %v473 = vpack.c.b16 %v442, %v441
      %v474 = vpack.c.b16 %v444, %v443
      %v475 = vpack.c.b16 %v446, %v445
      %v476 = vpack.c.b16 %v448, %v447
      %v477 = vpack.c.b16 %v450, %v449
      %v478 = vpack.c.b16 %v452, %v451
      %v479 = vpack.c.b16 %v454, %v453
      %v480 = vpack.c.b16 %v456, %v455
      %v481 = vpack.c.b16 %v458, %v457
      %v482 = vpack.c.b16 %v460, %v459
      %v483 = vpack.c.b16 %v462, %v461
      %v484 = vpack.c.b16 %v464, %v463
      %v485 = vpack.c.b16 %v466, %v465
      %v486 = vpack.c.b16 %v468, %v467
      %v487 = vpack.c.b16 %v470, %v469
      %v488 = vpack.c.b16 %v472, %v471
      %505 = vmatprep.subr.bf16.mxu0 0
      %506 = vmatpush1.bf16.msra.mxu0 %v473
      %507 = vmatprep.subr.bf16.mxu0 0
      %508 = vmatpush1.bf16.msra.mxu0 %v474
      %509 = vmatprep.subr.bf16.mxu0 0
      %510 = vmatpush1.bf16.msra.mxu0 %v475
      %511 = vmatprep.subr.bf16.mxu0 0
      %512 = vmatpush1.bf16.msra.mxu0 %v476
      %513 = vmatprep.subr.bf16.mxu0 0
      %514 = vmatpush1.bf16.msra.mxu0 %v477
      %515 = vmatprep.subr.bf16.mxu0 0
      %516 = vmatpush1.bf16.msra.mxu0 %v478
      %517 = vmatprep.subr.bf16.mxu0 0
      %518 = vmatpush1.bf16.msra.mxu0 %v479
      %519 = vmatprep.subr.bf16.mxu0 0
      %520 = vmatpush1.bf16.msra.mxu0 %v480
      %521 = vmatprep.subr.bf16.mxu0 0
      %522 = vmatpush1.bf16.msra.mxu0 %v481
      %523 = vmatprep.subr.bf16.mxu0 0
      %524 = vmatpush1.bf16.msra.mxu0 %v482
      %525 = vmatprep.subr.bf16.mxu0 0
      %526 = vmatpush1.bf16.msra.mxu0 %v483
      %527 = vmatprep.subr.bf16.mxu0 0
      %528 = vmatpush1.bf16.msra.mxu0 %v484
      %529 = vmatprep.subr.bf16.mxu0 0
      %530 = vmatpush1.bf16.msra.mxu0 %v485
      %531 = vmatprep.subr.bf16.mxu0 0
      %532 = vmatpush1.bf16.msra.mxu0 %v486
      %533 = vmatprep.subr.bf16.mxu0 0
      %534 = vmatpush1.bf16.msra.mxu0 %v487
      %535 = vmatprep.subr.bf16.mxu0 0
      %536 = vmatpush1.bf16.msra.mxu0 %v488
      %537 = vmatprep.mubr.bf16.mxu0 %v346
      %538 = vmatmul.mubr.bf16.gmra.mrb[0].mxu0 %v345
      %v539 = vpop.f32.mrb[0].mxu0
      %v540 = vadd.f32 %v247, %v539
      %v541 = vpop.f32.mrb[0].mxu0
      %v542 = vpop.f32.mrb[0].mxu0
      %v543 = vadd.f32 %v247, %v542
      %v544 = vpop.f32.mrb[0].mxu0
      %545 = vmatprep.mubr.bf16.mxu0 %v348
      %546 = vmatmul.mubr.bf16.gmra.mrb[0].mxu0 %v347
      %v547 = vpop.f32.mrb[0].mxu0
      %v548 = vadd.f32 %v247, %v547
      %v549 = vpop.f32.mrb[0].mxu0
      %v550 = vpop.f32.mrb[0].mxu0
      %v551 = vadd.f32 %v247, %v550
      %v552 = vpop.f32.mrb[0].mxu0
      %553 = vmatprep.mubr.bf16.mxu0 %v350
      %554 = vmatmul.mubr.bf16.gmra.mrb[0].mxu0 %v349
      %v555 = vpop.f32.mrb[0].mxu0
      %v556 = vadd.f32 %v247, %v555
      %v557 = vpop.f32.mrb[0].mxu0
      %v558 = vpop.f32.mrb[0].mxu0
      %v559 = vadd.f32 %v247, %v558
      %v560 = vpop.f32.mrb[0].mxu0
      %561 = vmatprep.mubr.bf16.mxu0 %v352
      %562 = vmatmul.mubr.bf16.gmra.mrb[0].mxu0 %v351
      %v563 = vpop.f32.mrb[0].mxu0
      %v564 = vadd.f32 %v247, %v563
      %v565 = vpop.f32.mrb[0].mxu0
      %v566 = vpop.f32.mrb[0].mxu0
      %v567 = vadd.f32 %v247, %v566
      %v568 = vpop.f32.mrb[0].mxu0
      %569 = vmatprep.mubr.bf16.mxu0 %v354
      %570 = vmatmul.mubr.bf16.gmra.mrb[0].mxu0 %v353
      %v571 = vpop.f32.mrb[0].mxu0
      %v572 = vadd.f32 %v247, %v571
      %v573 = vpop.f32.mrb[0].mxu0
      %v574 = vpop.f32.mrb[0].mxu0
      %v575 = vadd.f32 %v247, %v574
      %v576 = vpop.f32.mrb[0].mxu0
      %577 = vmatprep.mubr.bf16.mxu0 %v356
      %578 = vmatmul.mubr.bf16.gmra.mrb[0].mxu0 %v355
      %v579 = vpop.f32.mrb[0].mxu0
      %v580 = vadd.f32 %v247, %v579
      %v581 = vpop.f32.mrb[0].mxu0
      %v582 = vpop.f32.mrb[0].mxu0
      %v583 = vadd.f32 %v247, %v582
      %v584 = vpop.f32.mrb[0].mxu0
      %585 = vmatprep.mubr.bf16.mxu0 %v358
      %586 = vmatmul.mubr.bf16.gmra.mrb[0].mxu0 %v357
      %v587 = vpop.f32.mrb[0].mxu0
      %v588 = vadd.f32 %v247, %v587
      %v589 = vpop.f32.mrb[0].mxu0
      %v590 = vpop.f32.mrb[0].mxu0
      %v591 = vadd.f32 %v247, %v590
      %v592 = vpop.f32.mrb[0].mxu0
      %593 = vmatprep.mubr.bf16.mxu0 %v360
      %594 = vmatmul.mubr.bf16.gmra.mrb[0].mxu0 %v359
      %v595 = vpop.f32.mrb[0].mxu0
      %v596 = vadd.f32 %v247, %v595
      %v597 = vpop.f32.mrb[0].mxu0
      %v598 = vpop.f32.mrb[0].mxu0
      %v599 = vadd.f32 %v247, %v598
      %v600 = vpop.f32.mrb[0].mxu0
      %601 = vmatprep.mubr.bf16.mxu0 %v362
      %602 = vmatmul.mubr.bf16.gmra.mrb[0].mxu0 %v361
      %v603 = vpop.f32.mrb[0].mxu0
      %v604 = vadd.f32 %v247, %v603
      %v605 = vpop.f32.mrb[0].mxu0
      %v606 = vpop.f32.mrb[0].mxu0
      %v607 = vadd.f32 %v247, %v606
      %v608 = vpop.f32.mrb[0].mxu0
      %609 = vmatprep.mubr.bf16.mxu0 %v364
      %610 = vmatmul.mubr.bf16.gmra.mrb[0].mxu0 %v363
      %v611 = vpop.f32.mrb[0].mxu0
      %v612 = vadd.f32 %v247, %v611
      %v613 = vpop.f32.mrb[0].mxu0
      %v614 = vpop.f32.mrb[0].mxu0
      %v615 = vadd.f32 %v247, %v614
      %v616 = vpop.f32.mrb[0].mxu0
      %617 = vmatprep.mubr.bf16.mxu0 %v366
      %618 = vmatmul.mubr.bf16.gmra.mrb[0].mxu0 %v365
      %v619 = vpop.f32.mrb[0].mxu0
      %v620 = vadd.f32 %v247, %v619
      %v621 = vpop.f32.mrb[0].mxu0
      %v622 = vpop.f32.mrb[0].mxu0
      %v623 = vadd.f32 %v247, %v622
      %v624 = vpop.f32.mrb[0].mxu0
      %625 = vmatprep.mubr.bf16.mxu0 %v368
      %626 = vmatmul.mubr.bf16.gmra.mrb[0].mxu0 %v367
      %v627 = vpop.f32.mrb[0].mxu0
      %v628 = vadd.f32 %v247, %v627
      %v629 = vpop.f32.mrb[0].mxu0
      %v630 = vpop.f32.mrb[0].mxu0
      %v631 = vadd.f32 %v247, %v630
      %v632 = vpop.f32.mrb[0].mxu0
      %633 = vmatprep.mubr.bf16.mxu0 %v370
      %634 = vmatmul.mubr.bf16.gmra.mrb[0].mxu0 %v369
      %v635 = vpop.f32.mrb[0].mxu0
      %v636 = vadd.f32 %v247, %v635
      %v637 = vpop.f32.mrb[0].mxu0
      %v638 = vpop.f32.mrb[0].mxu0
      %v639 = vadd.f32 %v247, %v638
      %v640 = vpop.f32.mrb[0].mxu0
      %641 = vmatprep.mubr.bf16.mxu0 %v372
      %642 = vmatmul.mubr.bf16.gmra.mrb[0].mxu0 %v371
      %v643 = vpop.f32.mrb[0].mxu0
      %v644 = vadd.f32 %v247, %v643
      %v645 = vpop.f32.mrb[0].mxu0
      %v646 = vpop.f32.mrb[0].mxu0
      %v647 = vadd.f32 %v247, %v646
      %v648 = vpop.f32.mrb[0].mxu0
      %649 = vmatprep.mubr.bf16.mxu0 %v374
      %650 = vmatmul.mubr.bf16.gmra.mrb[0].mxu0 %v373
      %v651 = vpop.f32.mrb[0].mxu0
      %v652 = vadd.f32 %v247, %v651
      %v653 = vpop.f32.mrb[0].mxu0
      %v654 = vpop.f32.mrb[0].mxu0
      %v655 = vadd.f32 %v247, %v654
      %v656 = vpop.f32.mrb[0].mxu0
      %657 = vmatprep.mubr.bf16.mxu0 %v376
      %658 = vmatmul.mubr.bf16.gmra.mrb[0].mxu0 %v375
      %v659 = vpop.f32.mrb[0].mxu0
      %v660 = vadd.f32 %v247, %v659
      %v661 = vpop.f32.mrb[0].mxu0
      %v662 = vpop.f32.mrb[0].mxu0
      %v663 = vadd.f32 %v247, %v662
      %v664 = vpop.f32.mrb[0].mxu0
      %665 = vdwg.mxu0
      %v666 = vmax.f32 %v540, 0.0
      %v667 = vmax.f32 %v543, 0.0
      %v668 = vmax.f32 %v548, 0.0
      %v669 = vmax.f32 %v551, 0.0
      %v670 = vmax.f32 %v556, 0.0
      %v671 = vmax.f32 %v559, 0.0
      %v672 = vmax.f32 %v564, 0.0
      %v673 = vmax.f32 %v567, 0.0
      %v674 = vmax.f32 %v572, 0.0
      %v675 = vmax.f32 %v575, 0.0
      %v676 = vmax.f32 %v580, 0.0
      %v677 = vmax.f32 %v583, 0.0
      %v678 = vmax.f32 %v588, 0.0
      %v679 = vmax.f32 %v591, 0.0
      %v680 = vmax.f32 %v596, 0.0
      %v681 = vmax.f32 %v599, 0.0
      %v682 = vmax.f32 %v604, 0.0
      %v683 = vmax.f32 %v607, 0.0
      %v684 = vmax.f32 %v612, 0.0
      %v685 = vmax.f32 %v615, 0.0
      %v686 = vmax.f32 %v620, 0.0
      %v687 = vmax.f32 %v623, 0.0
      %v688 = vmax.f32 %v628, 0.0
      %v689 = vmax.f32 %v631, 0.0
      %v690 = vmax.f32 %v636, 0.0
      %v691 = vmax.f32 %v639, 0.0
      %v692 = vmax.f32 %v644, 0.0
      %v693 = vmax.f32 %v647, 0.0
      %v694 = vmax.f32 %v652, 0.0
      %v695 = vmax.f32 %v655, 0.0
      %v696 = vmax.f32 %v660, 0.0
      %v697 = vmax.f32 %v663, 0.0
      %v698 = vpack.c.bf16 %v667, %v666
      %v699 = vpack.c.bf16 %v669, %v668
      %v700 = vpack.c.bf16 %v671, %v670
      %v701 = vpack.c.bf16 %v673, %v672
      %v702 = vpack.c.bf16 %v675, %v674
      %v703 = vpack.c.bf16 %v677, %v676
      %v704 = vpack.c.bf16 %v679, %v678
      %v705 = vpack.c.bf16 %v681, %v680
      %v706 = vpack.c.bf16 %v683, %v682
      %v707 = vpack.c.bf16 %v685, %v684
      %v708 = vpack.c.bf16 %v687, %v686
      %v709 = vpack.c.bf16 %v689, %v688
      %v710 = vpack.c.bf16 %v691, %v690
      %v711 = vpack.c.bf16 %v693, %v692
      %v712 = vpack.c.bf16 %v695, %v694
      %v713 = vpack.c.bf16 %v697, %v696
      %v730 = vunpack.c.l.b16 %v698
      %v731 = vunpack.c.h.b16 %v698
      %v732 = vunpack.c.l.b16 %v699
      %v733 = vunpack.c.h.b16 %v699
      %v734 = vunpack.c.l.b16 %v700
      %v735 = vunpack.c.h.b16 %v700
      %v736 = vunpack.c.l.b16 %v701
      %v737 = vunpack.c.h.b16 %v701
      %v738 = vunpack.c.l.b16 %v702
      %v739 = vunpack.c.h.b16 %v702
      %v740 = vunpack.c.l.b16 %v703
      %v741 = vunpack.c.h.b16 %v703
      %v742 = vunpack.c.l.b16 %v704
      %v743 = vunpack.c.h.b16 %v704
      %v744 = vunpack.c.l.b16 %v705
      %v745 = vunpack.c.h.b16 %v705
      %v746 = vunpack.c.l.b16 %v706
      %v747 = vunpack.c.h.b16 %v706
      %v748 = vunpack.c.l.b16 %v707
      %v749 = vunpack.c.h.b16 %v707
      %v750 = vunpack.c.l.b16 %v708
      %v751 = vunpack.c.h.b16 %v708
      %v752 = vunpack.c.l.b16 %v709
      %v753 = vunpack.c.h.b16 %v709
      %v754 = vunpack.c.l.b16 %v710
      %v755 = vunpack.c.h.b16 %v710
      %v756 = vunpack.c.l.b16 %v711
      %v757 = vunpack.c.h.b16 %v711
      %v758 = vunpack.c.l.b16 %v712
      %v759 = vunpack.c.h.b16 %v712
      %v760 = vunpack.c.l.b16 %v713
      %v761 = vunpack.c.h.b16 %v713
      %v762 = vpack.c.b16 %v730, %v730
      %v763 = vpack.c.b16 %v731, %v731
      %v764 = vpack.c.b16 %v732, %v732
      %v765 = vpack.c.b16 %v733, %v733
      %v766 = vpack.c.b16 %v734, %v734
      %v767 = vpack.c.b16 %v735, %v735
      %v768 = vpack.c.b16 %v736, %v736
      %v769 = vpack.c.b16 %v737, %v737
      %v770 = vpack.c.b16 %v738, %v738
      %v771 = vpack.c.b16 %v739, %v739
      %v772 = vpack.c.b16 %v740, %v740
      %v773 = vpack.c.b16 %v741, %v741
      %v774 = vpack.c.b16 %v742, %v742
      %v775 = vpack.c.b16 %v743, %v743
      %v776 = vpack.c.b16 %v744, %v744
      %v777 = vpack.c.b16 %v745, %v745
      %v778 = vpack.c.b16 %v746, %v746
      %v779 = vpack.c.b16 %v747, %v747
      %v780 = vpack.c.b16 %v748, %v748
      %v781 = vpack.c.b16 %v749, %v749
      %v782 = vpack.c.b16 %v750, %v750
      %v783 = vpack.c.b16 %v751, %v751
      %v784 = vpack.c.b16 %v752, %v752
      %v785 = vpack.c.b16 %v753, %v753
      %v786 = vpack.c.b16 %v754, %v754
      %v787 = vpack.c.b16 %v755, %v755
      %v788 = vpack.c.b16 %v756, %v756
      %v789 = vpack.c.b16 %v757, %v757
      %v790 = vpack.c.b16 %v758, %v758
      %v791 = vpack.c.b16 %v759, %v759
      %v792 = vpack.c.b16 %v760, %v760
      %v793 = vpack.c.b16 %v761, %v761
      %826 = vst [vmem:[%s175] sm:$0xf] %v762
      %827 = vst [vmem:[%s175 + $0x4] sm:$0xf] %v763
      %828 = vst [vmem:[%s175 + $0x8] sm:$0xf] %v764
      %829 = vst [vmem:[%s175 + $0xc] sm:$0xf] %v765
      %830 = vst [vmem:[%s175 + $0x10] sm:$0xf] %v766
      %831 = vst [vmem:[%s175 + $0x14] sm:$0xf] %v767
      %832 = vst [vmem:[%s175 + $0x18] sm:$0xf] %v768
      %833 = vst [vmem:[%s175 + $0x1c] sm:$0xf] %v769
      %834 = vst [vmem:[%s175 + $0x20] sm:$0xf] %v770
      %835 = vst [vmem:[%s175 + $0x24] sm:$0xf] %v771
      %836 = vst [vmem:[%s175 + $0x28] sm:$0xf] %v772
      %837 = vst [vmem:[%s175 + $0x2c] sm:$0xf] %v773
      %838 = vst [vmem:[%s175 + $0x30] sm:$0xf] %v774
      %839 = vst [vmem:[%s175 + $0x34] sm:$0xf] %v775
      %840 = vst [vmem:[%s175 + $0x38] sm:$0xf] %v776
      %841 = vst [vmem:[%s175 + $0x3c] sm:$0xf] %v777
      %842 = vst [vmem:[%s175 + $0x40] sm:$0xf] %v778
      %843 = vst [vmem:[%s175 + $0x44] sm:$0xf] %v779
      %844 = vst [vmem:[%s175 + $0x48] sm:$0xf] %v780
      %845 = vst [vmem:[%s175 + $0x4c] sm:$0xf] %v781
      %846 = vst [vmem:[%s175 + $0x50] sm:$0xf] %v782
      %847 = vst [vmem:[%s175 + $0x54] sm:$0xf] %v783
      %848 = vst [vmem:[%s175 + $0x58] sm:$0xf] %v784
      %849 = vst [vmem:[%s175 + $0x5c] sm:$0xf] %v785
      %850 = vst [vmem:[%s175 + $0x60] sm:$0xf] %v786
      %851 = vst [vmem:[%s175 + $0x64] sm:$0xf] %v787
      %852 = vst [vmem:[%s175 + $0x68] sm:$0xf] %v788
      %853 = vst [vmem:[%s175 + $0x6c] sm:$0xf] %v789
      %854 = vst [vmem:[%s175 + $0x70] sm:$0xf] %v790
      %855 = vst [vmem:[%s175 + $0x74] sm:$0xf] %v791
      %856 = vst [vmem:[%s175 + $0x78] sm:$0xf] %v792
      %857 = vst [vmem:[%s175 + $0x7c] sm:$0xf] %v793
      %s858 = smul.u32 32, %s14
      %p859 = scmp.lt.s32.totalorder %s858, 127
      %s860 = scalar_select %p859, %s858, 127
      %s861 = smul.addr %s860, 4
      %s862 = scalar_lea.vmem %s3, %s861
      // Predicated region
      $region33: #{_lambda_.4} parent=31 // pred_check
        %p863 = pneg %p100
      $region34: #{_lambda_.4} parent=31 // pred_check_branch
        %865 = sbr.rel (%p863) target = $region36
      $region35: #{_lambda_.4} parent=31 // pred_region
        %s866 = smul.u32 32, %s14
      $region36: #{_lambda_.4} parent=31 // pred_fallthru
        _
    $region32: #{_lambda_.4} parent=5 // pred_fallthru
      _
    %p867 = scmp.le.s32.totalorder 2, %s9
    // Predicated region
    $region37: #{_lambda_.4} parent=5 // pred_check
      %p868 = pneg %p867
    $region38: #{_lambda_.4} parent=5 // pred_check_branch
      %870 = sbr.rel (%p868) target = $region40
    $region39: #{_lambda_.4} parent=5 // pred_region
      %s871 = ssub.s32 %s9, 2
      // Predicated region
      $region41: #{_lambda_.4} parent=39 // pred_check
        %p872 = pneg %p106
      $region42: #{_lambda_.4} parent=39 // pred_check_branch
        %874 = sbr.rel (%p872) target = $region44
      $region43: #{_lambda_.4} parent=39 // pred_region
        %s875 = smul.u32 32, %s15
        %p876 = scmp.lt.s32.totalorder %s875, 127
        %s877 = scalar_select %p876, %s875, 127
        %s878 = smul.addr %s877, 4
        %s879 = scalar_lea.vmem %s3, %s878
      $region44: #{_lambda_.4} parent=39 // pred_fallthru
        _
    $region40: #{_lambda_.4} parent=5 // pred_fallthru
      _
  $region6: #{_lambda_.4} parent=0 // loop_footer
    %s13 = sadd.s32 1, %s9
  $region7: #{_lambda_.4} parent=0 // loop_footer_branch
    %8 = sbr.rel target = $region3
  $region8: #{_lambda_.4} parent=0 // loop_exit
    _

// kernel: _lambda_.5
$region0: #{_lambda_.5}
  #allocation0 [shape = 'u32[]', space=smem, size = 0x4, offset = 0x4, fixed_abs, tag = 'smem constant byte address 0x4 - core index']
  #allocation1 [shape = 'u32[144,128]{1,0:T(1,128)}', space=vmem, size = 0x12000, scoped, tag = 'internal scratch']
  %s0 = inlined_call_operand.vmem [shape: bf16[200,512], index: 0, kind: input, shape index: {}]
  %s1 = inlined_call_operand.vmem [shape: bf16[512,128], index: 1, kind: input, shape index: {}]
  %s2 = inlined_call_operand.vmem [shape: f32[1,128], index: 2, kind: input, shape index: {}]
  %s3 = inlined_call_operand.vmem [shape: bf16[200,128], index: 3, kind: output, shape index: {}]
  %s4 = sld [smem:[#allocation0]]
  $region22: #{_lambda_.5} parent=0
    _
  %s6 = ssub.s32 1, %s4
  %s7 = scalar_select 0, %s6, %s4
  // Predicated region
  $region2: #{_lambda_.5} parent=0 // pred_check
    _
  $region3: #{_lambda_.5} parent=0 // pred_check_branch
    %9 = sbr.rel (0) target = $region5
  $region4: #{_lambda_.5} parent=0 // pred_region
    _
  $region5: #{_lambda_.5} parent=0 // pred_fallthru
    _
  // Predicated region
  $region6: #{_lambda_.5} parent=0 // pred_check
    _
  $region7: #{_lambda_.5} parent=0 // pred_check_branch
    %11 = sbr.rel (0) target = $region9
  $region8: #{_lambda_.5} parent=0 // pred_region
    _
  $region9: #{_lambda_.5} parent=0 // pred_fallthru
    _
  // Predicated region
  $region10: #{_lambda_.5} parent=0 // pred_check
    _
  $region11: #{_lambda_.5} parent=0 // pred_check_branch
    %13 = sbr.rel (0) target = $region13
  $region12: #{_lambda_.5} parent=0 // pred_region
    _
  $region13: #{_lambda_.5} parent=0 // pred_fallthru
    _
  %v15 = vld [vmem:[%s0] sm:$0xff]
  %v16 = vld [vmem:[%s0 + $0x8] sm:$0xff]
  %v17 = vld [vmem:[%s0 + $0x10] sm:$0xff]
  %v18 = vld [vmem:[%s0 + $0x18] sm:$0xff]
  %v19 = vld [vmem:[%s0 + $0x20] sm:$0xff]
  %v20 = vld [vmem:[%s0 + $0x28] sm:$0xff]
  %v21 = vld [vmem:[%s0 + $0x30] sm:$0xff]
  %v22 = vld [vmem:[%s0 + $0x38] sm:$0xff]
  %v23 = vld [vmem:[%s0 + $0x40] sm:$0xff]
  %v24 = vld [vmem:[%s0 + $0x48] sm:$0xff]
  %v25 = vld [vmem:[%s0 + $0x50] sm:$0xff]
  %v26 = vld [vmem:[%s0 + $0x58] sm:$0xff]
  %v27 = vld [vmem:[%s0 + $0x60] sm:$0xff]
  %v28 = vld [vmem:[%s0 + $0x68] sm:$0xff]
  %v29 = vld [vmem:[%s0 + $0x70] sm:$0xff]
  %v30 = vld [vmem:[%s0 + $0x78] sm:$0xff]
  %v31 = vld [vmem:[%s0 + $0x80] sm:$0xff]
  %v32 = vld [vmem:[%s0 + $0x88] sm:$0xff]
  %v33 = vld [vmem:[%s0 + $0x90] sm:$0xff]
  %v34 = vld [vmem:[%s0 + $0x98] sm:$0xff]
  %v35 = vld [vmem:[%s0 + $0xa0] sm:$0xff]
  %v36 = vld [vmem:[%s0 + $0xa8] sm:$0xff]
  %v37 = vld [vmem:[%s0 + $0xb0] sm:$0xff]
  %v38 = vld [vmem:[%s0 + $0xb8] sm:$0xff]
  %v39 = vld [vmem:[%s0 + $0xc0] sm:$0xff]
  %v40 = vld [vmem:[%s0 + $0xc8] sm:$0xff]
  %v41 = vld [vmem:[%s0 + $0xd0] sm:$0xff]
  %v42 = vld [vmem:[%s0 + $0xd8] sm:$0xff]
  %v43 = vld [vmem:[%s0 + $0xe0] sm:$0xff]
  %v44 = vld [vmem:[%s0 + $0xe8] sm:$0xff]
  %v45 = vld [vmem:[%s0 + $0xf0] sm:$0xff]
  %v46 = vld [vmem:[%s0 + $0xf8] sm:$0xff]
  %v47 = vld [vmem:[%s0 + $0x100] sm:$0xff]
  %v48 = vld [vmem:[%s0 + $0x108] sm:$0xff]
  %v49 = vld [vmem:[%s0 + $0x110] sm:$0xff]
  %v50 = vld [vmem:[%s0 + $0x118] sm:$0xff]
  %v51 = vld [vmem:[%s0 + $0x120] sm:$0xff]
  %v52 = vld [vmem:[%s0 + $0x128] sm:$0xff]
  %v53 = vld [vmem:[%s0 + $0x130] sm:$0xff]
  %v54 = vld [vmem:[%s0 + $0x138] sm:$0xff]
  %v55 = vld [vmem:[%s0 + $0x140] sm:$0xff]
  %v56 = vld [vmem:[%s0 + $0x148] sm:$0xff]
  %v57 = vld [vmem:[%s0 + $0x150] sm:$0xff]
  %v58 = vld [vmem:[%s0 + $0x158] sm:$0xff]
  %v59 = vld [vmem:[%s0 + $0x160] sm:$0xff]
  %v60 = vld [vmem:[%s0 + $0x168] sm:$0xff]
  %v61 = vld [vmem:[%s0 + $0x170] sm:$0xff]
  %v62 = vld [vmem:[%s0 + $0x178] sm:$0xff]
  %v63 = vld [vmem:[%s0 + $0x180] sm:$0xff]
  %v64 = vld [vmem:[%s0 + $0x188] sm:$0xff]
  %v65 = vld [vmem:[%s1] sm:$0xf]
  %v66 = vld [vmem:[%s1 + $0x4] sm:$0xf]
  %v67 = vld [vmem:[%s1 + $0x8] sm:$0xf]
  %v68 = vld [vmem:[%s1 + $0xc] sm:$0xf]
  %v69 = vld [vmem:[%s1 + $0x10] sm:$0xf]
  %v70 = vld [vmem:[%s1 + $0x14] sm:$0xf]
  %v71 = vld [vmem:[%s1 + $0x18] sm:$0xf]
  %v72 = vld [vmem:[%s1 + $0x1c] sm:$0xf]
  %v73 = vld [vmem:[%s1 + $0x20] sm:$0xf]
  %v74 = vld [vmem:[%s1 + $0x24] sm:$0xf]
  %v75 = vld [vmem:[%s1 + $0x28] sm:$0xf]
  %v76 = vld [vmem:[%s1 + $0x2c] sm:$0xf]
  %v77 = vld [vmem:[%s1 + $0x30] sm:$0xf]
  %v78 = vld [vmem:[%s1 + $0x34] sm:$0xf]
  %v79 = vld [vmem:[%s1 + $0x38] sm:$0xf]
  %v80 = vld [vmem:[%s1 + $0x3c] sm:$0xf]
  %v81 = vld [vmem:[%s1 + $0x40] sm:$0xf]
  %v82 = vld [vmem:[%s1 + $0x44] sm:$0xf]
  %v83 = vld [vmem:[%s1 + $0x48] sm:$0xf]
  %v84 = vld [vmem:[%s1 + $0x4c] sm:$0xf]
  %v85 = vld [vmem:[%s1 + $0x50] sm:$0xf]
  %v86 = vld [vmem:[%s1 + $0x54] sm:$0xf]
  %v87 = vld [vmem:[%s1 + $0x58] sm:$0xf]
  %v88 = vld [vmem:[%s1 + $0x5c] sm:$0xf]
  %v89 = vld [vmem:[%s1 + $0x60] sm:$0xf]
  %v90 = vld [vmem:[%s1 + $0x64] sm:$0xf]
  %v91 = vld [vmem:[%s1 + $0x68] sm:$0xf]
  %v92 = vld [vmem:[%s1 + $0x6c] sm:$0xf]
  %v93 = vld [vmem:[%s1 + $0x70] sm:$0xf]
  %v94 = vld [vmem:[%s1 + $0x74] sm:$0xf]
  %v95 = vld [vmem:[%s1 + $0x78] sm:$0xf]
  %v96 = vld [vmem:[%s1 + $0x7c] sm:$0xf]
  %v97 = vld [vmem:[%s1 + $0x80] sm:$0xf]
  %v98 = vld [vmem:[%s1 + $0x84] sm:$0xf]
  %v99 = vld [vmem:[%s1 + $0x88] sm:$0xf]
  %v100 = vld [vmem:[%s1 + $0x8c] sm:$0xf]
  %v101 = vld [vmem:[%s1 + $0x90] sm:$0xf]
  %v102 = vld [vmem:[%s1 + $0x94] sm:$0xf]
  %v103 = vld [vmem:[%s1 + $0x98] sm:$0xf]
  %v104 = vld [vmem:[%s1 + $0x9c] sm:$0xf]
  %v105 = vld [vmem:[%s1 + $0xa0] sm:$0xf]
  %v106 = vld [vmem:[%s1 + $0xa4] sm:$0xf]
  %v107 = vld [vmem:[%s1 + $0xa8] sm:$0xf]
  %v108 = vld [vmem:[%s1 + $0xac] sm:$0xf]
  %v109 = vld [vmem:[%s1 + $0xb0] sm:$0xf]
  %v110 = vld [vmem:[%s1 + $0xb4] sm:$0xf]
  %v111 = vld [vmem:[%s1 + $0xb8] sm:$0xf]
  %v112 = vld [vmem:[%s1 + $0xbc] sm:$0xf]
  %v113 = vld [vmem:[%s1 + $0xc0] sm:$0xf]
  %v114 = vld [vmem:[%s1 + $0xc4] sm:$0xf]
  %v115 = vld [vmem:[%s1 + $0xc8] sm:$0xf]
  %v116 = vld [vmem:[%s1 + $0xcc] sm:$0xf]
  %v117 = vld [vmem:[%s1 + $0xd0] sm:$0xf]
  %v118 = vld [vmem:[%s1 + $0xd4] sm:$0xf]
  %v119 = vld [vmem:[%s1 + $0xd8] sm:$0xf]
  %v120 = vld [vmem:[%s1 + $0xdc] sm:$0xf]
  %v121 = vld [vmem:[%s1 + $0xe0] sm:$0xf]
  %v122 = vld [vmem:[%s1 + $0xe4] sm:$0xf]
  %v123 = vld [vmem:[%s1 + $0xe8] sm:$0xf]
  %v124 = vld [vmem:[%s1 + $0xec] sm:$0xf]
  %v125 = vld [vmem:[%s1 + $0xf0] sm:$0xf]
  %v126 = vld [vmem:[%s1 + $0xf4] sm:$0xf]
  %v127 = vld [vmem:[%s1 + $0xf8] sm:$0xf]
  %v128 = vld [vmem:[%s1 + $0xfc] sm:$0xf]
  %v129 = vld [vmem:[%s2] sm:$0x1]
  %v131 = vlaneseq
  %v132 = vshrl.u32 %v131, 7
  %v133 = vsub.s32 0, %v132
  %v134 = vrot.slane %v129, %v133
  %v186 = vunpack.c.l.b16 %v15
  %v187 = vunpack.c.h.b16 %v15
  %v188 = vunpack.c.l.b16 %v16
  %v189 = vunpack.c.h.b16 %v16
  %v190 = vunpack.c.l.b16 %v17
  %v191 = vunpack.c.h.b16 %v17
  %v192 = vunpack.c.l.b16 %v18
  %v193 = vunpack.c.h.b16 %v18
  %v194 = vunpack.c.l.b16 %v19
  %v195 = vunpack.c.h.b16 %v19
  %v196 = vunpack.c.l.b16 %v20
  %v197 = vunpack.c.h.b16 %v20
  %v198 = vunpack.c.l.b16 %v21
  %v199 = vunpack.c.h.b16 %v21
  %v200 = vunpack.c.l.b16 %v22
  %v201 = vunpack.c.h.b16 %v22
  %v202 = vunpack.c.l.b16 %v23
  %v203 = vunpack.c.h.b16 %v23
  %v204 = vunpack.c.l.b16 %v24
  %v205 = vunpack.c.h.b16 %v24
  %v206 = vunpack.c.l.b16 %v25
  %v207 = vunpack.c.h.b16 %v25
  %v208 = vunpack.c.l.b16 %v26
  %v209 = vunpack.c.h.b16 %v26
  %v210 = vunpack.c.l.b16 %v27
  %v211 = vunpack.c.h.b16 %v27
  %v212 = vunpack.c.l.b16 %v28
  %v213 = vunpack.c.h.b16 %v28
  %v214 = vunpack.c.l.b16 %v29
  %v215 = vunpack.c.h.b16 %v29
  %v216 = vunpack.c.l.b16 %v30
  %v217 = vunpack.c.h.b16 %v30
  %v218 = vunpack.c.l.b16 %v31
  %v219 = vunpack.c.h.b16 %v31
  %v220 = vunpack.c.l.b16 %v32
  %v221 = vunpack.c.h.b16 %v32
  %v222 = vunpack.c.l.b16 %v33
  %v223 = vunpack.c.h.b16 %v33
  %v224 = vunpack.c.l.b16 %v34
  %v225 = vunpack.c.h.b16 %v34
  %v226 = vunpack.c.l.b16 %v35
  %v227 = vunpack.c.h.b16 %v35
  %v228 = vunpack.c.l.b16 %v36
  %v229 = vunpack.c.h.b16 %v36
  %v230 = vunpack.c.l.b16 %v37
  %v231 = vunpack.c.h.b16 %v37
  %v232 = vunpack.c.l.b16 %v38
  %v233 = vunpack.c.h.b16 %v38
  %v234 = vunpack.c.l.b16 %v39
  %v235 = vunpack.c.h.b16 %v39
  %v236 = vunpack.c.l.b16 %v40
  %v237 = vunpack.c.h.b16 %v40
  %v238 = vunpack.c.l.b16 %v41
  %v239 = vunpack.c.h.b16 %v41
  %v240 = vunpack.c.l.b16 %v42
  %v241 = vunpack.c.h.b16 %v42
  %v242 = vunpack.c.l.b16 %v43
  %v243 = vunpack.c.h.b16 %v43
  %v244 = vunpack.c.l.b16 %v44
  %v245 = vunpack.c.h.b16 %v44
  %v246 = vunpack.c.l.b16 %v45
  %v247 = vunpack.c.h.b16 %v45
  %v248 = vunpack.c.l.b16 %v46
  %v249 = vunpack.c.h.b16 %v46
  %v250 = vunpack.c.l.b16 %v47
  %v251 = vunpack.c.h.b16 %v47
  %v252 = vunpack.c.l.b16 %v48
  %v253 = vunpack.c.h.b16 %v48
  %v254 = vunpack.c.l.b16 %v49
  %v255 = vunpack.c.h.b16 %v49
  %v256 = vunpack.c.l.b16 %v50
  %v257 = vunpack.c.h.b16 %v50
  %v258 = vunpack.c.l.b16 %v51
  %v259 = vunpack.c.h.b16 %v51
  %v260 = vunpack.c.l.b16 %v52
  %v261 = vunpack.c.h.b16 %v52
  %v262 = vunpack.c.l.b16 %v53
  %v263 = vunpack.c.h.b16 %v53
  %v264 = vunpack.c.l.b16 %v54
  %v265 = vunpack.c.h.b16 %v54
  %v266 = vunpack.c.l.b16 %v55
  %v267 = vunpack.c.h.b16 %v55
  %v268 = vunpack.c.l.b16 %v56
  %v269 = vunpack.c.h.b16 %v56
  %v270 = vunpack.c.l.b16 %v57
  %v271 = vunpack.c.h.b16 %v57
  %v272 = vunpack.c.l.b16 %v58
  %v273 = vunpack.c.h.b16 %v58
  %v274 = vunpack.c.l.b16 %v59
  %v275 = vunpack.c.h.b16 %v59
  %v276 = vunpack.c.l.b16 %v60
  %v277 = vunpack.c.h.b16 %v60
  %v278 = vunpack.c.l.b16 %v61
  %v279 = vunpack.c.h.b16 %v61
  %v280 = vunpack.c.l.b16 %v62
  %v281 = vunpack.c.h.b16 %v62
  %v282 = vunpack.c.l.b16 %v63
  %v283 = vunpack.c.h.b16 %v63
  %v284 = vunpack.c.l.b16 %v64
  %v285 = vunpack.c.h.b16 %v64
  %v286 = vpack.c.b16 %v190, %v186
  %v287 = vpack.c.b16 %v191, %v187
  %v288 = vpack.c.b16 %v192, %v188
  %v289 = vpack.c.b16 %v193, %v189
  %v290 = vpack.c.b16 %v198, %v194
  %v291 = vpack.c.b16 %v199, %v195
  %v292 = vpack.c.b16 %v200, %v196
  %v293 = vpack.c.b16 %v201, %v197
  %v294 = vpack.c.b16 %v206, %v202
  %v295 = vpack.c.b16 %v207, %v203
  %v296 = vpack.c.b16 %v208, %v204
  %v297 = vpack.c.b16 %v209, %v205
  %v298 = vpack.c.b16 %v214, %v210
  %v299 = vpack.c.b16 %v215, %v211
  %v300 = vpack.c.b16 %v216, %v212
  %v301 = vpack.c.b16 %v217, %v213
  %v302 = vpack.c.b16 %v222, %v218
  %v303 = vpack.c.b16 %v223, %v219
  %v304 = vpack.c.b16 %v224, %v220
  %v305 = vpack.c.b16 %v225, %v221
  %v306 = vpack.c.b16 %v230, %v226
  %v307 = vpack.c.b16 %v231, %v227
  %v308 = vpack.c.b16 %v232, %v228
  %v309 = vpack.c.b16 %v233, %v229
  %v310 = vpack.c.b16 %v238, %v234
  %v311 = vpack.c.b16 %v239, %v235
  %v312 = vpack.c.b16 %v240, %v236
  %v313 = vpack.c.b16 %v241, %v237
  %v314 = vpack.c.b16 %v246, %v242
  %v315 = vpack.c.b16 %v247, %v243
  %v316 = vpack.c.b16 %v248, %v244
  %v317 = vpack.c.b16 %v249, %v245
  %v318 = vpack.c.b16 %v254, %v250
  %v319 = vpack.c.b16 %v255, %v251
  %v320 = vpack.c.b16 %v256, %v252
  %v321 = vpack.c.b16 %v257, %v253
  %v322 = vpack.c.b16 %v262, %v258
  %v323 = vpack.c.b16 %v263, %v259
  %v324 = vpack.c.b16 %v264, %v260
  %v325 = vpack.c.b16 %v265, %v261
  %v326 = vpack.c.b16 %v270, %v266
  %v327 = vpack.c.b16 %v271, %v267
  %v328 = vpack.c.b16 %v272, %v268
  %v329 = vpack.c.b16 %v273, %v269
  %v330 = vpack.c.b16 %v278, %v274
  %v331 = vpack.c.b16 %v279, %v275
  %v332 = vpack.c.b16 %v280, %v276
  %v333 = vpack.c.b16 %v281, %v277
  %v334 = vpack.c.b16 %v282, %v282
  %v335 = vpack.c.b16 %v283, %v283
  %v336 = vpack.c.b16 %v284, %v284
  %v337 = vpack.c.b16 %v285, %v285
  %v454 = vunpack.c.l.b16 %v65
  %v455 = vunpack.c.l.b16 %v66
  %v456 = vunpack.c.l.b16 %v67
  %v457 = vunpack.c.l.b16 %v68
  %v458 = vunpack.c.l.b16 %v69
  %v459 = vunpack.c.l.b16 %v70
  %v460 = vunpack.c.l.b16 %v71
  %v461 = vunpack.c.l.b16 %v72
  %v462 = vunpack.c.l.b16 %v73
  %v463 = vunpack.c.l.b16 %v74
  %v464 = vunpack.c.l.b16 %v75
  %v465 = vunpack.c.l.b16 %v76
  %v466 = vunpack.c.l.b16 %v77
  %v467 = vunpack.c.l.b16 %v78
  %v468 = vunpack.c.l.b16 %v79
  %v469 = vunpack.c.l.b16 %v80
  %v470 = vunpack.c.l.b16 %v81
  %v471 = vunpack.c.l.b16 %v82
  %v472 = vunpack.c.l.b16 %v83
  %v473 = vunpack.c.l.b16 %v84
  %v474 = vunpack.c.l.b16 %v85
  %v475 = vunpack.c.l.b16 %v86
  %v476 = vunpack.c.l.b16 %v87
  %v477 = vunpack.c.l.b16 %v88
  %v478 = vunpack.c.l.b16 %v89
  %v479 = vunpack.c.l.b16 %v90
  %v480 = vunpack.c.l.b16 %v91
  %v481 = vunpack.c.l.b16 %v92
  %v482 = vunpack.c.l.b16 %v93
  %v483 = vunpack.c.l.b16 %v94
  %v484 = vunpack.c.l.b16 %v95
  %v485 = vunpack.c.l.b16 %v96
  %v486 = vunpack.c.l.b16 %v97
  %v487 = vunpack.c.l.b16 %v98
  %v488 = vunpack.c.l.b16 %v99
  %v489 = vunpack.c.l.b16 %v100
  %v490 = vunpack.c.l.b16 %v101
  %v491 = vunpack.c.l.b16 %v102
  %v492 = vunpack.c.l.b16 %v103
  %v493 = vunpack.c.l.b16 %v104
  %v494 = vunpack.c.l.b16 %v105
  %v495 = vunpack.c.l.b16 %v106
  %v496 = vunpack.c.l.b16 %v107
  %v497 = vunpack.c.l.b16 %v108
  %v498 = vunpack.c.l.b16 %v109
  %v499 = vunpack.c.l.b16 %v110
  %v500 = vunpack.c.l.b16 %v111
  %v501 = vunpack.c.l.b16 %v112
  %v502 = vunpack.c.l.b16 %v113
  %v503 = vunpack.c.l.b16 %v114
  %v504 = vunpack.c.l.b16 %v115
  %v505 = vunpack.c.l.b16 %v116
  %v506 = vunpack.c.l.b16 %v117
  %v507 = vunpack.c.l.b16 %v118
  %v508 = vunpack.c.l.b16 %v119
  %v509 = vunpack.c.l.b16 %v120
  %v510 = vunpack.c.l.b16 %v121
  %v511 = vunpack.c.l.b16 %v122
  %v512 = vunpack.c.l.b16 %v123
  %v513 = vunpack.c.l.b16 %v124
  %v514 = vunpack.c.l.b16 %v125
  %v515 = vunpack.c.l.b16 %v126
  %v516 = vunpack.c.l.b16 %v127
  %v517 = vunpack.c.l.b16 %v128
  %v518 = vpack.c.b16 %v455, %v454
  %v519 = vpack.c.b16 %v457, %v456
  %v520 = vpack.c.b16 %v459, %v458
  %v521 = vpack.c.b16 %v461, %v460
  %v522 = vpack.c.b16 %v463, %v462
  %v523 = vpack.c.b16 %v465, %v464
  %v524 = vpack.c.b16 %v467, %v466
  %v525 = vpack.c.b16 %v469, %v468
  %v526 = vpack.c.b16 %v471, %v470
  %v527 = vpack.c.b16 %v473, %v472
  %v528 = vpack.c.b16 %v475, %v474
  %v529 = vpack.c.b16 %v477, %v476
  %v530 = vpack.c.b16 %v479, %v478
  %v531 = vpack.c.b16 %v481, %v480
  %v532 = vpack.c.b16 %v483, %v482
  %v533 = vpack.c.b16 %v485, %v484
  %v534 = vpack.c.b16 %v487, %v486
  %v535 = vpack.c.b16 %v489, %v488
  %v536 = vpack.c.b16 %v491, %v490
  %v537 = vpack.c.b16 %v493, %v492
  %v538 = vpack.c.b16 %v495, %v494
  %v539 = vpack.c.b16 %v497, %v496
  %v540 = vpack.c.b16 %v499, %v498
  %v541 = vpack.c.b16 %v501, %v500
  %v542 = vpack.c.b16 %v503, %v502
  %v543 = vpack.c.b16 %v505, %v504
  %v544 = vpack.c.b16 %v507, %v506
  %v545 = vpack.c.b16 %v509, %v508
  %v546 = vpack.c.b16 %v511, %v510
  %v547 = vpack.c.b16 %v513, %v512
  %v548 = vpack.c.b16 %v515, %v514
  %v549 = vpack.c.b16 %v517, %v516
  %582 = vmatprep.subr.bf16.mxu0 0
  %583 = vmatpush1.bf16.msra.mxu0 %v518
  %584 = vmatprep.subr.bf16.mxu0 0
  %585 = vmatpush1.bf16.msra.mxu0 %v519
  %586 = vmatprep.subr.bf16.mxu0 0
  %587 = vmatpush1.bf16.msra.mxu0 %v520
  %588 = vmatprep.subr.bf16.mxu0 0
  %589 = vmatpush1.bf16.msra.mxu0 %v521
  %590 = vmatprep.subr.bf16.mxu0 0
  %591 = vmatpush1.bf16.msra.mxu0 %v522
  %592 = vmatprep.subr.bf16.mxu0 0
  %593 = vmatpush1.bf16.msra.mxu0 %v523
  %594 = vmatprep.subr.bf16.mxu0 0
  %595 = vmatpush1.bf16.msra.mxu0 %v524
  %596 = vmatprep.subr.bf16.mxu0 0
  %597 = vmatpush1.bf16.msra.mxu0 %v525
  %598 = vmatprep.subr.bf16.mxu0 0
  %599 = vmatpush1.bf16.msra.mxu0 %v526
  %600 = vmatprep.subr.bf16.mxu0 0
  %601 = vmatpush1.bf16.msra.mxu0 %v527
  %602 = vmatprep.subr.bf16.mxu0 0
  %603 = vmatpush1.bf16.msra.mxu0 %v528
  %604 = vmatprep.subr.bf16.mxu0 0
  %605 = vmatpush1.bf16.msra.mxu0 %v529
  %606 = vmatprep.subr.bf16.mxu0 0
  %607 = vmatpush1.bf16.msra.mxu0 %v530
  %608 = vmatprep.subr.bf16.mxu0 0
  %609 = vmatpush1.bf16.msra.mxu0 %v531
  %610 = vmatprep.subr.bf16.mxu0 0
  %611 = vmatpush1.bf16.msra.mxu0 %v532
  %612 = vmatprep.subr.bf16.mxu0 0
  %613 = vmatpush1.bf16.msra.mxu0 %v533
  %614 = vmatprep.mubr.bf16.mxu0 %v287
  %615 = vmatmul.mubr.bf16.gmra.mrb[0].mxu0 %v286
  %v616 = vpop.f32.mrb[0].mxu0
  %v617 = vadd.f32 %v134, %v616
  %v618 = vpop.f32.mrb[0].mxu0
  %v619 = vpop.f32.mrb[0].mxu0
  %v620 = vadd.f32 %v134, %v619
  %v621 = vpop.f32.mrb[0].mxu0
  %622 = vmatprep.mubr.bf16.mxu0 %v291
  %623 = vmatmul.mubr.bf16.gmra.mrb[0].mxu0 %v290
  %v624 = vpop.f32.mrb[0].mxu0
  %v625 = vadd.f32 %v134, %v624
  %v626 = vpop.f32.mrb[0].mxu0
  %v627 = vpop.f32.mrb[0].mxu0
  %v628 = vadd.f32 %v134, %v627
  %v629 = vpop.f32.mrb[0].mxu0
  %630 = vmatprep.mubr.bf16.mxu0 %v295
  %631 = vmatmul.mubr.bf16.gmra.mrb[0].mxu0 %v294
  %v632 = vpop.f32.mrb[0].mxu0
  %v633 = vadd.f32 %v134, %v632
  %v634 = vpop.f32.mrb[0].mxu0
  %v635 = vpop.f32.mrb[0].mxu0
  %v636 = vadd.f32 %v134, %v635
  %v637 = vpop.f32.mrb[0].mxu0
  %638 = vmatprep.mubr.bf16.mxu0 %v299
  %639 = vmatmul.mubr.bf16.gmra.mrb[0].mxu0 %v298
  %v640 = vpop.f32.mrb[0].mxu0
  %v641 = vadd.f32 %v134, %v640
  %v642 = vpop.f32.mrb[0].mxu0
  %v643 = vpop.f32.mrb[0].mxu0
  %v644 = vadd.f32 %v134, %v643
  %v645 = vpop.f32.mrb[0].mxu0
  %646 = vmatprep.mubr.bf16.mxu0 %v303
  %647 = vmatmul.mubr.bf16.gmra.mrb[0].mxu0 %v302
  %v648 = vpop.f32.mrb[0].mxu0
  %v649 = vadd.f32 %v134, %v648
  %v650 = vpop.f32.mrb[0].mxu0
  %v651 = vpop.f32.mrb[0].mxu0
  %v652 = vadd.f32 %v134, %v651
  %v653 = vpop.f32.mrb[0].mxu0
  %654 = vmatprep.mubr.bf16.mxu0 %v307
  %655 = vmatmul.mubr.bf16.gmra.mrb[0].mxu0 %v306
  %v656 = vpop.f32.mrb[0].mxu0
  %v657 = vadd.f32 %v134, %v656
  %v658 = vpop.f32.mrb[0].mxu0
  %v659 = vpop.f32.mrb[0].mxu0
  %v660 = vadd.f32 %v134, %v659
  %v661 = vpop.f32.mrb[0].mxu0
  %662 = vmatprep.mubr.bf16.mxu0 %v311
  %663 = vmatmul.mubr.bf16.gmra.mrb[0].mxu0 %v310
  %v664 = vpop.f32.mrb[0].mxu0
  %v665 = vadd.f32 %v134, %v664
  %v666 = vpop.f32.mrb[0].mxu0
  %v667 = vpop.f32.mrb[0].mxu0
  %v668 = vadd.f32 %v134, %v667
  %v669 = vpop.f32.mrb[0].mxu0
  %670 = vmatprep.mubr.bf16.mxu0 %v315
  %671 = vmatmul.mubr.bf16.gmra.mrb[0].mxu0 %v314
  %v672 = vpop.f32.mrb[0].mxu0
  %v673 = vadd.f32 %v134, %v672
  %v674 = vpop.f32.mrb[0].mxu0
  %v675 = vpop.f32.mrb[0].mxu0
  %v676 = vadd.f32 %v134, %v675
  %v677 = vpop.f32.mrb[0].mxu0
  %678 = vmatprep.mubr.bf16.mxu0 %v319
  %679 = vmatmul.mubr.bf16.gmra.mrb[0].mxu0 %v318
  %v680 = vpop.f32.mrb[0].mxu0
  %v681 = vadd.f32 %v134, %v680
  %v682 = vpop.f32.mrb[0].mxu0
  %v683 = vpop.f32.mrb[0].mxu0
  %v684 = vadd.f32 %v134, %v683
  %v685 = vpop.f32.mrb[0].mxu0
  %686 = vmatprep.mubr.bf16.mxu0 %v323
  %687 = vmatmul.mubr.bf16.gmra.mrb[0].mxu0 %v322
  %v688 = vpop.f32.mrb[0].mxu0
  %v689 = vadd.f32 %v134, %v688
  %v690 = vpop.f32.mrb[0].mxu0
  %v691 = vpop.f32.mrb[0].mxu0
  %v692 = vadd.f32 %v134, %v691
  %v693 = vpop.f32.mrb[0].mxu0
  %694 = vmatprep.mubr.bf16.mxu0 %v327
  %695 = vmatmul.mubr.bf16.gmra.mrb[0].mxu0 %v326
  %v696 = vpop.f32.mrb[0].mxu0
  %v697 = vadd.f32 %v134, %v696
  %v698 = vpop.f32.mrb[0].mxu0
  %v699 = vpop.f32.mrb[0].mxu0
  %v700 = vadd.f32 %v134, %v699
  %v701 = vpop.f32.mrb[0].mxu0
  %702 = vmatprep.mubr.bf16.mxu0 %v331
  %703 = vmatmul.mubr.bf16.gmra.mrb[0].mxu0 %v330
  %v704 = vpop.f32.mrb[0].mxu0
  %v705 = vadd.f32 %v134, %v704
  %v706 = vpop.f32.mrb[0].mxu0
  %v707 = vpop.f32.mrb[0].mxu0
  %v708 = vadd.f32 %v134, %v707
  %v709 = vpop.f32.mrb[0].mxu0
  %710 = vmatprep.mubr.bf16.mxu0 %v335
  %711 = vmatmul.mubr.bf16.gmra.mrb[0].mxu0 %v334
  %v712 = vpop.f32.mrb[0].mxu0
  %v713 = vadd.f32 %v134, %v712
  %v714 = vpop.f32.mrb[0].mxu0
  %v715 = vpop.f32.mrb[0].mxu0
  %v716 = vpop.f32.mrb[0].mxu0
  %717 = vdwg.mxu0
  %718 = vmatprep.subr.bf16.mxu0 0
  %719 = vmatpush1.bf16.msra.mxu0 %v534
  %720 = vmatprep.subr.bf16.mxu0 0
  %721 = vmatpush1.bf16.msra.mxu0 %v535
  %722 = vmatprep.subr.bf16.mxu0 0
  %723 = vmatpush1.bf16.msra.mxu0 %v536
  %724 = vmatprep.subr.bf16.mxu0 0
  %725 = vmatpush1.bf16.msra.mxu0 %v537
  %726 = vmatprep.subr.bf16.mxu0 0
  %727 = vmatpush1.bf16.msra.mxu0 %v538
  %728 = vmatprep.subr.bf16.mxu0 0
  %729 = vmatpush1.bf16.msra.mxu0 %v539
  %730 = vmatprep.subr.bf16.mxu0 0
  %731 = vmatpush1.bf16.msra.mxu0 %v540
  %732 = vmatprep.subr.bf16.mxu0 0
  %733 = vmatpush1.bf16.msra.mxu0 %v541
  %734 = vmatprep.subr.bf16.mxu0 0
  %735 = vmatpush1.bf16.msra.mxu0 %v542
  %736 = vmatprep.subr.bf16.mxu0 0
  %737 = vmatpush1.bf16.msra.mxu0 %v543
  %738 = vmatprep.subr.bf16.mxu0 0
  %739 = vmatpush1.bf16.msra.mxu0 %v544
  %740 = vmatprep.subr.bf16.mxu0 0
  %741 = vmatpush1.bf16.msra.mxu0 %v545
  %742 = vmatprep.subr.bf16.mxu0 0
  %743 = vmatpush1.bf16.msra.mxu0 %v546
  %744 = vmatprep.subr.bf16.mxu0 0
  %745 = vmatpush1.bf16.msra.mxu0 %v547
  %746 = vmatprep.subr.bf16.mxu0 0
  %747 = vmatpush1.bf16.msra.mxu0 %v548
  %748 = vmatprep.subr.bf16.mxu0 0
  %749 = vmatpush1.bf16.msra.mxu0 %v549
  %750 = vmatprep.mubr.bf16.mxu0 %v289
  %751 = vmatmul.mubr.bf16.gmra.mrb[0].mxu0 %v288
  %v752 = vpop.f32.mrb[0].mxu0
  %v753 = vadd.f32 %v617, %v752
  %v754 = vpop.f32.mrb[0].mxu0
  %v755 = vpop.f32.mrb[0].mxu0
  %v756 = vadd.f32 %v620, %v755
  %v757 = vpop.f32.mrb[0].mxu0
  %758 = vmatprep.mubr.bf16.mxu0 %v293
  %759 = vmatmul.mubr.bf16.gmra.mrb[0].mxu0 %v292
  %v760 = vpop.f32.mrb[0].mxu0
  %v761 = vadd.f32 %v625, %v760
  %v762 = vpop.f32.mrb[0].mxu0
  %v763 = vpop.f32.mrb[0].mxu0
  %v764 = vadd.f32 %v628, %v763
  %v765 = vpop.f32.mrb[0].mxu0
  %766 = vmatprep.mubr.bf16.mxu0 %v297
  %767 = vmatmul.mubr.bf16.gmra.mrb[0].mxu0 %v296
  %v768 = vpop.f32.mrb[0].mxu0
  %v769 = vadd.f32 %v633, %v768
  %v770 = vpop.f32.mrb[0].mxu0
  %v771 = vpop.f32.mrb[0].mxu0
  %v772 = vadd.f32 %v636, %v771
  %v773 = vpop.f32.mrb[0].mxu0
  %774 = vmatprep.mubr.bf16.mxu0 %v301
  %775 = vmatmul.mubr.bf16.gmra.mrb[0].mxu0 %v300
  %v776 = vpop.f32.mrb[0].mxu0
  %v777 = vadd.f32 %v641, %v776
  %v778 = vpop.f32.mrb[0].mxu0
  %v779 = vpop.f32.mrb[0].mxu0
  %v780 = vadd.f32 %v644, %v779
  %v781 = vpop.f32.mrb[0].mxu0
  %782 = vmatprep.mubr.bf16.mxu0 %v305
  %783 = vmatmul.mubr.bf16.gmra.mrb[0].mxu0 %v304
  %v784 = vpop.f32.mrb[0].mxu0
  %v785 = vadd.f32 %v649, %v784
  %v786 = vpop.f32.mrb[0].mxu0
  %v787 = vpop.f32.mrb[0].mxu0
  %v788 = vadd.f32 %v652, %v787
  %v789 = vpop.f32.mrb[0].mxu0
  %790 = vmatprep.mubr.bf16.mxu0 %v309
  %791 = vmatmul.mubr.bf16.gmra.mrb[0].mxu0 %v308
  %v792 = vpop.f32.mrb[0].mxu0
  %v793 = vadd.f32 %v657, %v792
  %v794 = vpop.f32.mrb[0].mxu0
  %v795 = vpop.f32.mrb[0].mxu0
  %v796 = vadd.f32 %v660, %v795
  %v797 = vpop.f32.mrb[0].mxu0
  %798 = vmatprep.mubr.bf16.mxu0 %v313
  %799 = vmatmul.mubr.bf16.gmra.mrb[0].mxu0 %v312
  %v800 = vpop.f32.mrb[0].mxu0
  %v801 = vadd.f32 %v665, %v800
  %v802 = vpop.f32.mrb[0].mxu0
  %v803 = vpop.f32.mrb[0].mxu0
  %v804 = vadd.f32 %v668, %v803
  %v805 = vpop.f32.mrb[0].mxu0
  %806 = vmatprep.mubr.bf16.mxu0 %v317
  %807 = vmatmul.mubr.bf16.gmra.mrb[0].mxu0 %v316
  %v808 = vpop.f32.mrb[0].mxu0
  %v809 = vadd.f32 %v673, %v808
  %v810 = vpop.f32.mrb[0].mxu0
  %v811 = vpop.f32.mrb[0].mxu0
  %v812 = vadd.f32 %v676, %v811
  %v813 = vpop.f32.mrb[0].mxu0
  %814 = vmatprep.mubr.bf16.mxu0 %v321
  %815 = vmatmul.mubr.bf16.gmra.mrb[0].mxu0 %v320
  %v816 = vpop.f32.mrb[0].mxu0
  %v817 = vadd.f32 %v681, %v816
  %v818 = vpop.f32.mrb[0].mxu0
  %v819 = vpop.f32.mrb[0].mxu0
  %v820 = vadd.f32 %v684, %v819
  %v821 = vpop.f32.mrb[0].mxu0
  %822 = vmatprep.mubr.bf16.mxu0 %v325
  %823 = vmatmul.mubr.bf16.gmra.mrb[0].mxu0 %v324
  %v824 = vpop.f32.mrb[0].mxu0
  %v825 = vadd.f32 %v689, %v824
  %v826 = vpop.f32.mrb[0].mxu0
  %v827 = vpop.f32.mrb[0].mxu0
  %v828 = vadd.f32 %v692, %v827
  %v829 = vpop.f32.mrb[0].mxu0
  %830 = vmatprep.mubr.bf16.mxu0 %v329
  %831 = vmatmul.mubr.bf16.gmra.mrb[0].mxu0 %v328
  %v832 = vpop.f32.mrb[0].mxu0
  %v833 = vadd.f32 %v697, %v832
  %v834 = vpop.f32.mrb[0].mxu0
  %v835 = vpop.f32.mrb[0].mxu0
  %v836 = vadd.f32 %v700, %v835
  %v837 = vpop.f32.mrb[0].mxu0
  %838 = vmatprep.mubr.bf16.mxu0 %v333
  %839 = vmatmul.mubr.bf16.gmra.mrb[0].mxu0 %v332
  %v840 = vpop.f32.mrb[0].mxu0
  %v841 = vadd.f32 %v705, %v840
  %v842 = vpop.f32.mrb[0].mxu0
  %v843 = vpop.f32.mrb[0].mxu0
  %v844 = vadd.f32 %v708, %v843
  %v845 = vpop.f32.mrb[0].mxu0
  %846 = vmatprep.mubr.bf16.mxu0 %v337
  %847 = vmatmul.mubr.bf16.gmra.mrb[0].mxu0 %v336
  %v848 = vpop.f32.mrb[0].mxu0
  %v849 = vadd.f32 %v713, %v848
  %v850 = vpop.f32.mrb[0].mxu0
  %v851 = vpop.f32.mrb[0].mxu0
  %v852 = vpop.f32.mrb[0].mxu0
  %853 = vdwg.mxu0
  %v854 = vmax.f32 %v753, 0.0
  %v855 = vmax.f32 %v756, 0.0
  %v856 = vmax.f32 %v761, 0.0
  %v857 = vmax.f32 %v764, 0.0
  %v858 = vmax.f32 %v769, 0.0
  %v859 = vmax.f32 %v772, 0.0
  %v860 = vmax.f32 %v777, 0.0
  %v861 = vmax.f32 %v780, 0.0
  %v862 = vmax.f32 %v785, 0.0
  %v863 = vmax.f32 %v788, 0.0
  %v864 = vmax.f32 %v793, 0.0
  %v865 = vmax.f32 %v796, 0.0
  %v866 = vmax.f32 %v801, 0.0
  %v867 = vmax.f32 %v804, 0.0
  %v868 = vmax.f32 %v809, 0.0
  %v869 = vmax.f32 %v812, 0.0
  %v870 = vmax.f32 %v817, 0.0
  %v871 = vmax.f32 %v820, 0.0
  %v872 = vmax.f32 %v825, 0.0
  %v873 = vmax.f32 %v828, 0.0
  %v874 = vmax.f32 %v833, 0.0
  %v875 = vmax.f32 %v836, 0.0
  %v876 = vmax.f32 %v841, 0.0
  %v877 = vmax.f32 %v844, 0.0
  %v878 = vmax.f32 %v849, 0.0
  %v879 = vpack.c.bf16 %v855, %v854
  %v880 = vpack.c.bf16 %v857, %v856
  %v881 = vpack.c.bf16 %v859, %v858
  %v882 = vpack.c.bf16 %v861, %v860
  %v883 = vpack.c.bf16 %v863, %v862
  %v884 = vpack.c.bf16 %v865, %v864
  %v885 = vpack.c.bf16 %v867, %v866
  %v886 = vpack.c.bf16 %v869, %v868
  %v887 = vpack.c.bf16 %v871, %v870
  %v888 = vpack.c.bf16 %v873, %v872
  %v889 = vpack.c.bf16 %v875, %v874
  %v890 = vpack.c.bf16 %v877, %v876
  %v891 = vpack.c.bf16 %v878, %v878
  %v905 = vunpack.c.l.b16 %v879
  %v906 = vunpack.c.h.b16 %v879
  %v907 = vunpack.c.l.b16 %v880
  %v908 = vunpack.c.h.b16 %v880
  %v909 = vunpack.c.l.b16 %v881
  %v910 = vunpack.c.h.b16 %v881
  %v911 = vunpack.c.l.b16 %v882
  %v912 = vunpack.c.h.b16 %v882
  %v913 = vunpack.c.l.b16 %v883
  %v914 = vunpack.c.h.b16 %v883
  %v915 = vunpack.c.l.b16 %v884
  %v916 = vunpack.c.h.b16 %v884
  %v917 = vunpack.c.l.b16 %v885
  %v918 = vunpack.c.h.b16 %v885
  %v919 = vunpack.c.l.b16 %v886
  %v920 = vunpack.c.h.b16 %v886
  %v921 = vunpack.c.l.b16 %v887
  %v922 = vunpack.c.h.b16 %v887
  %v923 = vunpack.c.l.b16 %v888
  %v924 = vunpack.c.h.b16 %v888
  %v925 = vunpack.c.l.b16 %v889
  %v926 = vunpack.c.h.b16 %v889
  %v927 = vunpack.c.l.b16 %v890
  %v928 = vunpack.c.h.b16 %v890
  %v929 = vunpack.c.l.b16 %v891
  %v930 = vpack.c.b16 %v905, %v905
  %v931 = vpack.c.b16 %v906, %v906
  %v932 = vpack.c.b16 %v907, %v907
  %v933 = vpack.c.b16 %v908, %v908
  %v934 = vpack.c.b16 %v909, %v909
  %v935 = vpack.c.b16 %v910, %v910
  %v936 = vpack.c.b16 %v911, %v911
  %v937 = vpack.c.b16 %v912, %v912
  %v938 = vpack.c.b16 %v913, %v913
  %v939 = vpack.c.b16 %v914, %v914
  %v940 = vpack.c.b16 %v915, %v915
  %v941 = vpack.c.b16 %v916, %v916
  %v942 = vpack.c.b16 %v917, %v917
  %v943 = vpack.c.b16 %v918, %v918
  %v944 = vpack.c.b16 %v919, %v919
  %v945 = vpack.c.b16 %v920, %v920
  %v946 = vpack.c.b16 %v921, %v921
  %v947 = vpack.c.b16 %v922, %v922
  %v948 = vpack.c.b16 %v923, %v923
  %v949 = vpack.c.b16 %v924, %v924
  %v950 = vpack.c.b16 %v925, %v925
  %v951 = vpack.c.b16 %v926, %v926
  %v952 = vpack.c.b16 %v927, %v927
  %v953 = vpack.c.b16 %v928, %v928
  %v954 = vpack.c.b16 %v929, %v929
  %980 = vst [vmem:[%s3] sm:$0xf] %v930
  %981 = vst [vmem:[%s3 + $0x4] sm:$0xf] %v931
  %982 = vst [vmem:[%s3 + $0x8] sm:$0xf] %v932
  %983 = vst [vmem:[%s3 + $0xc] sm:$0xf] %v933
  %984 = vst [vmem:[%s3 + $0x10] sm:$0xf] %v934
  %985 = vst [vmem:[%s3 + $0x14] sm:$0xf] %v935
  %986 = vst [vmem:[%s3 + $0x18] sm:$0xf] %v936
  %987 = vst [vmem:[%s3 + $0x1c] sm:$0xf] %v937
  %988 = vst [vmem:[%s3 + $0x20] sm:$0xf] %v938
  %989 = vst [vmem:[%s3 + $0x24] sm:$0xf] %v939
  %990 = vst [vmem:[%s3 + $0x28] sm:$0xf] %v940
  %991 = vst [vmem:[%s3 + $0x2c] sm:$0xf] %v941
  %992 = vst [vmem:[%s3 + $0x30] sm:$0xf] %v942
  %993 = vst [vmem:[%s3 + $0x34] sm:$0xf] %v943
  %994 = vst [vmem:[%s3 + $0x38] sm:$0xf] %v944
  %995 = vst [vmem:[%s3 + $0x3c] sm:$0xf] %v945
  %996 = vst [vmem:[%s3 + $0x40] sm:$0xf] %v946
  %997 = vst [vmem:[%s3 + $0x44] sm:$0xf] %v947
  %998 = vst [vmem:[%s3 + $0x48] sm:$0xf] %v948
  %999 = vst [vmem:[%s3 + $0x4c] sm:$0xf] %v949
  %1000 = vst [vmem:[%s3 + $0x50] sm:$0xf] %v950
  %1001 = vst [vmem:[%s3 + $0x54] sm:$0xf] %v951
  %1002 = vst [vmem:[%s3 + $0x58] sm:$0xf] %v952
  %1003 = vst [vmem:[%s3 + $0x5c] sm:$0xf] %v953
  %1004 = vst [vmem:[%s3 + $0x60] sm:$0xf] %v954
  // Predicated region
  $region14: #{_lambda_.5} parent=0 // pred_check
    _
  $region15: #{_lambda_.5} parent=0 // pred_check_branch
    %1006 = sbr.rel (0) target = $region17
  $region16: #{_lambda_.5} parent=0 // pred_region
    _
  $region17: #{_lambda_.5} parent=0 // pred_fallthru
    _
  // Predicated region
  $region18: #{_lambda_.5} parent=0 // pred_check
    _
  $region19: #{_lambda_.5} parent=0 // pred_check_branch
    %1008 = sbr.rel (0) target = $region21
  $region20: #{_lambda_.5} parent=0 // pred_region
    _
  $region21: #{_lambda_.5} parent=0 // pred_fallthru
    _

// kernel: _lambda_.6
$region0: #{_lambda_.6}
  #allocation0 [shape = 'u32[]', space=smem, size = 0x4, offset = 0x4, fixed_abs, tag = 'smem constant byte address 0x4 - core index']
  #allocation1 [shape = 'u32[144,128]{1,0:T(1,128)}', space=vmem, size = 0x12000, scoped, tag = 'internal scratch']
  %s0 = inlined_call_operand.vmem [shape: bf16[128,576], index: 0, kind: input, shape index: {}]
  %s1 = inlined_call_operand.vmem [shape: bf16[576,128], index: 1, kind: input, shape index: {}]
  %s2 = inlined_call_operand.vmem [shape: f32[1,128], index: 2, kind: input, shape index: {}]
  %s3 = inlined_call_operand.vmem [shape: bf16[128,128], index: 3, kind: output, shape index: {}]
  %s4 = sld [smem:[#allocation0]]
  $region22: #{_lambda_.6} parent=0
    _
  %s6 = ssub.s32 1, %s4
  %s7 = scalar_select 0, %s6, %s4
  // Predicated region
  $region2: #{_lambda_.6} parent=0 // pred_check
    _
  $region3: #{_lambda_.6} parent=0 // pred_check_branch
    %9 = sbr.rel (0) target = $region5
  $region4: #{_lambda_.6} parent=0 // pred_region
    _
  $region5: #{_lambda_.6} parent=0 // pred_fallthru
    _
  // Predicated region
  $region6: #{_lambda_.6} parent=0 // pred_check
    _
  $region7: #{_lambda_.6} parent=0 // pred_check_branch
    %11 = sbr.rel (0) target = $region9
  $region8: #{_lambda_.6} parent=0 // pred_region
    _
  $region9: #{_lambda_.6} parent=0 // pred_fallthru
    _
  // Predicated region
  $region10: #{_lambda_.6} parent=0 // pred_check
    _
  $region11: #{_lambda_.6} parent=0 // pred_check_branch
    %13 = sbr.rel (0) target = $region13
  $region12: #{_lambda_.6} parent=0 // pred_region
    _
  $region13: #{_lambda_.6} parent=0 // pred_fallthru
    _
  %v15 = vld [vmem:[%s0] sm:$0xff]
  %v16 = vld [vmem:[%s0 + $0x8] sm:$0xff]
  %v17 = vld [vmem:[%s0 + $0x10] sm:$0xf]
  %v18 = vld [vmem:[%s0 + $0x14] sm:$0xff]
  %v19 = vld [vmem:[%s0 + $0x1c] sm:$0xff]
  %v20 = vld [vmem:[%s0 + $0x24] sm:$0xf]
  %v21 = vld [vmem:[%s0 + $0x28] sm:$0xff]
  %v22 = vld [vmem:[%s0 + $0x30] sm:$0xff]
  %v23 = vld [vmem:[%s0 + $0x38] sm:$0xf]
  %v24 = vld [vmem:[%s0 + $0x3c] sm:$0xff]
  %v25 = vld [vmem:[%s0 + $0x44] sm:$0xff]
  %v26 = vld [vmem:[%s0 + $0x4c] sm:$0xf]
  %v27 = vld [vmem:[%s0 + $0x50] sm:$0xff]
  %v28 = vld [vmem:[%s0 + $0x58] sm:$0xff]
  %v29 = vld [vmem:[%s0 + $0x60] sm:$0xf]
  %v30 = vld [vmem:[%s0 + $0x64] sm:$0xff]
  %v31 = vld [vmem:[%s0 + $0x6c] sm:$0xff]
  %v32 = vld [vmem:[%s0 + $0x74] sm:$0xf]
  %v33 = vld [vmem:[%s0 + $0x78] sm:$0xff]
  %v34 = vld [vmem:[%s0 + $0x80] sm:$0xff]
  %v35 = vld [vmem:[%s0 + $0x88] sm:$0xf]
  %v36 = vld [vmem:[%s0 + $0x8c] sm:$0xff]
  %v37 = vld [vmem:[%s0 + $0x94] sm:$0xff]
  %v38 = vld [vmem:[%s0 + $0x9c] sm:$0xf]
  %v39 = vld [vmem:[%s0 + $0xa0] sm:$0xff]
  %v40 = vld [vmem:[%s0 + $0xa8] sm:$0xff]
  %v41 = vld [vmem:[%s0 + $0xb0] sm:$0xf]
  %v42 = vld [vmem:[%s0 + $0xb4] sm:$0xff]
  %v43 = vld [vmem:[%s0 + $0xbc] sm:$0xff]
  %v44 = vld [vmem:[%s0 + $0xc4] sm:$0xf]
  %v45 = vld [vmem:[%s0 + $0xc8] sm:$0xff]
  %v46 = vld [vmem:[%s0 + $0xd0] sm:$0xff]
  %v47 = vld [vmem:[%s0 + $0xd8] sm:$0xf]
  %v48 = vld [vmem:[%s0 + $0xdc] sm:$0xff]
  %v49 = vld [vmem:[%s0 + $0xe4] sm:$0xff]
  %v50 = vld [vmem:[%s0 + $0xec] sm:$0xf]
  %v51 = vld [vmem:[%s0 + $0xf0] sm:$0xff]
  %v52 = vld [vmem:[%s0 + $0xf8] sm:$0xff]
  %v53 = vld [vmem:[%s0 + $0x100] sm:$0xf]
  %v54 = vld [vmem:[%s0 + $0x104] sm:$0xff]
  %v55 = vld [vmem:[%s0 + $0x10c] sm:$0xff]
  %v56 = vld [vmem:[%s0 + $0x114] sm:$0xf]
  %v57 = vld [vmem:[%s0 + $0x118] sm:$0xff]
  %v58 = vld [vmem:[%s0 + $0x120] sm:$0xff]
  %v59 = vld [vmem:[%s0 + $0x128] sm:$0xf]
  %v60 = vld [vmem:[%s0 + $0x12c] sm:$0xff]
  %v61 = vld [vmem:[%s0 + $0x134] sm:$0xff]
  %v62 = vld [vmem:[%s0 + $0x13c] sm:$0xf]
  %v63 = vld [vmem:[%s1] sm:$0xf]
  %v64 = vld [vmem:[%s1 + $0x4] sm:$0xf]
  %v65 = vld [vmem:[%s1 + $0x8] sm:$0xf]
  %v66 = vld [vmem:[%s1 + $0xc] sm:$0xf]
  %v67 = vld [vmem:[%s1 + $0x10] sm:$0xf]
  %v68 = vld [vmem:[%s1 + $0x14] sm:$0xf]
  %v69 = vld [vmem:[%s1 + $0x18] sm:$0xf]
  %v70 = vld [vmem:[%s1 + $0x1c] sm:$0xf]
  %v71 = vld [vmem:[%s1 + $0x20] sm:$0xf]
  %v72 = vld [vmem:[%s1 + $0x24] sm:$0xf]
  %v73 = vld [vmem:[%s1 + $0x28] sm:$0xf]
  %v74 = vld [vmem:[%s1 + $0x2c] sm:$0xf]
  %v75 = vld [vmem:[%s1 + $0x30] sm:$0xf]
  %v76 = vld [vmem:[%s1 + $0x34] sm:$0xf]
  %v77 = vld [vmem:[%s1 + $0x38] sm:$0xf]
  %v78 = vld [vmem:[%s1 + $0x3c] sm:$0xf]
  %v79 = vld [vmem:[%s1 + $0x40] sm:$0xf]
  %v80 = vld [vmem:[%s1 + $0x44] sm:$0xf]
  %v81 = vld [vmem:[%s1 + $0x48] sm:$0xf]
  %v82 = vld [vmem:[%s1 + $0x4c] sm:$0xf]
  %v83 = vld [vmem:[%s1 + $0x50] sm:$0xf]
  %v84 = vld [vmem:[%s1 + $0x54] sm:$0xf]
  %v85 = vld [vmem:[%s1 + $0x58] sm:$0xf]
  %v86 = vld [vmem:[%s1 + $0x5c] sm:$0xf]
  %v87 = vld [vmem:[%s1 + $0x60] sm:$0xf]
  %v88 = vld [vmem:[%s1 + $0x64] sm:$0xf]
  %v89 = vld [vmem:[%s1 + $0x68] sm:$0xf]
  %v90 = vld [vmem:[%s1 + $0x6c] sm:$0xf]
  %v91 = vld [vmem:[%s1 + $0x70] sm:$0xf]
  %v92 = vld [vmem:[%s1 + $0x74] sm:$0xf]
  %v93 = vld [vmem:[%s1 + $0x78] sm:$0xf]
  %v94 = vld [vmem:[%s1 + $0x7c] sm:$0xf]
  %v95 = vld [vmem:[%s1 + $0x80] sm:$0xf]
  %v96 = vld [vmem:[%s1 + $0x84] sm:$0xf]
  %v97 = vld [vmem:[%s1 + $0x88] sm:$0xf]
  %v98 = vld [vmem:[%s1 + $0x8c] sm:$0xf]
  %v99 = vld [vmem:[%s1 + $0x90] sm:$0xf]
  %v100 = vld [vmem:[%s1 + $0x94] sm:$0xf]
  %v101 = vld [vmem:[%s1 + $0x98] sm:$0xf]
  %v102 = vld [vmem:[%s1 + $0x9c] sm:$0xf]
  %v103 = vld [vmem:[%s1 + $0xa0] sm:$0xf]
  %v104 = vld [vmem:[%s1 + $0xa4] sm:$0xf]
  %v105 = vld [vmem:[%s1 + $0xa8] sm:$0xf]
  %v106 = vld [vmem:[%s1 + $0xac] sm:$0xf]
  %v107 = vld [vmem:[%s1 + $0xb0] sm:$0xf]
  %v108 = vld [vmem:[%s1 + $0xb4] sm:$0xf]
  %v109 = vld [vmem:[%s1 + $0xb8] sm:$0xf]
  %v110 = vld [vmem:[%s1 + $0xbc] sm:$0xf]
  %v111 = vld [vmem:[%s1 + $0xc0] sm:$0xf]
  %v112 = vld [vmem:[%s1 + $0xc4] sm:$0xf]
  %v113 = vld [vmem:[%s1 + $0xc8] sm:$0xf]
  %v114 = vld [vmem:[%s1 + $0xcc] sm:$0xf]
  %v115 = vld [vmem:[%s1 + $0xd0] sm:$0xf]
  %v116 = vld [vmem:[%s1 + $0xd4] sm:$0xf]
  %v117 = vld [vmem:[%s1 + $0xd8] sm:$0xf]
  %v118 = vld [vmem:[%s1 + $0xdc] sm:$0xf]
  %v119 = vld [vmem:[%s1 + $0xe0] sm:$0xf]
  %v120 = vld [vmem:[%s1 + $0xe4] sm:$0xf]
  %v121 = vld [vmem:[%s1 + $0xe8] sm:$0xf]
  %v122 = vld [vmem:[%s1 + $0xec] sm:$0xf]
  %v123 = vld [vmem:[%s1 + $0xf0] sm:$0xf]
  %v124 = vld [vmem:[%s1 + $0xf4] sm:$0xf]
  %v125 = vld [vmem:[%s1 + $0xf8] sm:$0xf]
  %v126 = vld [vmem:[%s1 + $0xfc] sm:$0xf]
  %v127 = vld [vmem:[%s1 + $0x100] sm:$0xf]
  %v128 = vld [vmem:[%s1 + $0x104] sm:$0xf]
  %v129 = vld [vmem:[%s1 + $0x108] sm:$0xf]
  %v130 = vld [vmem:[%s1 + $0x10c] sm:$0xf]
  %v131 = vld [vmem:[%s1 + $0x110] sm:$0xf]
  %v132 = vld [vmem:[%s1 + $0x114] sm:$0xf]
  %v133 = vld [vmem:[%s1 + $0x118] sm:$0xf]
  %v134 = vld [vmem:[%s1 + $0x11c] sm:$0xf]
  %v135 = vld [vmem:[%s2] sm:$0x1]
  %v137 = vlaneseq
  %v138 = vshrl.u32 %v137, 7
  %v139 = vsub.s32 0, %v138
  %v140 = vrot.slane %v135, %v139
  %v190 = vunpack.c.l.b16 %v15
  %v191 = vunpack.c.h.b16 %v15
  %v192 = vunpack.c.l.b16 %v16
  %v193 = vunpack.c.h.b16 %v16
  %v194 = vunpack.c.l.b16 %v17
  %v195 = vunpack.c.l.b16 %v18
  %v196 = vunpack.c.h.b16 %v18
  %v197 = vunpack.c.l.b16 %v19
  %v198 = vunpack.c.h.b16 %v19
  %v199 = vunpack.c.l.b16 %v20
  %v200 = vunpack.c.l.b16 %v21
  %v201 = vunpack.c.h.b16 %v21
  %v202 = vunpack.c.l.b16 %v22
  %v203 = vunpack.c.h.b16 %v22
  %v204 = vunpack.c.l.b16 %v23
  %v205 = vunpack.c.l.b16 %v24
  %v206 = vunpack.c.h.b16 %v24
  %v207 = vunpack.c.l.b16 %v25
  %v208 = vunpack.c.h.b16 %v25
  %v209 = vunpack.c.l.b16 %v26
  %v210 = vunpack.c.l.b16 %v27
  %v211 = vunpack.c.h.b16 %v27
  %v212 = vunpack.c.l.b16 %v28
  %v213 = vunpack.c.h.b16 %v28
  %v214 = vunpack.c.l.b16 %v29
  %v215 = vunpack.c.l.b16 %v30
  %v216 = vunpack.c.h.b16 %v30
  %v217 = vunpack.c.l.b16 %v31
  %v218 = vunpack.c.h.b16 %v31
  %v219 = vunpack.c.l.b16 %v32
  %v220 = vunpack.c.l.b16 %v33
  %v221 = vunpack.c.h.b16 %v33
  %v222 = vunpack.c.l.b16 %v34
  %v223 = vunpack.c.h.b16 %v34
  %v224 = vunpack.c.l.b16 %v35
  %v225 = vunpack.c.l.b16 %v36
  %v226 = vunpack.c.h.b16 %v36
  %v227 = vunpack.c.l.b16 %v37
  %v228 = vunpack.c.h.b16 %v37
  %v229 = vunpack.c.l.b16 %v38
  %v230 = vunpack.c.l.b16 %v39
  %v231 = vunpack.c.h.b16 %v39
  %v232 = vunpack.c.l.b16 %v40
  %v233 = vunpack.c.h.b16 %v40
  %v234 = vunpack.c.l.b16 %v41
  %v235 = vunpack.c.l.b16 %v42
  %v236 = vunpack.c.h.b16 %v42
  %v237 = vunpack.c.l.b16 %v43
  %v238 = vunpack.c.h.b16 %v43
  %v239 = vunpack.c.l.b16 %v44
  %v240 = vunpack.c.l.b16 %v45
  %v241 = vunpack.c.h.b16 %v45
  %v242 = vunpack.c.l.b16 %v46
  %v243 = vunpack.c.h.b16 %v46
  %v244 = vunpack.c.l.b16 %v47
  %v245 = vunpack.c.l.b16 %v48
  %v246 = vunpack.c.h.b16 %v48
  %v247 = vunpack.c.l.b16 %v49
  %v248 = vunpack.c.h.b16 %v49
  %v249 = vunpack.c.l.b16 %v50
  %v250 = vunpack.c.l.b16 %v51
  %v251 = vunpack.c.h.b16 %v51
  %v252 = vunpack.c.l.b16 %v52
  %v253 = vunpack.c.h.b16 %v52
  %v254 = vunpack.c.l.b16 %v53
  %v255 = vunpack.c.l.b16 %v54
  %v256 = vunpack.c.h.b16 %v54
  %v257 = vunpack.c.l.b16 %v55
  %v258 = vunpack.c.h.b16 %v55
  %v259 = vunpack.c.l.b16 %v56
  %v260 = vunpack.c.l.b16 %v57
  %v261 = vunpack.c.h.b16 %v57
  %v262 = vunpack.c.l.b16 %v58
  %v263 = vunpack.c.h.b16 %v58
  %v264 = vunpack.c.l.b16 %v59
  %v265 = vunpack.c.l.b16 %v60
  %v266 = vunpack.c.h.b16 %v60
  %v267 = vunpack.c.l.b16 %v61
  %v268 = vunpack.c.h.b16 %v61
  %v269 = vunpack.c.l.b16 %v62
  %v270 = vpack.c.b16 %v195, %v190
  %v271 = vpack.c.b16 %v196, %v191
  %v272 = vpack.c.b16 %v197, %v192
  %v273 = vpack.c.b16 %v198, %v193
  %v274 = vpack.c.b16 %v199, %v194
  %v275 = vpack.c.b16 %v205, %v200
  %v276 = vpack.c.b16 %v206, %v201
  %v277 = vpack.c.b16 %v207, %v202
  %v278 = vpack.c.b16 %v208, %v203
  %v279 = vpack.c.b16 %v209, %v204
  %v280 = vpack.c.b16 %v215, %v210
  %v281 = vpack.c.b16 %v216, %v211
  %v282 = vpack.c.b16 %v217, %v212
  %v283 = vpack.c.b16 %v218, %v213
  %v284 = vpack.c.b16 %v219, %v214
  %v285 = vpack.c.b16 %v225, %v220
  %v286 = vpack.c.b16 %v226, %v221
  %v287 = vpack.c.b16 %v227, %v222
  %v288 = vpack.c.b16 %v228, %v223
  %v289 = vpack.c.b16 %v229, %v224
  %v290 = vpack.c.b16 %v235, %v230
  %v291 = vpack.c.b16 %v236, %v231
  %v292 = vpack.c.b16 %v237, %v232
  %v293 = vpack.c.b16 %v238, %v233
  %v294 = vpack.c.b16 %v239, %v234
  %v295 = vpack.c.b16 %v245, %v240
  %v296 = vpack.c.b16 %v246, %v241
  %v297 = vpack.c.b16 %v247, %v242
  %v298 = vpack.c.b16 %v248, %v243
  %v299 = vpack.c.b16 %v249, %v244
  %v300 = vpack.c.b16 %v255, %v250
  %v301 = vpack.c.b16 %v256, %v251
  %v302 = vpack.c.b16 %v257, %v252
  %v303 = vpack.c.b16 %v258, %v253
  %v304 = vpack.c.b16 %v259, %v254
  %v305 = vpack.c.b16 %v265, %v260
  %v306 = vpack.c.b16 %v266, %v261
  %v307 = vpack.c.b16 %v267, %v262
  %v308 = vpack.c.b16 %v268, %v263
  %v309 = vpack.c.b16 %v269, %v264
  %v414 = vunpack.c.l.b16 %v63
  %v415 = vunpack.c.l.b16 %v64
  %v416 = vunpack.c.l.b16 %v65
  %v417 = vunpack.c.l.b16 %v66
  %v418 = vunpack.c.l.b16 %v67
  %v419 = vunpack.c.l.b16 %v68
  %v420 = vunpack.c.l.b16 %v69
  %v421 = vunpack.c.l.b16 %v70
  %v422 = vunpack.c.l.b16 %v71
  %v423 = vunpack.c.l.b16 %v72
  %v424 = vunpack.c.l.b16 %v73
  %v425 = vunpack.c.l.b16 %v74
  %v426 = vunpack.c.l.b16 %v75
  %v427 = vunpack.c.l.b16 %v76
  %v428 = vunpack.c.l.b16 %v77
  %v429 = vunpack.c.l.b16 %v78
  %v430 = vunpack.c.l.b16 %v79
  %v431 = vunpack.c.l.b16 %v80
  %v432 = vunpack.c.l.b16 %v81
  %v433 = vunpack.c.l.b16 %v82
  %v434 = vunpack.c.l.b16 %v83
  %v435 = vunpack.c.l.b16 %v84
  %v436 = vunpack.c.l.b16 %v85
  %v437 = vunpack.c.l.b16 %v86
  %v438 = vunpack.c.l.b16 %v87
  %v439 = vunpack.c.l.b16 %v88
  %v440 = vunpack.c.l.b16 %v89
  %v441 = vunpack.c.l.b16 %v90
  %v442 = vunpack.c.l.b16 %v91
  %v443 = vunpack.c.l.b16 %v92
  %v444 = vunpack.c.l.b16 %v93
  %v445 = vunpack.c.l.b16 %v94
  %v446 = vunpack.c.l.b16 %v95
  %v447 = vunpack.c.l.b16 %v96
  %v448 = vunpack.c.l.b16 %v97
  %v449 = vunpack.c.l.b16 %v98
  %v450 = vunpack.c.l.b16 %v99
  %v451 = vunpack.c.l.b16 %v100
  %v452 = vunpack.c.l.b16 %v101
  %v453 = vunpack.c.l.b16 %v102
  %v454 = vunpack.c.l.b16 %v103
  %v455 = vunpack.c.l.b16 %v104
  %v456 = vunpack.c.l.b16 %v105
  %v457 = vunpack.c.l.b16 %v106
  %v458 = vunpack.c.l.b16 %v107
  %v459 = vunpack.c.l.b16 %v108
  %v460 = vunpack.c.l.b16 %v109
  %v461 = vunpack.c.l.b16 %v110
  %v462 = vunpack.c.l.b16 %v111
  %v463 = vunpack.c.l.b16 %v112
  %v464 = vunpack.c.l.b16 %v113
  %v465 = vunpack.c.l.b16 %v114
  %v466 = vunpack.c.l.b16 %v115
  %v467 = vunpack.c.l.b16 %v116
  %v468 = vunpack.c.l.b16 %v117
  %v469 = vunpack.c.l.b16 %v118
  %v470 = vunpack.c.l.b16 %v119
  %v471 = vunpack.c.l.b16 %v120
  %v472 = vunpack.c.l.b16 %v121
  %v473 = vunpack.c.l.b16 %v122
  %v474 = vunpack.c.l.b16 %v123
  %v475 = vunpack.c.l.b16 %v124
  %v476 = vunpack.c.l.b16 %v125
  %v477 = vunpack.c.l.b16 %v126
  %v478 = vunpack.c.l.b16 %v127
  %v479 = vunpack.c.l.b16 %v128
  %v480 = vunpack.c.l.b16 %v129
  %v481 = vunpack.c.l.b16 %v130
  %v482 = vunpack.c.l.b16 %v131
  %v483 = vunpack.c.l.b16 %v132
  %v484 = vunpack.c.l.b16 %v133
  %v485 = vunpack.c.l.b16 %v134
  %v486 = vpack.c.b16 %v415, %v414
  %v487 = vpack.c.b16 %v417, %v416
  %v488 = vpack.c.b16 %v419, %v418
  %v489 = vpack.c.b16 %v421, %v420
  %v490 = vpack.c.b16 %v423, %v422
  %v491 = vpack.c.b16 %v425, %v424
  %v492 = vpack.c.b16 %v427, %v426
  %v493 = vpack.c.b16 %v429, %v428
  %v494 = vpack.c.b16 %v431, %v430
  %v495 = vpack.c.b16 %v433, %v432
  %v496 = vpack.c.b16 %v435, %v434
  %v497 = vpack.c.b16 %v437, %v436
  %v498 = vpack.c.b16 %v439, %v438
  %v499 = vpack.c.b16 %v441, %v440
  %v500 = vpack.c.b16 %v443, %v442
  %v501 = vpack.c.b16 %v445, %v444
  %v502 = vpack.c.b16 %v447, %v446
  %v503 = vpack.c.b16 %v449, %v448
  %v504 = vpack.c.b16 %v451, %v450
  %v505 = vpack.c.b16 %v453, %v452
  %v506 = vpack.c.b16 %v455, %v454
  %v507 = vpack.c.b16 %v457, %v456
  %v508 = vpack.c.b16 %v459, %v458
  %v509 = vpack.c.b16 %v461, %v460
  %v510 = vpack.c.b16 %v463, %v462
  %v511 = vpack.c.b16 %v465, %v464
  %v512 = vpack.c.b16 %v467, %v466
  %v513 = vpack.c.b16 %v469, %v468
  %v514 = vpack.c.b16 %v471, %v470
  %v515 = vpack.c.b16 %v473, %v472
  %v516 = vpack.c.b16 %v475, %v474
  %v517 = vpack.c.b16 %v477, %v476
  %v518 = vpack.c.b16 %v479, %v478
  %v519 = vpack.c.b16 %v481, %v480
  %v520 = vpack.c.b16 %v483, %v482
  %v521 = vpack.c.b16 %v485, %v484
  %vm558 = vcmask 523264
  %v560 = vsel %vm558, %v274, 0
  %v563 = vsel %vm558, %v279, 0
  %v566 = vsel %vm558, %v284, 0
  %v569 = vsel %vm558, %v289, 0
  %v572 = vsel %vm558, %v294, 0
  %v575 = vsel %vm558, %v299, 0
  %v578 = vsel %vm558, %v304, 0
  %v581 = vsel %vm558, %v309, 0
  %583 = vmatprep.subr.bf16.mxu0 0
  %584 = vmatpush1.bf16.msra.mxu0 %v486
  %585 = vmatprep.subr.bf16.mxu0 0
  %586 = vmatpush1.bf16.msra.mxu0 %v487
  %587 = vmatprep.subr.bf16.mxu0 0
  %588 = vmatpush1.bf16.msra.mxu0 %v488
  %589 = vmatprep.subr.bf16.mxu0 0
  %590 = vmatpush1.bf16.msra.mxu0 %v489
  %591 = vmatprep.subr.bf16.mxu0 0
  %592 = vmatpush1.bf16.msra.mxu0 %v490
  %593 = vmatprep.subr.bf16.mxu0 0
  %594 = vmatpush1.bf16.msra.mxu0 %v491
  %595 = vmatprep.subr.bf16.mxu0 0
  %596 = vmatpush1.bf16.msra.mxu0 %v492
  %597 = vmatprep.subr.bf16.mxu0 0
  %598 = vmatpush1.bf16.msra.mxu0 %v493
  %599 = vmatprep.subr.bf16.mxu0 0
  %600 = vmatpush1.bf16.msra.mxu0 %v494
  %601 = vmatprep.subr.bf16.mxu0 0
  %602 = vmatpush1.bf16.msra.mxu0 %v495
  %603 = vmatprep.subr.bf16.mxu0 0
  %604 = vmatpush1.bf16.msra.mxu0 %v496
  %605 = vmatprep.subr.bf16.mxu0 0
  %606 = vmatpush1.bf16.msra.mxu0 %v497
  %607 = vmatprep.subr.bf16.mxu0 0
  %608 = vmatpush1.bf16.msra.mxu0 %v498
  %609 = vmatprep.subr.bf16.mxu0 0
  %610 = vmatpush1.bf16.msra.mxu0 %v499
  %611 = vmatprep.subr.bf16.mxu0 0
  %612 = vmatpush1.bf16.msra.mxu0 %v500
  %613 = vmatprep.subr.bf16.mxu0 0
  %614 = vmatpush1.bf16.msra.mxu0 %v501
  %615 = vmatprep.mubr.bf16.mxu0 %v271
  %616 = vmatmul.mubr.bf16.gmra.mrb[0].mxu0 %v270
  %v617 = vpop.f32.mrb[0].mxu0
  %v618 = vadd.f32 %v140, %v617
  %v619 = vpop.f32.mrb[0].mxu0
  %v620 = vpop.f32.mrb[0].mxu0
  %v621 = vadd.f32 %v140, %v620
  %v622 = vpop.f32.mrb[0].mxu0
  %623 = vmatprep.mubr.bf16.mxu0 %v276
  %624 = vmatmul.mubr.bf16.gmra.mrb[0].mxu0 %v275
  %v625 = vpop.f32.mrb[0].mxu0
  %v626 = vadd.f32 %v140, %v625
  %v627 = vpop.f32.mrb[0].mxu0
  %v628 = vpop.f32.mrb[0].mxu0
  %v629 = vadd.f32 %v140, %v628
  %v630 = vpop.f32.mrb[0].mxu0
  %631 = vmatprep.mubr.bf16.mxu0 %v281
  %632 = vmatmul.mubr.bf16.gmra.mrb[0].mxu0 %v280
  %v633 = vpop.f32.mrb[0].mxu0
  %v634 = vadd.f32 %v140, %v633
  %v635 = vpop.f32.mrb[0].mxu0
  %v636 = vpop.f32.mrb[0].mxu0
  %v637 = vadd.f32 %v140, %v636
  %v638 = vpop.f32.mrb[0].mxu0
  %639 = vmatprep.mubr.bf16.mxu0 %v286
  %640 = vmatmul.mubr.bf16.gmra.mrb[0].mxu0 %v285
  %v641 = vpop.f32.mrb[0].mxu0
  %v642 = vadd.f32 %v140, %v641
  %v643 = vpop.f32.mrb[0].mxu0
  %v644 = vpop.f32.mrb[0].mxu0
  %v645 = vadd.f32 %v140, %v644
  %v646 = vpop.f32.mrb[0].mxu0
  %647 = vmatprep.mubr.bf16.mxu0 %v291
  %648 = vmatmul.mubr.bf16.gmra.mrb[0].mxu0 %v290
  %v649 = vpop.f32.mrb[0].mxu0
  %v650 = vadd.f32 %v140, %v649
  %v651 = vpop.f32.mrb[0].mxu0
  %v652 = vpop.f32.mrb[0].mxu0
  %v653 = vadd.f32 %v140, %v652
  %v654 = vpop.f32.mrb[0].mxu0
  %655 = vmatprep.mubr.bf16.mxu0 %v296
  %656 = vmatmul.mubr.bf16.gmra.mrb[0].mxu0 %v295
  %v657 = vpop.f32.mrb[0].mxu0
  %v658 = vadd.f32 %v140, %v657
  %v659 = vpop.f32.mrb[0].mxu0
  %v660 = vpop.f32.mrb[0].mxu0
  %v661 = vadd.f32 %v140, %v660
  %v662 = vpop.f32.mrb[0].mxu0
  %663 = vmatprep.mubr.bf16.mxu0 %v301
  %664 = vmatmul.mubr.bf16.gmra.mrb[0].mxu0 %v300
  %v665 = vpop.f32.mrb[0].mxu0
  %v666 = vadd.f32 %v140, %v665
  %v667 = vpop.f32.mrb[0].mxu0
  %v668 = vpop.f32.mrb[0].mxu0
  %v669 = vadd.f32 %v140, %v668
  %v670 = vpop.f32.mrb[0].mxu0
  %671 = vmatprep.mubr.bf16.mxu0 %v306
  %672 = vmatmul.mubr.bf16.gmra.mrb[0].mxu0 %v305
  %v673 = vpop.f32.mrb[0].mxu0
  %v674 = vadd.f32 %v140, %v673
  %v675 = vpop.f32.mrb[0].mxu0
  %v676 = vpop.f32.mrb[0].mxu0
  %v677 = vadd.f32 %v140, %v676
  %v678 = vpop.f32.mrb[0].mxu0
  %679 = vdwg.mxu0
  %680 = vmatprep.subr.bf16.mxu0 0
  %681 = vmatpush1.bf16.msra.mxu0 %v502
  %682 = vmatprep.subr.bf16.mxu0 0
  %683 = vmatpush1.bf16.msra.mxu0 %v503
  %684 = vmatprep.subr.bf16.mxu0 0
  %685 = vmatpush1.bf16.msra.mxu0 %v504
  %686 = vmatprep.subr.bf16.mxu0 0
  %687 = vmatpush1.bf16.msra.mxu0 %v505
  %688 = vmatprep.subr.bf16.mxu0 0
  %689 = vmatpush1.bf16.msra.mxu0 %v506
  %690 = vmatprep.subr.bf16.mxu0 0
  %691 = vmatpush1.bf16.msra.mxu0 %v507
  %692 = vmatprep.subr.bf16.mxu0 0
  %693 = vmatpush1.bf16.msra.mxu0 %v508
  %694 = vmatprep.subr.bf16.mxu0 0
  %695 = vmatpush1.bf16.msra.mxu0 %v509
  %696 = vmatprep.subr.bf16.mxu0 0
  %697 = vmatpush1.bf16.msra.mxu0 %v510
  %698 = vmatprep.subr.bf16.mxu0 0
  %699 = vmatpush1.bf16.msra.mxu0 %v511
  %700 = vmatprep.subr.bf16.mxu0 0
  %701 = vmatpush1.bf16.msra.mxu0 %v512
  %702 = vmatprep.subr.bf16.mxu0 0
  %703 = vmatpush1.bf16.msra.mxu0 %v513
  %704 = vmatprep.subr.bf16.mxu0 0
  %705 = vmatpush1.bf16.msra.mxu0 %v514
  %706 = vmatprep.subr.bf16.mxu0 0
  %707 = vmatpush1.bf16.msra.mxu0 %v515
  %708 = vmatprep.subr.bf16.mxu0 0
  %709 = vmatpush1.bf16.msra.mxu0 %v516
  %710 = vmatprep.subr.bf16.mxu0 0
  %711 = vmatpush1.bf16.msra.mxu0 %v517
  %712 = vmatprep.mubr.bf16.mxu0 %v273
  %713 = vmatmul.mubr.bf16.gmra.mrb[0].mxu0 %v272
  %v714 = vpop.f32.mrb[0].mxu0
  %v715 = vadd.f32 %v618, %v714
  %v716 = vpop.f32.mrb[0].mxu0
  %v717 = vpop.f32.mrb[0].mxu0
  %v718 = vadd.f32 %v621, %v717
  %v719 = vpop.f32.mrb[0].mxu0
  %720 = vmatprep.mubr.bf16.mxu0 %v278
  %721 = vmatmul.mubr.bf16.gmra.mrb[0].mxu0 %v277
  %v722 = vpop.f32.mrb[0].mxu0
  %v723 = vadd.f32 %v626, %v722
  %v724 = vpop.f32.mrb[0].mxu0
  %v725 = vpop.f32.mrb[0].mxu0
  %v726 = vadd.f32 %v629, %v725
  %v727 = vpop.f32.mrb[0].mxu0
  %728 = vmatprep.mubr.bf16.mxu0 %v283
  %729 = vmatmul.mubr.bf16.gmra.mrb[0].mxu0 %v282
  %v730 = vpop.f32.mrb[0].mxu0
  %v731 = vadd.f32 %v634, %v730
  %v732 = vpop.f32.mrb[0].mxu0
  %v733 = vpop.f32.mrb[0].mxu0
  %v734 = vadd.f32 %v637, %v733
  %v735 = vpop.f32.mrb[0].mxu0
  %736 = vmatprep.mubr.bf16.mxu0 %v288
  %737 = vmatmul.mubr.bf16.gmra.mrb[0].mxu0 %v287
  %v738 = vpop.f32.mrb[0].mxu0
  %v739 = vadd.f32 %v642, %v738
  %v740 = vpop.f32.mrb[0].mxu0
  %v741 = vpop.f32.mrb[0].mxu0
  %v742 = vadd.f32 %v645, %v741
  %v743 = vpop.f32.mrb[0].mxu0
  %744 = vmatprep.mubr.bf16.mxu0 %v293
  %745 = vmatmul.mubr.bf16.gmra.mrb[0].mxu0 %v292
  %v746 = vpop.f32.mrb[0].mxu0
  %v747 = vadd.f32 %v650, %v746
  %v748 = vpop.f32.mrb[0].mxu0
  %v749 = vpop.f32.mrb[0].mxu0
  %v750 = vadd.f32 %v653, %v749
  %v751 = vpop.f32.mrb[0].mxu0
  %752 = vmatprep.mubr.bf16.mxu0 %v298
  %753 = vmatmul.mubr.bf16.gmra.mrb[0].mxu0 %v297
  %v754 = vpop.f32.mrb[0].mxu0
  %v755 = vadd.f32 %v658, %v754
  %v756 = vpop.f32.mrb[0].mxu0
  %v757 = vpop.f32.mrb[0].mxu0
  %v758 = vadd.f32 %v661, %v757
  %v759 = vpop.f32.mrb[0].mxu0
  %760 = vmatprep.mubr.bf16.mxu0 %v303
  %761 = vmatmul.mubr.bf16.gmra.mrb[0].mxu0 %v302
  %v762 = vpop.f32.mrb[0].mxu0
  %v763 = vadd.f32 %v666, %v762
  %v764 = vpop.f32.mrb[0].mxu0
  %v765 = vpop.f32.mrb[0].mxu0
  %v766 = vadd.f32 %v669, %v765
  %v767 = vpop.f32.mrb[0].mxu0
  %768 = vmatprep.mubr.bf16.mxu0 %v308
  %769 = vmatmul.mubr.bf16.gmra.mrb[0].mxu0 %v307
  %v770 = vpop.f32.mrb[0].mxu0
  %v771 = vadd.f32 %v674, %v770
  %v772 = vpop.f32.mrb[0].mxu0
  %v773 = vpop.f32.mrb[0].mxu0
  %v774 = vadd.f32 %v677, %v773
  %v775 = vpop.f32.mrb[0].mxu0
  %776 = vdwg.mxu0
  %777 = vmatprep.subr.bf16.mxu0 0
  %778 = vmatpush1.bf16.msra.mxu0 %v518
  %779 = vmatprep.subr.bf16.mxu0 0
  %780 = vmatpush1.bf16.msra.mxu0 %v519
  %781 = vmatprep.subr.bf16.mxu0 0
  %782 = vmatpush1.bf16.msra.mxu0 %v520
  %783 = vmatprep.subr.bf16.mxu0 0
  %784 = vmatpush1.bf16.msra.mxu0 %v521
  %785 = vmatprep.subr.bf16.mxu0 0
  %786 = vmatpush1.bf16.msra.mxu0 0
  %787 = vmatprep.subr.bf16.mxu0 0
  %788 = vmatpush1.bf16.msra.mxu0 0
  %789 = vmatprep.subr.bf16.mxu0 0
  %790 = vmatpush1.bf16.msra.mxu0 0
  %791 = vmatprep.subr.bf16.mxu0 0
  %792 = vmatpush1.bf16.msra.mxu0 0
  %793 = vmatprep.subr.bf16.mxu0 0
  %794 = vmatpush1.bf16.msra.mxu0 0
  %795 = vmatprep.subr.bf16.mxu0 0
  %796 = vmatpush1.bf16.msra.mxu0 0
  %797 = vmatprep.subr.bf16.mxu0 0
  %798 = vmatpush1.bf16.msra.mxu0 0
  %799 = vmatprep.subr.bf16.mxu0 0
  %800 = vmatpush1.bf16.msra.mxu0 0
  %801 = vmatprep.subr.bf16.mxu0 0
  %802 = vmatpush1.bf16.msra.mxu0 0
  %803 = vmatprep.subr.bf16.mxu0 0
  %804 = vmatpush1.bf16.msra.mxu0 0
  %805 = vmatprep.subr.bf16.mxu0 0
  %806 = vmatpush1.bf16.msra.mxu0 0
  %807 = vmatprep.subr.bf16.mxu0 0
  %808 = vmatpush1.bf16.msra.mxu0 0
  %809 = vmatprep.mubr.bf16.mxu0 0
  %810 = vmatmul.mubr.bf16.gmra.mrb[0].mxu0 %v560
  %v811 = vpop.f32.mrb[0].mxu0
  %v812 = vadd.f32 %v715, %v811
  %v813 = vpop.f32.mrb[0].mxu0
  %v814 = vpop.f32.mrb[0].mxu0
  %v815 = vadd.f32 %v718, %v814
  %v816 = vpop.f32.mrb[0].mxu0
  %817 = vmatprep.mubr.bf16.mxu0 0
  %818 = vmatmul.mubr.bf16.gmra.mrb[0].mxu0 %v563
  %v819 = vpop.f32.mrb[0].mxu0
  %v820 = vadd.f32 %v723, %v819
  %v821 = vpop.f32.mrb[0].mxu0
  %v822 = vpop.f32.mrb[0].mxu0
  %v823 = vadd.f32 %v726, %v822
  %v824 = vpop.f32.mrb[0].mxu0
  %825 = vmatprep.mubr.bf16.mxu0 0
  %826 = vmatmul.mubr.bf16.gmra.mrb[0].mxu0 %v566
  %v827 = vpop.f32.mrb[0].mxu0
  %v828 = vadd.f32 %v731, %v827
  %v829 = vpop.f32.mrb[0].mxu0
  %v830 = vpop.f32.mrb[0].mxu0
  %v831 = vadd.f32 %v734, %v830
  %v832 = vpop.f32.mrb[0].mxu0
  %833 = vmatprep.mubr.bf16.mxu0 0
  %834 = vmatmul.mubr.bf16.gmra.mrb[0].mxu0 %v569
  %v835 = vpop.f32.mrb[0].mxu0
  %v836 = vadd.f32 %v739, %v835
  %v837 = vpop.f32.mrb[0].mxu0
  %v838 = vpop.f32.mrb[0].mxu0
  %v839 = vadd.f32 %v742, %v838
  %v840 = vpop.f32.mrb[0].mxu0
  %841 = vmatprep.mubr.bf16.mxu0 0
  %842 = vmatmul.mubr.bf16.gmra.mrb[0].mxu0 %v572
  %v843 = vpop.f32.mrb[0].mxu0
  %v844 = vadd.f32 %v747, %v843
  %v845 = vpop.f32.mrb[0].mxu0
  %v846 = vpop.f32.mrb[0].mxu0
  %v847 = vadd.f32 %v750, %v846
  %v848 = vpop.f32.mrb[0].mxu0
  %849 = vmatprep.mubr.bf16.mxu0 0
  %850 = vmatmul.mubr.bf16.gmra.mrb[0].mxu0 %v575
  %v851 = vpop.f32.mrb[0].mxu0
  %v852 = vadd.f32 %v755, %v851
  %v853 = vpop.f32.mrb[0].mxu0
  %v854 = vpop.f32.mrb[0].mxu0
  %v855 = vadd.f32 %v758, %v854
  %v856 = vpop.f32.mrb[0].mxu0
  %857 = vmatprep.mubr.bf16.mxu0 0
  %858 = vmatmul.mubr.bf16.gmra.mrb[0].mxu0 %v578
  %v859 = vpop.f32.mrb[0].mxu0
  %v860 = vadd.f32 %v763, %v859
  %v861 = vpop.f32.mrb[0].mxu0
  %v862 = vpop.f32.mrb[0].mxu0
  %v863 = vadd.f32 %v766, %v862
  %v864 = vpop.f32.mrb[0].mxu0
  %865 = vmatprep.mubr.bf16.mxu0 0
  %866 = vmatmul.mubr.bf16.gmra.mrb[0].mxu0 %v581
  %v867 = vpop.f32.mrb[0].mxu0
  %v868 = vadd.f32 %v771, %v867
  %v869 = vpop.f32.mrb[0].mxu0
  %v870 = vpop.f32.mrb[0].mxu0
  %v871 = vadd.f32 %v774, %v870
  %v872 = vpop.f32.mrb[0].mxu0
  %873 = vdwg.mxu0
  %v874 = vmax.f32 %v812, 0.0
  %v875 = vmax.f32 %v815, 0.0
  %v876 = vmax.f32 %v820, 0.0
  %v877 = vmax.f32 %v823, 0.0
  %v878 = vmax.f32 %v828, 0.0
  %v879 = vmax.f32 %v831, 0.0
  %v880 = vmax.f32 %v836, 0.0
  %v881 = vmax.f32 %v839, 0.0
  %v882 = vmax.f32 %v844, 0.0
  %v883 = vmax.f32 %v847, 0.0
  %v884 = vmax.f32 %v852, 0.0
  %v885 = vmax.f32 %v855, 0.0
  %v886 = vmax.f32 %v860, 0.0
  %v887 = vmax.f32 %v863, 0.0
  %v888 = vmax.f32 %v868, 0.0
  %v889 = vmax.f32 %v871, 0.0
  %v890 = vpack.c.bf16 %v875, %v874
  %v891 = vpack.c.bf16 %v877, %v876
  %v892 = vpack.c.bf16 %v879, %v878
  %v893 = vpack.c.bf16 %v881, %v880
  %v894 = vpack.c.bf16 %v883, %v882
  %v895 = vpack.c.bf16 %v885, %v884
  %v896 = vpack.c.bf16 %v887, %v886
  %v897 = vpack.c.bf16 %v889, %v888
  %v906 = vunpack.c.l.b16 %v890
  %v907 = vunpack.c.h.b16 %v890
  %v908 = vunpack.c.l.b16 %v891
  %v909 = vunpack.c.h.b16 %v891
  %v910 = vunpack.c.l.b16 %v892
  %v911 = vunpack.c.h.b16 %v892
  %v912 = vunpack.c.l.b16 %v893
  %v913 = vunpack.c.h.b16 %v893
  %v914 = vunpack.c.l.b16 %v894
  %v915 = vunpack.c.h.b16 %v894
  %v916 = vunpack.c.l.b16 %v895
  %v917 = vunpack.c.h.b16 %v895
  %v918 = vunpack.c.l.b16 %v896
  %v919 = vunpack.c.h.b16 %v896
  %v920 = vunpack.c.l.b16 %v897
  %v921 = vunpack.c.h.b16 %v897
  %v922 = vpack.c.b16 %v906, %v906
  %v923 = vpack.c.b16 %v907, %v907
  %v924 = vpack.c.b16 %v908, %v908
  %v925 = vpack.c.b16 %v909, %v909
  %v926 = vpack.c.b16 %v910, %v910
  %v927 = vpack.c.b16 %v911, %v911
  %v928 = vpack.c.b16 %v912, %v912
  %v929 = vpack.c.b16 %v913, %v913
  %v930 = vpack.c.b16 %v914, %v914
  %v931 = vpack.c.b16 %v915, %v915
  %v932 = vpack.c.b16 %v916, %v916
  %v933 = vpack.c.b16 %v917, %v917
  %v934 = vpack.c.b16 %v918, %v918
  %v935 = vpack.c.b16 %v919, %v919
  %v936 = vpack.c.b16 %v920, %v920
  %v937 = vpack.c.b16 %v921, %v921
  %954 = vst [vmem:[%s3] sm:$0xf] %v922
  %955 = vst [vmem:[%s3 + $0x4] sm:$0xf] %v923
  %956 = vst [vmem:[%s3 + $0x8] sm:$0xf] %v924
  %957 = vst [vmem:[%s3 + $0xc] sm:$0xf] %v925
  %958 = vst [vmem:[%s3 + $0x10] sm:$0xf] %v926
  %959 = vst [vmem:[%s3 + $0x14] sm:$0xf] %v927
  %960 = vst [vmem:[%s3 + $0x18] sm:$0xf] %v928
  %961 = vst [vmem:[%s3 + $0x1c] sm:$0xf] %v929
  %962 = vst [vmem:[%s3 + $0x20] sm:$0xf] %v930
  %963 = vst [vmem:[%s3 + $0x24] sm:$0xf] %v931
  %964 = vst [vmem:[%s3 + $0x28] sm:$0xf] %v932
  %965 = vst [vmem:[%s3 + $0x2c] sm:$0xf] %v933
  %966 = vst [vmem:[%s3 + $0x30] sm:$0xf] %v934
  %967 = vst [vmem:[%s3 + $0x34] sm:$0xf] %v935
  %968 = vst [vmem:[%s3 + $0x38] sm:$0xf] %v936
  %969 = vst [vmem:[%s3 + $0x3c] sm:$0xf] %v937
  // Predicated region
  $region14: #{_lambda_.6} parent=0 // pred_check
    _
  $region15: #{_lambda_.6} parent=0 // pred_check_branch
    %971 = sbr.rel (0) target = $region17
  $region16: #{_lambda_.6} parent=0 // pred_region
    _
  $region17: #{_lambda_.6} parent=0 // pred_fallthru
    _
  // Predicated region
  $region18: #{_lambda_.6} parent=0 // pred_check
    _
  $region19: #{_lambda_.6} parent=0 // pred_check_branch
    %973 = sbr.rel (0) target = $region21
  $region20: #{_lambda_.6} parent=0 // pred_region
    _
  $region21: #{_lambda_.6} parent=0 // pred_fallthru
    _

// kernel: _lambda_.7
$region0: #{_lambda_.7}
  #allocation0 [shape = 'u32[]', space=smem, size = 0x4, offset = 0x4, fixed_abs, tag = 'smem constant byte address 0x4 - core index']
  #allocation1 [shape = 'u32[144,128]{1,0:T(1,128)}', space=vmem, size = 0x12000, scoped, tag = 'internal scratch']
  %s0 = inlined_call_operand.vmem [shape: bf16[8,4096], index: 0, kind: input, shape index: {}]
  %s1 = inlined_call_operand.vmem [shape: bf16[4096,512], index: 1, kind: input, shape index: {}]
  %s2 = inlined_call_operand.vmem [shape: f32[1,512], index: 2, kind: input, shape index: {}]
  %s3 = inlined_call_operand.vmem [shape: bf16[512,128], index: 3, kind: input, shape index: {}]
  %s4 = inlined_call_operand.vmem [shape: f32[1,128], index: 4, kind: input, shape index: {}]
  %s5 = inlined_call_operand.vmem [shape: f32[8,128], index: 5, kind: output, shape index: {}]
  %s6 = sld [smem:[#allocation0]]
  $region30: #{_lambda_.7} parent=0
    _
  %s8 = ssub.s32 1, %s6
  %s9 = scalar_select 0, %s8, %s6
  // Predicated region
  $region2: #{_lambda_.7} parent=0 // pred_check
    _
  $region3: #{_lambda_.7} parent=0 // pred_check_branch
    %11 = sbr.rel (0) target = $region5
  $region4: #{_lambda_.7} parent=0 // pred_region
    _
  $region5: #{_lambda_.7} parent=0 // pred_fallthru
    _
  // Predicated region
  $region6: #{_lambda_.7} parent=0 // pred_check
    _
  $region7: #{_lambda_.7} parent=0 // pred_check_branch
    %13 = sbr.rel (0) target = $region9
  $region8: #{_lambda_.7} parent=0 // pred_region
    _
  $region9: #{_lambda_.7} parent=0 // pred_fallthru
    _
  // Predicated region
  $region10: #{_lambda_.7} parent=0 // pred_check
    _
  $region11: #{_lambda_.7} parent=0 // pred_check_branch
    %15 = sbr.rel (0) target = $region13
  $region12: #{_lambda_.7} parent=0 // pred_region
    _
  $region13: #{_lambda_.7} parent=0 // pred_fallthru
    _
  // Predicated region
  $region14: #{_lambda_.7} parent=0 // pred_check
    _
  $region15: #{_lambda_.7} parent=0 // pred_check_branch
    %17 = sbr.rel (0) target = $region17
  $region16: #{_lambda_.7} parent=0 // pred_region
    _
  $region17: #{_lambda_.7} parent=0 // pred_fallthru
    _
  // Predicated region
  $region18: #{_lambda_.7} parent=0 // pred_check
    _
  $region19: #{_lambda_.7} parent=0 // pred_check_branch
    %19 = sbr.rel (0) target = $region21
  $region20: #{_lambda_.7} parent=0 // pred_region
    _
  $region21: #{_lambda_.7} parent=0 // pred_fallthru
    _
  %v21 = vld [vmem:[%s0] sm:$0xff]
  %v22 = vld [vmem:[%s0 + $0x8] sm:$0xff]
  %v23 = vld [vmem:[%s0 + $0x10] sm:$0xff]
  %v24 = vld [vmem:[%s0 + $0x18] sm:$0xff]
  %v25 = vld [vmem:[%s0 + $0x20] sm:$0xff]
  %v26 = vld [vmem:[%s0 + $0x28] sm:$0xff]
  %v27 = vld [vmem:[%s0 + $0x30] sm:$0xff]
  %v28 = vld [vmem:[%s0 + $0x38] sm:$0xff]
  %v29 = vld [vmem:[%s0 + $0x40] sm:$0xff]
  %v30 = vld [vmem:[%s0 + $0x48] sm:$0xff]
  %v31 = vld [vmem:[%s0 + $0x50] sm:$0xff]
  %v32 = vld [vmem:[%s0 + $0x58] sm:$0xff]
  %v33 = vld [vmem:[%s0 + $0x60] sm:$0xff]
  %v34 = vld [vmem:[%s0 + $0x68] sm:$0xff]
  %v35 = vld [vmem:[%s0 + $0x70] sm:$0xff]
  %v36 = vld [vmem:[%s0 + $0x78] sm:$0xff]
  %v37 = vld [vmem:[%s1] sm:$0xff]
  %v38 = vld [vmem:[%s1 + $0x8] sm:$0xff]
  %v39 = vld [vmem:[%s1 + $0x10] sm:$0xff]
  %v40 = vld [vmem:[%s1 + $0x18] sm:$0xff]
  %v41 = vld [vmem:[%s1 + $0x20] sm:$0xff]
  %v42 = vld [vmem:[%s1 + $0x28] sm:$0xff]
  %v43 = vld [vmem:[%s1 + $0x30] sm:$0xff]
  %v44 = vld [vmem:[%s1 + $0x38] sm:$0xff]
  %v45 = vld [vmem:[%s1 + $0x40] sm:$0xff]
  %v46 = vld [vmem:[%s1 + $0x48] sm:$0xff]
  %v47 = vld [vmem:[%s1 + $0x50] sm:$0xff]
  %v48 = vld [vmem:[%s1 + $0x58] sm:$0xff]
  %v49 = vld [vmem:[%s1 + $0x60] sm:$0xff]
  %v50 = vld [vmem:[%s1 + $0x68] sm:$0xff]
  %v51 = vld [vmem:[%s1 + $0x70] sm:$0xff]
  %v52 = vld [vmem:[%s1 + $0x78] sm:$0xff]
  %v53 = vld [vmem:[%s1 + $0x80] sm:$0xff]
  %v54 = vld [vmem:[%s1 + $0x88] sm:$0xff]
  %v55 = vld [vmem:[%s1 + $0x90] sm:$0xff]
  %v56 = vld [vmem:[%s1 + $0x98] sm:$0xff]
  %v57 = vld [vmem:[%s1 + $0xa0] sm:$0xff]
  %v58 = vld [vmem:[%s1 + $0xa8] sm:$0xff]
  %v59 = vld [vmem:[%s1 + $0xb0] sm:$0xff]
  %v60 = vld [vmem:[%s1 + $0xb8] sm:$0xff]
  %v61 = vld [vmem:[%s1 + $0xc0] sm:$0xff]
  %v62 = vld [vmem:[%s1 + $0xc8] sm:$0xff]
  %v63 = vld [vmem:[%s1 + $0xd0] sm:$0xff]
  %v64 = vld [vmem:[%s1 + $0xd8] sm:$0xff]
  %v65 = vld [vmem:[%s1 + $0xe0] sm:$0xff]
  %v66 = vld [vmem:[%s1 + $0xe8] sm:$0xff]
  %v67 = vld [vmem:[%s1 + $0xf0] sm:$0xff]
  %v68 = vld [vmem:[%s1 + $0xf8] sm:$0xff]
  %v69 = vld [vmem:[%s1 + $0x100] sm:$0xff]
  %v70 = vld [vmem:[%s1 + $0x108] sm:$0xff]
  %v71 = vld [vmem:[%s1 + $0x110] sm:$0xff]
  %v72 = vld [vmem:[%s1 + $0x118] sm:$0xff]
  %v73 = vld [vmem:[%s1 + $0x120] sm:$0xff]
  %v74 = vld [vmem:[%s1 + $0x128] sm:$0xff]
  %v75 = vld [vmem:[%s1 + $0x130] sm:$0xff]
  %v76 = vld [vmem:[%s1 + $0x138] sm:$0xff]
  %v77 = vld [vmem:[%s1 + $0x140] sm:$0xff]
  %v78 = vld [vmem:[%s1 + $0x148] sm:$0xff]
  %v79 = vld [vmem:[%s1 + $0x150] sm:$0xff]
  %v80 = vld [vmem:[%s1 + $0x158] sm:$0xff]
  %v81 = vld [vmem:[%s1 + $0x160] sm:$0xff]
  %v82 = vld [vmem:[%s1 + $0x168] sm:$0xff]
  %v83 = vld [vmem:[%s1 + $0x170] sm:$0xff]
  %v84 = vld [vmem:[%s1 + $0x178] sm:$0xff]
  %v85 = vld [vmem:[%s1 + $0x180] sm:$0xff]
  %v86 = vld [vmem:[%s1 + $0x188] sm:$0xff]
  %v87 = vld [vmem:[%s1 + $0x190] sm:$0xff]
  %v88 = vld [vmem:[%s1 + $0x198] sm:$0xff]
  %v89 = vld [vmem:[%s1 + $0x1a0] sm:$0xff]
  %v90 = vld [vmem:[%s1 + $0x1a8] sm:$0xff]
  %v91 = vld [vmem:[%s1 + $0x1b0] sm:$0xff]
  %v92 = vld [vmem:[%s1 + $0x1b8] sm:$0xff]
  %v93 = vld [vmem:[%s1 + $0x1c0] sm:$0xff]
  %v94 = vld [vmem:[%s1 + $0x1c8] sm:$0xff]
  %v95 = vld [vmem:[%s1 + $0x1d0] sm:$0xff]
  %v96 = vld [vmem:[%s1 + $0x1d8] sm:$0xff]
  %v97 = vld [vmem:[%s1 + $0x1e0] sm:$0xff]
  %v98 = vld [vmem:[%s1 + $0x1e8] sm:$0xff]
  %v99 = vld [vmem:[%s1 + $0x1f0] sm:$0xff]
  %v100 = vld [vmem:[%s1 + $0x1f8] sm:$0xff]
  %v101 = vld [vmem:[%s1 + $0x200] sm:$0xff]
  %v102 = vld [vmem:[%s1 + $0x208] sm:$0xff]
  %v103 = vld [vmem:[%s1 + $0x210] sm:$0xff]
  %v104 = vld [vmem:[%s1 + $0x218] sm:$0xff]
  %v105 = vld [vmem:[%s1 + $0x220] sm:$0xff]
  %v106 = vld [vmem:[%s1 + $0x228] sm:$0xff]
  %v107 = vld [vmem:[%s1 + $0x230] sm:$0xff]
  %v108 = vld [vmem:[%s1 + $0x238] sm:$0xff]
  %v109 = vld [vmem:[%s1 + $0x240] sm:$0xff]
  %v110 = vld [vmem:[%s1 + $0x248] sm:$0xff]
  %v111 = vld [vmem:[%s1 + $0x250] sm:$0xff]
  %v112 = vld [vmem:[%s1 + $0x258] sm:$0xff]
  %v113 = vld [vmem:[%s1 + $0x260] sm:$0xff]
  %v114 = vld [vmem:[%s1 + $0x268] sm:$0xff]
  %v115 = vld [vmem:[%s1 + $0x270] sm:$0xff]
  %v116 = vld [vmem:[%s1 + $0x278] sm:$0xff]
  %v117 = vld [vmem:[%s1 + $0x280] sm:$0xff]
  %v118 = vld [vmem:[%s1 + $0x288] sm:$0xff]
  %v119 = vld [vmem:[%s1 + $0x290] sm:$0xff]
  %v120 = vld [vmem:[%s1 + $0x298] sm:$0xff]
  %v121 = vld [vmem:[%s1 + $0x2a0] sm:$0xff]
  %v122 = vld [vmem:[%s1 + $0x2a8] sm:$0xff]
  %v123 = vld [vmem:[%s1 + $0x2b0] sm:$0xff]
  %v124 = vld [vmem:[%s1 + $0x2b8] sm:$0xff]
  %v125 = vld [vmem:[%s1 + $0x2c0] sm:$0xff]
  %v126 = vld [vmem:[%s1 + $0x2c8] sm:$0xff]
  %v127 = vld [vmem:[%s1 + $0x2d0] sm:$0xff]
  %v128 = vld [vmem:[%s1 + $0x2d8] sm:$0xff]
  %v129 = vld [vmem:[%s1 + $0x2e0] sm:$0xff]
  %v130 = vld [vmem:[%s1 + $0x2e8] sm:$0xff]
  %v131 = vld [vmem:[%s1 + $0x2f0] sm:$0xff]
  %v132 = vld [vmem:[%s1 + $0x2f8] sm:$0xff]
  %v133 = vld [vmem:[%s1 + $0x300] sm:$0xff]
  %v134 = vld [vmem:[%s1 + $0x308] sm:$0xff]
  %v135 = vld [vmem:[%s1 + $0x310] sm:$0xff]
  %v136 = vld [vmem:[%s1 + $0x318] sm:$0xff]
  %v137 = vld [vmem:[%s1 + $0x320] sm:$0xff]
  %v138 = vld [vmem:[%s1 + $0x328] sm:$0xff]
  %v139 = vld [vmem:[%s1 + $0x330] sm:$0xff]
  %v140 = vld [vmem:[%s1 + $0x338] sm:$0xff]
  %v141 = vld [vmem:[%s1 + $0x340] sm:$0xff]
  %v142 = vld [vmem:[%s1 + $0x348] sm:$0xff]
  %v143 = vld [vmem:[%s1 + $0x350] sm:$0xff]
  %v144 = vld [vmem:[%s1 + $0x358] sm:$0xff]
  %v145 = vld [vmem:[%s1 + $0x360] sm:$0xff]
  %v146 = vld [vmem:[%s1 + $0x368] sm:$0xff]
  %v147 = vld [vmem:[%s1 + $0x370] sm:$0xff]
  %v148 = vld [vmem:[%s1 + $0x378] sm:$0xff]
  %v149 = vld [vmem:[%s1 + $0x380] sm:$0xff]
  %v150 = vld [vmem:[%s1 + $0x388] sm:$0xff]
  %v151 = vld [vmem:[%s1 + $0x390] sm:$0xff]
  %v152 = vld [vmem:[%s1 + $0x398] sm:$0xff]
  %v153 = vld [vmem:[%s1 + $0x3a0] sm:$0xff]
  %v154 = vld [vmem:[%s1 + $0x3a8] sm:$0xff]
  %v155 = vld [vmem:[%s1 + $0x3b0] sm:$0xff]
  %v156 = vld [vmem:[%s1 + $0x3b8] sm:$0xff]
  %v157 = vld [vmem:[%s1 + $0x3c0] sm:$0xff]
  %v158 = vld [vmem:[%s1 + $0x3c8] sm:$0xff]
  %v159 = vld [vmem:[%s1 + $0x3d0] sm:$0xff]
  %v160 = vld [vmem:[%s1 + $0x3d8] sm:$0xff]
  %v161 = vld [vmem:[%s1 + $0x3e0] sm:$0xff]
  %v162 = vld [vmem:[%s1 + $0x3e8] sm:$0xff]
  %v163 = vld [vmem:[%s1 + $0x3f0] sm:$0xff]
  %v164 = vld [vmem:[%s1 + $0x3f8] sm:$0xff]
  %v165 = vld [vmem:[%s1 + $0x400] sm:$0xff]
  %v166 = vld [vmem:[%s1 + $0x408] sm:$0xff]
  %v167 = vld [vmem:[%s1 + $0x410] sm:$0xff]
  %v168 = vld [vmem:[%s1 + $0x418] sm:$0xff]
  %v169 = vld [vmem:[%s1 + $0x420] sm:$0xff]
  %v170 = vld [vmem:[%s1 + $0x428] sm:$0xff]
  %v171 = vld [vmem:[%s1 + $0x430] sm:$0xff]
  %v172 = vld [vmem:[%s1 + $0x438] sm:$0xff]
  %v173 = vld [vmem:[%s1 + $0x440] sm:$0xff]
  %v174 = vld [vmem:[%s1 + $0x448] sm:$0xff]
  %v175 = vld [vmem:[%s1 + $0x450] sm:$0xff]
  %v176 = vld [vmem:[%s1 + $0x458] sm:$0xff]
  %v177 = vld [vmem:[%s1 + $0x460] sm:$0xff]
  %v178 = vld [vmem:[%s1 + $0x468] sm:$0xff]
  %v179 = vld [vmem:[%s1 + $0x470] sm:$0xff]
  %v180 = vld [vmem:[%s1 + $0x478] sm:$0xff]
  %v181 = vld [vmem:[%s1 + $0x480] sm:$0xff]
  %v182 = vld [vmem:[%s1 + $0x488] sm:$0xff]
  %v183 = vld [vmem:[%s1 + $0x490] sm:$0xff]
  %v184 = vld [vmem:[%s1 + $0x498] sm:$0xff]
  %v185 = vld [vmem:[%s1 + $0x4a0] sm:$0xff]
  %v186 = vld [vmem:[%s1 + $0x4a8] sm:$0xff]
  %v187 = vld [vmem:[%s1 + $0x4b0] sm:$0xff]
  %v188 = vld [vmem:[%s1 + $0x4b8] sm:$0xff]
  %v189 = vld [vmem:[%s1 + $0x4c0] sm:$0xff]
  %v190 = vld [vmem:[%s1 + $0x4c8] sm:$0xff]
  %v191 = vld [vmem:[%s1 + $0x4d0] sm:$0xff]
  %v192 = vld [vmem:[%s1 + $0x4d8] sm:$0xff]
  %v193 = vld [vmem:[%s1 + $0x4e0] sm:$0xff]
  %v194 = vld [vmem:[%s1 + $0x4e8] sm:$0xff]
  %v195 = vld [vmem:[%s1 + $0x4f0] sm:$0xff]
  %v196 = vld [vmem:[%s1 + $0x4f8] sm:$0xff]
  %v197 = vld [vmem:[%s1 + $0x500] sm:$0xff]
  %v198 = vld [vmem:[%s1 + $0x508] sm:$0xff]
  %v199 = vld [vmem:[%s1 + $0x510] sm:$0xff]
  %v200 = vld [vmem:[%s1 + $0x518] sm:$0xff]
  %v201 = vld [vmem:[%s1 + $0x520] sm:$0xff]
  %v202 = vld [vmem:[%s1 + $0x528] sm:$0xff]
  %v203 = vld [vmem:[%s1 + $0x530] sm:$0xff]
  %v204 = vld [vmem:[%s1 + $0x538] sm:$0xff]
  %v205 = vld [vmem:[%s1 + $0x540] sm:$0xff]
  %v206 = vld [vmem:[%s1 + $0x548] sm:$0xff]
  %v207 = vld [vmem:[%s1 + $0x550] sm:$0xff]
  %v208 = vld [vmem:[%s1 + $0x558] sm:$0xff]
  %v209 = vld [vmem:[%s1 + $0x560] sm:$0xff]
  %v210 = vld [vmem:[%s1 + $0x568] sm:$0xff]
  %v211 = vld [vmem:[%s1 + $0x570] sm:$0xff]
  %v212 = vld [vmem:[%s1 + $0x578] sm:$0xff]
  %v213 = vld [vmem:[%s1 + $0x580] sm:$0xff]
  %v214 = vld [vmem:[%s1 + $0x588] sm:$0xff]
  %v215 = vld [vmem:[%s1 + $0x590] sm:$0xff]
  %v216 = vld [vmem:[%s1 + $0x598] sm:$0xff]
  %v217 = vld [vmem:[%s1 + $0x5a0] sm:$0xff]
  %v218 = vld [vmem:[%s1 + $0x5a8] sm:$0xff]
  %v219 = vld [vmem:[%s1 + $0x5b0] sm:$0xff]
  %v220 = vld [vmem:[%s1 + $0x5b8] sm:$0xff]
  %v221 = vld [vmem:[%s1 + $0x5c0] sm:$0xff]
  %v222 = vld [vmem:[%s1 + $0x5c8] sm:$0xff]
  %v223 = vld [vmem:[%s1 + $0x5d0] sm:$0xff]
  %v224 = vld [vmem:[%s1 + $0x5d8] sm:$0xff]
  %v225 = vld [vmem:[%s1 + $0x5e0] sm:$0xff]
  %v226 = vld [vmem:[%s1 + $0x5e8] sm:$0xff]
  %v227 = vld [vmem:[%s1 + $0x5f0] sm:$0xff]
  %v228 = vld [vmem:[%s1 + $0x5f8] sm:$0xff]
  %v229 = vld [vmem:[%s1 + $0x600] sm:$0xff]
  %v230 = vld [vmem:[%s1 + $0x608] sm:$0xff]
  %v231 = vld [vmem:[%s1 + $0x610] sm:$0xff]
  %v232 = vld [vmem:[%s1 + $0x618] sm:$0xff]
  %v233 = vld [vmem:[%s1 + $0x620] sm:$0xff]
  %v234 = vld [vmem:[%s1 + $0x628] sm:$0xff]
  %v235 = vld [vmem:[%s1 + $0x630] sm:$0xff]
  %v236 = vld [vmem:[%s1 + $0x638] sm:$0xff]
  %v237 = vld [vmem:[%s1 + $0x640] sm:$0xff]
  %v238 = vld [vmem:[%s1 + $0x648] sm:$0xff]
  %v239 = vld [vmem:[%s1 + $0x650] sm:$0xff]
  %v240 = vld [vmem:[%s1 + $0x658] sm:$0xff]
  %v241 = vld [vmem:[%s1 + $0x660] sm:$0xff]
  %v242 = vld [vmem:[%s1 + $0x668] sm:$0xff]
  %v243 = vld [vmem:[%s1 + $0x670] sm:$0xff]
  %v244 = vld [vmem:[%s1 + $0x678] sm:$0xff]
  %v245 = vld [vmem:[%s1 + $0x680] sm:$0xff]
  %v246 = vld [vmem:[%s1 + $0x688] sm:$0xff]
  %v247 = vld [vmem:[%s1 + $0x690] sm:$0xff]
  %v248 = vld [vmem:[%s1 + $0x698] sm:$0xff]
  %v249 = vld [vmem:[%s1 + $0x6a0] sm:$0xff]
  %v250 = vld [vmem:[%s1 + $0x6a8] sm:$0xff]
  %v251 = vld [vmem:[%s1 + $0x6b0] sm:$0xff]
  %v252 = vld [vmem:[%s1 + $0x6b8] sm:$0xff]
  %v253 = vld [vmem:[%s1 + $0x6c0] sm:$0xff]
  %v254 = vld [vmem:[%s1 + $0x6c8] sm:$0xff]
  %v255 = vld [vmem:[%s1 + $0x6d0] sm:$0xff]
  %v256 = vld [vmem:[%s1 + $0x6d8] sm:$0xff]
  %v257 = vld [vmem:[%s1 + $0x6e0] sm:$0xff]
  %v258 = vld [vmem:[%s1 + $0x6e8] sm:$0xff]
  %v259 = vld [vmem:[%s1 + $0x6f0] sm:$0xff]
  %v260 = vld [vmem:[%s1 + $0x6f8] sm:$0xff]
  %v261 = vld [vmem:[%s1 + $0x700] sm:$0xff]
  %v262 = vld [vmem:[%s1 + $0x708] sm:$0xff]
  %v263 = vld [vmem:[%s1 + $0x710] sm:$0xff]
  %v264 = vld [vmem:[%s1 + $0x718] sm:$0xff]
  %v265 = vld [vmem:[%s1 + $0x720] sm:$0xff]
  %v266 = vld [vmem:[%s1 + $0x728] sm:$0xff]
  %v267 = vld [vmem:[%s1 + $0x730] sm:$0xff]
  %v268 = vld [vmem:[%s1 + $0x738] sm:$0xff]
  %v269 = vld [vmem:[%s1 + $0x740] sm:$0xff]
  %v270 = vld [vmem:[%s1 + $0x748] sm:$0xff]
  %v271 = vld [vmem:[%s1 + $0x750] sm:$0xff]
  %v272 = vld [vmem:[%s1 + $0x758] sm:$0xff]
  %v273 = vld [vmem:[%s1 + $0x760] sm:$0xff]
  %v274 = vld [vmem:[%s1 + $0x768] sm:$0xff]
  %v275 = vld [vmem:[%s1 + $0x770] sm:$0xff]
  %v276 = vld [vmem:[%s1 + $0x778] sm:$0xff]
  %v277 = vld [vmem:[%s1 + $0x780] sm:$0xff]
  %v278 = vld [vmem:[%s1 + $0x788] sm:$0xff]
  %v279 = vld [vmem:[%s1 + $0x790] sm:$0xff]
  %v280 = vld [vmem:[%s1 + $0x798] sm:$0xff]
  %v281 = vld [vmem:[%s1 + $0x7a0] sm:$0xff]
  %v282 = vld [vmem:[%s1 + $0x7a8] sm:$0xff]
  %v283 = vld [vmem:[%s1 + $0x7b0] sm:$0xff]
  %v284 = vld [vmem:[%s1 + $0x7b8] sm:$0xff]
  %v285 = vld [vmem:[%s1 + $0x7c0] sm:$0xff]
  %v286 = vld [vmem:[%s1 + $0x7c8] sm:$0xff]
  %v287 = vld [vmem:[%s1 + $0x7d0] sm:$0xff]
  %v288 = vld [vmem:[%s1 + $0x7d8] sm:$0xff]
  %v289 = vld [vmem:[%s1 + $0x7e0] sm:$0xff]
  %v290 = vld [vmem:[%s1 + $0x7e8] sm:$0xff]
  %v291 = vld [vmem:[%s1 + $0x7f0] sm:$0xff]
  %v292 = vld [vmem:[%s1 + $0x7f8] sm:$0xff]
  %v293 = vld [vmem:[%s1 + $0x800] sm:$0xff]
  %v294 = vld [vmem:[%s1 + $0x808] sm:$0xff]
  %v295 = vld [vmem:[%s1 + $0x810] sm:$0xff]
  %v296 = vld [vmem:[%s1 + $0x818] sm:$0xff]
  %v297 = vld [vmem:[%s1 + $0x820] sm:$0xff]
  %v298 = vld [vmem:[%s1 + $0x828] sm:$0xff]
  %v299 = vld [vmem:[%s1 + $0x830] sm:$0xff]
  %v300 = vld [vmem:[%s1 + $0x838] sm:$0xff]
  %v301 = vld [vmem:[%s1 + $0x840] sm:$0xff]
  %v302 = vld [vmem:[%s1 + $0x848] sm:$0xff]
  %v303 = vld [vmem:[%s1 + $0x850] sm:$0xff]
  %v304 = vld [vmem:[%s1 + $0x858] sm:$0xff]
  %v305 = vld [vmem:[%s1 + $0x860] sm:$0xff]
  %v306 = vld [vmem:[%s1 + $0x868] sm:$0xff]
  %v307 = vld [vmem:[%s1 + $0x870] sm:$0xff]
  %v308 = vld [vmem:[%s1 + $0x878] sm:$0xff]
  %v309 = vld [vmem:[%s1 + $0x880] sm:$0xff]
  %v310 = vld [vmem:[%s1 + $0x888] sm:$0xff]
  %v311 = vld [vmem:[%s1 + $0x890] sm:$0xff]
  %v312 = vld [vmem:[%s1 + $0x898] sm:$0xff]
  %v313 = vld [vmem:[%s1 + $0x8a0] sm:$0xff]
  %v314 = vld [vmem:[%s1 + $0x8a8] sm:$0xff]
  %v315 = vld [vmem:[%s1 + $0x8b0] sm:$0xff]
  %v316 = vld [vmem:[%s1 + $0x8b8] sm:$0xff]
  %v317 = vld [vmem:[%s1 + $0x8c0] sm:$0xff]
  %v318 = vld [vmem:[%s1 + $0x8c8] sm:$0xff]
  %v319 = vld [vmem:[%s1 + $0x8d0] sm:$0xff]
  %v320 = vld [vmem:[%s1 + $0x8d8] sm:$0xff]
  %v321 = vld [vmem:[%s1 + $0x8e0] sm:$0xff]
  %v322 = vld [vmem:[%s1 + $0x8e8] sm:$0xff]
  %v323 = vld [vmem:[%s1 + $0x8f0] sm:$0xff]
  %v324 = vld [vmem:[%s1 + $0x8f8] sm:$0xff]
  %v325 = vld [vmem:[%s1 + $0x900] sm:$0xff]
  %v326 = vld [vmem:[%s1 + $0x908] sm:$0xff]
  %v327 = vld [vmem:[%s1 + $0x910] sm:$0xff]
  %v328 = vld [vmem:[%s1 + $0x918] sm:$0xff]
  %v329 = vld [vmem:[%s1 + $0x920] sm:$0xff]
  %v330 = vld [vmem:[%s1 + $0x928] sm:$0xff]
  %v331 = vld [vmem:[%s1 + $0x930] sm:$0xff]
  %v332 = vld [vmem:[%s1 + $0x938] sm:$0xff]
  %v333 = vld [vmem:[%s1 + $0x940] sm:$0xff]
  %v334 = vld [vmem:[%s1 + $0x948] sm:$0xff]
  %v335 = vld [vmem:[%s1 + $0x950] sm:$0xff]
  %v336 = vld [vmem:[%s1 + $0x958] sm:$0xff]
  %v337 = vld [vmem:[%s1 + $0x960] sm:$0xff]
  %v338 = vld [vmem:[%s1 + $0x968] sm:$0xff]
  %v339 = vld [vmem:[%s1 + $0x970] sm:$0xff]
  %v340 = vld [vmem:[%s1 + $0x978] sm:$0xff]
  %v341 = vld [vmem:[%s1 + $0x980] sm:$0xff]
  %v342 = vld [vmem:[%s1 + $0x988] sm:$0xff]
  %v343 = vld [vmem:[%s1 + $0x990] sm:$0xff]
  %v344 = vld [vmem:[%s1 + $0x998] sm:$0xff]
  %v345 = vld [vmem:[%s1 + $0x9a0] sm:$0xff]
  %v346 = vld [vmem:[%s1 + $0x9a8] sm:$0xff]
  %v347 = vld [vmem:[%s1 + $0x9b0] sm:$0xff]
  %v348 = vld [vmem:[%s1 + $0x9b8] sm:$0xff]
  %v349 = vld [vmem:[%s1 + $0x9c0] sm:$0xff]
  %v350 = vld [vmem:[%s1 + $0x9c8] sm:$0xff]
  %v351 = vld [vmem:[%s1 + $0x9d0] sm:$0xff]
  %v352 = vld [vmem:[%s1 + $0x9d8] sm:$0xff]
  %v353 = vld [vmem:[%s1 + $0x9e0] sm:$0xff]
  %v354 = vld [vmem:[%s1 + $0x9e8] sm:$0xff]
  %v355 = vld [vmem:[%s1 + $0x9f0] sm:$0xff]
  %v356 = vld [vmem:[%s1 + $0x9f8] sm:$0xff]
  %v357 = vld [vmem:[%s1 + $0xa00] sm:$0xff]
  %v358 = vld [vmem:[%s1 + $0xa08] sm:$0xff]
  %v359 = vld [vmem:[%s1 + $0xa10] sm:$0xff]
  %v360 = vld [vmem:[%s1 + $0xa18] sm:$0xff]
  %v361 = vld [vmem:[%s1 + $0xa20] sm:$0xff]
  %v362 = vld [vmem:[%s1 + $0xa28] sm:$0xff]
  %v363 = vld [vmem:[%s1 + $0xa30] sm:$0xff]
  %v364 = vld [vmem:[%s1 + $0xa38] sm:$0xff]
  %v365 = vld [vmem:[%s1 + $0xa40] sm:$0xff]
  %v366 = vld [vmem:[%s1 + $0xa48] sm:$0xff]
  %v367 = vld [vmem:[%s1 + $0xa50] sm:$0xff]
  %v368 = vld [vmem:[%s1 + $0xa58] sm:$0xff]
  %v369 = vld [vmem:[%s1 + $0xa60] sm:$0xff]
  %v370 = vld [vmem:[%s1 + $0xa68] sm:$0xff]
  %v371 = vld [vmem:[%s1 + $0xa70] sm:$0xff]
  %v372 = vld [vmem:[%s1 + $0xa78] sm:$0xff]
  %v373 = vld [vmem:[%s1 + $0xa80] sm:$0xff]
  %v374 = vld [vmem:[%s1 + $0xa88] sm:$0xff]
  %v375 = vld [vmem:[%s1 + $0xa90] sm:$0xff]
  %v376 = vld [vmem:[%s1 + $0xa98] sm:$0xff]
  %v377 = vld [vmem:[%s1 + $0xaa0] sm:$0xff]
  %v378 = vld [vmem:[%s1 + $0xaa8] sm:$0xff]
  %v379 = vld [vmem:[%s1 + $0xab0] sm:$0xff]
  %v380 = vld [vmem:[%s1 + $0xab8] sm:$0xff]
  %v381 = vld [vmem:[%s1 + $0xac0] sm:$0xff]
  %v382 = vld [vmem:[%s1 + $0xac8] sm:$0xff]
  %v383 = vld [vmem:[%s1 + $0xad0] sm:$0xff]
  %v384 = vld [vmem:[%s1 + $0xad8] sm:$0xff]
  %v385 = vld [vmem:[%s1 + $0xae0] sm:$0xff]
  %v386 = vld [vmem:[%s1 + $0xae8] sm:$0xff]
  %v387 = vld [vmem:[%s1 + $0xaf0] sm:$0xff]
  %v388 = vld [vmem:[%s1 + $0xaf8] sm:$0xff]
  %v389 = vld [vmem:[%s1 + $0xb00] sm:$0xff]
  %v390 = vld [vmem:[%s1 + $0xb08] sm:$0xff]
  %v391 = vld [vmem:[%s1 + $0xb10] sm:$0xff]
  %v392 = vld [vmem:[%s1 + $0xb18] sm:$0xff]
  %v393 = vld [vmem:[%s1 + $0xb20] sm:$0xff]
  %v394 = vld [vmem:[%s1 + $0xb28] sm:$0xff]
  %v395 = vld [vmem:[%s1 + $0xb30] sm:$0xff]
  %v396 = vld [vmem:[%s1 + $0xb38] sm:$0xff]
  %v397 = vld [vmem:[%s1 + $0xb40] sm:$0xff]
  %v398 = vld [vmem:[%s1 + $0xb48] sm:$0xff]
  %v399 = vld [vmem:[%s1 + $0xb50] sm:$0xff]
  %v400 = vld [vmem:[%s1 + $0xb58] sm:$0xff]
  %v401 = vld [vmem:[%s1 + $0xb60] sm:$0xff]
  %v402 = vld [vmem:[%s1 + $0xb68] sm:$0xff]
  %v403 = vld [vmem:[%s1 + $0xb70] sm:$0xff]
  %v404 = vld [vmem:[%s1 + $0xb78] sm:$0xff]
  %v405 = vld [vmem:[%s1 + $0xb80] sm:$0xff]
  %v406 = vld [vmem:[%s1 + $0xb88] sm:$0xff]
  %v407 = vld [vmem:[%s1 + $0xb90] sm:$0xff]
  %v408 = vld [vmem:[%s1 + $0xb98] sm:$0xff]
  %v409 = vld [vmem:[%s1 + $0xba0] sm:$0xff]
  %v410 = vld [vmem:[%s1 + $0xba8] sm:$0xff]
  %v411 = vld [vmem:[%s1 + $0xbb0] sm:$0xff]
  %v412 = vld [vmem:[%s1 + $0xbb8] sm:$0xff]
  %v413 = vld [vmem:[%s1 + $0xbc0] sm:$0xff]
  %v414 = vld [vmem:[%s1 + $0xbc8] sm:$0xff]
  %v415 = vld [vmem:[%s1 + $0xbd0] sm:$0xff]
  %v416 = vld [vmem:[%s1 + $0xbd8] sm:$0xff]
  %v417 = vld [vmem:[%s1 + $0xbe0] sm:$0xff]
  %v418 = vld [vmem:[%s1 + $0xbe8] sm:$0xff]
  %v419 = vld [vmem:[%s1 + $0xbf0] sm:$0xff]
  %v420 = vld [vmem:[%s1 + $0xbf8] sm:$0xff]
  %v421 = vld [vmem:[%s1 + $0xc00] sm:$0xff]
  %v422 = vld [vmem:[%s1 + $0xc08] sm:$0xff]
  %v423 = vld [vmem:[%s1 + $0xc10] sm:$0xff]
  %v424 = vld [vmem:[%s1 + $0xc18] sm:$0xff]
  %v425 = vld [vmem:[%s1 + $0xc20] sm:$0xff]
  %v426 = vld [vmem:[%s1 + $0xc28] sm:$0xff]
  %v427 = vld [vmem:[%s1 + $0xc30] sm:$0xff]
  %v428 = vld [vmem:[%s1 + $0xc38] sm:$0xff]
  %v429 = vld [vmem:[%s1 + $0xc40] sm:$0xff]
  %v430 = vld [vmem:[%s1 + $0xc48] sm:$0xff]
  %v431 = vld [vmem:[%s1 + $0xc50] sm:$0xff]
  %v432 = vld [vmem:[%s1 + $0xc58] sm:$0xff]
  %v433 = vld [vmem:[%s1 + $0xc60] sm:$0xff]
  %v434 = vld [vmem:[%s1 + $0xc68] sm:$0xff]
  %v435 = vld [vmem:[%s1 + $0xc70] sm:$0xff]
  %v436 = vld [vmem:[%s1 + $0xc78] sm:$0xff]
  %v437 = vld [vmem:[%s1 + $0xc80] sm:$0xff]
  %v438 = vld [vmem:[%s1 + $0xc88] sm:$0xff]
  %v439 = vld [vmem:[%s1 + $0xc90] sm:$0xff]
  %v440 = vld [vmem:[%s1 + $0xc98] sm:$0xff]
  %v441 = vld [vmem:[%s1 + $0xca0] sm:$0xff]
  %v442 = vld [vmem:[%s1 + $0xca8] sm:$0xff]
  %v443 = vld [vmem:[%s1 + $0xcb0] sm:$0xff]
  %v444 = vld [vmem:[%s1 + $0xcb8] sm:$0xff]
  %v445 = vld [vmem:[%s1 + $0xcc0] sm:$0xff]
  %v446 = vld [vmem:[%s1 + $0xcc8] sm:$0xff]
  %v447 = vld [vmem:[%s1 + $0xcd0] sm:$0xff]
  %v448 = vld [vmem:[%s1 + $0xcd8] sm:$0xff]
  %v449 = vld [vmem:[%s1 + $0xce0] sm:$0xff]
  %v450 = vld [vmem:[%s1 + $0xce8] sm:$0xff]
  %v451 = vld [vmem:[%s1 + $0xcf0] sm:$0xff]
  %v452 = vld [vmem:[%s1 + $0xcf8] sm:$0xff]
  %v453 = vld [vmem:[%s1 + $0xd00] sm:$0xff]
  %v454 = vld [vmem:[%s1 + $0xd08] sm:$0xff]
  %v455 = vld [vmem:[%s1 + $0xd10] sm:$0xff]
  %v456 = vld [vmem:[%s1 + $0xd18] sm:$0xff]
  %v457 = vld [vmem:[%s1 + $0xd20] sm:$0xff]
  %v458 = vld [vmem:[%s1 + $0xd28] sm:$0xff]
  %v459 = vld [vmem:[%s1 + $0xd30] sm:$0xff]
  %v460 = vld [vmem:[%s1 + $0xd38] sm:$0xff]
  %v461 = vld [vmem:[%s1 + $0xd40] sm:$0xff]
  %v462 = vld [vmem:[%s1 + $0xd48] sm:$0xff]
  %v463 = vld [vmem:[%s1 + $0xd50] sm:$0xff]
  %v464 = vld [vmem:[%s1 + $0xd58] sm:$0xff]
  %v465 = vld [vmem:[%s1 + $0xd60] sm:$0xff]
  %v466 = vld [vmem:[%s1 + $0xd68] sm:$0xff]
  %v467 = vld [vmem:[%s1 + $0xd70] sm:$0xff]
  %v468 = vld [vmem:[%s1 + $0xd78] sm:$0xff]
  %v469 = vld [vmem:[%s1 + $0xd80] sm:$0xff]
  %v470 = vld [vmem:[%s1 + $0xd88] sm:$0xff]
  %v471 = vld [vmem:[%s1 + $0xd90] sm:$0xff]
  %v472 = vld [vmem:[%s1 + $0xd98] sm:$0xff]
  %v473 = vld [vmem:[%s1 + $0xda0] sm:$0xff]
  %v474 = vld [vmem:[%s1 + $0xda8] sm:$0xff]
  %v475 = vld [vmem:[%s1 + $0xdb0] sm:$0xff]
  %v476 = vld [vmem:[%s1 + $0xdb8] sm:$0xff]
  %v477 = vld [vmem:[%s1 + $0xdc0] sm:$0xff]
  %v478 = vld [vmem:[%s1 + $0xdc8] sm:$0xff]
  %v479 = vld [vmem:[%s1 + $0xdd0] sm:$0xff]
  %v480 = vld [vmem:[%s1 + $0xdd8] sm:$0xff]
  %v481 = vld [vmem:[%s1 + $0xde0] sm:$0xff]
  %v482 = vld [vmem:[%s1 + $0xde8] sm:$0xff]
  %v483 = vld [vmem:[%s1 + $0xdf0] sm:$0xff]
  %v484 = vld [vmem:[%s1 + $0xdf8] sm:$0xff]
  %v485 = vld [vmem:[%s1 + $0xe00] sm:$0xff]
  %v486 = vld [vmem:[%s1 + $0xe08] sm:$0xff]
  %v487 = vld [vmem:[%s1 + $0xe10] sm:$0xff]
  %v488 = vld [vmem:[%s1 + $0xe18] sm:$0xff]
  %v489 = vld [vmem:[%s1 + $0xe20] sm:$0xff]
  %v490 = vld [vmem:[%s1 + $0xe28] sm:$0xff]
  %v491 = vld [vmem:[%s1 + $0xe30] sm:$0xff]
  %v492 = vld [vmem:[%s1 + $0xe38] sm:$0xff]
  %v493 = vld [vmem:[%s1 + $0xe40] sm:$0xff]
  %v494 = vld [vmem:[%s1 + $0xe48] sm:$0xff]
  %v495 = vld [vmem:[%s1 + $0xe50] sm:$0xff]
  %v496 = vld [vmem:[%s1 + $0xe58] sm:$0xff]
  %v497 = vld [vmem:[%s1 + $0xe60] sm:$0xff]
  %v498 = vld [vmem:[%s1 + $0xe68] sm:$0xff]
  %v499 = vld [vmem:[%s1 + $0xe70] sm:$0xff]
  %v500 = vld [vmem:[%s1 + $0xe78] sm:$0xff]
  %v501 = vld [vmem:[%s1 + $0xe80] sm:$0xff]
  %v502 = vld [vmem:[%s1 + $0xe88] sm:$0xff]
  %v503 = vld [vmem:[%s1 + $0xe90] sm:$0xff]
  %v504 = vld [vmem:[%s1 + $0xe98] sm:$0xff]
  %v505 = vld [vmem:[%s1 + $0xea0] sm:$0xff]
  %v506 = vld [vmem:[%s1 + $0xea8] sm:$0xff]
  %v507 = vld [vmem:[%s1 + $0xeb0] sm:$0xff]
  %v508 = vld [vmem:[%s1 + $0xeb8] sm:$0xff]
  %v509 = vld [vmem:[%s1 + $0xec0] sm:$0xff]
  %v510 = vld [vmem:[%s1 + $0xec8] sm:$0xff]
  %v511 = vld [vmem:[%s1 + $0xed0] sm:$0xff]
  %v512 = vld [vmem:[%s1 + $0xed8] sm:$0xff]
  %v513 = vld [vmem:[%s1 + $0xee0] sm:$0xff]
  %v514 = vld [vmem:[%s1 + $0xee8] sm:$0xff]
  %v515 = vld [vmem:[%s1 + $0xef0] sm:$0xff]
  %v516 = vld [vmem:[%s1 + $0xef8] sm:$0xff]
  %v517 = vld [vmem:[%s1 + $0xf00] sm:$0xff]
  %v518 = vld [vmem:[%s1 + $0xf08] sm:$0xff]
  %v519 = vld [vmem:[%s1 + $0xf10] sm:$0xff]
  %v520 = vld [vmem:[%s1 + $0xf18] sm:$0xff]
  %v521 = vld [vmem:[%s1 + $0xf20] sm:$0xff]
  %v522 = vld [vmem:[%s1 + $0xf28] sm:$0xff]
  %v523 = vld [vmem:[%s1 + $0xf30] sm:$0xff]
  %v524 = vld [vmem:[%s1 + $0xf38] sm:$0xff]
  %v525 = vld [vmem:[%s1 + $0xf40] sm:$0xff]
  %v526 = vld [vmem:[%s1 + $0xf48] sm:$0xff]
  %v527 = vld [vmem:[%s1 + $0xf50] sm:$0xff]
  %v528 = vld [vmem:[%s1 + $0xf58] sm:$0xff]
  %v529 = vld [vmem:[%s1 + $0xf60] sm:$0xff]
  %v530 = vld [vmem:[%s1 + $0xf68] sm:$0xff]
  %v531 = vld [vmem:[%s1 + $0xf70] sm:$0xff]
  %v532 = vld [vmem:[%s1 + $0xf78] sm:$0xff]
  %v533 = vld [vmem:[%s1 + $0xf80] sm:$0xff]
  %v534 = vld [vmem:[%s1 + $0xf88] sm:$0xff]
  %v535 = vld [vmem:[%s1 + $0xf90] sm:$0xff]
  %v536 = vld [vmem:[%s1 + $0xf98] sm:$0xff]
  %v537 = vld [vmem:[%s1 + $0xfa0] sm:$0xff]
  %v538 = vld [vmem:[%s1 + $0xfa8] sm:$0xff]
  %v539 = vld [vmem:[%s1 + $0xfb0] sm:$0xff]
  %v540 = vld [vmem:[%s1 + $0xfb8] sm:$0xff]
  %v541 = vld [vmem:[%s1 + $0xfc0] sm:$0xff]
  %v542 = vld [vmem:[%s1 + $0xfc8] sm:$0xff]
  %v543 = vld [vmem:[%s1 + $0xfd0] sm:$0xff]
  %v544 = vld [vmem:[%s1 + $0xfd8] sm:$0xff]
  %v545 = vld [vmem:[%s1 + $0xfe0] sm:$0xff]
  %v546 = vld [vmem:[%s1 + $0xfe8] sm:$0xff]
  %v547 = vld [vmem:[%s1 + $0xff0] sm:$0xff]
  %v548 = vld [vmem:[%s1 + $0xff8] sm:$0xff]
  %v549 = vld [vmem:[%s1 + $0x1000] sm:$0xff]
  %v550 = vld [vmem:[%s1 + $0x1008] sm:$0xff]
  %v551 = vld [vmem:[%s1 + $0x1010] sm:$0xff]
  %v552 = vld [vmem:[%s1 + $0x1018] sm:$0xff]
  %v553 = vld [vmem:[%s1 + $0x1020] sm:$0xff]
  %v554 = vld [vmem:[%s1 + $0x1028] sm:$0xff]
  %v555 = vld [vmem:[%s1 + $0x1030] sm:$0xff]
  %v556 = vld [vmem:[%s1 + $0x1038] sm:$0xff]
  %v557 = vld [vmem:[%s1 + $0x1040] sm:$0xff]
  %v558 = vld [vmem:[%s1 + $0x1048] sm:$0xff]
  %v559 = vld [vmem:[%s1 + $0x1050] sm:$0xff]
  %v560 = vld [vmem:[%s1 + $0x1058] sm:$0xff]
  %v561 = vld [vmem:[%s1 + $0x1060] sm:$0xff]
  %v562 = vld [vmem:[%s1 + $0x1068] sm:$0xff]
  %v563 = vld [vmem:[%s1 + $0x1070] sm:$0xff]
  %v564 = vld [vmem:[%s1 + $0x1078] sm:$0xff]
  %v565 = vld [vmem:[%s1 + $0x1080] sm:$0xff]
  %v566 = vld [vmem:[%s1 + $0x1088] sm:$0xff]
  %v567 = vld [vmem:[%s1 + $0x1090] sm:$0xff]
  %v568 = vld [vmem:[%s1 + $0x1098] sm:$0xff]
  %v569 = vld [vmem:[%s1 + $0x10a0] sm:$0xff]
  %v570 = vld [vmem:[%s1 + $0x10a8] sm:$0xff]
  %v571 = vld [vmem:[%s1 + $0x10b0] sm:$0xff]
  %v572 = vld [vmem:[%s1 + $0x10b8] sm:$0xff]
  %v573 = vld [vmem:[%s1 + $0x10c0] sm:$0xff]
  %v574 = vld [vmem:[%s1 + $0x10c8] sm:$0xff]
  %v575 = vld [vmem:[%s1 + $0x10d0] sm:$0xff]
  %v576 = vld [vmem:[%s1 + $0x10d8] sm:$0xff]
  %v577 = vld [vmem:[%s1 + $0x10e0] sm:$0xff]
  %v578 = vld [vmem:[%s1 + $0x10e8] sm:$0xff]
  %v579 = vld [vmem:[%s1 + $0x10f0] sm:$0xff]
  %v580 = vld [vmem:[%s1 + $0x10f8] sm:$0xff]
  %v581 = vld [vmem:[%s1 + $0x1100] sm:$0xff]
  %v582 = vld [vmem:[%s1 + $0x1108] sm:$0xff]
  %v583 = vld [vmem:[%s1 + $0x1110] sm:$0xff]
  %v584 = vld [vmem:[%s1 + $0x1118] sm:$0xff]
  %v585 = vld [vmem:[%s1 + $0x1120] sm:$0xff]
  %v586 = vld [vmem:[%s1 + $0x1128] sm:$0xff]
  %v587 = vld [vmem:[%s1 + $0x1130] sm:$0xff]
  %v588 = vld [vmem:[%s1 + $0x1138] sm:$0xff]
  %v589 = vld [vmem:[%s1 + $0x1140] sm:$0xff]
  %v590 = vld [vmem:[%s1 + $0x1148] sm:$0xff]
  %v591 = vld [vmem:[%s1 + $0x1150] sm:$0xff]
  %v592 = vld [vmem:[%s1 + $0x1158] sm:$0xff]
  %v593 = vld [vmem:[%s1 + $0x1160] sm:$0xff]
  %v594 = vld [vmem:[%s1 + $0x1168] sm:$0xff]
  %v595 = vld [vmem:[%s1 + $0x1170] sm:$0xff]
  %v596 = vld [vmem:[%s1 + $0x1178] sm:$0xff]
  %v597 = vld [vmem:[%s1 + $0x1180] sm:$0xff]
  %v598 = vld [vmem:[%s1 + $0x1188] sm:$0xff]
  %v599 = vld [vmem:[%s1 + $0x1190] sm:$0xff]
  %v600 = vld [vmem:[%s1 + $0x1198] sm:$0xff]
  %v601 = vld [vmem:[%s1 + $0x11a0] sm:$0xff]
  %v602 = vld [vmem:[%s1 + $0x11a8] sm:$0xff]
  %v603 = vld [vmem:[%s1 + $0x11b0] sm:$0xff]
  %v604 = vld [vmem:[%s1 + $0x11b8] sm:$0xff]
  %v605 = vld [vmem:[%s1 + $0x11c0] sm:$0xff]
  %v606 = vld [vmem:[%s1 + $0x11c8] sm:$0xff]
  %v607 = vld [vmem:[%s1 + $0x11d0] sm:$0xff]
  %v608 = vld [vmem:[%s1 + $0x11d8] sm:$0xff]
  %v609 = vld [vmem:[%s1 + $0x11e0] sm:$0xff]
  %v610 = vld [vmem:[%s1 + $0x11e8] sm:$0xff]
  %v611 = vld [vmem:[%s1 + $0x11f0] sm:$0xff]
  %v612 = vld [vmem:[%s1 + $0x11f8] sm:$0xff]
  %v613 = vld [vmem:[%s1 + $0x1200] sm:$0xff]
  %v614 = vld [vmem:[%s1 + $0x1208] sm:$0xff]
  %v615 = vld [vmem:[%s1 + $0x1210] sm:$0xff]
  %v616 = vld [vmem:[%s1 + $0x1218] sm:$0xff]
  %v617 = vld [vmem:[%s1 + $0x1220] sm:$0xff]
  %v618 = vld [vmem:[%s1 + $0x1228] sm:$0xff]
  %v619 = vld [vmem:[%s1 + $0x1230] sm:$0xff]
  %v620 = vld [vmem:[%s1 + $0x1238] sm:$0xff]
  %v621 = vld [vmem:[%s1 + $0x1240] sm:$0xff]
  %v622 = vld [vmem:[%s1 + $0x1248] sm:$0xff]
  %v623 = vld [vmem:[%s1 + $0x1250] sm:$0xff]
  %v624 = vld [vmem:[%s1 + $0x1258] sm:$0xff]
  %v625 = vld [vmem:[%s1 + $0x1260] sm:$0xff]
  %v626 = vld [vmem:[%s1 + $0x1268] sm:$0xff]
  %v627 = vld [vmem:[%s1 + $0x1270] sm:$0xff]
  %v628 = vld [vmem:[%s1 + $0x1278] sm:$0xff]
  %v629 = vld [vmem:[%s1 + $0x1280] sm:$0xff]
  %v630 = vld [vmem:[%s1 + $0x1288] sm:$0xff]
  %v631 = vld [vmem:[%s1 + $0x1290] sm:$0xff]
  %v632 = vld [vmem:[%s1 + $0x1298] sm:$0xff]
  %v633 = vld [vmem:[%s1 + $0x12a0] sm:$0xff]
  %v634 = vld [vmem:[%s1 + $0x12a8] sm:$0xff]
  %v635 = vld [vmem:[%s1 + $0x12b0] sm:$0xff]
  %v636 = vld [vmem:[%s1 + $0x12b8] sm:$0xff]
  %v637 = vld [vmem:[%s1 + $0x12c0] sm:$0xff]
  %v638 = vld [vmem:[%s1 + $0x12c8] sm:$0xff]
  %v639 = vld [vmem:[%s1 + $0x12d0] sm:$0xff]
  %v640 = vld [vmem:[%s1 + $0x12d8] sm:$0xff]
  %v641 = vld [vmem:[%s1 + $0x12e0] sm:$0xff]
  %v642 = vld [vmem:[%s1 + $0x12e8] sm:$0xff]
  %v643 = vld [vmem:[%s1 + $0x12f0] sm:$0xff]
  %v644 = vld [vmem:[%s1 + $0x12f8] sm:$0xff]
  %v645 = vld [vmem:[%s1 + $0x1300] sm:$0xff]
  %v646 = vld [vmem:[%s1 + $0x1308] sm:$0xff]
  %v647 = vld [vmem:[%s1 + $0x1310] sm:$0xff]
  %v648 = vld [vmem:[%s1 + $0x1318] sm:$0xff]
  %v649 = vld [vmem:[%s1 + $0x1320] sm:$0xff]
  %v650 = vld [vmem:[%s1 + $0x1328] sm:$0xff]
  %v651 = vld [vmem:[%s1 + $0x1330] sm:$0xff]
  %v652 = vld [vmem:[%s1 + $0x1338] sm:$0xff]
  %v653 = vld [vmem:[%s1 + $0x1340] sm:$0xff]
  %v654 = vld [vmem:[%s1 + $0x1348] sm:$0xff]
  %v655 = vld [vmem:[%s1 + $0x1350] sm:$0xff]
  %v656 = vld [vmem:[%s1 + $0x1358] sm:$0xff]
  %v657 = vld [vmem:[%s1 + $0x1360] sm:$0xff]
  %v658 = vld [vmem:[%s1 + $0x1368] sm:$0xff]
  %v659 = vld [vmem:[%s1 + $0x1370] sm:$0xff]
  %v660 = vld [vmem:[%s1 + $0x1378] sm:$0xff]
  %v661 = vld [vmem:[%s1 + $0x1380] sm:$0xff]
  %v662 = vld [vmem:[%s1 + $0x1388] sm:$0xff]
  %v663 = vld [vmem:[%s1 + $0x1390] sm:$0xff]
  %v664 = vld [vmem:[%s1 + $0x1398] sm:$0xff]
  %v665 = vld [vmem:[%s1 + $0x13a0] sm:$0xff]
  %v666 = vld [vmem:[%s1 + $0x13a8] sm:$0xff]
  %v667 = vld [vmem:[%s1 + $0x13b0] sm:$0xff]
  %v668 = vld [vmem:[%s1 + $0x13b8] sm:$0xff]
  %v669 = vld [vmem:[%s1 + $0x13c0] sm:$0xff]
  %v670 = vld [vmem:[%s1 + $0x13c8] sm:$0xff]
  %v671 = vld [vmem:[%s1 + $0x13d0] sm:$0xff]
  %v672 = vld [vmem:[%s1 + $0x13d8] sm:$0xff]
  %v673 = vld [vmem:[%s1 + $0x13e0] sm:$0xff]
  %v674 = vld [vmem:[%s1 + $0x13e8] sm:$0xff]
  %v675 = vld [vmem:[%s1 + $0x13f0] sm:$0xff]
  %v676 = vld [vmem:[%s1 + $0x13f8] sm:$0xff]
  %v677 = vld [vmem:[%s1 + $0x1400] sm:$0xff]
  %v678 = vld [vmem:[%s1 + $0x1408] sm:$0xff]
  %v679 = vld [vmem:[%s1 + $0x1410] sm:$0xff]
  %v680 = vld [vmem:[%s1 + $0x1418] sm:$0xff]
  %v681 = vld [vmem:[%s1 + $0x1420] sm:$0xff]
  %v682 = vld [vmem:[%s1 + $0x1428] sm:$0xff]
  %v683 = vld [vmem:[%s1 + $0x1430] sm:$0xff]
  %v684 = vld [vmem:[%s1 + $0x1438] sm:$0xff]
  %v685 = vld [vmem:[%s1 + $0x1440] sm:$0xff]
  %v686 = vld [vmem:[%s1 + $0x1448] sm:$0xff]
  %v687 = vld [vmem:[%s1 + $0x1450] sm:$0xff]
  %v688 = vld [vmem:[%s1 + $0x1458] sm:$0xff]
  %v689 = vld [vmem:[%s1 + $0x1460] sm:$0xff]
  %v690 = vld [vmem:[%s1 + $0x1468] sm:$0xff]
  %v691 = vld [vmem:[%s1 + $0x1470] sm:$0xff]
  %v692 = vld [vmem:[%s1 + $0x1478] sm:$0xff]
  %v693 = vld [vmem:[%s1 + $0x1480] sm:$0xff]
  %v694 = vld [vmem:[%s1 + $0x1488] sm:$0xff]
  %v695 = vld [vmem:[%s1 + $0x1490] sm:$0xff]
  %v696 = vld [vmem:[%s1 + $0x1498] sm:$0xff]
  %v697 = vld [vmem:[%s1 + $0x14a0] sm:$0xff]
  %v698 = vld [vmem:[%s1 + $0x14a8] sm:$0xff]
  %v699 = vld [vmem:[%s1 + $0x14b0] sm:$0xff]
  %v700 = vld [vmem:[%s1 + $0x14b8] sm:$0xff]
  %v701 = vld [vmem:[%s1 + $0x14c0] sm:$0xff]
  %v702 = vld [vmem:[%s1 + $0x14c8] sm:$0xff]
  %v703 = vld [vmem:[%s1 + $0x14d0] sm:$0xff]
  %v704 = vld [vmem:[%s1 + $0x14d8] sm:$0xff]
  %v705 = vld [vmem:[%s1 + $0x14e0] sm:$0xff]
  %v706 = vld [vmem:[%s1 + $0x14e8] sm:$0xff]
  %v707 = vld [vmem:[%s1 + $0x14f0] sm:$0xff]
  %v708 = vld [vmem:[%s1 + $0x14f8] sm:$0xff]
  %v709 = vld [vmem:[%s1 + $0x1500] sm:$0xff]
  %v710 = vld [vmem:[%s1 + $0x1508] sm:$0xff]
  %v711 = vld [vmem:[%s1 + $0x1510] sm:$0xff]
  %v712 = vld [vmem:[%s1 + $0x1518] sm:$0xff]
  %v713 = vld [vmem:[%s1 + $0x1520] sm:$0xff]
  %v714 = vld [vmem:[%s1 + $0x1528] sm:$0xff]
  %v715 = vld [vmem:[%s1 + $0x1530] sm:$0xff]
  %v716 = vld [vmem:[%s1 + $0x1538] sm:$0xff]
  %v717 = vld [vmem:[%s1 + $0x1540] sm:$0xff]
  %v718 = vld [vmem:[%s1 + $0x1548] sm:$0xff]
  %v719 = vld [vmem:[%s1 + $0x1550] sm:$0xff]
  %v720 = vld [vmem:[%s1 + $0x1558] sm:$0xff]
  %v721 = vld [vmem:[%s1 + $0x1560] sm:$0xff]
  %v722 = vld [vmem:[%s1 + $0x1568] sm:$0xff]
  %v723 = vld [vmem:[%s1 + $0x1570] sm:$0xff]
  %v724 = vld [vmem:[%s1 + $0x1578] sm:$0xff]
  %v725 = vld [vmem:[%s1 + $0x1580] sm:$0xff]
  %v726 = vld [vmem:[%s1 + $0x1588] sm:$0xff]
  %v727 = vld [vmem:[%s1 + $0x1590] sm:$0xff]
  %v728 = vld [vmem:[%s1 + $0x1598] sm:$0xff]
  %v729 = vld [vmem:[%s1 + $0x15a0] sm:$0xff]
  %v730 = vld [vmem:[%s1 + $0x15a8] sm:$0xff]
  %v731 = vld [vmem:[%s1 + $0x15b0] sm:$0xff]
  %v732 = vld [vmem:[%s1 + $0x15b8] sm:$0xff]
  %v733 = vld [vmem:[%s1 + $0x15c0] sm:$0xff]
  %v734 = vld [vmem:[%s1 + $0x15c8] sm:$0xff]
  %v735 = vld [vmem:[%s1 + $0x15d0] sm:$0xff]
  %v736 = vld [vmem:[%s1 + $0x15d8] sm:$0xff]
  %v737 = vld [vmem:[%s1 + $0x15e0] sm:$0xff]
  %v738 = vld [vmem:[%s1 + $0x15e8] sm:$0xff]
  %v739 = vld [vmem:[%s1 + $0x15f0] sm:$0xff]
  %v740 = vld [vmem:[%s1 + $0x15f8] sm:$0xff]
  %v741 = vld [vmem:[%s1 + $0x1600] sm:$0xff]
  %v742 = vld [vmem:[%s1 + $0x1608] sm:$0xff]
  %v743 = vld [vmem:[%s1 + $0x1610] sm:$0xff]
  %v744 = vld [vmem:[%s1 + $0x1618] sm:$0xff]
  %v745 = vld [vmem:[%s1 + $0x1620] sm:$0xff]
  %v746 = vld [vmem:[%s1 + $0x1628] sm:$0xff]
  %v747 = vld [vmem:[%s1 + $0x1630] sm:$0xff]
  %v748 = vld [vmem:[%s1 + $0x1638] sm:$0xff]
  %v749 = vld [vmem:[%s1 + $0x1640] sm:$0xff]
  %v750 = vld [vmem:[%s1 + $0x1648] sm:$0xff]
  %v751 = vld [vmem:[%s1 + $0x1650] sm:$0xff]
  %v752 = vld [vmem:[%s1 + $0x1658] sm:$0xff]
  %v753 = vld [vmem:[%s1 + $0x1660] sm:$0xff]
  %v754 = vld [vmem:[%s1 + $0x1668] sm:$0xff]
  %v755 = vld [vmem:[%s1 + $0x1670] sm:$0xff]
  %v756 = vld [vmem:[%s1 + $0x1678] sm:$0xff]
  %v757 = vld [vmem:[%s1 + $0x1680] sm:$0xff]
  %v758 = vld [vmem:[%s1 + $0x1688] sm:$0xff]
  %v759 = vld [vmem:[%s1 + $0x1690] sm:$0xff]
  %v760 = vld [vmem:[%s1 + $0x1698] sm:$0xff]
  %v761 = vld [vmem:[%s1 + $0x16a0] sm:$0xff]
  %v762 = vld [vmem:[%s1 + $0x16a8] sm:$0xff]
  %v763 = vld [vmem:[%s1 + $0x16b0] sm:$0xff]
  %v764 = vld [vmem:[%s1 + $0x16b8] sm:$0xff]
  %v765 = vld [vmem:[%s1 + $0x16c0] sm:$0xff]
  %v766 = vld [vmem:[%s1 + $0x16c8] sm:$0xff]
  %v767 = vld [vmem:[%s1 + $0x16d0] sm:$0xff]
  %v768 = vld [vmem:[%s1 + $0x16d8] sm:$0xff]
  %v769 = vld [vmem:[%s1 + $0x16e0] sm:$0xff]
  %v770 = vld [vmem:[%s1 + $0x16e8] sm:$0xff]
  %v771 = vld [vmem:[%s1 + $0x16f0] sm:$0xff]
  %v772 = vld [vmem:[%s1 + $0x16f8] sm:$0xff]
  %v773 = vld [vmem:[%s1 + $0x1700] sm:$0xff]
  %v774 = vld [vmem:[%s1 + $0x1708] sm:$0xff]
  %v775 = vld [vmem:[%s1 + $0x1710] sm:$0xff]
  %v776 = vld [vmem:[%s1 + $0x1718] sm:$0xff]
  %v777 = vld [vmem:[%s1 + $0x1720] sm:$0xff]
  %v778 = vld [vmem:[%s1 + $0x1728] sm:$0xff]
  %v779 = vld [vmem:[%s1 + $0x1730] sm:$0xff]
  %v780 = vld [vmem:[%s1 + $0x1738] sm:$0xff]
  %v781 = vld [vmem:[%s1 + $0x1740] sm:$0xff]
  %v782 = vld [vmem:[%s1 + $0x1748] sm:$0xff]
  %v783 = vld [vmem:[%s1 + $0x1750] sm:$0xff]
  %v784 = vld [vmem:[%s1 + $0x1758] sm:$0xff]
  %v785 = vld [vmem:[%s1 + $0x1760] sm:$0xff]
  %v786 = vld [vmem:[%s1 + $0x1768] sm:$0xff]
  %v787 = vld [vmem:[%s1 + $0x1770] sm:$0xff]
  %v788 = vld [vmem:[%s1 + $0x1778] sm:$0xff]
  %v789 = vld [vmem:[%s1 + $0x1780] sm:$0xff]
  %v790 = vld [vmem:[%s1 + $0x1788] sm:$0xff]
  %v791 = vld [vmem:[%s1 + $0x1790] sm:$0xff]
  %v792 = vld [vmem:[%s1 + $0x1798] sm:$0xff]
  %v793 = vld [vmem:[%s1 + $0x17a0] sm:$0xff]
  %v794 = vld [vmem:[%s1 + $0x17a8] sm:$0xff]
  %v795 = vld [vmem:[%s1 + $0x17b0] sm:$0xff]
  %v796 = vld [vmem:[%s1 + $0x17b8] sm:$0xff]
  %v797 = vld [vmem:[%s1 + $0x17c0] sm:$0xff]
  %v798 = vld [vmem:[%s1 + $0x17c8] sm:$0xff]
  %v799 = vld [vmem:[%s1 + $0x17d0] sm:$0xff]
  %v800 = vld [vmem:[%s1 + $0x17d8] sm:$0xff]
  %v801 = vld [vmem:[%s1 + $0x17e0] sm:$0xff]
  %v802 = vld [vmem:[%s1 + $0x17e8] sm:$0xff]
  %v803 = vld [vmem:[%s1 + $0x17f0] sm:$0xff]
  %v804 = vld [vmem:[%s1 + $0x17f8] sm:$0xff]
  %v805 = vld [vmem:[%s1 + $0x1800] sm:$0xff]
  %v806 = vld [vmem:[%s1 + $0x1808] sm:$0xff]
  %v807 = vld [vmem:[%s1 + $0x1810] sm:$0xff]
  %v808 = vld [vmem:[%s1 + $0x1818] sm:$0xff]
  %v809 = vld [vmem:[%s1 + $0x1820] sm:$0xff]
  %v810 = vld [vmem:[%s1 + $0x1828] sm:$0xff]
  %v811 = vld [vmem:[%s1 + $0x1830] sm:$0xff]
  %v812 = vld [vmem:[%s1 + $0x1838] sm:$0xff]
  %v813 = vld [vmem:[%s1 + $0x1840] sm:$0xff]
  %v814 = vld [vmem:[%s1 + $0x1848] sm:$0xff]
  %v815 = vld [vmem:[%s1 + $0x1850] sm:$0xff]
  %v816 = vld [vmem:[%s1 + $0x1858] sm:$0xff]
  %v817 = vld [vmem:[%s1 + $0x1860] sm:$0xff]
  %v818 = vld [vmem:[%s1 + $0x1868] sm:$0xff]
  %v819 = vld [vmem:[%s1 + $0x1870] sm:$0xff]
  %v820 = vld [vmem:[%s1 + $0x1878] sm:$0xff]
  %v821 = vld [vmem:[%s1 + $0x1880] sm:$0xff]
  %v822 = vld [vmem:[%s1 + $0x1888] sm:$0xff]
  %v823 = vld [vmem:[%s1 + $0x1890] sm:$0xff]
  %v824 = vld [vmem:[%s1 + $0x1898] sm:$0xff]
  %v825 = vld [vmem:[%s1 + $0x18a0] sm:$0xff]
  %v826 = vld [vmem:[%s1 + $0x18a8] sm:$0xff]
  %v827 = vld [vmem:[%s1 + $0x18b0] sm:$0xff]
  %v828 = vld [vmem:[%s1 + $0x18b8] sm:$0xff]
  %v829 = vld [vmem:[%s1 + $0x18c0] sm:$0xff]
  %v830 = vld [vmem:[%s1 + $0x18c8] sm:$0xff]
  %v831 = vld [vmem:[%s1 + $0x18d0] sm:$0xff]
  %v832 = vld [vmem:[%s1 + $0x18d8] sm:$0xff]
  %v833 = vld [vmem:[%s1 + $0x18e0] sm:$0xff]
  %v834 = vld [vmem:[%s1 + $0x18e8] sm:$0xff]
  %v835 = vld [vmem:[%s1 + $0x18f0] sm:$0xff]
  %v836 = vld [vmem:[%s1 + $0x18f8] sm:$0xff]
  %v837 = vld [vmem:[%s1 + $0x1900] sm:$0xff]
  %v838 = vld [vmem:[%s1 + $0x1908] sm:$0xff]
  %v839 = vld [vmem:[%s1 + $0x1910] sm:$0xff]
  %v840 = vld [vmem:[%s1 + $0x1918] sm:$0xff]
  %v841 = vld [vmem:[%s1 + $0x1920] sm:$0xff]
  %v842 = vld [vmem:[%s1 + $0x1928] sm:$0xff]
  %v843 = vld [vmem:[%s1 + $0x1930] sm:$0xff]
  %v844 = vld [vmem:[%s1 + $0x1938] sm:$0xff]
  %v845 = vld [vmem:[%s1 + $0x1940] sm:$0xff]
  %v846 = vld [vmem:[%s1 + $0x1948] sm:$0xff]
  %v847 = vld [vmem:[%s1 + $0x1950] sm:$0xff]
  %v848 = vld [vmem:[%s1 + $0x1958] sm:$0xff]
  %v849 = vld [vmem:[%s1 + $0x1960] sm:$0xff]
  %v850 = vld [vmem:[%s1 + $0x1968] sm:$0xff]
  %v851 = vld [vmem:[%s1 + $0x1970] sm:$0xff]
  %v852 = vld [vmem:[%s1 + $0x1978] sm:$0xff]
  %v853 = vld [vmem:[%s1 + $0x1980] sm:$0xff]
  %v854 = vld [vmem:[%s1 + $0x1988] sm:$0xff]
  %v855 = vld [vmem:[%s1 + $0x1990] sm:$0xff]
  %v856 = vld [vmem:[%s1 + $0x1998] sm:$0xff]
  %v857 = vld [vmem:[%s1 + $0x19a0] sm:$0xff]
  %v858 = vld [vmem:[%s1 + $0x19a8] sm:$0xff]
  %v859 = vld [vmem:[%s1 + $0x19b0] sm:$0xff]
  %v860 = vld [vmem:[%s1 + $0x19b8] sm:$0xff]
  %v861 = vld [vmem:[%s1 + $0x19c0] sm:$0xff]
  %v862 = vld [vmem:[%s1 + $0x19c8] sm:$0xff]
  %v863 = vld [vmem:[%s1 + $0x19d0] sm:$0xff]
  %v864 = vld [vmem:[%s1 + $0x19d8] sm:$0xff]
  %v865 = vld [vmem:[%s1 + $0x19e0] sm:$0xff]
  %v866 = vld [vmem:[%s1 + $0x19e8] sm:$0xff]
  %v867 = vld [vmem:[%s1 + $0x19f0] sm:$0xff]
  %v868 = vld [vmem:[%s1 + $0x19f8] sm:$0xff]
  %v869 = vld [vmem:[%s1 + $0x1a00] sm:$0xff]
  %v870 = vld [vmem:[%s1 + $0x1a08] sm:$0xff]
  %v871 = vld [vmem:[%s1 + $0x1a10] sm:$0xff]
  %v872 = vld [vmem:[%s1 + $0x1a18] sm:$0xff]
  %v873 = vld [vmem:[%s1 + $0x1a20] sm:$0xff]
  %v874 = vld [vmem:[%s1 + $0x1a28] sm:$0xff]
  %v875 = vld [vmem:[%s1 + $0x1a30] sm:$0xff]
  %v876 = vld [vmem:[%s1 + $0x1a38] sm:$0xff]
  %v877 = vld [vmem:[%s1 + $0x1a40] sm:$0xff]
  %v878 = vld [vmem:[%s1 + $0x1a48] sm:$0xff]
  %v879 = vld [vmem:[%s1 + $0x1a50] sm:$0xff]
  %v880 = vld [vmem:[%s1 + $0x1a58] sm:$0xff]
  %v881 = vld [vmem:[%s1 + $0x1a60] sm:$0xff]
  %v882 = vld [vmem:[%s1 + $0x1a68] sm:$0xff]
  %v883 = vld [vmem:[%s1 + $0x1a70] sm:$0xff]
  %v884 = vld [vmem:[%s1 + $0x1a78] sm:$0xff]
  %v885 = vld [vmem:[%s1 + $0x1a80] sm:$0xff]
  %v886 = vld [vmem:[%s1 + $0x1a88] sm:$0xff]
  %v887 = vld [vmem:[%s1 + $0x1a90] sm:$0xff]
  %v888 = vld [vmem:[%s1 + $0x1a98] sm:$0xff]
  %v889 = vld [vmem:[%s1 + $0x1aa0] sm:$0xff]
  %v890 = vld [vmem:[%s1 + $0x1aa8] sm:$0xff]
  %v891 = vld [vmem:[%s1 + $0x1ab0] sm:$0xff]
  %v892 = vld [vmem:[%s1 + $0x1ab8] sm:$0xff]
  %v893 = vld [vmem:[%s1 + $0x1ac0] sm:$0xff]
  %v894 = vld [vmem:[%s1 + $0x1ac8] sm:$0xff]
  %v895 = vld [vmem:[%s1 + $0x1ad0] sm:$0xff]
  %v896 = vld [vmem:[%s1 + $0x1ad8] sm:$0xff]
  %v897 = vld [vmem:[%s1 + $0x1ae0] sm:$0xff]
  %v898 = vld [vmem:[%s1 + $0x1ae8] sm:$0xff]
  %v899 = vld [vmem:[%s1 + $0x1af0] sm:$0xff]
  %v900 = vld [vmem:[%s1 + $0x1af8] sm:$0xff]
  %v901 = vld [vmem:[%s1 + $0x1b00] sm:$0xff]
  %v902 = vld [vmem:[%s1 + $0x1b08] sm:$0xff]
  %v903 = vld [vmem:[%s1 + $0x1b10] sm:$0xff]
  %v904 = vld [vmem:[%s1 + $0x1b18] sm:$0xff]
  %v905 = vld [vmem:[%s1 + $0x1b20] sm:$0xff]
  %v906 = vld [vmem:[%s1 + $0x1b28] sm:$0xff]
  %v907 = vld [vmem:[%s1 + $0x1b30] sm:$0xff]
  %v908 = vld [vmem:[%s1 + $0x1b38] sm:$0xff]
  %v909 = vld [vmem:[%s1 + $0x1b40] sm:$0xff]
  %v910 = vld [vmem:[%s1 + $0x1b48] sm:$0xff]
  %v911 = vld [vmem:[%s1 + $0x1b50] sm:$0xff]
  %v912 = vld [vmem:[%s1 + $0x1b58] sm:$0xff]
  %v913 = vld [vmem:[%s1 + $0x1b60] sm:$0xff]
  %v914 = vld [vmem:[%s1 + $0x1b68] sm:$0xff]
  %v915 = vld [vmem:[%s1 + $0x1b70] sm:$0xff]
  %v916 = vld [vmem:[%s1 + $0x1b78] sm:$0xff]
  %v917 = vld [vmem:[%s1 + $0x1b80] sm:$0xff]
  %v918 = vld [vmem:[%s1 + $0x1b88] sm:$0xff]
  %v919 = vld [vmem:[%s1 + $0x1b90] sm:$0xff]
  %v920 = vld [vmem:[%s1 + $0x1b98] sm:$0xff]
  %v921 = vld [vmem:[%s1 + $0x1ba0] sm:$0xff]
  %v922 = vld [vmem:[%s1 + $0x1ba8] sm:$0xff]
  %v923 = vld [vmem:[%s1 + $0x1bb0] sm:$0xff]
  %v924 = vld [vmem:[%s1 + $0x1bb8] sm:$0xff]
  %v925 = vld [vmem:[%s1 + $0x1bc0] sm:$0xff]
  %v926 = vld [vmem:[%s1 + $0x1bc8] sm:$0xff]
  %v927 = vld [vmem:[%s1 + $0x1bd0] sm:$0xff]
  %v928 = vld [vmem:[%s1 + $0x1bd8] sm:$0xff]
  %v929 = vld [vmem:[%s1 + $0x1be0] sm:$0xff]
  %v930 = vld [vmem:[%s1 + $0x1be8] sm:$0xff]
  %v931 = vld [vmem:[%s1 + $0x1bf0] sm:$0xff]
  %v932 = vld [vmem:[%s1 + $0x1bf8] sm:$0xff]
  %v933 = vld [vmem:[%s1 + $0x1c00] sm:$0xff]
  %v934 = vld [vmem:[%s1 + $0x1c08] sm:$0xff]
  %v935 = vld [vmem:[%s1 + $0x1c10] sm:$0xff]
  %v936 = vld [vmem:[%s1 + $0x1c18] sm:$0xff]
  %v937 = vld [vmem:[%s1 + $0x1c20] sm:$0xff]
  %v938 = vld [vmem:[%s1 + $0x1c28] sm:$0xff]
  %v939 = vld [vmem:[%s1 + $0x1c30] sm:$0xff]
  %v940 = vld [vmem:[%s1 + $0x1c38] sm:$0xff]
  %v941 = vld [vmem:[%s1 + $0x1c40] sm:$0xff]
  %v942 = vld [vmem:[%s1 + $0x1c48] sm:$0xff]
  %v943 = vld [vmem:[%s1 + $0x1c50] sm:$0xff]
  %v944 = vld [vmem:[%s1 + $0x1c58] sm:$0xff]
  %v945 = vld [vmem:[%s1 + $0x1c60] sm:$0xff]
  %v946 = vld [vmem:[%s1 + $0x1c68] sm:$0xff]
  %v947 = vld [vmem:[%s1 + $0x1c70] sm:$0xff]
  %v948 = vld [vmem:[%s1 + $0x1c78] sm:$0xff]
  %v949 = vld [vmem:[%s1 + $0x1c80] sm:$0xff]
  %v950 = vld [vmem:[%s1 + $0x1c88] sm:$0xff]
  %v951 = vld [vmem:[%s1 + $0x1c90] sm:$0xff]
  %v952 = vld [vmem:[%s1 + $0x1c98] sm:$0xff]
  %v953 = vld [vmem:[%s1 + $0x1ca0] sm:$0xff]
  %v954 = vld [vmem:[%s1 + $0x1ca8] sm:$0xff]
  %v955 = vld [vmem:[%s1 + $0x1cb0] sm:$0xff]
  %v956 = vld [vmem:[%s1 + $0x1cb8] sm:$0xff]
  %v957 = vld [vmem:[%s1 + $0x1cc0] sm:$0xff]
  %v958 = vld [vmem:[%s1 + $0x1cc8] sm:$0xff]
  %v959 = vld [vmem:[%s1 + $0x1cd0] sm:$0xff]
  %v960 = vld [vmem:[%s1 + $0x1cd8] sm:$0xff]
  %v961 = vld [vmem:[%s1 + $0x1ce0] sm:$0xff]
  %v962 = vld [vmem:[%s1 + $0x1ce8] sm:$0xff]
  %v963 = vld [vmem:[%s1 + $0x1cf0] sm:$0xff]
  %v964 = vld [vmem:[%s1 + $0x1cf8] sm:$0xff]
  %v965 = vld [vmem:[%s1 + $0x1d00] sm:$0xff]
  %v966 = vld [vmem:[%s1 + $0x1d08] sm:$0xff]
  %v967 = vld [vmem:[%s1 + $0x1d10] sm:$0xff]
  %v968 = vld [vmem:[%s1 + $0x1d18] sm:$0xff]
  %v969 = vld [vmem:[%s1 + $0x1d20] sm:$0xff]
  %v970 = vld [vmem:[%s1 + $0x1d28] sm:$0xff]
  %v971 = vld [vmem:[%s1 + $0x1d30] sm:$0xff]
  %v972 = vld [vmem:[%s1 + $0x1d38] sm:$0xff]
  %v973 = vld [vmem:[%s1 + $0x1d40] sm:$0xff]
  %v974 = vld [vmem:[%s1 + $0x1d48] sm:$0xff]
  %v975 = vld [vmem:[%s1 + $0x1d50] sm:$0xff]
  %v976 = vld [vmem:[%s1 + $0x1d58] sm:$0xff]
  %v977 = vld [vmem:[%s1 + $0x1d60] sm:$0xff]
  %v978 = vld [vmem:[%s1 + $0x1d68] sm:$0xff]
  %v979 = vld [vmem:[%s1 + $0x1d70] sm:$0xff]
  %v980 = vld [vmem:[%s1 + $0x1d78] sm:$0xff]
  %v981 = vld [vmem:[%s1 + $0x1d80] sm:$0xff]
  %v982 = vld [vmem:[%s1 + $0x1d88] sm:$0xff]
  %v983 = vld [vmem:[%s1 + $0x1d90] sm:$0xff]
  %v984 = vld [vmem:[%s1 + $0x1d98] sm:$0xff]
  %v985 = vld [vmem:[%s1 + $0x1da0] sm:$0xff]
  %v986 = vld [vmem:[%s1 + $0x1da8] sm:$0xff]
  %v987 = vld [vmem:[%s1 + $0x1db0] sm:$0xff]
  %v988 = vld [vmem:[%s1 + $0x1db8] sm:$0xff]
  %v989 = vld [vmem:[%s1 + $0x1dc0] sm:$0xff]
  %v990 = vld [vmem:[%s1 + $0x1dc8] sm:$0xff]
  %v991 = vld [vmem:[%s1 + $0x1dd0] sm:$0xff]
  %v992 = vld [vmem:[%s1 + $0x1dd8] sm:$0xff]
  %v993 = vld [vmem:[%s1 + $0x1de0] sm:$0xff]
  %v994 = vld [vmem:[%s1 + $0x1de8] sm:$0xff]
  %v995 = vld [vmem:[%s1 + $0x1df0] sm:$0xff]
  %v996 = vld [vmem:[%s1 + $0x1df8] sm:$0xff]
  %v997 = vld [vmem:[%s1 + $0x1e00] sm:$0xff]
  %v998 = vld [vmem:[%s1 + $0x1e08] sm:$0xff]
  %v999 = vld [vmem:[%s1 + $0x1e10] sm:$0xff]
  %v1000 = vld [vmem:[%s1 + $0x1e18] sm:$0xff]
  %v1001 = vld [vmem:[%s1 + $0x1e20] sm:$0xff]
  %v1002 = vld [vmem:[%s1 + $0x1e28] sm:$0xff]
  %v1003 = vld [vmem:[%s1 + $0x1e30] sm:$0xff]
  %v1004 = vld [vmem:[%s1 + $0x1e38] sm:$0xff]
  %v1005 = vld [vmem:[%s1 + $0x1e40] sm:$0xff]
  %v1006 = vld [vmem:[%s1 + $0x1e48] sm:$0xff]
  %v1007 = vld [vmem:[%s1 + $0x1e50] sm:$0xff]
  %v1008 = vld [vmem:[%s1 + $0x1e58] sm:$0xff]
  %v1009 = vld [vmem:[%s1 + $0x1e60] sm:$0xff]
  %v1010 = vld [vmem:[%s1 + $0x1e68] sm:$0xff]
  %v1011 = vld [vmem:[%s1 + $0x1e70] sm:$0xff]
  %v1012 = vld [vmem:[%s1 + $0x1e78] sm:$0xff]
  %v1013 = vld [vmem:[%s1 + $0x1e80] sm:$0xff]
  %v1014 = vld [vmem:[%s1 + $0x1e88] sm:$0xff]
  %v1015 = vld [vmem:[%s1 + $0x1e90] sm:$0xff]
  %v1016 = vld [vmem:[%s1 + $0x1e98] sm:$0xff]
  %v1017 = vld [vmem:[%s1 + $0x1ea0] sm:$0xff]
  %v1018 = vld [vmem:[%s1 + $0x1ea8] sm:$0xff]
  %v1019 = vld [vmem:[%s1 + $0x1eb0] sm:$0xff]
  %v1020 = vld [vmem:[%s1 + $0x1eb8] sm:$0xff]
  %v1021 = vld [vmem:[%s1 + $0x1ec0] sm:$0xff]
  %v1022 = vld [vmem:[%s1 + $0x1ec8] sm:$0xff]
  %v1023 = vld [vmem:[%s1 + $0x1ed0] sm:$0xff]
  %v1024 = vld [vmem:[%s1 + $0x1ed8] sm:$0xff]
  %v1025 = vld [vmem:[%s1 + $0x1ee0] sm:$0xff]
  %v1026 = vld [vmem:[%s1 + $0x1ee8] sm:$0xff]
  %v1027 = vld [vmem:[%s1 + $0x1ef0] sm:$0xff]
  %v1028 = vld [vmem:[%s1 + $0x1ef8] sm:$0xff]
  %v1029 = vld [vmem:[%s1 + $0x1f00] sm:$0xff]
  %v1030 = vld [vmem:[%s1 + $0x1f08] sm:$0xff]
  %v1031 = vld [vmem:[%s1 + $0x1f10] sm:$0xff]
  %v1032 = vld [vmem:[%s1 + $0x1f18] sm:$0xff]
  %v1033 = vld [vmem:[%s1 + $0x1f20] sm:$0xff]
  %v1034 = vld [vmem:[%s1 + $0x1f28] sm:$0xff]
  %v1035 = vld [vmem:[%s1 + $0x1f30] sm:$0xff]
  %v1036 = vld [vmem:[%s1 + $0x1f38] sm:$0xff]
  %v1037 = vld [vmem:[%s1 + $0x1f40] sm:$0xff]
  %v1038 = vld [vmem:[%s1 + $0x1f48] sm:$0xff]
  %v1039 = vld [vmem:[%s1 + $0x1f50] sm:$0xff]
  %v1040 = vld [vmem:[%s1 + $0x1f58] sm:$0xff]
  %v1041 = vld [vmem:[%s1 + $0x1f60] sm:$0xff]
  %v1042 = vld [vmem:[%s1 + $0x1f68] sm:$0xff]
  %v1043 = vld [vmem:[%s1 + $0x1f70] sm:$0xff]
  %v1044 = vld [vmem:[%s1 + $0x1f78] sm:$0xff]
  %v1045 = vld [vmem:[%s1 + $0x1f80] sm:$0xff]
  %v1046 = vld [vmem:[%s1 + $0x1f88] sm:$0xff]
  %v1047 = vld [vmem:[%s1 + $0x1f90] sm:$0xff]
  %v1048 = vld [vmem:[%s1 + $0x1f98] sm:$0xff]
  %v1049 = vld [vmem:[%s1 + $0x1fa0] sm:$0xff]
  %v1050 = vld [vmem:[%s1 + $0x1fa8] sm:$0xff]
  %v1051 = vld [vmem:[%s1 + $0x1fb0] sm:$0xff]
  %v1052 = vld [vmem:[%s1 + $0x1fb8] sm:$0xff]
  %v1053 = vld [vmem:[%s1 + $0x1fc0] sm:$0xff]
  %v1054 = vld [vmem:[%s1 + $0x1fc8] sm:$0xff]
  %v1055 = vld [vmem:[%s1 + $0x1fd0] sm:$0xff]
  %v1056 = vld [vmem:[%s1 + $0x1fd8] sm:$0xff]
  %v1057 = vld [vmem:[%s1 + $0x1fe0] sm:$0xff]
  %v1058 = vld [vmem:[%s1 + $0x1fe8] sm:$0xff]
  %v1059 = vld [vmem:[%s1 + $0x1ff0] sm:$0xff]
  %v1060 = vld [vmem:[%s1 + $0x1ff8] sm:$0xff]
  %v1061 = vld [vmem:[%s2] sm:$0xf]
  %v1063 = vlaneseq
  %v1064 = vshrl.u32 %v1063, 7
  %v1065 = vsub.s32 0, %v1064
  %v1066 = vrot.slane %v1061, %v1065
  %v1067 = vlaneseq
  %v1068 = vshrl.u32 %v1067, 7
  %v1069 = vsub.s32 1, %v1068
  %v1070 = vrot.slane %v1061, %v1069
  %v1071 = vlaneseq
  %v1072 = vshrl.u32 %v1071, 7
  %v1073 = vsub.s32 2, %v1072
  %v1074 = vrot.slane %v1061, %v1073
  %v1075 = vlaneseq
  %v1076 = vshrl.u32 %v1075, 7
  %v1077 = vsub.s32 3, %v1076
  %v1078 = vrot.slane %v1061, %v1077
  %v1099 = vunpack.c.l.b16 %v21
  %v1100 = vunpack.c.h.b16 %v21
  %v1101 = vunpack.c.l.b16 %v22
  %v1102 = vunpack.c.h.b16 %v22
  %v1103 = vunpack.c.l.b16 %v23
  %v1104 = vunpack.c.h.b16 %v23
  %v1105 = vunpack.c.l.b16 %v24
  %v1106 = vunpack.c.h.b16 %v24
  %v1107 = vunpack.c.l.b16 %v25
  %v1108 = vunpack.c.h.b16 %v25
  %v1109 = vunpack.c.l.b16 %v26
  %v1110 = vunpack.c.h.b16 %v26
  %v1111 = vunpack.c.l.b16 %v27
  %v1112 = vunpack.c.h.b16 %v27
  %v1113 = vunpack.c.l.b16 %v28
  %v1114 = vunpack.c.h.b16 %v28
  %v1115 = vunpack.c.l.b16 %v29
  %v1116 = vunpack.c.h.b16 %v29
  %v1117 = vunpack.c.l.b16 %v30
  %v1118 = vunpack.c.h.b16 %v30
  %v1119 = vunpack.c.l.b16 %v31
  %v1120 = vunpack.c.h.b16 %v31
  %v1121 = vunpack.c.l.b16 %v32
  %v1122 = vunpack.c.h.b16 %v32
  %v1123 = vunpack.c.l.b16 %v33
  %v1124 = vunpack.c.h.b16 %v33
  %v1125 = vunpack.c.l.b16 %v34
  %v1126 = vunpack.c.h.b16 %v34
  %v1127 = vunpack.c.l.b16 %v35
  %v1128 = vunpack.c.h.b16 %v35
  %v1129 = vunpack.c.l.b16 %v36
  %v1130 = vunpack.c.h.b16 %v36
  %v1131 = vpack.c.b16 %v1099, %v1099
  %v1132 = vpack.c.b16 %v1100, %v1100
  %v1133 = vpack.c.b16 %v1101, %v1101
  %v1134 = vpack.c.b16 %v1102, %v1102
  %v1135 = vpack.c.b16 %v1103, %v1103
  %v1136 = vpack.c.b16 %v1104, %v1104
  %v1137 = vpack.c.b16 %v1105, %v1105
  %v1138 = vpack.c.b16 %v1106, %v1106
  %v1139 = vpack.c.b16 %v1107, %v1107
  %v1140 = vpack.c.b16 %v1108, %v1108
  %v1141 = vpack.c.b16 %v1109, %v1109
  %v1142 = vpack.c.b16 %v1110, %v1110
  %v1143 = vpack.c.b16 %v1111, %v1111
  %v1144 = vpack.c.b16 %v1112, %v1112
  %v1145 = vpack.c.b16 %v1113, %v1113
  %v1146 = vpack.c.b16 %v1114, %v1114
  %v1147 = vpack.c.b16 %v1115, %v1115
  %v1148 = vpack.c.b16 %v1116, %v1116
  %v1149 = vpack.c.b16 %v1117, %v1117
  %v1150 = vpack.c.b16 %v1118, %v1118
  %v1151 = vpack.c.b16 %v1119, %v1119
  %v1152 = vpack.c.b16 %v1120, %v1120
  %v1153 = vpack.c.b16 %v1121, %v1121
  %v1154 = vpack.c.b16 %v1122, %v1122
  %v1155 = vpack.c.b16 %v1123, %v1123
  %v1156 = vpack.c.b16 %v1124, %v1124
  %v1157 = vpack.c.b16 %v1125, %v1125
  %v1158 = vpack.c.b16 %v1126, %v1126
  %v1159 = vpack.c.b16 %v1127, %v1127
  %v1160 = vpack.c.b16 %v1128, %v1128
  %v1161 = vpack.c.b16 %v1129, %v1129
  %v1162 = vpack.c.b16 %v1130, %v1130
  %v2219 = vunpack.c.l.b16 %v37
  %v2220 = vunpack.c.h.b16 %v37
  %v2221 = vunpack.c.l.b16 %v38
  %v2222 = vunpack.c.h.b16 %v38
  %v2223 = vunpack.c.l.b16 %v39
  %v2224 = vunpack.c.h.b16 %v39
  %v2225 = vunpack.c.l.b16 %v40
  %v2226 = vunpack.c.h.b16 %v40
  %v2227 = vunpack.c.l.b16 %v41
  %v2228 = vunpack.c.h.b16 %v41
  %v2229 = vunpack.c.l.b16 %v42
  %v2230 = vunpack.c.h.b16 %v42
  %v2231 = vunpack.c.l.b16 %v43
  %v2232 = vunpack.c.h.b16 %v43
  %v2233 = vunpack.c.l.b16 %v44
  %v2234 = vunpack.c.h.b16 %v44
  %v2235 = vunpack.c.l.b16 %v45
  %v2236 = vunpack.c.h.b16 %v45
  %v2237 = vunpack.c.l.b16 %v46
  %v2238 = vunpack.c.h.b16 %v46
  %v2239 = vunpack.c.l.b16 %v47
  %v2240 = vunpack.c.h.b16 %v47
  %v2241 = vunpack.c.l.b16 %v48
  %v2242 = vunpack.c.h.b16 %v48
  %v2243 = vunpack.c.l.b16 %v49
  %v2244 = vunpack.c.h.b16 %v49
  %v2245 = vunpack.c.l.b16 %v50
  %v2246 = vunpack.c.h.b16 %v50
  %v2247 = vunpack.c.l.b16 %v51
  %v2248 = vunpack.c.h.b16 %v51
  %v2249 = vunpack.c.l.b16 %v52
  %v2250 = vunpack.c.h.b16 %v52
  %v2251 = vunpack.c.l.b16 %v53
  %v2252 = vunpack.c.h.b16 %v53
  %v2253 = vunpack.c.l.b16 %v54
  %v2254 = vunpack.c.h.b16 %v54
  %v2255 = vunpack.c.l.b16 %v55
  %v2256 = vunpack.c.h.b16 %v55
  %v2257 = vunpack.c.l.b16 %v56
  %v2258 = vunpack.c.h.b16 %v56
  %v2259 = vunpack.c.l.b16 %v57
  %v2260 = vunpack.c.h.b16 %v57
  %v2261 = vunpack.c.l.b16 %v58
  %v2262 = vunpack.c.h.b16 %v58
  %v2263 = vunpack.c.l.b16 %v59
  %v2264 = vunpack.c.h.b16 %v59
  %v2265 = vunpack.c.l.b16 %v60
  %v2266 = vunpack.c.h.b16 %v60
  %v2267 = vunpack.c.l.b16 %v61
  %v2268 = vunpack.c.h.b16 %v61
  %v2269 = vunpack.c.l.b16 %v62
  %v2270 = vunpack.c.h.b16 %v62
  %v2271 = vunpack.c.l.b16 %v63
  %v2272 = vunpack.c.h.b16 %v63
  %v2273 = vunpack.c.l.b16 %v64
  %v2274 = vunpack.c.h.b16 %v64
  %v2275 = vunpack.c.l.b16 %v65
  %v2276 = vunpack.c.h.b16 %v65
  %v2277 = vunpack.c.l.b16 %v66
  %v2278 = vunpack.c.h.b16 %v66
  %v2279 = vunpack.c.l.b16 %v67
  %v2280 = vunpack.c.h.b16 %v67
  %v2281 = vunpack.c.l.b16 %v68
  %v2282 = vunpack.c.h.b16 %v68
  %v2283 = vunpack.c.l.b16 %v69
  %v2284 = vunpack.c.h.b16 %v69
  %v2285 = vunpack.c.l.b16 %v70
  %v2286 = vunpack.c.h.b16 %v70
  %v2287 = vunpack.c.l.b16 %v71
  %v2288 = vunpack.c.h.b16 %v71
  %v2289 = vunpack.c.l.b16 %v72
  %v2290 = vunpack.c.h.b16 %v72
  %v2291 = vunpack.c.l.b16 %v73
  %v2292 = vunpack.c.h.b16 %v73
  %v2293 = vunpack.c.l.b16 %v74
  %v2294 = vunpack.c.h.b16 %v74
  %v2295 = vunpack.c.l.b16 %v75
  %v2296 = vunpack.c.h.b16 %v75
  %v2297 = vunpack.c.l.b16 %v76
  %v2298 = vunpack.c.h.b16 %v76
  %v2299 = vunpack.c.l.b16 %v77
  %v2300 = vunpack.c.h.b16 %v77
  %v2301 = vunpack.c.l.b16 %v78
  %v2302 = vunpack.c.h.b16 %v78
  %v2303 = vunpack.c.l.b16 %v79
  %v2304 = vunpack.c.h.b16 %v79
  %v2305 = vunpack.c.l.b16 %v80
  %v2306 = vunpack.c.h.b16 %v80
  %v2307 = vunpack.c.l.b16 %v81
  %v2308 = vunpack.c.h.b16 %v81
  %v2309 = vunpack.c.l.b16 %v82
  %v2310 = vunpack.c.h.b16 %v82
  %v2311 = vunpack.c.l.b16 %v83
  %v2312 = vunpack.c.h.b16 %v83
  %v2313 = vunpack.c.l.b16 %v84
  %v2314 = vunpack.c.h.b16 %v84
  %v2315 = vunpack.c.l.b16 %v85
  %v2316 = vunpack.c.h.b16 %v85
  %v2317 = vunpack.c.l.b16 %v86
  %v2318 = vunpack.c.h.b16 %v86
  %v2319 = vunpack.c.l.b16 %v87
  %v2320 = vunpack.c.h.b16 %v87
  %v2321 = vunpack.c.l.b16 %v88
  %v2322 = vunpack.c.h.b16 %v88
  %v2323 = vunpack.c.l.b16 %v89
  %v2324 = vunpack.c.h.b16 %v89
  %v2325 = vunpack.c.l.b16 %v90
  %v2326 = vunpack.c.h.b16 %v90
  %v2327 = vunpack.c.l.b16 %v91
  %v2328 = vunpack.c.h.b16 %v91
  %v2329 = vunpack.c.l.b16 %v92
  %v2330 = vunpack.c.h.b16 %v92
  %v2331 = vunpack.c.l.b16 %v93
  %v2332 = vunpack.c.h.b16 %v93
  %v2333 = vunpack.c.l.b16 %v94
  %v2334 = vunpack.c.h.b16 %v94
  %v2335 = vunpack.c.l.b16 %v95
  %v2336 = vunpack.c.h.b16 %v95
  %v2337 = vunpack.c.l.b16 %v96
  %v2338 = vunpack.c.h.b16 %v96
  %v2339 = vunpack.c.l.b16 %v97
  %v2340 = vunpack.c.h.b16 %v97
  %v2341 = vunpack.c.l.b16 %v98
  %v2342 = vunpack.c.h.b16 %v98
  %v2343 = vunpack.c.l.b16 %v99
  %v2344 = vunpack.c.h.b16 %v99
  %v2345 = vunpack.c.l.b16 %v100
  %v2346 = vunpack.c.h.b16 %v100
  %v2347 = vunpack.c.l.b16 %v101
  %v2348 = vunpack.c.h.b16 %v101
  %v2349 = vunpack.c.l.b16 %v102
  %v2350 = vunpack.c.h.b16 %v102
  %v2351 = vunpack.c.l.b16 %v103
  %v2352 = vunpack.c.h.b16 %v103
  %v2353 = vunpack.c.l.b16 %v104
  %v2354 = vunpack.c.h.b16 %v104
  %v2355 = vunpack.c.l.b16 %v105
  %v2356 = vunpack.c.h.b16 %v105
  %v2357 = vunpack.c.l.b16 %v106
  %v2358 = vunpack.c.h.b16 %v106
  %v2359 = vunpack.c.l.b16 %v107
  %v2360 = vunpack.c.h.b16 %v107
  %v2361 = vunpack.c.l.b16 %v108
  %v2362 = vunpack.c.h.b16 %v108
  %v2363 = vunpack.c.l.b16 %v109
  %v2364 = vunpack.c.h.b16 %v109
  %v2365 = vunpack.c.l.b16 %v110
  %v2366 = vunpack.c.h.b16 %v110
  %v2367 = vunpack.c.l.b16 %v111
  %v2368 = vunpack.c.h.b16 %v111
  %v2369 = vunpack.c.l.b16 %v112
  %v2370 = vunpack.c.h.b16 %v112
  %v2371 = vunpack.c.l.b16 %v113
  %v2372 = vunpack.c.h.b16 %v113
  %v2373 = vunpack.c.l.b16 %v114
  %v2374 = vunpack.c.h.b16 %v114
  %v2375 = vunpack.c.l.b16 %v115
  %v2376 = vunpack.c.h.b16 %v115
  %v2377 = vunpack.c.l.b16 %v116
  %v2378 = vunpack.c.h.b16 %v116
  %v2379 = vunpack.c.l.b16 %v117
  %v2380 = vunpack.c.h.b16 %v117
  %v2381 = vunpack.c.l.b16 %v118
  %v2382 = vunpack.c.h.b16 %v118
  %v2383 = vunpack.c.l.b16 %v119
  %v2384 = vunpack.c.h.b16 %v119
  %v2385 = vunpack.c.l.b16 %v120
  %v2386 = vunpack.c.h.b16 %v120
  %v2387 = vunpack.c.l.b16 %v121
  %v2388 = vunpack.c.h.b16 %v121
  %v2389 = vunpack.c.l.b16 %v122
  %v2390 = vunpack.c.h.b16 %v122
  %v2391 = vunpack.c.l.b16 %v123
  %v2392 = vunpack.c.h.b16 %v123
  %v2393 = vunpack.c.l.b16 %v124
  %v2394 = vunpack.c.h.b16 %v124
  %v2395 = vunpack.c.l.b16 %v125
  %v2396 = vunpack.c.h.b16 %v125
  %v2397 = vunpack.c.l.b16 %v126
  %v2398 = vunpack.c.h.b16 %v126
  %v2399 = vunpack.c.l.b16 %v127
  %v2400 = vunpack.c.h.b16 %v127
  %v2401 = vunpack.c.l.b16 %v128
  %v2402 = vunpack.c.h.b16 %v128
  %v2403 = vunpack.c.l.b16 %v129
  %v2404 = vunpack.c.h.b16 %v129
  %v2405 = vunpack.c.l.b16 %v130
  %v2406 = vunpack.c.h.b16 %v130
  %v2407 = vunpack.c.l.b16 %v131
  %v2408 = vunpack.c.h.b16 %v131
  %v2409 = vunpack.c.l.b16 %v132
  %v2410 = vunpack.c.h.b16 %v132
  %v2411 = vunpack.c.l.b16 %v133
  %v2412 = vunpack.c.h.b16 %v133
  %v2413 = vunpack.c.l.b16 %v134
  %v2414 = vunpack.c.h.b16 %v134
  %v2415 = vunpack.c.l.b16 %v135
  %v2416 = vunpack.c.h.b16 %v135
  %v2417 = vunpack.c.l.b16 %v136
  %v2418 = vunpack.c.h.b16 %v136
  %v2419 = vunpack.c.l.b16 %v137
  %v2420 = vunpack.c.h.b16 %v137
  %v2421 = vunpack.c.l.b16 %v138
  %v2422 = vunpack.c.h.b16 %v138
  %v2423 = vunpack.c.l.b16 %v139
  %v2424 = vunpack.c.h.b16 %v139
  %v2425 = vunpack.c.l.b16 %v140
  %v2426 = vunpack.c.h.b16 %v140
  %v2427 = vunpack.c.l.b16 %v141
  %v2428 = vunpack.c.h.b16 %v141
  %v2429 = vunpack.c.l.b16 %v142
  %v2430 = vunpack.c.h.b16 %v142
  %v2431 = vunpack.c.l.b16 %v143
  %v2432 = vunpack.c.h.b16 %v143
  %v2433 = vunpack.c.l.b16 %v144
  %v2434 = vunpack.c.h.b16 %v144
  %v2435 = vunpack.c.l.b16 %v145
  %v2436 = vunpack.c.h.b16 %v145
  %v2437 = vunpack.c.l.b16 %v146
  %v2438 = vunpack.c.h.b16 %v146
  %v2439 = vunpack.c.l.b16 %v147
  %v2440 = vunpack.c.h.b16 %v147
  %v2441 = vunpack.c.l.b16 %v148
  %v2442 = vunpack.c.h.b16 %v148
  %v2443 = vunpack.c.l.b16 %v149
  %v2444 = vunpack.c.h.b16 %v149
  %v2445 = vunpack.c.l.b16 %v150
  %v2446 = vunpack.c.h.b16 %v150
  %v2447 = vunpack.c.l.b16 %v151
  %v2448 = vunpack.c.h.b16 %v151
  %v2449 = vunpack.c.l.b16 %v152
  %v2450 = vunpack.c.h.b16 %v152
  %v2451 = vunpack.c.l.b16 %v153
  %v2452 = vunpack.c.h.b16 %v153
  %v2453 = vunpack.c.l.b16 %v154
  %v2454 = vunpack.c.h.b16 %v154
  %v2455 = vunpack.c.l.b16 %v155
  %v2456 = vunpack.c.h.b16 %v155
  %v2457 = vunpack.c.l.b16 %v156
  %v2458 = vunpack.c.h.b16 %v156
  %v2459 = vunpack.c.l.b16 %v157
  %v2460 = vunpack.c.h.b16 %v157
  %v2461 = vunpack.c.l.b16 %v158
  %v2462 = vunpack.c.h.b16 %v158
  %v2463 = vunpack.c.l.b16 %v159
  %v2464 = vunpack.c.h.b16 %v159
  %v2465 = vunpack.c.l.b16 %v160
  %v2466 = vunpack.c.h.b16 %v160
  %v2467 = vunpack.c.l.b16 %v161
  %v2468 = vunpack.c.h.b16 %v161
  %v2469 = vunpack.c.l.b16 %v162
  %v2470 = vunpack.c.h.b16 %v162
  %v2471 = vunpack.c.l.b16 %v163
  %v2472 = vunpack.c.h.b16 %v163
  %v2473 = vunpack.c.l.b16 %v164
  %v2474 = vunpack.c.h.b16 %v164
  %v2475 = vunpack.c.l.b16 %v165
  %v2476 = vunpack.c.h.b16 %v165
  %v2477 = vunpack.c.l.b16 %v166
  %v2478 = vunpack.c.h.b16 %v166
  %v2479 = vunpack.c.l.b16 %v167
  %v2480 = vunpack.c.h.b16 %v167
  %v2481 = vunpack.c.l.b16 %v168
  %v2482 = vunpack.c.h.b16 %v168
  %v2483 = vunpack.c.l.b16 %v169
  %v2484 = vunpack.c.h.b16 %v169
  %v2485 = vunpack.c.l.b16 %v170
  %v2486 = vunpack.c.h.b16 %v170
  %v2487 = vunpack.c.l.b16 %v171
  %v2488 = vunpack.c.h.b16 %v171
  %v2489 = vunpack.c.l.b16 %v172
  %v2490 = vunpack.c.h.b16 %v172
  %v2491 = vunpack.c.l.b16 %v173
  %v2492 = vunpack.c.h.b16 %v173
  %v2493 = vunpack.c.l.b16 %v174
  %v2494 = vunpack.c.h.b16 %v174
  %v2495 = vunpack.c.l.b16 %v175
  %v2496 = vunpack.c.h.b16 %v175
  %v2497 = vunpack.c.l.b16 %v176
  %v2498 = vunpack.c.h.b16 %v176
  %v2499 = vunpack.c.l.b16 %v177
  %v2500 = vunpack.c.h.b16 %v177
  %v2501 = vunpack.c.l.b16 %v178
  %v2502 = vunpack.c.h.b16 %v178
  %v2503 = vunpack.c.l.b16 %v179
  %v2504 = vunpack.c.h.b16 %v179
  %v2505 = vunpack.c.l.b16 %v180
  %v2506 = vunpack.c.h.b16 %v180
  %v2507 = vunpack.c.l.b16 %v181
  %v2508 = vunpack.c.h.b16 %v181
  %v2509 = vunpack.c.l.b16 %v182
  %v2510 = vunpack.c.h.b16 %v182
  %v2511 = vunpack.c.l.b16 %v183
  %v2512 = vunpack.c.h.b16 %v183
  %v2513 = vunpack.c.l.b16 %v184
  %v2514 = vunpack.c.h.b16 %v184
  %v2515 = vunpack.c.l.b16 %v185
  %v2516 = vunpack.c.h.b16 %v185
  %v2517 = vunpack.c.l.b16 %v186
  %v2518 = vunpack.c.h.b16 %v186
  %v2519 = vunpack.c.l.b16 %v187
  %v2520 = vunpack.c.h.b16 %v187
  %v2521 = vunpack.c.l.b16 %v188
  %v2522 = vunpack.c.h.b16 %v188
  %v2523 = vunpack.c.l.b16 %v189
  %v2524 = vunpack.c.h.b16 %v189
  %v2525 = vunpack.c.l.b16 %v190
  %v2526 = vunpack.c.h.b16 %v190
  %v2527 = vunpack.c.l.b16 %v191
  %v2528 = vunpack.c.h.b16 %v191
  %v2529 = vunpack.c.l.b16 %v192
  %v2530 = vunpack.c.h.b16 %v192
  %v2531 = vunpack.c.l.b16 %v193
  %v2532 = vunpack.c.h.b16 %v193
  %v2533 = vunpack.c.l.b16 %v194
  %v2534 = vunpack.c.h.b16 %v194
  %v2535 = vunpack.c.l.b16 %v195
  %v2536 = vunpack.c.h.b16 %v195
  %v2537 = vunpack.c.l.b16 %v196
  %v2538 = vunpack.c.h.b16 %v196
  %v2539 = vunpack.c.l.b16 %v197
  %v2540 = vunpack.c.h.b16 %v197
  %v2541 = vunpack.c.l.b16 %v198
  %v2542 = vunpack.c.h.b16 %v198
  %v2543 = vunpack.c.l.b16 %v199
  %v2544 = vunpack.c.h.b16 %v199
  %v2545 = vunpack.c.l.b16 %v200
  %v2546 = vunpack.c.h.b16 %v200
  %v2547 = vunpack.c.l.b16 %v201
  %v2548 = vunpack.c.h.b16 %v201
  %v2549 = vunpack.c.l.b16 %v202
  %v2550 = vunpack.c.h.b16 %v202
  %v2551 = vunpack.c.l.b16 %v203
  %v2552 = vunpack.c.h.b16 %v203
  %v2553 = vunpack.c.l.b16 %v204
  %v2554 = vunpack.c.h.b16 %v204
  %v2555 = vunpack.c.l.b16 %v205
  %v2556 = vunpack.c.h.b16 %v205
  %v2557 = vunpack.c.l.b16 %v206
  %v2558 = vunpack.c.h.b16 %v206
  %v2559 = vunpack.c.l.b16 %v207
  %v2560 = vunpack.c.h.b16 %v207
  %v2561 = vunpack.c.l.b16 %v208
  %v2562 = vunpack.c.h.b16 %v208
  %v2563 = vunpack.c.l.b16 %v209
  %v2564 = vunpack.c.h.b16 %v209
  %v2565 = vunpack.c.l.b16 %v210
  %v2566 = vunpack.c.h.b16 %v210
  %v2567 = vunpack.c.l.b16 %v211
  %v2568 = vunpack.c.h.b16 %v211
  %v2569 = vunpack.c.l.b16 %v212
  %v2570 = vunpack.c.h.b16 %v212
  %v2571 = vunpack.c.l.b16 %v213
  %v2572 = vunpack.c.h.b16 %v213
  %v2573 = vunpack.c.l.b16 %v214
  %v2574 = vunpack.c.h.b16 %v214
  %v2575 = vunpack.c.l.b16 %v215
  %v2576 = vunpack.c.h.b16 %v215
  %v2577 = vunpack.c.l.b16 %v216
  %v2578 = vunpack.c.h.b16 %v216
  %v2579 = vunpack.c.l.b16 %v217
  %v2580 = vunpack.c.h.b16 %v217
  %v2581 = vunpack.c.l.b16 %v218
  %v2582 = vunpack.c.h.b16 %v218
  %v2583 = vunpack.c.l.b16 %v219
  %v2584 = vunpack.c.h.b16 %v219
  %v2585 = vunpack.c.l.b16 %v220
  %v2586 = vunpack.c.h.b16 %v220
  %v2587 = vunpack.c.l.b16 %v221
  %v2588 = vunpack.c.h.b16 %v221
  %v2589 = vunpack.c.l.b16 %v222
  %v2590 = vunpack.c.h.b16 %v222
  %v2591 = vunpack.c.l.b16 %v223
  %v2592 = vunpack.c.h.b16 %v223
  %v2593 = vunpack.c.l.b16 %v224
  %v2594 = vunpack.c.h.b16 %v224
  %v2595 = vunpack.c.l.b16 %v225
  %v2596 = vunpack.c.h.b16 %v225
  %v2597 = vunpack.c.l.b16 %v226
  %v2598 = vunpack.c.h.b16 %v226
  %v2599 = vunpack.c.l.b16 %v227
  %v2600 = vunpack.c.h.b16 %v227
  %v2601 = vunpack.c.l.b16 %v228
  %v2602 = vunpack.c.h.b16 %v228
  %v2603 = vunpack.c.l.b16 %v229
  %v2604 = vunpack.c.h.b16 %v229
  %v2605 = vunpack.c.l.b16 %v230
  %v2606 = vunpack.c.h.b16 %v230
  %v2607 = vunpack.c.l.b16 %v231
  %v2608 = vunpack.c.h.b16 %v231
  %v2609 = vunpack.c.l.b16 %v232
  %v2610 = vunpack.c.h.b16 %v232
  %v2611 = vunpack.c.l.b16 %v233
  %v2612 = vunpack.c.h.b16 %v233
  %v2613 = vunpack.c.l.b16 %v234
  %v2614 = vunpack.c.h.b16 %v234
  %v2615 = vunpack.c.l.b16 %v235
  %v2616 = vunpack.c.h.b16 %v235
  %v2617 = vunpack.c.l.b16 %v236
  %v2618 = vunpack.c.h.b16 %v236
  %v2619 = vunpack.c.l.b16 %v237
  %v2620 = vunpack.c.h.b16 %v237
  %v2621 = vunpack.c.l.b16 %v238
  %v2622 = vunpack.c.h.b16 %v238
  %v2623 = vunpack.c.l.b16 %v239
  %v2624 = vunpack.c.h.b16 %v239
  %v2625 = vunpack.c.l.b16 %v240
  %v2626 = vunpack.c.h.b16 %v240
  %v2627 = vunpack.c.l.b16 %v241
  %v2628 = vunpack.c.h.b16 %v241
  %v2629 = vunpack.c.l.b16 %v242
  %v2630 = vunpack.c.h.b16 %v242
  %v2631 = vunpack.c.l.b16 %v243
  %v2632 = vunpack.c.h.b16 %v243
  %v2633 = vunpack.c.l.b16 %v244
  %v2634 = vunpack.c.h.b16 %v244
  %v2635 = vunpack.c.l.b16 %v245
  %v2636 = vunpack.c.h.b16 %v245
  %v2637 = vunpack.c.l.b16 %v246
  %v2638 = vunpack.c.h.b16 %v246
  %v2639 = vunpack.c.l.b16 %v247
  %v2640 = vunpack.c.h.b16 %v247
  %v2641 = vunpack.c.l.b16 %v248
  %v2642 = vunpack.c.h.b16 %v248
  %v2643 = vunpack.c.l.b16 %v249
  %v2644 = vunpack.c.h.b16 %v249
  %v2645 = vunpack.c.l.b16 %v250
  %v2646 = vunpack.c.h.b16 %v250
  %v2647 = vunpack.c.l.b16 %v251
  %v2648 = vunpack.c.h.b16 %v251
  %v2649 = vunpack.c.l.b16 %v252
  %v2650 = vunpack.c.h.b16 %v252
  %v2651 = vunpack.c.l.b16 %v253
  %v2652 = vunpack.c.h.b16 %v253
  %v2653 = vunpack.c.l.b16 %v254
  %v2654 = vunpack.c.h.b16 %v254
  %v2655 = vunpack.c.l.b16 %v255
  %v2656 = vunpack.c.h.b16 %v255
  %v2657 = vunpack.c.l.b16 %v256
  %v2658 = vunpack.c.h.b16 %v256
  %v2659 = vunpack.c.l.b16 %v257
  %v2660 = vunpack.c.h.b16 %v257
  %v2661 = vunpack.c.l.b16 %v258
  %v2662 = vunpack.c.h.b16 %v258
  %v2663 = vunpack.c.l.b16 %v259
  %v2664 = vunpack.c.h.b16 %v259
  %v2665 = vunpack.c.l.b16 %v260
  %v2666 = vunpack.c.h.b16 %v260
  %v2667 = vunpack.c.l.b16 %v261
  %v2668 = vunpack.c.h.b16 %v261
  %v2669 = vunpack.c.l.b16 %v262
  %v2670 = vunpack.c.h.b16 %v262
  %v2671 = vunpack.c.l.b16 %v263
  %v2672 = vunpack.c.h.b16 %v263
  %v2673 = vunpack.c.l.b16 %v264
  %v2674 = vunpack.c.h.b16 %v264
  %v2675 = vunpack.c.l.b16 %v265
  %v2676 = vunpack.c.h.b16 %v265
  %v2677 = vunpack.c.l.b16 %v266
  %v2678 = vunpack.c.h.b16 %v266
  %v2679 = vunpack.c.l.b16 %v267
  %v2680 = vunpack.c.h.b16 %v267
  %v2681 = vunpack.c.l.b16 %v268
  %v2682 = vunpack.c.h.b16 %v268
  %v2683 = vunpack.c.l.b16 %v269
  %v2684 = vunpack.c.h.b16 %v269
  %v2685 = vunpack.c.l.b16 %v270
  %v2686 = vunpack.c.h.b16 %v270
  %v2687 = vunpack.c.l.b16 %v271
  %v2688 = vunpack.c.h.b16 %v271
  %v2689 = vunpack.c.l.b16 %v272
  %v2690 = vunpack.c.h.b16 %v272
  %v2691 = vunpack.c.l.b16 %v273
  %v2692 = vunpack.c.h.b16 %v273
  %v2693 = vunpack.c.l.b16 %v274
  %v2694 = vunpack.c.h.b16 %v274
  %v2695 = vunpack.c.l.b16 %v275
  %v2696 = vunpack.c.h.b16 %v275
  %v2697 = vunpack.c.l.b16 %v276
  %v2698 = vunpack.c.h.b16 %v276
  %v2699 = vunpack.c.l.b16 %v277
  %v2700 = vunpack.c.h.b16 %v277
  %v2701 = vunpack.c.l.b16 %v278
  %v2702 = vunpack.c.h.b16 %v278
  %v2703 = vunpack.c.l.b16 %v279
  %v2704 = vunpack.c.h.b16 %v279
  %v2705 = vunpack.c.l.b16 %v280
  %v2706 = vunpack.c.h.b16 %v280
  %v2707 = vunpack.c.l.b16 %v281
  %v2708 = vunpack.c.h.b16 %v281
  %v2709 = vunpack.c.l.b16 %v282
  %v2710 = vunpack.c.h.b16 %v282
  %v2711 = vunpack.c.l.b16 %v283
  %v2712 = vunpack.c.h.b16 %v283
  %v2713 = vunpack.c.l.b16 %v284
  %v2714 = vunpack.c.h.b16 %v284
  %v2715 = vunpack.c.l.b16 %v285
  %v2716 = vunpack.c.h.b16 %v285
  %v2717 = vunpack.c.l.b16 %v286
  %v2718 = vunpack.c.h.b16 %v286
  %v2719 = vunpack.c.l.b16 %v287
  %v2720 = vunpack.c.h.b16 %v287
  %v2721 = vunpack.c.l.b16 %v288
  %v2722 = vunpack.c.h.b16 %v288
  %v2723 = vunpack.c.l.b16 %v289
  %v2724 = vunpack.c.h.b16 %v289
  %v2725 = vunpack.c.l.b16 %v290
  %v2726 = vunpack.c.h.b16 %v290
  %v2727 = vunpack.c.l.b16 %v291
  %v2728 = vunpack.c.h.b16 %v291
  %v2729 = vunpack.c.l.b16 %v292
  %v2730 = vunpack.c.h.b16 %v292
  %v2731 = vunpack.c.l.b16 %v293
  %v2732 = vunpack.c.h.b16 %v293
  %v2733 = vunpack.c.l.b16 %v294
  %v2734 = vunpack.c.h.b16 %v294
  %v2735 = vunpack.c.l.b16 %v295
  %v2736 = vunpack.c.h.b16 %v295
  %v2737 = vunpack.c.l.b16 %v296
  %v2738 = vunpack.c.h.b16 %v296
  %v2739 = vunpack.c.l.b16 %v297
  %v2740 = vunpack.c.h.b16 %v297
  %v2741 = vunpack.c.l.b16 %v298
  %v2742 = vunpack.c.h.b16 %v298
  %v2743 = vunpack.c.l.b16 %v299
  %v2744 = vunpack.c.h.b16 %v299
  %v2745 = vunpack.c.l.b16 %v300
  %v2746 = vunpack.c.h.b16 %v300
  %v2747 = vunpack.c.l.b16 %v301
  %v2748 = vunpack.c.h.b16 %v301
  %v2749 = vunpack.c.l.b16 %v302
  %v2750 = vunpack.c.h.b16 %v302
  %v2751 = vunpack.c.l.b16 %v303
  %v2752 = vunpack.c.h.b16 %v303
  %v2753 = vunpack.c.l.b16 %v304
  %v2754 = vunpack.c.h.b16 %v304
  %v2755 = vunpack.c.l.b16 %v305
  %v2756 = vunpack.c.h.b16 %v305
  %v2757 = vunpack.c.l.b16 %v306
  %v2758 = vunpack.c.h.b16 %v306
  %v2759 = vunpack.c.l.b16 %v307
  %v2760 = vunpack.c.h.b16 %v307
  %v2761 = vunpack.c.l.b16 %v308
  %v2762 = vunpack.c.h.b16 %v308
  %v2763 = vunpack.c.l.b16 %v309
  %v2764 = vunpack.c.h.b16 %v309
  %v2765 = vunpack.c.l.b16 %v310
  %v2766 = vunpack.c.h.b16 %v310
  %v2767 = vunpack.c.l.b16 %v311
  %v2768 = vunpack.c.h.b16 %v311
  %v2769 = vunpack.c.l.b16 %v312
  %v2770 = vunpack.c.h.b16 %v312
  %v2771 = vunpack.c.l.b16 %v313
  %v2772 = vunpack.c.h.b16 %v313
  %v2773 = vunpack.c.l.b16 %v314
  %v2774 = vunpack.c.h.b16 %v314
  %v2775 = vunpack.c.l.b16 %v315
  %v2776 = vunpack.c.h.b16 %v315
  %v2777 = vunpack.c.l.b16 %v316
  %v2778 = vunpack.c.h.b16 %v316
  %v2779 = vunpack.c.l.b16 %v317
  %v2780 = vunpack.c.h.b16 %v317
  %v2781 = vunpack.c.l.b16 %v318
  %v2782 = vunpack.c.h.b16 %v318
  %v2783 = vunpack.c.l.b16 %v319
  %v2784 = vunpack.c.h.b16 %v319
  %v2785 = vunpack.c.l.b16 %v320
  %v2786 = vunpack.c.h.b16 %v320
  %v2787 = vunpack.c.l.b16 %v321
  %v2788 = vunpack.c.h.b16 %v321
  %v2789 = vunpack.c.l.b16 %v322
  %v2790 = vunpack.c.h.b16 %v322
  %v2791 = vunpack.c.l.b16 %v323
  %v2792 = vunpack.c.h.b16 %v323
  %v2793 = vunpack.c.l.b16 %v324
  %v2794 = vunpack.c.h.b16 %v324
  %v2795 = vunpack.c.l.b16 %v325
  %v2796 = vunpack.c.h.b16 %v325
  %v2797 = vunpack.c.l.b16 %v326
  %v2798 = vunpack.c.h.b16 %v326
  %v2799 = vunpack.c.l.b16 %v327
  %v2800 = vunpack.c.h.b16 %v327
  %v2801 = vunpack.c.l.b16 %v328
  %v2802 = vunpack.c.h.b16 %v328
  %v2803 = vunpack.c.l.b16 %v329
  %v2804 = vunpack.c.h.b16 %v329
  %v2805 = vunpack.c.l.b16 %v330
  %v2806 = vunpack.c.h.b16 %v330
  %v2807 = vunpack.c.l.b16 %v331
  %v2808 = vunpack.c.h.b16 %v331
  %v2809 = vunpack.c.l.b16 %v332
  %v2810 = vunpack.c.h.b16 %v332
  %v2811 = vunpack.c.l.b16 %v333
  %v2812 = vunpack.c.h.b16 %v333
  %v2813 = vunpack.c.l.b16 %v334
  %v2814 = vunpack.c.h.b16 %v334
  %v2815 = vunpack.c.l.b16 %v335
  %v2816 = vunpack.c.h.b16 %v335
  %v2817 = vunpack.c.l.b16 %v336
  %v2818 = vunpack.c.h.b16 %v336
  %v2819 = vunpack.c.l.b16 %v337
  %v2820 = vunpack.c.h.b16 %v337
  %v2821 = vunpack.c.l.b16 %v338
  %v2822 = vunpack.c.h.b16 %v338
  %v2823 = vunpack.c.l.b16 %v339
  %v2824 = vunpack.c.h.b16 %v339
  %v2825 = vunpack.c.l.b16 %v340
  %v2826 = vunpack.c.h.b16 %v340
  %v2827 = vunpack.c.l.b16 %v341
  %v2828 = vunpack.c.h.b16 %v341
  %v2829 = vunpack.c.l.b16 %v342
  %v2830 = vunpack.c.h.b16 %v342
  %v2831 = vunpack.c.l.b16 %v343
  %v2832 = vunpack.c.h.b16 %v343
  %v2833 = vunpack.c.l.b16 %v344
  %v2834 = vunpack.c.h.b16 %v344
  %v2835 = vunpack.c.l.b16 %v345
  %v2836 = vunpack.c.h.b16 %v345
  %v2837 = vunpack.c.l.b16 %v346
  %v2838 = vunpack.c.h.b16 %v346
  %v2839 = vunpack.c.l.b16 %v347
  %v2840 = vunpack.c.h.b16 %v347
  %v2841 = vunpack.c.l.b16 %v348
  %v2842 = vunpack.c.h.b16 %v348
  %v2843 = vunpack.c.l.b16 %v349
  %v2844 = vunpack.c.h.b16 %v349
  %v2845 = vunpack.c.l.b16 %v350
  %v2846 = vunpack.c.h.b16 %v350
  %v2847 = vunpack.c.l.b16 %v351
  %v2848 = vunpack.c.h.b16 %v351
  %v2849 = vunpack.c.l.b16 %v352
  %v2850 = vunpack.c.h.b16 %v352
  %v2851 = vunpack.c.l.b16 %v353
  %v2852 = vunpack.c.h.b16 %v353
  %v2853 = vunpack.c.l.b16 %v354
  %v2854 = vunpack.c.h.b16 %v354
  %v2855 = vunpack.c.l.b16 %v355
  %v2856 = vunpack.c.h.b16 %v355
  %v2857 = vunpack.c.l.b16 %v356
  %v2858 = vunpack.c.h.b16 %v356
  %v2859 = vunpack.c.l.b16 %v357
  %v2860 = vunpack.c.h.b16 %v357
  %v2861 = vunpack.c.l.b16 %v358
  %v2862 = vunpack.c.h.b16 %v358
  %v2863 = vunpack.c.l.b16 %v359
  %v2864 = vunpack.c.h.b16 %v359
  %v2865 = vunpack.c.l.b16 %v360
  %v2866 = vunpack.c.h.b16 %v360
  %v2867 = vunpack.c.l.b16 %v361
  %v2868 = vunpack.c.h.b16 %v361
  %v2869 = vunpack.c.l.b16 %v362
  %v2870 = vunpack.c.h.b16 %v362
  %v2871 = vunpack.c.l.b16 %v363
  %v2872 = vunpack.c.h.b16 %v363
  %v2873 = vunpack.c.l.b16 %v364
  %v2874 = vunpack.c.h.b16 %v364
  %v2875 = vunpack.c.l.b16 %v365
  %v2876 = vunpack.c.h.b16 %v365
  %v2877 = vunpack.c.l.b16 %v366
  %v2878 = vunpack.c.h.b16 %v366
  %v2879 = vunpack.c.l.b16 %v367
  %v2880 = vunpack.c.h.b16 %v367
  %v2881 = vunpack.c.l.b16 %v368
  %v2882 = vunpack.c.h.b16 %v368
  %v2883 = vunpack.c.l.b16 %v369
  %v2884 = vunpack.c.h.b16 %v369
  %v2885 = vunpack.c.l.b16 %v370
  %v2886 = vunpack.c.h.b16 %v370
  %v2887 = vunpack.c.l.b16 %v371
  %v2888 = vunpack.c.h.b16 %v371
  %v2889 = vunpack.c.l.b16 %v372
  %v2890 = vunpack.c.h.b16 %v372
  %v2891 = vunpack.c.l.b16 %v373
  %v2892 = vunpack.c.h.b16 %v373
  %v2893 = vunpack.c.l.b16 %v374
  %v2894 = vunpack.c.h.b16 %v374
  %v2895 = vunpack.c.l.b16 %v375
  %v2896 = vunpack.c.h.b16 %v375
  %v2897 = vunpack.c.l.b16 %v376
  %v2898 = vunpack.c.h.b16 %v376
  %v2899 = vunpack.c.l.b16 %v377
  %v2900 = vunpack.c.h.b16 %v377
  %v2901 = vunpack.c.l.b16 %v378
  %v2902 = vunpack.c.h.b16 %v378
  %v2903 = vunpack.c.l.b16 %v379
  %v2904 = vunpack.c.h.b16 %v379
  %v2905 = vunpack.c.l.b16 %v380
  %v2906 = vunpack.c.h.b16 %v380
  %v2907 = vunpack.c.l.b16 %v381
  %v2908 = vunpack.c.h.b16 %v381
  %v2909 = vunpack.c.l.b16 %v382
  %v2910 = vunpack.c.h.b16 %v382
  %v2911 = vunpack.c.l.b16 %v383
  %v2912 = vunpack.c.h.b16 %v383
  %v2913 = vunpack.c.l.b16 %v384
  %v2914 = vunpack.c.h.b16 %v384
  %v2915 = vunpack.c.l.b16 %v385
  %v2916 = vunpack.c.h.b16 %v385
  %v2917 = vunpack.c.l.b16 %v386
  %v2918 = vunpack.c.h.b16 %v386
  %v2919 = vunpack.c.l.b16 %v387
  %v2920 = vunpack.c.h.b16 %v387
  %v2921 = vunpack.c.l.b16 %v388
  %v2922 = vunpack.c.h.b16 %v388
  %v2923 = vunpack.c.l.b16 %v389
  %v2924 = vunpack.c.h.b16 %v389
  %v2925 = vunpack.c.l.b16 %v390
  %v2926 = vunpack.c.h.b16 %v390
  %v2927 = vunpack.c.l.b16 %v391
  %v2928 = vunpack.c.h.b16 %v391
  %v2929 = vunpack.c.l.b16 %v392
  %v2930 = vunpack.c.h.b16 %v392
  %v2931 = vunpack.c.l.b16 %v393
  %v2932 = vunpack.c.h.b16 %v393
  %v2933 = vunpack.c.l.b16 %v394
  %v2934 = vunpack.c.h.b16 %v394
  %v2935 = vunpack.c.l.b16 %v395
  %v2936 = vunpack.c.h.b16 %v395
  %v2937 = vunpack.c.l.b16 %v396
  %v2938 = vunpack.c.h.b16 %v396
  %v2939 = vunpack.c.l.b16 %v397
  %v2940 = vunpack.c.h.b16 %v397
  %v2941 = vunpack.c.l.b16 %v398
  %v2942 = vunpack.c.h.b16 %v398
  %v2943 = vunpack.c.l.b16 %v399
  %v2944 = vunpack.c.h.b16 %v399
  %v2945 = vunpack.c.l.b16 %v400
  %v2946 = vunpack.c.h.b16 %v400
  %v2947 = vunpack.c.l.b16 %v401
  %v2948 = vunpack.c.h.b16 %v401
  %v2949 = vunpack.c.l.b16 %v402
  %v2950 = vunpack.c.h.b16 %v402
  %v2951 = vunpack.c.l.b16 %v403
  %v2952 = vunpack.c.h.b16 %v403
  %v2953 = vunpack.c.l.b16 %v404
  %v2954 = vunpack.c.h.b16 %v404
  %v2955 = vunpack.c.l.b16 %v405
  %v2956 = vunpack.c.h.b16 %v405
  %v2957 = vunpack.c.l.b16 %v406
  %v2958 = vunpack.c.h.b16 %v406
  %v2959 = vunpack.c.l.b16 %v407
  %v2960 = vunpack.c.h.b16 %v407
  %v2961 = vunpack.c.l.b16 %v408
  %v2962 = vunpack.c.h.b16 %v408
  %v2963 = vunpack.c.l.b16 %v409
  %v2964 = vunpack.c.h.b16 %v409
  %v2965 = vunpack.c.l.b16 %v410
  %v2966 = vunpack.c.h.b16 %v410
  %v2967 = vunpack.c.l.b16 %v411
  %v2968 = vunpack.c.h.b16 %v411
  %v2969 = vunpack.c.l.b16 %v412
  %v2970 = vunpack.c.h.b16 %v412
  %v2971 = vunpack.c.l.b16 %v413
  %v2972 = vunpack.c.h.b16 %v413
  %v2973 = vunpack.c.l.b16 %v414
  %v2974 = vunpack.c.h.b16 %v414
  %v2975 = vunpack.c.l.b16 %v415
  %v2976 = vunpack.c.h.b16 %v415
  %v2977 = vunpack.c.l.b16 %v416
  %v2978 = vunpack.c.h.b16 %v416
  %v2979 = vunpack.c.l.b16 %v417
  %v2980 = vunpack.c.h.b16 %v417
  %v2981 = vunpack.c.l.b16 %v418
  %v2982 = vunpack.c.h.b16 %v418
  %v2983 = vunpack.c.l.b16 %v419
  %v2984 = vunpack.c.h.b16 %v419
  %v2985 = vunpack.c.l.b16 %v420
  %v2986 = vunpack.c.h.b16 %v420
  %v2987 = vunpack.c.l.b16 %v421
  %v2988 = vunpack.c.h.b16 %v421
  %v2989 = vunpack.c.l.b16 %v422
  %v2990 = vunpack.c.h.b16 %v422
  %v2991 = vunpack.c.l.b16 %v423
  %v2992 = vunpack.c.h.b16 %v423
  %v2993 = vunpack.c.l.b16 %v424
  %v2994 = vunpack.c.h.b16 %v424
  %v2995 = vunpack.c.l.b16 %v425
  %v2996 = vunpack.c.h.b16 %v425
  %v2997 = vunpack.c.l.b16 %v426
  %v2998 = vunpack.c.h.b16 %v426
  %v2999 = vunpack.c.l.b16 %v427
  %v3000 = vunpack.c.h.b16 %v427
  %v3001 = vunpack.c.l.b16 %v428
  %v3002 = vunpack.c.h.b16 %v428
  %v3003 = vunpack.c.l.b16 %v429
  %v3004 = vunpack.c.h.b16 %v429
  %v3005 = vunpack.c.l.b16 %v430
  %v3006 = vunpack.c.h.b16 %v430
  %v3007 = vunpack.c.l.b16 %v431
  %v3008 = vunpack.c.h.b16 %v431
  %v3009 = vunpack.c.l.b16 %v432
  %v3010 = vunpack.c.h.b16 %v432
  %v3011 = vunpack.c.l.b16 %v433
  %v3012 = vunpack.c.h.b16 %v433
  %v3013 = vunpack.c.l.b16 %v434
  %v3014 = vunpack.c.h.b16 %v434
  %v3015 = vunpack.c.l.b16 %v435
  %v3016 = vunpack.c.h.b16 %v435
  %v3017 = vunpack.c.l.b16 %v436
  %v3018 = vunpack.c.h.b16 %v436
  %v3019 = vunpack.c.l.b16 %v437
  %v3020 = vunpack.c.h.b16 %v437
  %v3021 = vunpack.c.l.b16 %v438
  %v3022 = vunpack.c.h.b16 %v438
  %v3023 = vunpack.c.l.b16 %v439
  %v3024 = vunpack.c.h.b16 %v439
  %v3025 = vunpack.c.l.b16 %v440
  %v3026 = vunpack.c.h.b16 %v440
  %v3027 = vunpack.c.l.b16 %v441
  %v3028 = vunpack.c.h.b16 %v441
  %v3029 = vunpack.c.l.b16 %v442
  %v3030 = vunpack.c.h.b16 %v442
  %v3031 = vunpack.c.l.b16 %v443
  %v3032 = vunpack.c.h.b16 %v443
  %v3033 = vunpack.c.l.b16 %v444
  %v3034 = vunpack.c.h.b16 %v444
  %v3035 = vunpack.c.l.b16 %v445
  %v3036 = vunpack.c.h.b16 %v445
  %v3037 = vunpack.c.l.b16 %v446
  %v3038 = vunpack.c.h.b16 %v446
  %v3039 = vunpack.c.l.b16 %v447
  %v3040 = vunpack.c.h.b16 %v447
  %v3041 = vunpack.c.l.b16 %v448
  %v3042 = vunpack.c.h.b16 %v448
  %v3043 = vunpack.c.l.b16 %v449
  %v3044 = vunpack.c.h.b16 %v449
  %v3045 = vunpack.c.l.b16 %v450
  %v3046 = vunpack.c.h.b16 %v450
  %v3047 = vunpack.c.l.b16 %v451
  %v3048 = vunpack.c.h.b16 %v451
  %v3049 = vunpack.c.l.b16 %v452
  %v3050 = vunpack.c.h.b16 %v452
  %v3051 = vunpack.c.l.b16 %v453
  %v3052 = vunpack.c.h.b16 %v453
  %v3053 = vunpack.c.l.b16 %v454
  %v3054 = vunpack.c.h.b16 %v454
  %v3055 = vunpack.c.l.b16 %v455
  %v3056 = vunpack.c.h.b16 %v455
  %v3057 = vunpack.c.l.b16 %v456
  %v3058 = vunpack.c.h.b16 %v456
  %v3059 = vunpack.c.l.b16 %v457
  %v3060 = vunpack.c.h.b16 %v457
  %v3061 = vunpack.c.l.b16 %v458
  %v3062 = vunpack.c.h.b16 %v458
  %v3063 = vunpack.c.l.b16 %v459
  %v3064 = vunpack.c.h.b16 %v459
  %v3065 = vunpack.c.l.b16 %v460
  %v3066 = vunpack.c.h.b16 %v460
  %v3067 = vunpack.c.l.b16 %v461
  %v3068 = vunpack.c.h.b16 %v461
  %v3069 = vunpack.c.l.b16 %v462
  %v3070 = vunpack.c.h.b16 %v462
  %v3071 = vunpack.c.l.b16 %v463
  %v3072 = vunpack.c.h.b16 %v463
  %v3073 = vunpack.c.l.b16 %v464
  %v3074 = vunpack.c.h.b16 %v464
  %v3075 = vunpack.c.l.b16 %v465
  %v3076 = vunpack.c.h.b16 %v465
  %v3077 = vunpack.c.l.b16 %v466
  %v3078 = vunpack.c.h.b16 %v466
  %v3079 = vunpack.c.l.b16 %v467
  %v3080 = vunpack.c.h.b16 %v467
  %v3081 = vunpack.c.l.b16 %v468
  %v3082 = vunpack.c.h.b16 %v468
  %v3083 = vunpack.c.l.b16 %v469
  %v3084 = vunpack.c.h.b16 %v469
  %v3085 = vunpack.c.l.b16 %v470
  %v3086 = vunpack.c.h.b16 %v470
  %v3087 = vunpack.c.l.b16 %v471
  %v3088 = vunpack.c.h.b16 %v471
  %v3089 = vunpack.c.l.b16 %v472
  %v3090 = vunpack.c.h.b16 %v472
  %v3091 = vunpack.c.l.b16 %v473
  %v3092 = vunpack.c.h.b16 %v473
  %v3093 = vunpack.c.l.b16 %v474
  %v3094 = vunpack.c.h.b16 %v474
  %v3095 = vunpack.c.l.b16 %v475
  %v3096 = vunpack.c.h.b16 %v475
  %v3097 = vunpack.c.l.b16 %v476
  %v3098 = vunpack.c.h.b16 %v476
  %v3099 = vunpack.c.l.b16 %v477
  %v3100 = vunpack.c.h.b16 %v477
  %v3101 = vunpack.c.l.b16 %v478
  %v3102 = vunpack.c.h.b16 %v478
  %v3103 = vunpack.c.l.b16 %v479
  %v3104 = vunpack.c.h.b16 %v479
  %v3105 = vunpack.c.l.b16 %v480
  %v3106 = vunpack.c.h.b16 %v480
  %v3107 = vunpack.c.l.b16 %v481
  %v3108 = vunpack.c.h.b16 %v481
  %v3109 = vunpack.c.l.b16 %v482
  %v3110 = vunpack.c.h.b16 %v482
  %v3111 = vunpack.c.l.b16 %v483
  %v3112 = vunpack.c.h.b16 %v483
  %v3113 = vunpack.c.l.b16 %v484
  %v3114 = vunpack.c.h.b16 %v484
  %v3115 = vunpack.c.l.b16 %v485
  %v3116 = vunpack.c.h.b16 %v485
  %v3117 = vunpack.c.l.b16 %v486
  %v3118 = vunpack.c.h.b16 %v486
  %v3119 = vunpack.c.l.b16 %v487
  %v3120 = vunpack.c.h.b16 %v487
  %v3121 = vunpack.c.l.b16 %v488
  %v3122 = vunpack.c.h.b16 %v488
  %v3123 = vunpack.c.l.b16 %v489
  %v3124 = vunpack.c.h.b16 %v489
  %v3125 = vunpack.c.l.b16 %v490
  %v3126 = vunpack.c.h.b16 %v490
  %v3127 = vunpack.c.l.b16 %v491
  %v3128 = vunpack.c.h.b16 %v491
  %v3129 = vunpack.c.l.b16 %v492
  %v3130 = vunpack.c.h.b16 %v492
  %v3131 = vunpack.c.l.b16 %v493
  %v3132 = vunpack.c.h.b16 %v493
  %v3133 = vunpack.c.l.b16 %v494
  %v3134 = vunpack.c.h.b16 %v494
  %v3135 = vunpack.c.l.b16 %v495
  %v3136 = vunpack.c.h.b16 %v495
  %v3137 = vunpack.c.l.b16 %v496
  %v3138 = vunpack.c.h.b16 %v496
  %v3139 = vunpack.c.l.b16 %v497
  %v3140 = vunpack.c.h.b16 %v497
  %v3141 = vunpack.c.l.b16 %v498
  %v3142 = vunpack.c.h.b16 %v498
  %v3143 = vunpack.c.l.b16 %v499
  %v3144 = vunpack.c.h.b16 %v499
  %v3145 = vunpack.c.l.b16 %v500
  %v3146 = vunpack.c.h.b16 %v500
  %v3147 = vunpack.c.l.b16 %v501
  %v3148 = vunpack.c.h.b16 %v501
  %v3149 = vunpack.c.l.b16 %v502
  %v3150 = vunpack.c.h.b16 %v502
  %v3151 = vunpack.c.l.b16 %v503
  %v3152 = vunpack.c.h.b16 %v503
  %v3153 = vunpack.c.l.b16 %v504
  %v3154 = vunpack.c.h.b16 %v504
  %v3155 = vunpack.c.l.b16 %v505
  %v3156 = vunpack.c.h.b16 %v505
  %v3157 = vunpack.c.l.b16 %v506
  %v3158 = vunpack.c.h.b16 %v506
  %v3159 = vunpack.c.l.b16 %v507
  %v3160 = vunpack.c.h.b16 %v507
  %v3161 = vunpack.c.l.b16 %v508
  %v3162 = vunpack.c.h.b16 %v508
  %v3163 = vunpack.c.l.b16 %v509
  %v3164 = vunpack.c.h.b16 %v509
  %v3165 = vunpack.c.l.b16 %v510
  %v3166 = vunpack.c.h.b16 %v510
  %v3167 = vunpack.c.l.b16 %v511
  %v3168 = vunpack.c.h.b16 %v511
  %v3169 = vunpack.c.l.b16 %v512
  %v3170 = vunpack.c.h.b16 %v512
  %v3171 = vunpack.c.l.b16 %v513
  %v3172 = vunpack.c.h.b16 %v513
  %v3173 = vunpack.c.l.b16 %v514
  %v3174 = vunpack.c.h.b16 %v514
  %v3175 = vunpack.c.l.b16 %v515
  %v3176 = vunpack.c.h.b16 %v515
  %v3177 = vunpack.c.l.b16 %v516
  %v3178 = vunpack.c.h.b16 %v516
  %v3179 = vunpack.c.l.b16 %v517
  %v3180 = vunpack.c.h.b16 %v517
  %v3181 = vunpack.c.l.b16 %v518
  %v3182 = vunpack.c.h.b16 %v518
  %v3183 = vunpack.c.l.b16 %v519
  %v3184 = vunpack.c.h.b16 %v519
  %v3185 = vunpack.c.l.b16 %v520
  %v3186 = vunpack.c.h.b16 %v520
  %v3187 = vunpack.c.l.b16 %v521
  %v3188 = vunpack.c.h.b16 %v521
  %v3189 = vunpack.c.l.b16 %v522
  %v3190 = vunpack.c.h.b16 %v522
  %v3191 = vunpack.c.l.b16 %v523
  %v3192 = vunpack.c.h.b16 %v523
  %v3193 = vunpack.c.l.b16 %v524
  %v3194 = vunpack.c.h.b16 %v524
  %v3195 = vunpack.c.l.b16 %v525
  %v3196 = vunpack.c.h.b16 %v525
  %v3197 = vunpack.c.l.b16 %v526
  %v3198 = vunpack.c.h.b16 %v526
  %v3199 = vunpack.c.l.b16 %v527
  %v3200 = vunpack.c.h.b16 %v527
  %v3201 = vunpack.c.l.b16 %v528
  %v3202 = vunpack.c.h.b16 %v528
  %v3203 = vunpack.c.l.b16 %v529
  %v3204 = vunpack.c.h.b16 %v529
  %v3205 = vunpack.c.l.b16 %v530
  %v3206 = vunpack.c.h.b16 %v530
  %v3207 = vunpack.c.l.b16 %v531
  %v3208 = vunpack.c.h.b16 %v531
  %v3209 = vunpack.c.l.b16 %v532
  %v3210 = vunpack.c.h.b16 %v532
  %v3211 = vunpack.c.l.b16 %v533
  %v3212 = vunpack.c.h.b16 %v533
  %v3213 = vunpack.c.l.b16 %v534
  %v3214 = vunpack.c.h.b16 %v534
  %v3215 = vunpack.c.l.b16 %v535
  %v3216 = vunpack.c.h.b16 %v535
  %v3217 = vunpack.c.l.b16 %v536
  %v3218 = vunpack.c.h.b16 %v536
  %v3219 = vunpack.c.l.b16 %v537
  %v3220 = vunpack.c.h.b16 %v537
  %v3221 = vunpack.c.l.b16 %v538
  %v3222 = vunpack.c.h.b16 %v538
  %v3223 = vunpack.c.l.b16 %v539
  %v3224 = vunpack.c.h.b16 %v539
  %v3225 = vunpack.c.l.b16 %v540
  %v3226 = vunpack.c.h.b16 %v540
  %v3227 = vunpack.c.l.b16 %v541
  %v3228 = vunpack.c.h.b16 %v541
  %v3229 = vunpack.c.l.b16 %v542
  %v3230 = vunpack.c.h.b16 %v542
  %v3231 = vunpack.c.l.b16 %v543
  %v3232 = vunpack.c.h.b16 %v543
  %v3233 = vunpack.c.l.b16 %v544
  %v3234 = vunpack.c.h.b16 %v544
  %v3235 = vunpack.c.l.b16 %v545
  %v3236 = vunpack.c.h.b16 %v545
  %v3237 = vunpack.c.l.b16 %v546
  %v3238 = vunpack.c.h.b16 %v546
  %v3239 = vunpack.c.l.b16 %v547
  %v3240 = vunpack.c.h.b16 %v547
  %v3241 = vunpack.c.l.b16 %v548
  %v3242 = vunpack.c.h.b16 %v548
  %v3243 = vunpack.c.l.b16 %v549
  %v3244 = vunpack.c.h.b16 %v549
  %v3245 = vunpack.c.l.b16 %v550
  %v3246 = vunpack.c.h.b16 %v550
  %v3247 = vunpack.c.l.b16 %v551
  %v3248 = vunpack.c.h.b16 %v551
  %v3249 = vunpack.c.l.b16 %v552
  %v3250 = vunpack.c.h.b16 %v552
  %v3251 = vunpack.c.l.b16 %v553
  %v3252 = vunpack.c.h.b16 %v553
  %v3253 = vunpack.c.l.b16 %v554
  %v3254 = vunpack.c.h.b16 %v554
  %v3255 = vunpack.c.l.b16 %v555
  %v3256 = vunpack.c.h.b16 %v555
  %v3257 = vunpack.c.l.b16 %v556
  %v3258 = vunpack.c.h.b16 %v556
  %v3259 = vunpack.c.l.b16 %v557
  %v3260 = vunpack.c.h.b16 %v557
  %v3261 = vunpack.c.l.b16 %v558
  %v3262 = vunpack.c.h.b16 %v558
  %v3263 = vunpack.c.l.b16 %v559
  %v3264 = vunpack.c.h.b16 %v559
  %v3265 = vunpack.c.l.b16 %v560
  %v3266 = vunpack.c.h.b16 %v560
  %v3267 = vunpack.c.l.b16 %v561
  %v3268 = vunpack.c.h.b16 %v561
  %v3269 = vunpack.c.l.b16 %v562
  %v3270 = vunpack.c.h.b16 %v562
  %v3271 = vunpack.c.l.b16 %v563
  %v3272 = vunpack.c.h.b16 %v563
  %v3273 = vunpack.c.l.b16 %v564
  %v3274 = vunpack.c.h.b16 %v564
  %v3275 = vunpack.c.l.b16 %v565
  %v3276 = vunpack.c.h.b16 %v565
  %v3277 = vunpack.c.l.b16 %v566
  %v3278 = vunpack.c.h.b16 %v566
  %v3279 = vunpack.c.l.b16 %v567
  %v3280 = vunpack.c.h.b16 %v567
  %v3281 = vunpack.c.l.b16 %v568
  %v3282 = vunpack.c.h.b16 %v568
  %v3283 = vunpack.c.l.b16 %v569
  %v3284 = vunpack.c.h.b16 %v569
  %v3285 = vunpack.c.l.b16 %v570
  %v3286 = vunpack.c.h.b16 %v570
  %v3287 = vunpack.c.l.b16 %v571
  %v3288 = vunpack.c.h.b16 %v571
  %v3289 = vunpack.c.l.b16 %v572
  %v3290 = vunpack.c.h.b16 %v572
  %v3291 = vunpack.c.l.b16 %v573
  %v3292 = vunpack.c.h.b16 %v573
  %v3293 = vunpack.c.l.b16 %v574
  %v3294 = vunpack.c.h.b16 %v574
  %v3295 = vunpack.c.l.b16 %v575
  %v3296 = vunpack.c.h.b16 %v575
  %v3297 = vunpack.c.l.b16 %v576
  %v3298 = vunpack.c.h.b16 %v576
  %v3299 = vunpack.c.l.b16 %v577
  %v3300 = vunpack.c.h.b16 %v577
  %v3301 = vunpack.c.l.b16 %v578
  %v3302 = vunpack.c.h.b16 %v578
  %v3303 = vunpack.c.l.b16 %v579
  %v3304 = vunpack.c.h.b16 %v579
  %v3305 = vunpack.c.l.b16 %v580
  %v3306 = vunpack.c.h.b16 %v580
  %v3307 = vunpack.c.l.b16 %v581
  %v3308 = vunpack.c.h.b16 %v581
  %v3309 = vunpack.c.l.b16 %v582
  %v3310 = vunpack.c.h.b16 %v582
  %v3311 = vunpack.c.l.b16 %v583
  %v3312 = vunpack.c.h.b16 %v583
  %v3313 = vunpack.c.l.b16 %v584
  %v3314 = vunpack.c.h.b16 %v584
  %v3315 = vunpack.c.l.b16 %v585
  %v3316 = vunpack.c.h.b16 %v585
  %v3317 = vunpack.c.l.b16 %v586
  %v3318 = vunpack.c.h.b16 %v586
  %v3319 = vunpack.c.l.b16 %v587
  %v3320 = vunpack.c.h.b16 %v587
  %v3321 = vunpack.c.l.b16 %v588
  %v3322 = vunpack.c.h.b16 %v588
  %v3323 = vunpack.c.l.b16 %v589
  %v3324 = vunpack.c.h.b16 %v589
  %v3325 = vunpack.c.l.b16 %v590
  %v3326 = vunpack.c.h.b16 %v590
  %v3327 = vunpack.c.l.b16 %v591
  %v3328 = vunpack.c.h.b16 %v591
  %v3329 = vunpack.c.l.b16 %v592
  %v3330 = vunpack.c.h.b16 %v592
  %v3331 = vunpack.c.l.b16 %v593
  %v3332 = vunpack.c.h.b16 %v593
  %v3333 = vunpack.c.l.b16 %v594
  %v3334 = vunpack.c.h.b16 %v594
  %v3335 = vunpack.c.l.b16 %v595
  %v3336 = vunpack.c.h.b16 %v595
  %v3337 = vunpack.c.l.b16 %v596
  %v3338 = vunpack.c.h.b16 %v596
  %v3339 = vunpack.c.l.b16 %v597
  %v3340 = vunpack.c.h.b16 %v597
  %v3341 = vunpack.c.l.b16 %v598
  %v3342 = vunpack.c.h.b16 %v598
  %v3343 = vunpack.c.l.b16 %v599
  %v3344 = vunpack.c.h.b16 %v599
  %v3345 = vunpack.c.l.b16 %v600
  %v3346 = vunpack.c.h.b16 %v600
  %v3347 = vunpack.c.l.b16 %v601
  %v3348 = vunpack.c.h.b16 %v601
  %v3349 = vunpack.c.l.b16 %v602
  %v3350 = vunpack.c.h.b16 %v602
  %v3351 = vunpack.c.l.b16 %v603
  %v3352 = vunpack.c.h.b16 %v603
  %v3353 = vunpack.c.l.b16 %v604
  %v3354 = vunpack.c.h.b16 %v604
  %v3355 = vunpack.c.l.b16 %v605
  %v3356 = vunpack.c.h.b16 %v605
  %v3357 = vunpack.c.l.b16 %v606
  %v3358 = vunpack.c.h.b16 %v606
  %v3359 = vunpack.c.l.b16 %v607
  %v3360 = vunpack.c.h.b16 %v607
  %v3361 = vunpack.c.l.b16 %v608
  %v3362 = vunpack.c.h.b16 %v608
  %v3363 = vunpack.c.l.b16 %v609
  %v3364 = vunpack.c.h.b16 %v609
  %v3365 = vunpack.c.l.b16 %v610
  %v3366 = vunpack.c.h.b16 %v610
  %v3367 = vunpack.c.l.b16 %v611
  %v3368 = vunpack.c.h.b16 %v611
  %v3369 = vunpack.c.l.b16 %v612
  %v3370 = vunpack.c.h.b16 %v612
  %v3371 = vunpack.c.l.b16 %v613
  %v3372 = vunpack.c.h.b16 %v613
  %v3373 = vunpack.c.l.b16 %v614
  %v3374 = vunpack.c.h.b16 %v614
  %v3375 = vunpack.c.l.b16 %v615
  %v3376 = vunpack.c.h.b16 %v615
  %v3377 = vunpack.c.l.b16 %v616
  %v3378 = vunpack.c.h.b16 %v616
  %v3379 = vunpack.c.l.b16 %v617
  %v3380 = vunpack.c.h.b16 %v617
  %v3381 = vunpack.c.l.b16 %v618
  %v3382 = vunpack.c.h.b16 %v618
  %v3383 = vunpack.c.l.b16 %v619
  %v3384 = vunpack.c.h.b16 %v619
  %v3385 = vunpack.c.l.b16 %v620
  %v3386 = vunpack.c.h.b16 %v620
  %v3387 = vunpack.c.l.b16 %v621
  %v3388 = vunpack.c.h.b16 %v621
  %v3389 = vunpack.c.l.b16 %v622
  %v3390 = vunpack.c.h.b16 %v622
  %v3391 = vunpack.c.l.b16 %v623
  %v3392 = vunpack.c.h.b16 %v623
  %v3393 = vunpack.c.l.b16 %v624
  %v3394 = vunpack.c.h.b16 %v624
  %v3395 = vunpack.c.l.b16 %v625
  %v3396 = vunpack.c.h.b16 %v625
  %v3397 = vunpack.c.l.b16 %v626
  %v3398 = vunpack.c.h.b16 %v626
  %v3399 = vunpack.c.l.b16 %v627
  %v3400 = vunpack.c.h.b16 %v627
  %v3401 = vunpack.c.l.b16 %v628
  %v3402 = vunpack.c.h.b16 %v628
  %v3403 = vunpack.c.l.b16 %v629
  %v3404 = vunpack.c.h.b16 %v629
  %v3405 = vunpack.c.l.b16 %v630
  %v3406 = vunpack.c.h.b16 %v630
  %v3407 = vunpack.c.l.b16 %v631
  %v3408 = vunpack.c.h.b16 %v631
  %v3409 = vunpack.c.l.b16 %v632
  %v3410 = vunpack.c.h.b16 %v632
  %v3411 = vunpack.c.l.b16 %v633
  %v3412 = vunpack.c.h.b16 %v633
  %v3413 = vunpack.c.l.b16 %v634
  %v3414 = vunpack.c.h.b16 %v634
  %v3415 = vunpack.c.l.b16 %v635
  %v3416 = vunpack.c.h.b16 %v635
  %v3417 = vunpack.c.l.b16 %v636
  %v3418 = vunpack.c.h.b16 %v636
  %v3419 = vunpack.c.l.b16 %v637
  %v3420 = vunpack.c.h.b16 %v637
  %v3421 = vunpack.c.l.b16 %v638
  %v3422 = vunpack.c.h.b16 %v638
  %v3423 = vunpack.c.l.b16 %v639
  %v3424 = vunpack.c.h.b16 %v639
  %v3425 = vunpack.c.l.b16 %v640
  %v3426 = vunpack.c.h.b16 %v640
  %v3427 = vunpack.c.l.b16 %v641
  %v3428 = vunpack.c.h.b16 %v641
  %v3429 = vunpack.c.l.b16 %v642
  %v3430 = vunpack.c.h.b16 %v642
  %v3431 = vunpack.c.l.b16 %v643
  %v3432 = vunpack.c.h.b16 %v643
  %v3433 = vunpack.c.l.b16 %v644
  %v3434 = vunpack.c.h.b16 %v644
  %v3435 = vunpack.c.l.b16 %v645
  %v3436 = vunpack.c.h.b16 %v645
  %v3437 = vunpack.c.l.b16 %v646
  %v3438 = vunpack.c.h.b16 %v646
  %v3439 = vunpack.c.l.b16 %v647
  %v3440 = vunpack.c.h.b16 %v647
  %v3441 = vunpack.c.l.b16 %v648
  %v3442 = vunpack.c.h.b16 %v648
  %v3443 = vunpack.c.l.b16 %v649
  %v3444 = vunpack.c.h.b16 %v649
  %v3445 = vunpack.c.l.b16 %v650
  %v3446 = vunpack.c.h.b16 %v650
  %v3447 = vunpack.c.l.b16 %v651
  %v3448 = vunpack.c.h.b16 %v651
  %v3449 = vunpack.c.l.b16 %v652
  %v3450 = vunpack.c.h.b16 %v652
  %v3451 = vunpack.c.l.b16 %v653
  %v3452 = vunpack.c.h.b16 %v653
  %v3453 = vunpack.c.l.b16 %v654
  %v3454 = vunpack.c.h.b16 %v654
  %v3455 = vunpack.c.l.b16 %v655
  %v3456 = vunpack.c.h.b16 %v655
  %v3457 = vunpack.c.l.b16 %v656
  %v3458 = vunpack.c.h.b16 %v656
  %v3459 = vunpack.c.l.b16 %v657
  %v3460 = vunpack.c.h.b16 %v657
  %v3461 = vunpack.c.l.b16 %v658
  %v3462 = vunpack.c.h.b16 %v658
  %v3463 = vunpack.c.l.b16 %v659
  %v3464 = vunpack.c.h.b16 %v659
  %v3465 = vunpack.c.l.b16 %v660
  %v3466 = vunpack.c.h.b16 %v660
  %v3467 = vunpack.c.l.b16 %v661
  %v3468 = vunpack.c.h.b16 %v661
  %v3469 = vunpack.c.l.b16 %v662
  %v3470 = vunpack.c.h.b16 %v662
  %v3471 = vunpack.c.l.b16 %v663
  %v3472 = vunpack.c.h.b16 %v663
  %v3473 = vunpack.c.l.b16 %v664
  %v3474 = vunpack.c.h.b16 %v664
  %v3475 = vunpack.c.l.b16 %v665
  %v3476 = vunpack.c.h.b16 %v665
  %v3477 = vunpack.c.l.b16 %v666
  %v3478 = vunpack.c.h.b16 %v666
  %v3479 = vunpack.c.l.b16 %v667
  %v3480 = vunpack.c.h.b16 %v667
  %v3481 = vunpack.c.l.b16 %v668
  %v3482 = vunpack.c.h.b16 %v668
  %v3483 = vunpack.c.l.b16 %v669
  %v3484 = vunpack.c.h.b16 %v669
  %v3485 = vunpack.c.l.b16 %v670
  %v3486 = vunpack.c.h.b16 %v670
  %v3487 = vunpack.c.l.b16 %v671
  %v3488 = vunpack.c.h.b16 %v671
  %v3489 = vunpack.c.l.b16 %v672
  %v3490 = vunpack.c.h.b16 %v672
  %v3491 = vunpack.c.l.b16 %v673
  %v3492 = vunpack.c.h.b16 %v673
  %v3493 = vunpack.c.l.b16 %v674
  %v3494 = vunpack.c.h.b16 %v674
  %v3495 = vunpack.c.l.b16 %v675
  %v3496 = vunpack.c.h.b16 %v675
  %v3497 = vunpack.c.l.b16 %v676
  %v3498 = vunpack.c.h.b16 %v676
  %v3499 = vunpack.c.l.b16 %v677
  %v3500 = vunpack.c.h.b16 %v677
  %v3501 = vunpack.c.l.b16 %v678
  %v3502 = vunpack.c.h.b16 %v678
  %v3503 = vunpack.c.l.b16 %v679
  %v3504 = vunpack.c.h.b16 %v679
  %v3505 = vunpack.c.l.b16 %v680
  %v3506 = vunpack.c.h.b16 %v680
  %v3507 = vunpack.c.l.b16 %v681
  %v3508 = vunpack.c.h.b16 %v681
  %v3509 = vunpack.c.l.b16 %v682
  %v3510 = vunpack.c.h.b16 %v682
  %v3511 = vunpack.c.l.b16 %v683
  %v3512 = vunpack.c.h.b16 %v683
  %v3513 = vunpack.c.l.b16 %v684
  %v3514 = vunpack.c.h.b16 %v684
  %v3515 = vunpack.c.l.b16 %v685
  %v3516 = vunpack.c.h.b16 %v685
  %v3517 = vunpack.c.l.b16 %v686
  %v3518 = vunpack.c.h.b16 %v686
  %v3519 = vunpack.c.l.b16 %v687
  %v3520 = vunpack.c.h.b16 %v687
  %v3521 = vunpack.c.l.b16 %v688
  %v3522 = vunpack.c.h.b16 %v688
  %v3523 = vunpack.c.l.b16 %v689
  %v3524 = vunpack.c.h.b16 %v689
  %v3525 = vunpack.c.l.b16 %v690
  %v3526 = vunpack.c.h.b16 %v690
  %v3527 = vunpack.c.l.b16 %v691
  %v3528 = vunpack.c.h.b16 %v691
  %v3529 = vunpack.c.l.b16 %v692
  %v3530 = vunpack.c.h.b16 %v692
  %v3531 = vunpack.c.l.b16 %v693
  %v3532 = vunpack.c.h.b16 %v693
  %v3533 = vunpack.c.l.b16 %v694
  %v3534 = vunpack.c.h.b16 %v694
  %v3535 = vunpack.c.l.b16 %v695
  %v3536 = vunpack.c.h.b16 %v695
  %v3537 = vunpack.c.l.b16 %v696
  %v3538 = vunpack.c.h.b16 %v696
  %v3539 = vunpack.c.l.b16 %v697
  %v3540 = vunpack.c.h.b16 %v697
  %v3541 = vunpack.c.l.b16 %v698
  %v3542 = vunpack.c.h.b16 %v698
  %v3543 = vunpack.c.l.b16 %v699
  %v3544 = vunpack.c.h.b16 %v699
  %v3545 = vunpack.c.l.b16 %v700
  %v3546 = vunpack.c.h.b16 %v700
  %v3547 = vunpack.c.l.b16 %v701
  %v3548 = vunpack.c.h.b16 %v701
  %v3549 = vunpack.c.l.b16 %v702
  %v3550 = vunpack.c.h.b16 %v702
  %v3551 = vunpack.c.l.b16 %v703
  %v3552 = vunpack.c.h.b16 %v703
  %v3553 = vunpack.c.l.b16 %v704
  %v3554 = vunpack.c.h.b16 %v704
  %v3555 = vunpack.c.l.b16 %v705
  %v3556 = vunpack.c.h.b16 %v705
  %v3557 = vunpack.c.l.b16 %v706
  %v3558 = vunpack.c.h.b16 %v706
  %v3559 = vunpack.c.l.b16 %v707
  %v3560 = vunpack.c.h.b16 %v707
  %v3561 = vunpack.c.l.b16 %v708
  %v3562 = vunpack.c.h.b16 %v708
  %v3563 = vunpack.c.l.b16 %v709
  %v3564 = vunpack.c.h.b16 %v709
  %v3565 = vunpack.c.l.b16 %v710
  %v3566 = vunpack.c.h.b16 %v710
  %v3567 = vunpack.c.l.b16 %v711
  %v3568 = vunpack.c.h.b16 %v711
  %v3569 = vunpack.c.l.b16 %v712
  %v3570 = vunpack.c.h.b16 %v712
  %v3571 = vunpack.c.l.b16 %v713
  %v3572 = vunpack.c.h.b16 %v713
  %v3573 = vunpack.c.l.b16 %v714
  %v3574 = vunpack.c.h.b16 %v714
  %v3575 = vunpack.c.l.b16 %v715
  %v3576 = vunpack.c.h.b16 %v715
  %v3577 = vunpack.c.l.b16 %v716
  %v3578 = vunpack.c.h.b16 %v716
  %v3579 = vunpack.c.l.b16 %v717
  %v3580 = vunpack.c.h.b16 %v717
  %v3581 = vunpack.c.l.b16 %v718
  %v3582 = vunpack.c.h.b16 %v718
  %v3583 = vunpack.c.l.b16 %v719
  %v3584 = vunpack.c.h.b16 %v719
  %v3585 = vunpack.c.l.b16 %v720
  %v3586 = vunpack.c.h.b16 %v720
  %v3587 = vunpack.c.l.b16 %v721
  %v3588 = vunpack.c.h.b16 %v721
  %v3589 = vunpack.c.l.b16 %v722
  %v3590 = vunpack.c.h.b16 %v722
  %v3591 = vunpack.c.l.b16 %v723
  %v3592 = vunpack.c.h.b16 %v723
  %v3593 = vunpack.c.l.b16 %v724
  %v3594 = vunpack.c.h.b16 %v724
  %v3595 = vunpack.c.l.b16 %v725
  %v3596 = vunpack.c.h.b16 %v725
  %v3597 = vunpack.c.l.b16 %v726
  %v3598 = vunpack.c.h.b16 %v726
  %v3599 = vunpack.c.l.b16 %v727
  %v3600 = vunpack.c.h.b16 %v727
  %v3601 = vunpack.c.l.b16 %v728
  %v3602 = vunpack.c.h.b16 %v728
  %v3603 = vunpack.c.l.b16 %v729
  %v3604 = vunpack.c.h.b16 %v729
  %v3605 = vunpack.c.l.b16 %v730
  %v3606 = vunpack.c.h.b16 %v730
  %v3607 = vunpack.c.l.b16 %v731
  %v3608 = vunpack.c.h.b16 %v731
  %v3609 = vunpack.c.l.b16 %v732
  %v3610 = vunpack.c.h.b16 %v732
  %v3611 = vunpack.c.l.b16 %v733
  %v3612 = vunpack.c.h.b16 %v733
  %v3613 = vunpack.c.l.b16 %v734
  %v3614 = vunpack.c.h.b16 %v734
  %v3615 = vunpack.c.l.b16 %v735
  %v3616 = vunpack.c.h.b16 %v735
  %v3617 = vunpack.c.l.b16 %v736
  %v3618 = vunpack.c.h.b16 %v736
  %v3619 = vunpack.c.l.b16 %v737
  %v3620 = vunpack.c.h.b16 %v737
  %v3621 = vunpack.c.l.b16 %v738
  %v3622 = vunpack.c.h.b16 %v738
  %v3623 = vunpack.c.l.b16 %v739
  %v3624 = vunpack.c.h.b16 %v739
  %v3625 = vunpack.c.l.b16 %v740
  %v3626 = vunpack.c.h.b16 %v740
  %v3627 = vunpack.c.l.b16 %v741
  %v3628 = vunpack.c.h.b16 %v741
  %v3629 = vunpack.c.l.b16 %v742
  %v3630 = vunpack.c.h.b16 %v742
  %v3631 = vunpack.c.l.b16 %v743
  %v3632 = vunpack.c.h.b16 %v743
  %v3633 = vunpack.c.l.b16 %v744
  %v3634 = vunpack.c.h.b16 %v744
  %v3635 = vunpack.c.l.b16 %v745
  %v3636 = vunpack.c.h.b16 %v745
  %v3637 = vunpack.c.l.b16 %v746
  %v3638 = vunpack.c.h.b16 %v746
  %v3639 = vunpack.c.l.b16 %v747
  %v3640 = vunpack.c.h.b16 %v747
  %v3641 = vunpack.c.l.b16 %v748
  %v3642 = vunpack.c.h.b16 %v748
  %v3643 = vunpack.c.l.b16 %v749
  %v3644 = vunpack.c.h.b16 %v749
  %v3645 = vunpack.c.l.b16 %v750
  %v3646 = vunpack.c.h.b16 %v750
  %v3647 = vunpack.c.l.b16 %v751
  %v3648 = vunpack.c.h.b16 %v751
  %v3649 = vunpack.c.l.b16 %v752
  %v3650 = vunpack.c.h.b16 %v752
  %v3651 = vunpack.c.l.b16 %v753
  %v3652 = vunpack.c.h.b16 %v753
  %v3653 = vunpack.c.l.b16 %v754
  %v3654 = vunpack.c.h.b16 %v754
  %v3655 = vunpack.c.l.b16 %v755
  %v3656 = vunpack.c.h.b16 %v755
  %v3657 = vunpack.c.l.b16 %v756
  %v3658 = vunpack.c.h.b16 %v756
  %v3659 = vunpack.c.l.b16 %v757
  %v3660 = vunpack.c.h.b16 %v757
  %v3661 = vunpack.c.l.b16 %v758
  %v3662 = vunpack.c.h.b16 %v758
  %v3663 = vunpack.c.l.b16 %v759
  %v3664 = vunpack.c.h.b16 %v759
  %v3665 = vunpack.c.l.b16 %v760
  %v3666 = vunpack.c.h.b16 %v760
  %v3667 = vunpack.c.l.b16 %v761
  %v3668 = vunpack.c.h.b16 %v761
  %v3669 = vunpack.c.l.b16 %v762
  %v3670 = vunpack.c.h.b16 %v762
  %v3671 = vunpack.c.l.b16 %v763
  %v3672 = vunpack.c.h.b16 %v763
  %v3673 = vunpack.c.l.b16 %v764
  %v3674 = vunpack.c.h.b16 %v764
  %v3675 = vunpack.c.l.b16 %v765
  %v3676 = vunpack.c.h.b16 %v765
  %v3677 = vunpack.c.l.b16 %v766
  %v3678 = vunpack.c.h.b16 %v766
  %v3679 = vunpack.c.l.b16 %v767
  %v3680 = vunpack.c.h.b16 %v767
  %v3681 = vunpack.c.l.b16 %v768
  %v3682 = vunpack.c.h.b16 %v768
  %v3683 = vunpack.c.l.b16 %v769
  %v3684 = vunpack.c.h.b16 %v769
  %v3685 = vunpack.c.l.b16 %v770
  %v3686 = vunpack.c.h.b16 %v770
  %v3687 = vunpack.c.l.b16 %v771
  %v3688 = vunpack.c.h.b16 %v771
  %v3689 = vunpack.c.l.b16 %v772
  %v3690 = vunpack.c.h.b16 %v772
  %v3691 = vunpack.c.l.b16 %v773
  %v3692 = vunpack.c.h.b16 %v773
  %v3693 = vunpack.c.l.b16 %v774
  %v3694 = vunpack.c.h.b16 %v774
  %v3695 = vunpack.c.l.b16 %v775
  %v3696 = vunpack.c.h.b16 %v775
  %v3697 = vunpack.c.l.b16 %v776
  %v3698 = vunpack.c.h.b16 %v776
  %v3699 = vunpack.c.l.b16 %v777
  %v3700 = vunpack.c.h.b16 %v777
  %v3701 = vunpack.c.l.b16 %v778
  %v3702 = vunpack.c.h.b16 %v778
  %v3703 = vunpack.c.l.b16 %v779
  %v3704 = vunpack.c.h.b16 %v779
  %v3705 = vunpack.c.l.b16 %v780
  %v3706 = vunpack.c.h.b16 %v780
  %v3707 = vunpack.c.l.b16 %v781
  %v3708 = vunpack.c.h.b16 %v781
  %v3709 = vunpack.c.l.b16 %v782
  %v3710 = vunpack.c.h.b16 %v782
  %v3711 = vunpack.c.l.b16 %v783
  %v3712 = vunpack.c.h.b16 %v783
  %v3713 = vunpack.c.l.b16 %v784
  %v3714 = vunpack.c.h.b16 %v784
  %v3715 = vunpack.c.l.b16 %v785
  %v3716 = vunpack.c.h.b16 %v785
  %v3717 = vunpack.c.l.b16 %v786
  %v3718 = vunpack.c.h.b16 %v786
  %v3719 = vunpack.c.l.b16 %v787
  %v3720 = vunpack.c.h.b16 %v787
  %v3721 = vunpack.c.l.b16 %v788
  %v3722 = vunpack.c.h.b16 %v788
  %v3723 = vunpack.c.l.b16 %v789
  %v3724 = vunpack.c.h.b16 %v789
  %v3725 = vunpack.c.l.b16 %v790
  %v3726 = vunpack.c.h.b16 %v790
  %v3727 = vunpack.c.l.b16 %v791
  %v3728 = vunpack.c.h.b16 %v791
  %v3729 = vunpack.c.l.b16 %v792
  %v3730 = vunpack.c.h.b16 %v792
  %v3731 = vunpack.c.l.b16 %v793
  %v3732 = vunpack.c.h.b16 %v793
  %v3733 = vunpack.c.l.b16 %v794
  %v3734 = vunpack.c.h.b16 %v794
  %v3735 = vunpack.c.l.b16 %v795
  %v3736 = vunpack.c.h.b16 %v795
  %v3737 = vunpack.c.l.b16 %v796
  %v3738 = vunpack.c.h.b16 %v796
  %v3739 = vunpack.c.l.b16 %v797
  %v3740 = vunpack.c.h.b16 %v797
  %v3741 = vunpack.c.l.b16 %v798
  %v3742 = vunpack.c.h.b16 %v798
  %v3743 = vunpack.c.l.b16 %v799
  %v3744 = vunpack.c.h.b16 %v799
  %v3745 = vunpack.c.l.b16 %v800
  %v3746 = vunpack.c.h.b16 %v800
  %v3747 = vunpack.c.l.b16 %v801
  %v3748 = vunpack.c.h.b16 %v801
  %v3749 = vunpack.c.l.b16 %v802
  %v3750 = vunpack.c.h.b16 %v802
  %v3751 = vunpack.c.l.b16 %v803
  %v3752 = vunpack.c.h.b16 %v803
  %v3753 = vunpack.c.l.b16 %v804
  %v3754 = vunpack.c.h.b16 %v804
  %v3755 = vunpack.c.l.b16 %v805
  %v3756 = vunpack.c.h.b16 %v805
  %v3757 = vunpack.c.l.b16 %v806
  %v3758 = vunpack.c.h.b16 %v806
  %v3759 = vunpack.c.l.b16 %v807
  %v3760 = vunpack.c.h.b16 %v807
  %v3761 = vunpack.c.l.b16 %v808
  %v3762 = vunpack.c.h.b16 %v808
  %v3763 = vunpack.c.l.b16 %v809
  %v3764 = vunpack.c.h.b16 %v809
  %v3765 = vunpack.c.l.b16 %v810
  %v3766 = vunpack.c.h.b16 %v810
  %v3767 = vunpack.c.l.b16 %v811
  %v3768 = vunpack.c.h.b16 %v811
  %v3769 = vunpack.c.l.b16 %v812
  %v3770 = vunpack.c.h.b16 %v812
  %v3771 = vunpack.c.l.b16 %v813
  %v3772 = vunpack.c.h.b16 %v813
  %v3773 = vunpack.c.l.b16 %v814
  %v3774 = vunpack.c.h.b16 %v814
  %v3775 = vunpack.c.l.b16 %v815
  %v3776 = vunpack.c.h.b16 %v815
  %v3777 = vunpack.c.l.b16 %v816
  %v3778 = vunpack.c.h.b16 %v816
  %v3779 = vunpack.c.l.b16 %v817
  %v3780 = vunpack.c.h.b16 %v817
  %v3781 = vunpack.c.l.b16 %v818
  %v3782 = vunpack.c.h.b16 %v818
  %v3783 = vunpack.c.l.b16 %v819
  %v3784 = vunpack.c.h.b16 %v819
  %v3785 = vunpack.c.l.b16 %v820
  %v3786 = vunpack.c.h.b16 %v820
  %v3787 = vunpack.c.l.b16 %v821
  %v3788 = vunpack.c.h.b16 %v821
  %v3789 = vunpack.c.l.b16 %v822
  %v3790 = vunpack.c.h.b16 %v822
  %v3791 = vunpack.c.l.b16 %v823
  %v3792 = vunpack.c.h.b16 %v823
  %v3793 = vunpack.c.l.b16 %v824
  %v3794 = vunpack.c.h.b16 %v824
  %v3795 = vunpack.c.l.b16 %v825
  %v3796 = vunpack.c.h.b16 %v825
  %v3797 = vunpack.c.l.b16 %v826
  %v3798 = vunpack.c.h.b16 %v826
  %v3799 = vunpack.c.l.b16 %v827
  %v3800 = vunpack.c.h.b16 %v827
  %v3801 = vunpack.c.l.b16 %v828
  %v3802 = vunpack.c.h.b16 %v828
  %v3803 = vunpack.c.l.b16 %v829
  %v3804 = vunpack.c.h.b16 %v829
  %v3805 = vunpack.c.l.b16 %v830
  %v3806 = vunpack.c.h.b16 %v830
  %v3807 = vunpack.c.l.b16 %v831
  %v3808 = vunpack.c.h.b16 %v831
  %v3809 = vunpack.c.l.b16 %v832
  %v3810 = vunpack.c.h.b16 %v832
  %v3811 = vunpack.c.l.b16 %v833
  %v3812 = vunpack.c.h.b16 %v833
  %v3813 = vunpack.c.l.b16 %v834
  %v3814 = vunpack.c.h.b16 %v834
  %v3815 = vunpack.c.l.b16 %v835
  %v3816 = vunpack.c.h.b16 %v835
  %v3817 = vunpack.c.l.b16 %v836
  %v3818 = vunpack.c.h.b16 %v836
  %v3819 = vunpack.c.l.b16 %v837
  %v3820 = vunpack.c.h.b16 %v837
  %v3821 = vunpack.c.l.b16 %v838
  %v3822 = vunpack.c.h.b16 %v838
  %v3823 = vunpack.c.l.b16 %v839
  %v3824 = vunpack.c.h.b16 %v839
  %v3825 = vunpack.c.l.b16 %v840
  %v3826 = vunpack.c.h.b16 %v840
  %v3827 = vunpack.c.l.b16 %v841
  %v3828 = vunpack.c.h.b16 %v841
  %v3829 = vunpack.c.l.b16 %v842
  %v3830 = vunpack.c.h.b16 %v842
  %v3831 = vunpack.c.l.b16 %v843
  %v3832 = vunpack.c.h.b16 %v843
  %v3833 = vunpack.c.l.b16 %v844
  %v3834 = vunpack.c.h.b16 %v844
  %v3835 = vunpack.c.l.b16 %v845
  %v3836 = vunpack.c.h.b16 %v845
  %v3837 = vunpack.c.l.b16 %v846
  %v3838 = vunpack.c.h.b16 %v846
  %v3839 = vunpack.c.l.b16 %v847
  %v3840 = vunpack.c.h.b16 %v847
  %v3841 = vunpack.c.l.b16 %v848
  %v3842 = vunpack.c.h.b16 %v848
  %v3843 = vunpack.c.l.b16 %v849
  %v3844 = vunpack.c.h.b16 %v849
  %v3845 = vunpack.c.l.b16 %v850
  %v3846 = vunpack.c.h.b16 %v850
  %v3847 = vunpack.c.l.b16 %v851
  %v3848 = vunpack.c.h.b16 %v851
  %v3849 = vunpack.c.l.b16 %v852
  %v3850 = vunpack.c.h.b16 %v852
  %v3851 = vunpack.c.l.b16 %v853
  %v3852 = vunpack.c.h.b16 %v853
  %v3853 = vunpack.c.l.b16 %v854
  %v3854 = vunpack.c.h.b16 %v854
  %v3855 = vunpack.c.l.b16 %v855
  %v3856 = vunpack.c.h.b16 %v855
  %v3857 = vunpack.c.l.b16 %v856
  %v3858 = vunpack.c.h.b16 %v856
  %v3859 = vunpack.c.l.b16 %v857
  %v3860 = vunpack.c.h.b16 %v857
  %v3861 = vunpack.c.l.b16 %v858
  %v3862 = vunpack.c.h.b16 %v858
  %v3863 = vunpack.c.l.b16 %v859
  %v3864 = vunpack.c.h.b16 %v859
  %v3865 = vunpack.c.l.b16 %v860
  %v3866 = vunpack.c.h.b16 %v860
  %v3867 = vunpack.c.l.b16 %v861
  %v3868 = vunpack.c.h.b16 %v861
  %v3869 = vunpack.c.l.b16 %v862
  %v3870 = vunpack.c.h.b16 %v862
  %v3871 = vunpack.c.l.b16 %v863
  %v3872 = vunpack.c.h.b16 %v863
  %v3873 = vunpack.c.l.b16 %v864
  %v3874 = vunpack.c.h.b16 %v864
  %v3875 = vunpack.c.l.b16 %v865
  %v3876 = vunpack.c.h.b16 %v865
  %v3877 = vunpack.c.l.b16 %v866
  %v3878 = vunpack.c.h.b16 %v866
  %v3879 = vunpack.c.l.b16 %v867
  %v3880 = vunpack.c.h.b16 %v867
  %v3881 = vunpack.c.l.b16 %v868
  %v3882 = vunpack.c.h.b16 %v868
  %v3883 = vunpack.c.l.b16 %v869
  %v3884 = vunpack.c.h.b16 %v869
  %v3885 = vunpack.c.l.b16 %v870
  %v3886 = vunpack.c.h.b16 %v870
  %v3887 = vunpack.c.l.b16 %v871
  %v3888 = vunpack.c.h.b16 %v871
  %v3889 = vunpack.c.l.b16 %v872
  %v3890 = vunpack.c.h.b16 %v872
  %v3891 = vunpack.c.l.b16 %v873
  %v3892 = vunpack.c.h.b16 %v873
  %v3893 = vunpack.c.l.b16 %v874
  %v3894 = vunpack.c.h.b16 %v874
  %v3895 = vunpack.c.l.b16 %v875
  %v3896 = vunpack.c.h.b16 %v875
  %v3897 = vunpack.c.l.b16 %v876
  %v3898 = vunpack.c.h.b16 %v876
  %v3899 = vunpack.c.l.b16 %v877
  %v3900 = vunpack.c.h.b16 %v877
  %v3901 = vunpack.c.l.b16 %v878
  %v3902 = vunpack.c.h.b16 %v878
  %v3903 = vunpack.c.l.b16 %v879
  %v3904 = vunpack.c.h.b16 %v879
  %v3905 = vunpack.c.l.b16 %v880
  %v3906 = vunpack.c.h.b16 %v880
  %v3907 = vunpack.c.l.b16 %v881
  %v3908 = vunpack.c.h.b16 %v881
  %v3909 = vunpack.c.l.b16 %v882
  %v3910 = vunpack.c.h.b16 %v882
  %v3911 = vunpack.c.l.b16 %v883
  %v3912 = vunpack.c.h.b16 %v883
  %v3913 = vunpack.c.l.b16 %v884
  %v3914 = vunpack.c.h.b16 %v884
  %v3915 = vunpack.c.l.b16 %v885
  %v3916 = vunpack.c.h.b16 %v885
  %v3917 = vunpack.c.l.b16 %v886
  %v3918 = vunpack.c.h.b16 %v886
  %v3919 = vunpack.c.l.b16 %v887
  %v3920 = vunpack.c.h.b16 %v887
  %v3921 = vunpack.c.l.b16 %v888
  %v3922 = vunpack.c.h.b16 %v888
  %v3923 = vunpack.c.l.b16 %v889
  %v3924 = vunpack.c.h.b16 %v889
  %v3925 = vunpack.c.l.b16 %v890
  %v3926 = vunpack.c.h.b16 %v890
  %v3927 = vunpack.c.l.b16 %v891
  %v3928 = vunpack.c.h.b16 %v891
  %v3929 = vunpack.c.l.b16 %v892
  %v3930 = vunpack.c.h.b16 %v892
  %v3931 = vunpack.c.l.b16 %v893
  %v3932 = vunpack.c.h.b16 %v893
  %v3933 = vunpack.c.l.b16 %v894
  %v3934 = vunpack.c.h.b16 %v894
  %v3935 = vunpack.c.l.b16 %v895
  %v3936 = vunpack.c.h.b16 %v895
  %v3937 = vunpack.c.l.b16 %v896
  %v3938 = vunpack.c.h.b16 %v896
  %v3939 = vunpack.c.l.b16 %v897
  %v3940 = vunpack.c.h.b16 %v897
  %v3941 = vunpack.c.l.b16 %v898
  %v3942 = vunpack.c.h.b16 %v898
  %v3943 = vunpack.c.l.b16 %v899
  %v3944 = vunpack.c.h.b16 %v899
  %v3945 = vunpack.c.l.b16 %v900
  %v3946 = vunpack.c.h.b16 %v900
  %v3947 = vunpack.c.l.b16 %v901
  %v3948 = vunpack.c.h.b16 %v901
  %v3949 = vunpack.c.l.b16 %v902
  %v3950 = vunpack.c.h.b16 %v902
  %v3951 = vunpack.c.l.b16 %v903
  %v3952 = vunpack.c.h.b16 %v903
  %v3953 = vunpack.c.l.b16 %v904
  %v3954 = vunpack.c.h.b16 %v904
  %v3955 = vunpack.c.l.b16 %v905
  %v3956 = vunpack.c.h.b16 %v905
  %v3957 = vunpack.c.l.b16 %v906
  %v3958 = vunpack.c.h.b16 %v906
  %v3959 = vunpack.c.l.b16 %v907
  %v3960 = vunpack.c.h.b16 %v907
  %v3961 = vunpack.c.l.b16 %v908
  %v3962 = vunpack.c.h.b16 %v908
  %v3963 = vunpack.c.l.b16 %v909
  %v3964 = vunpack.c.h.b16 %v909
  %v3965 = vunpack.c.l.b16 %v910
  %v3966 = vunpack.c.h.b16 %v910
  %v3967 = vunpack.c.l.b16 %v911
  %v3968 = vunpack.c.h.b16 %v911
  %v3969 = vunpack.c.l.b16 %v912
  %v3970 = vunpack.c.h.b16 %v912
  %v3971 = vunpack.c.l.b16 %v913
  %v3972 = vunpack.c.h.b16 %v913
  %v3973 = vunpack.c.l.b16 %v914
  %v3974 = vunpack.c.h.b16 %v914
  %v3975 = vunpack.c.l.b16 %v915
  %v3976 = vunpack.c.h.b16 %v915
  %v3977 = vunpack.c.l.b16 %v916
  %v3978 = vunpack.c.h.b16 %v916
  %v3979 = vunpack.c.l.b16 %v917
  %v3980 = vunpack.c.h.b16 %v917
  %v3981 = vunpack.c.l.b16 %v918
  %v3982 = vunpack.c.h.b16 %v918
  %v3983 = vunpack.c.l.b16 %v919
  %v3984 = vunpack.c.h.b16 %v919
  %v3985 = vunpack.c.l.b16 %v920
  %v3986 = vunpack.c.h.b16 %v920
  %v3987 = vunpack.c.l.b16 %v921
  %v3988 = vunpack.c.h.b16 %v921
  %v3989 = vunpack.c.l.b16 %v922
  %v3990 = vunpack.c.h.b16 %v922
  %v3991 = vunpack.c.l.b16 %v923
  %v3992 = vunpack.c.h.b16 %v923
  %v3993 = vunpack.c.l.b16 %v924
  %v3994 = vunpack.c.h.b16 %v924
  %v3995 = vunpack.c.l.b16 %v925
  %v3996 = vunpack.c.h.b16 %v925
  %v3997 = vunpack.c.l.b16 %v926
  %v3998 = vunpack.c.h.b16 %v926
  %v3999 = vunpack.c.l.b16 %v927
  %v4000 = vunpack.c.h.b16 %v927
  %v4001 = vunpack.c.l.b16 %v928
  %v4002 = vunpack.c.h.b16 %v928
  %v4003 = vunpack.c.l.b16 %v929
  %v4004 = vunpack.c.h.b16 %v929
  %v4005 = vunpack.c.l.b16 %v930
  %v4006 = vunpack.c.h.b16 %v930
  %v4007 = vunpack.c.l.b16 %v931
  %v4008 = vunpack.c.h.b16 %v931
  %v4009 = vunpack.c.l.b16 %v932
  %v4010 = vunpack.c.h.b16 %v932
  %v4011 = vunpack.c.l.b16 %v933
  %v4012 = vunpack.c.h.b16 %v933
  %v4013 = vunpack.c.l.b16 %v934
  %v4014 = vunpack.c.h.b16 %v934
  %v4015 = vunpack.c.l.b16 %v935
  %v4016 = vunpack.c.h.b16 %v935
  %v4017 = vunpack.c.l.b16 %v936
  %v4018 = vunpack.c.h.b16 %v936
  %v4019 = vunpack.c.l.b16 %v937
  %v4020 = vunpack.c.h.b16 %v937
  %v4021 = vunpack.c.l.b16 %v938
  %v4022 = vunpack.c.h.b16 %v938
  %v4023 = vunpack.c.l.b16 %v939
  %v4024 = vunpack.c.h.b16 %v939
  %v4025 = vunpack.c.l.b16 %v940
  %v4026 = vunpack.c.h.b16 %v940
  %v4027 = vunpack.c.l.b16 %v941
  %v4028 = vunpack.c.h.b16 %v941
  %v4029 = vunpack.c.l.b16 %v942
  %v4030 = vunpack.c.h.b16 %v942
  %v4031 = vunpack.c.l.b16 %v943
  %v4032 = vunpack.c.h.b16 %v943
  %v4033 = vunpack.c.l.b16 %v944
  %v4034 = vunpack.c.h.b16 %v944
  %v4035 = vunpack.c.l.b16 %v945
  %v4036 = vunpack.c.h.b16 %v945
  %v4037 = vunpack.c.l.b16 %v946
  %v4038 = vunpack.c.h.b16 %v946
  %v4039 = vunpack.c.l.b16 %v947
  %v4040 = vunpack.c.h.b16 %v947
  %v4041 = vunpack.c.l.b16 %v948
  %v4042 = vunpack.c.h.b16 %v948
  %v4043 = vunpack.c.l.b16 %v949
  %v4044 = vunpack.c.h.b16 %v949
  %v4045 = vunpack.c.l.b16 %v950
  %v4046 = vunpack.c.h.b16 %v950
  %v4047 = vunpack.c.l.b16 %v951
  %v4048 = vunpack.c.h.b16 %v951
  %v4049 = vunpack.c.l.b16 %v952
  %v4050 = vunpack.c.h.b16 %v952
  %v4051 = vunpack.c.l.b16 %v953
  %v4052 = vunpack.c.h.b16 %v953
  %v4053 = vunpack.c.l.b16 %v954
  %v4054 = vunpack.c.h.b16 %v954
  %v4055 = vunpack.c.l.b16 %v955
  %v4056 = vunpack.c.h.b16 %v955
  %v4057 = vunpack.c.l.b16 %v956
  %v4058 = vunpack.c.h.b16 %v956
  %v4059 = vunpack.c.l.b16 %v957
  %v4060 = vunpack.c.h.b16 %v957
  %v4061 = vunpack.c.l.b16 %v958
  %v4062 = vunpack.c.h.b16 %v958
  %v4063 = vunpack.c.l.b16 %v959
  %v4064 = vunpack.c.h.b16 %v959
  %v4065 = vunpack.c.l.b16 %v960
  %v4066 = vunpack.c.h.b16 %v960
  %v4067 = vunpack.c.l.b16 %v961
  %v4068 = vunpack.c.h.b16 %v961
  %v4069 = vunpack.c.l.b16 %v962
  %v4070 = vunpack.c.h.b16 %v962
  %v4071 = vunpack.c.l.b16 %v963
  %v4072 = vunpack.c.h.b16 %v963
  %v4073 = vunpack.c.l.b16 %v964
  %v4074 = vunpack.c.h.b16 %v964
  %v4075 = vunpack.c.l.b16 %v965
  %v4076 = vunpack.c.h.b16 %v965
  %v4077 = vunpack.c.l.b16 %v966
  %v4078 = vunpack.c.h.b16 %v966
  %v4079 = vunpack.c.l.b16 %v967
  %v4080 = vunpack.c.h.b16 %v967
  %v4081 = vunpack.c.l.b16 %v968
  %v4082 = vunpack.c.h.b16 %v968
  %v4083 = vunpack.c.l.b16 %v969
  %v4084 = vunpack.c.h.b16 %v969
  %v4085 = vunpack.c.l.b16 %v970
  %v4086 = vunpack.c.h.b16 %v970
  %v4087 = vunpack.c.l.b16 %v971
  %v4088 = vunpack.c.h.b16 %v971
  %v4089 = vunpack.c.l.b16 %v972
  %v4090 = vunpack.c.h.b16 %v972
  %v4091 = vunpack.c.l.b16 %v973
  %v4092 = vunpack.c.h.b16 %v973
  %v4093 = vunpack.c.l.b16 %v974
  %v4094 = vunpack.c.h.b16 %v974
  %v4095 = vunpack.c.l.b16 %v975
  %v4096 = vunpack.c.h.b16 %v975
  %v4097 = vunpack.c.l.b16 %v976
  %v4098 = vunpack.c.h.b16 %v976
  %v4099 = vunpack.c.l.b16 %v977
  %v4100 = vunpack.c.h.b16 %v977
  %v4101 = vunpack.c.l.b16 %v978
  %v4102 = vunpack.c.h.b16 %v978
  %v4103 = vunpack.c.l.b16 %v979
  %v4104 = vunpack.c.h.b16 %v979
  %v4105 = vunpack.c.l.b16 %v980
  %v4106 = vunpack.c.h.b16 %v980
  %v4107 = vunpack.c.l.b16 %v981
  %v4108 = vunpack.c.h.b16 %v981
  %v4109 = vunpack.c.l.b16 %v982
  %v4110 = vunpack.c.h.b16 %v982
  %v4111 = vunpack.c.l.b16 %v983
  %v4112 = vunpack.c.h.b16 %v983
  %v4113 = vunpack.c.l.b16 %v984
  %v4114 = vunpack.c.h.b16 %v984
  %v4115 = vunpack.c.l.b16 %v985
  %v4116 = vunpack.c.h.b16 %v985
  %v4117 = vunpack.c.l.b16 %v986
  %v4118 = vunpack.c.h.b16 %v986
  %v4119 = vunpack.c.l.b16 %v987
  %v4120 = vunpack.c.h.b16 %v987
  %v4121 = vunpack.c.l.b16 %v988
  %v4122 = vunpack.c.h.b16 %v988
  %v4123 = vunpack.c.l.b16 %v989
  %v4124 = vunpack.c.h.b16 %v989
  %v4125 = vunpack.c.l.b16 %v990
  %v4126 = vunpack.c.h.b16 %v990
  %v4127 = vunpack.c.l.b16 %v991
  %v4128 = vunpack.c.h.b16 %v991
  %v4129 = vunpack.c.l.b16 %v992
  %v4130 = vunpack.c.h.b16 %v992
  %v4131 = vunpack.c.l.b16 %v993
  %v4132 = vunpack.c.h.b16 %v993
  %v4133 = vunpack.c.l.b16 %v994
  %v4134 = vunpack.c.h.b16 %v994
  %v4135 = vunpack.c.l.b16 %v995
  %v4136 = vunpack.c.h.b16 %v995
  %v4137 = vunpack.c.l.b16 %v996
  %v4138 = vunpack.c.h.b16 %v996
  %v4139 = vunpack.c.l.b16 %v997
  %v4140 = vunpack.c.h.b16 %v997
  %v4141 = vunpack.c.l.b16 %v998
  %v4142 = vunpack.c.h.b16 %v998
  %v4143 = vunpack.c.l.b16 %v999
  %v4144 = vunpack.c.h.b16 %v999
  %v4145 = vunpack.c.l.b16 %v1000
  %v4146 = vunpack.c.h.b16 %v1000
  %v4147 = vunpack.c.l.b16 %v1001
  %v4148 = vunpack.c.h.b16 %v1001
  %v4149 = vunpack.c.l.b16 %v1002
  %v4150 = vunpack.c.h.b16 %v1002
  %v4151 = vunpack.c.l.b16 %v1003
  %v4152 = vunpack.c.h.b16 %v1003
  %v4153 = vunpack.c.l.b16 %v1004
  %v4154 = vunpack.c.h.b16 %v1004
  %v4155 = vunpack.c.l.b16 %v1005
  %v4156 = vunpack.c.h.b16 %v1005
  %v4157 = vunpack.c.l.b16 %v1006
  %v4158 = vunpack.c.h.b16 %v1006
  %v4159 = vunpack.c.l.b16 %v1007
  %v4160 = vunpack.c.h.b16 %v1007
  %v4161 = vunpack.c.l.b16 %v1008
  %v4162 = vunpack.c.h.b16 %v1008
  %v4163 = vunpack.c.l.b16 %v1009
  %v4164 = vunpack.c.h.b16 %v1009
  %v4165 = vunpack.c.l.b16 %v1010
  %v4166 = vunpack.c.h.b16 %v1010
  %v4167 = vunpack.c.l.b16 %v1011
  %v4168 = vunpack.c.h.b16 %v1011
  %v4169 = vunpack.c.l.b16 %v1012
  %v4170 = vunpack.c.h.b16 %v1012
  %v4171 = vunpack.c.l.b16 %v1013
  %v4172 = vunpack.c.h.b16 %v1013
  %v4173 = vunpack.c.l.b16 %v1014
  %v4174 = vunpack.c.h.b16 %v1014
  %v4175 = vunpack.c.l.b16 %v1015
  %v4176 = vunpack.c.h.b16 %v1015
  %v4177 = vunpack.c.l.b16 %v1016
  %v4178 = vunpack.c.h.b16 %v1016
  %v4179 = vunpack.c.l.b16 %v1017
  %v4180 = vunpack.c.h.b16 %v1017
  %v4181 = vunpack.c.l.b16 %v1018
  %v4182 = vunpack.c.h.b16 %v1018
  %v4183 = vunpack.c.l.b16 %v1019
  %v4184 = vunpack.c.h.b16 %v1019
  %v4185 = vunpack.c.l.b16 %v1020
  %v4186 = vunpack.c.h.b16 %v1020
  %v4187 = vunpack.c.l.b16 %v1021
  %v4188 = vunpack.c.h.b16 %v1021
  %v4189 = vunpack.c.l.b16 %v1022
  %v4190 = vunpack.c.h.b16 %v1022
  %v4191 = vunpack.c.l.b16 %v1023
  %v4192 = vunpack.c.h.b16 %v1023
  %v4193 = vunpack.c.l.b16 %v1024
  %v4194 = vunpack.c.h.b16 %v1024
  %v4195 = vunpack.c.l.b16 %v1025
  %v4196 = vunpack.c.h.b16 %v1025
  %v4197 = vunpack.c.l.b16 %v1026
  %v4198 = vunpack.c.h.b16 %v1026
  %v4199 = vunpack.c.l.b16 %v1027
  %v4200 = vunpack.c.h.b16 %v1027
  %v4201 = vunpack.c.l.b16 %v1028
  %v4202 = vunpack.c.h.b16 %v1028
  %v4203 = vunpack.c.l.b16 %v1029
  %v4204 = vunpack.c.h.b16 %v1029
  %v4205 = vunpack.c.l.b16 %v1030
  %v4206 = vunpack.c.h.b16 %v1030
  %v4207 = vunpack.c.l.b16 %v1031
  %v4208 = vunpack.c.h.b16 %v1031
  %v4209 = vunpack.c.l.b16 %v1032
  %v4210 = vunpack.c.h.b16 %v1032
  %v4211 = vunpack.c.l.b16 %v1033
  %v4212 = vunpack.c.h.b16 %v1033
  %v4213 = vunpack.c.l.b16 %v1034
  %v4214 = vunpack.c.h.b16 %v1034
  %v4215 = vunpack.c.l.b16 %v1035
  %v4216 = vunpack.c.h.b16 %v1035
  %v4217 = vunpack.c.l.b16 %v1036
  %v4218 = vunpack.c.h.b16 %v1036
  %v4219 = vunpack.c.l.b16 %v1037
  %v4220 = vunpack.c.h.b16 %v1037
  %v4221 = vunpack.c.l.b16 %v1038
  %v4222 = vunpack.c.h.b16 %v1038
  %v4223 = vunpack.c.l.b16 %v1039
  %v4224 = vunpack.c.h.b16 %v1039
  %v4225 = vunpack.c.l.b16 %v1040
  %v4226 = vunpack.c.h.b16 %v1040
  %v4227 = vunpack.c.l.b16 %v1041
  %v4228 = vunpack.c.h.b16 %v1041
  %v4229 = vunpack.c.l.b16 %v1042
  %v4230 = vunpack.c.h.b16 %v1042
  %v4231 = vunpack.c.l.b16 %v1043
  %v4232 = vunpack.c.h.b16 %v1043
  %v4233 = vunpack.c.l.b16 %v1044
  %v4234 = vunpack.c.h.b16 %v1044
  %v4235 = vunpack.c.l.b16 %v1045
  %v4236 = vunpack.c.h.b16 %v1045
  %v4237 = vunpack.c.l.b16 %v1046
  %v4238 = vunpack.c.h.b16 %v1046
  %v4239 = vunpack.c.l.b16 %v1047
  %v4240 = vunpack.c.h.b16 %v1047
  %v4241 = vunpack.c.l.b16 %v1048
  %v4242 = vunpack.c.h.b16 %v1048
  %v4243 = vunpack.c.l.b16 %v1049
  %v4244 = vunpack.c.h.b16 %v1049
  %v4245 = vunpack.c.l.b16 %v1050
  %v4246 = vunpack.c.h.b16 %v1050
  %v4247 = vunpack.c.l.b16 %v1051
  %v4248 = vunpack.c.h.b16 %v1051
  %v4249 = vunpack.c.l.b16 %v1052
  %v4250 = vunpack.c.h.b16 %v1052
  %v4251 = vunpack.c.l.b16 %v1053
  %v4252 = vunpack.c.h.b16 %v1053
  %v4253 = vunpack.c.l.b16 %v1054
  %v4254 = vunpack.c.h.b16 %v1054
  %v4255 = vunpack.c.l.b16 %v1055
  %v4256 = vunpack.c.h.b16 %v1055
  %v4257 = vunpack.c.l.b16 %v1056
  %v4258 = vunpack.c.h.b16 %v1056
  %v4259 = vunpack.c.l.b16 %v1057
  %v4260 = vunpack.c.h.b16 %v1057
  %v4261 = vunpack.c.l.b16 %v1058
  %v4262 = vunpack.c.h.b16 %v1058
  %v4263 = vunpack.c.l.b16 %v1059
  %v4264 = vunpack.c.h.b16 %v1059
  %v4265 = vunpack.c.l.b16 %v1060
  %v4266 = vunpack.c.h.b16 %v1060
  %v4267 = vpack.c.b16 %v2223, %v2219
  %v4268 = vpack.c.b16 %v2224, %v2220
  %v4269 = vpack.c.b16 %v2225, %v2221
  %v4270 = vpack.c.b16 %v2226, %v2222
  %v4271 = vpack.c.b16 %v2231, %v2227
  %v4272 = vpack.c.b16 %v2232, %v2228
  %v4273 = vpack.c.b16 %v2233, %v2229
  %v4274 = vpack.c.b16 %v2234, %v2230
  %v4275 = vpack.c.b16 %v2239, %v2235
  %v4276 = vpack.c.b16 %v2240, %v2236
  %v4277 = vpack.c.b16 %v2241, %v2237
  %v4278 = vpack.c.b16 %v2242, %v2238
  %v4279 = vpack.c.b16 %v2247, %v2243
  %v4280 = vpack.c.b16 %v2248, %v2244
  %v4281 = vpack.c.b16 %v2249, %v2245
  %v4282 = vpack.c.b16 %v2250, %v2246
  %v4283 = vpack.c.b16 %v2255, %v2251
  %v4284 = vpack.c.b16 %v2256, %v2252
  %v4285 = vpack.c.b16 %v2257, %v2253
  %v4286 = vpack.c.b16 %v2258, %v2254
  %v4287 = vpack.c.b16 %v2263, %v2259
  %v4288 = vpack.c.b16 %v2264, %v2260
  %v4289 = vpack.c.b16 %v2265, %v2261
  %v4290 = vpack.c.b16 %v2266, %v2262
  %v4291 = vpack.c.b16 %v2271, %v2267
  %v4292 = vpack.c.b16 %v2272, %v2268
  %v4293 = vpack.c.b16 %v2273, %v2269
  %v4294 = vpack.c.b16 %v2274, %v2270
  %v4295 = vpack.c.b16 %v2279, %v2275
  %v4296 = vpack.c.b16 %v2280, %v2276
  %v4297 = vpack.c.b16 %v2281, %v2277
  %v4298 = vpack.c.b16 %v2282, %v2278
  %v4299 = vpack.c.b16 %v2287, %v2283
  %v4300 = vpack.c.b16 %v2288, %v2284
  %v4301 = vpack.c.b16 %v2289, %v2285
  %v4302 = vpack.c.b16 %v2290, %v2286
  %v4303 = vpack.c.b16 %v2295, %v2291
  %v4304 = vpack.c.b16 %v2296, %v2292
  %v4305 = vpack.c.b16 %v2297, %v2293
  %v4306 = vpack.c.b16 %v2298, %v2294
  %v4307 = vpack.c.b16 %v2303, %v2299
  %v4308 = vpack.c.b16 %v2304, %v2300
  %v4309 = vpack.c.b16 %v2305, %v2301
  %v4310 = vpack.c.b16 %v2306, %v2302
  %v4311 = vpack.c.b16 %v2311, %v2307
  %v4312 = vpack.c.b16 %v2312, %v2308
  %v4313 = vpack.c.b16 %v2313, %v2309
  %v4314 = vpack.c.b16 %v2314, %v2310
  %v4315 = vpack.c.b16 %v2319, %v2315
  %v4316 = vpack.c.b16 %v2320, %v2316
  %v4317 = vpack.c.b16 %v2321, %v2317
  %v4318 = vpack.c.b16 %v2322, %v2318
  %v4319 = vpack.c.b16 %v2327, %v2323
  %v4320 = vpack.c.b16 %v2328, %v2324
  %v4321 = vpack.c.b16 %v2329, %v2325
  %v4322 = vpack.c.b16 %v2330, %v2326
  %v4323 = vpack.c.b16 %v2335, %v2331
  %v4324 = vpack.c.b16 %v2336, %v2332
  %v4325 = vpack.c.b16 %v2337, %v2333
  %v4326 = vpack.c.b16 %v2338, %v2334
  %v4327 = vpack.c.b16 %v2343, %v2339
  %v4328 = vpack.c.b16 %v2344, %v2340
  %v4329 = vpack.c.b16 %v2345, %v2341
  %v4330 = vpack.c.b16 %v2346, %v2342
  %v4331 = vpack.c.b16 %v2351, %v2347
  %v4332 = vpack.c.b16 %v2352, %v2348
  %v4333 = vpack.c.b16 %v2353, %v2349
  %v4334 = vpack.c.b16 %v2354, %v2350
  %v4335 = vpack.c.b16 %v2359, %v2355
  %v4336 = vpack.c.b16 %v2360, %v2356
  %v4337 = vpack.c.b16 %v2361, %v2357
  %v4338 = vpack.c.b16 %v2362, %v2358
  %v4339 = vpack.c.b16 %v2367, %v2363
  %v4340 = vpack.c.b16 %v2368, %v2364
  %v4341 = vpack.c.b16 %v2369, %v2365
  %v4342 = vpack.c.b16 %v2370, %v2366
  %v4343 = vpack.c.b16 %v2375, %v2371
  %v4344 = vpack.c.b16 %v2376, %v2372
  %v4345 = vpack.c.b16 %v2377, %v2373
  %v4346 = vpack.c.b16 %v2378, %v2374
  %v4347 = vpack.c.b16 %v2383, %v2379
  %v4348 = vpack.c.b16 %v2384, %v2380
  %v4349 = vpack.c.b16 %v2385, %v2381
  %v4350 = vpack.c.b16 %v2386, %v2382
  %v4351 = vpack.c.b16 %v2391, %v2387
  %v4352 = vpack.c.b16 %v2392, %v2388
  %v4353 = vpack.c.b16 %v2393, %v2389
  %v4354 = vpack.c.b16 %v2394, %v2390
  %v4355 = vpack.c.b16 %v2399, %v2395
  %v4356 = vpack.c.b16 %v2400, %v2396
  %v4357 = vpack.c.b16 %v2401, %v2397
  %v4358 = vpack.c.b16 %v2402, %v2398
  %v4359 = vpack.c.b16 %v2407, %v2403
  %v4360 = vpack.c.b16 %v2408, %v2404
  %v4361 = vpack.c.b16 %v2409, %v2405
  %v4362 = vpack.c.b16 %v2410, %v2406
  %v4363 = vpack.c.b16 %v2415, %v2411
  %v4364 = vpack.c.b16 %v2416, %v2412
  %v4365 = vpack.c.b16 %v2417, %v2413
  %v4366 = vpack.c.b16 %v2418, %v2414
  %v4367 = vpack.c.b16 %v2423, %v2419
  %v4368 = vpack.c.b16 %v2424, %v2420
  %v4369 = vpack.c.b16 %v2425, %v2421
  %v4370 = vpack.c.b16 %v2426, %v2422
  %v4371 = vpack.c.b16 %v2431, %v2427
  %v4372 = vpack.c.b16 %v2432, %v2428
  %v4373 = vpack.c.b16 %v2433, %v2429
  %v4374 = vpack.c.b16 %v2434, %v2430
  %v4375 = vpack.c.b16 %v2439, %v2435
  %v4376 = vpack.c.b16 %v2440, %v2436
  %v4377 = vpack.c.b16 %v2441, %v2437
  %v4378 = vpack.c.b16 %v2442, %v2438
  %v4379 = vpack.c.b16 %v2447, %v2443
  %v4380 = vpack.c.b16 %v2448, %v2444
  %v4381 = vpack.c.b16 %v2449, %v2445
  %v4382 = vpack.c.b16 %v2450, %v2446
  %v4383 = vpack.c.b16 %v2455, %v2451
  %v4384 = vpack.c.b16 %v2456, %v2452
  %v4385 = vpack.c.b16 %v2457, %v2453
  %v4386 = vpack.c.b16 %v2458, %v2454
  %v4387 = vpack.c.b16 %v2463, %v2459
  %v4388 = vpack.c.b16 %v2464, %v2460
  %v4389 = vpack.c.b16 %v2465, %v2461
  %v4390 = vpack.c.b16 %v2466, %v2462
  %v4391 = vpack.c.b16 %v2471, %v2467
  %v4392 = vpack.c.b16 %v2472, %v2468
  %v4393 = vpack.c.b16 %v2473, %v2469
  %v4394 = vpack.c.b16 %v2474, %v2470
  %v4395 = vpack.c.b16 %v2479, %v2475
  %v4396 = vpack.c.b16 %v2480, %v2476
  %v4397 = vpack.c.b16 %v2481, %v2477
  %v4398 = vpack.c.b16 %v2482, %v2478
  %v4399 = vpack.c.b16 %v2487, %v2483
  %v4400 = vpack.c.b16 %v2488, %v2484
  %v4401 = vpack.c.b16 %v2489, %v2485
  %v4402 = vpack.c.b16 %v2490, %v2486
  %v4403 = vpack.c.b16 %v2495, %v2491
  %v4404 = vpack.c.b16 %v2496, %v2492
  %v4405 = vpack.c.b16 %v2497, %v2493
  %v4406 = vpack.c.b16 %v2498, %v2494
  %v4407 = vpack.c.b16 %v2503, %v2499
  %v4408 = vpack.c.b16 %v2504, %v2500
  %v4409 = vpack.c.b16 %v2505, %v2501
  %v4410 = vpack.c.b16 %v2506, %v2502
  %v4411 = vpack.c.b16 %v2511, %v2507
  %v4412 = vpack.c.b16 %v2512, %v2508
  %v4413 = vpack.c.b16 %v2513, %v2509
  %v4414 = vpack.c.b16 %v2514, %v2510
  %v4415 = vpack.c.b16 %v2519, %v2515
  %v4416 = vpack.c.b16 %v2520, %v2516
  %v4417 = vpack.c.b16 %v2521, %v2517
  %v4418 = vpack.c.b16 %v2522, %v2518
  %v4419 = vpack.c.b16 %v2527, %v2523
  %v4420 = vpack.c.b16 %v2528, %v2524
  %v4421 = vpack.c.b16 %v2529, %v2525
  %v4422 = vpack.c.b16 %v2530, %v2526
  %v4423 = vpack.c.b16 %v2535, %v2531
  %v4424 = vpack.c.b16 %v2536, %v2532
  %v4425 = vpack.c.b16 %v2537, %v2533
  %v4426 = vpack.c.b16 %v2538, %v2534
  %v4427 = vpack.c.b16 %v2543, %v2539
  %v4428 = vpack.c.b16 %v2544, %v2540
  %v4429 = vpack.c.b16 %v2545, %v2541
  %v4430 = vpack.c.b16 %v2546, %v2542
  %v4431 = vpack.c.b16 %v2551, %v2547
  %v4432 = vpack.c.b16 %v2552, %v2548
  %v4433 = vpack.c.b16 %v2553, %v2549
  %v4434 = vpack.c.b16 %v2554, %v2550
  %v4435 = vpack.c.b16 %v2559, %v2555
  %v4436 = vpack.c.b16 %v2560, %v2556
  %v4437 = vpack.c.b16 %v2561, %v2557
  %v4438 = vpack.c.b16 %v2562, %v2558
  %v4439 = vpack.c.b16 %v2567, %v2563
  %v4440 = vpack.c.b16 %v2568, %v2564
  %v4441 = vpack.c.b16 %v2569, %v2565
  %v4442 = vpack.c.b16 %v2570, %v2566
  %v4443 = vpack.c.b16 %v2575, %v2571
  %v4444 = vpack.c.b16 %v2576, %v2572
  %v4445 = vpack.c.b16 %v2577, %v2573
  %v4446 = vpack.c.b16 %v2578, %v2574
  %v4447 = vpack.c.b16 %v2583, %v2579
  %v4448 = vpack.c.b16 %v2584, %v2580
  %v4449 = vpack.c.b16 %v2585, %v2581
  %v4450 = vpack.c.b16 %v2586, %v2582
  %v4451 = vpack.c.b16 %v2591, %v2587
  %v4452 = vpack.c.b16 %v2592, %v2588
  %v4453 = vpack.c.b16 %v2593, %v2589
  %v4454 = vpack.c.b16 %v2594, %v2590
  %v4455 = vpack.c.b16 %v2599, %v2595
  %v4456 = vpack.c.b16 %v2600, %v2596
  %v4457 = vpack.c.b16 %v2601, %v2597
  %v4458 = vpack.c.b16 %v2602, %v2598
  %v4459 = vpack.c.b16 %v2607, %v2603
  %v4460 = vpack.c.b16 %v2608, %v2604
  %v4461 = vpack.c.b16 %v2609, %v2605
  %v4462 = vpack.c.b16 %v2610, %v2606
  %v4463 = vpack.c.b16 %v2615, %v2611
  %v4464 = vpack.c.b16 %v2616, %v2612
  %v4465 = vpack.c.b16 %v2617, %v2613
  %v4466 = vpack.c.b16 %v2618, %v2614
  %v4467 = vpack.c.b16 %v2623, %v2619
  %v4468 = vpack.c.b16 %v2624, %v2620
  %v4469 = vpack.c.b16 %v2625, %v2621
  %v4470 = vpack.c.b16 %v2626, %v2622
  %v4471 = vpack.c.b16 %v2631, %v2627
  %v4472 = vpack.c.b16 %v2632, %v2628
  %v4473 = vpack.c.b16 %v2633, %v2629
  %v4474 = vpack.c.b16 %v2634, %v2630
  %v4475 = vpack.c.b16 %v2639, %v2635
  %v4476 = vpack.c.b16 %v2640, %v2636
  %v4477 = vpack.c.b16 %v2641, %v2637
  %v4478 = vpack.c.b16 %v2642, %v2638
  %v4479 = vpack.c.b16 %v2647, %v2643
  %v4480 = vpack.c.b16 %v2648, %v2644
  %v4481 = vpack.c.b16 %v2649, %v2645
  %v4482 = vpack.c.b16 %v2650, %v2646
  %v4483 = vpack.c.b16 %v2655, %v2651
  %v4484 = vpack.c.b16 %v2656, %v2652
  %v4485 = vpack.c.b16 %v2657, %v2653
  %v4486 = vpack.c.b16 %v2658, %v2654
  %v4487 = vpack.c.b16 %v2663, %v2659
  %v4488 = vpack.c.b16 %v2664, %v2660
  %v4489 = vpack.c.b16 %v2665, %v2661
  %v4490 = vpack.c.b16 %v2666, %v2662
  %v4491 = vpack.c.b16 %v2671, %v2667
  %v4492 = vpack.c.b16 %v2672, %v2668
  %v4493 = vpack.c.b16 %v2673, %v2669
  %v4494 = vpack.c.b16 %v2674, %v2670
  %v4495 = vpack.c.b16 %v2679, %v2675
  %v4496 = vpack.c.b16 %v2680, %v2676
  %v4497 = vpack.c.b16 %v2681, %v2677
  %v4498 = vpack.c.b16 %v2682, %v2678
  %v4499 = vpack.c.b16 %v2687, %v2683
  %v4500 = vpack.c.b16 %v2688, %v2684
  %v4501 = vpack.c.b16 %v2689, %v2685
  %v4502 = vpack.c.b16 %v2690, %v2686
  %v4503 = vpack.c.b16 %v2695, %v2691
  %v4504 = vpack.c.b16 %v2696, %v2692
  %v4505 = vpack.c.b16 %v2697, %v2693
  %v4506 = vpack.c.b16 %v2698, %v2694
  %v4507 = vpack.c.b16 %v2703, %v2699
  %v4508 = vpack.c.b16 %v2704, %v2700
  %v4509 = vpack.c.b16 %v2705, %v2701
  %v4510 = vpack.c.b16 %v2706, %v2702
  %v4511 = vpack.c.b16 %v2711, %v2707
  %v4512 = vpack.c.b16 %v2712, %v2708
  %v4513 = vpack.c.b16 %v2713, %v2709
  %v4514 = vpack.c.b16 %v2714, %v2710
  %v4515 = vpack.c.b16 %v2719, %v2715
  %v4516 = vpack.c.b16 %v2720, %v2716
  %v4517 = vpack.c.b16 %v2721, %v2717
  %v4518 = vpack.c.b16 %v2722, %v2718
  %v4519 = vpack.c.b16 %v2727, %v2723
  %v4520 = vpack.c.b16 %v2728, %v2724
  %v4521 = vpack.c.b16 %v2729, %v2725
  %v4522 = vpack.c.b16 %v2730, %v2726
  %v4523 = vpack.c.b16 %v2735, %v2731
  %v4524 = vpack.c.b16 %v2736, %v2732
  %v4525 = vpack.c.b16 %v2737, %v2733
  %v4526 = vpack.c.b16 %v2738, %v2734
  %v4527 = vpack.c.b16 %v2743, %v2739
  %v4528 = vpack.c.b16 %v2744, %v2740
  %v4529 = vpack.c.b16 %v2745, %v2741
  %v4530 = vpack.c.b16 %v2746, %v2742
  %v4531 = vpack.c.b16 %v2751, %v2747
  %v4532 = vpack.c.b16 %v2752, %v2748
  %v4533 = vpack.c.b16 %v2753, %v2749
  %v4534 = vpack.c.b16 %v2754, %v2750
  %v4535 = vpack.c.b16 %v2759, %v2755
  %v4536 = vpack.c.b16 %v2760, %v2756
  %v4537 = vpack.c.b16 %v2761, %v2757
  %v4538 = vpack.c.b16 %v2762, %v2758
  %v4539 = vpack.c.b16 %v2767, %v2763
  %v4540 = vpack.c.b16 %v2768, %v2764
  %v4541 = vpack.c.b16 %v2769, %v2765
  %v4542 = vpack.c.b16 %v2770, %v2766
  %v4543 = vpack.c.b16 %v2775, %v2771
  %v4544 = vpack.c.b16 %v2776, %v2772
  %v4545 = vpack.c.b16 %v2777, %v2773
  %v4546 = vpack.c.b16 %v2778, %v2774
  %v4547 = vpack.c.b16 %v2783, %v2779
  %v4548 = vpack.c.b16 %v2784, %v2780
  %v4549 = vpack.c.b16 %v2785, %v2781
  %v4550 = vpack.c.b16 %v2786, %v2782
  %v4551 = vpack.c.b16 %v2791, %v2787
  %v4552 = vpack.c.b16 %v2792, %v2788
  %v4553 = vpack.c.b16 %v2793, %v2789
  %v4554 = vpack.c.b16 %v2794, %v2790
  %v4555 = vpack.c.b16 %v2799, %v2795
  %v4556 = vpack.c.b16 %v2800, %v2796
  %v4557 = vpack.c.b16 %v2801, %v2797
  %v4558 = vpack.c.b16 %v2802, %v2798
  %v4559 = vpack.c.b16 %v2807, %v2803
  %v4560 = vpack.c.b16 %v2808, %v2804
  %v4561 = vpack.c.b16 %v2809, %v2805
  %v4562 = vpack.c.b16 %v2810, %v2806
  %v4563 = vpack.c.b16 %v2815, %v2811
  %v4564 = vpack.c.b16 %v2816, %v2812
  %v4565 = vpack.c.b16 %v2817, %v2813
  %v4566 = vpack.c.b16 %v2818, %v2814
  %v4567 = vpack.c.b16 %v2823, %v2819
  %v4568 = vpack.c.b16 %v2824, %v2820
  %v4569 = vpack.c.b16 %v2825, %v2821
  %v4570 = vpack.c.b16 %v2826, %v2822
  %v4571 = vpack.c.b16 %v2831, %v2827
  %v4572 = vpack.c.b16 %v2832, %v2828
  %v4573 = vpack.c.b16 %v2833, %v2829
  %v4574 = vpack.c.b16 %v2834, %v2830
  %v4575 = vpack.c.b16 %v2839, %v2835
  %v4576 = vpack.c.b16 %v2840, %v2836
  %v4577 = vpack.c.b16 %v2841, %v2837
  %v4578 = vpack.c.b16 %v2842, %v2838
  %v4579 = vpack.c.b16 %v2847, %v2843
  %v4580 = vpack.c.b16 %v2848, %v2844
  %v4581 = vpack.c.b16 %v2849, %v2845
  %v4582 = vpack.c.b16 %v2850, %v2846
  %v4583 = vpack.c.b16 %v2855, %v2851
  %v4584 = vpack.c.b16 %v2856, %v2852
  %v4585 = vpack.c.b16 %v2857, %v2853
  %v4586 = vpack.c.b16 %v2858, %v2854
  %v4587 = vpack.c.b16 %v2863, %v2859
  %v4588 = vpack.c.b16 %v2864, %v2860
  %v4589 = vpack.c.b16 %v2865, %v2861
  %v4590 = vpack.c.b16 %v2866, %v2862
  %v4591 = vpack.c.b16 %v2871, %v2867
  %v4592 = vpack.c.b16 %v2872, %v2868
  %v4593 = vpack.c.b16 %v2873, %v2869
  %v4594 = vpack.c.b16 %v2874, %v2870
  %v4595 = vpack.c.b16 %v2879, %v2875
  %v4596 = vpack.c.b16 %v2880, %v2876
  %v4597 = vpack.c.b16 %v2881, %v2877
  %v4598 = vpack.c.b16 %v2882, %v2878
  %v4599 = vpack.c.b16 %v2887, %v2883
  %v4600 = vpack.c.b16 %v2888, %v2884
  %v4601 = vpack.c.b16 %v2889, %v2885
  %v4602 = vpack.c.b16 %v2890, %v2886
  %v4603 = vpack.c.b16 %v2895, %v2891
  %v4604 = vpack.c.b16 %v2896, %v2892
  %v4605 = vpack.c.b16 %v2897, %v2893
  %v4606 = vpack.c.b16 %v2898, %v2894
  %v4607 = vpack.c.b16 %v2903, %v2899
  %v4608 = vpack.c.b16 %v2904, %v2900
  %v4609 = vpack.c.b16 %v2905, %v2901
  %v4610 = vpack.c.b16 %v2906, %v2902
  %v4611 = vpack.c.b16 %v2911, %v2907
  %v4612 = vpack.c.b16 %v2912, %v2908
  %v4613 = vpack.c.b16 %v2913, %v2909
  %v4614 = vpack.c.b16 %v2914, %v2910
  %v4615 = vpack.c.b16 %v2919, %v2915
  %v4616 = vpack.c.b16 %v2920, %v2916
  %v4617 = vpack.c.b16 %v2921, %v2917
  %v4618 = vpack.c.b16 %v2922, %v2918
  %v4619 = vpack.c.b16 %v2927, %v2923
  %v4620 = vpack.c.b16 %v2928, %v2924
  %v4621 = vpack.c.b16 %v2929, %v2925
  %v4622 = vpack.c.b16 %v2930, %v2926
  %v4623 = vpack.c.b16 %v2935, %v2931
  %v4624 = vpack.c.b16 %v2936, %v2932
  %v4625 = vpack.c.b16 %v2937, %v2933
  %v4626 = vpack.c.b16 %v2938, %v2934
  %v4627 = vpack.c.b16 %v2943, %v2939
  %v4628 = vpack.c.b16 %v2944, %v2940
  %v4629 = vpack.c.b16 %v2945, %v2941
  %v4630 = vpack.c.b16 %v2946, %v2942
  %v4631 = vpack.c.b16 %v2951, %v2947
  %v4632 = vpack.c.b16 %v2952, %v2948
  %v4633 = vpack.c.b16 %v2953, %v2949
  %v4634 = vpack.c.b16 %v2954, %v2950
  %v4635 = vpack.c.b16 %v2959, %v2955
  %v4636 = vpack.c.b16 %v2960, %v2956
  %v4637 = vpack.c.b16 %v2961, %v2957
  %v4638 = vpack.c.b16 %v2962, %v2958
  %v4639 = vpack.c.b16 %v2967, %v2963
  %v4640 = vpack.c.b16 %v2968, %v2964
  %v4641 = vpack.c.b16 %v2969, %v2965
  %v4642 = vpack.c.b16 %v2970, %v2966
  %v4643 = vpack.c.b16 %v2975, %v2971
  %v4644 = vpack.c.b16 %v2976, %v2972
  %v4645 = vpack.c.b16 %v2977, %v2973
  %v4646 = vpack.c.b16 %v2978, %v2974
  %v4647 = vpack.c.b16 %v2983, %v2979
  %v4648 = vpack.c.b16 %v2984, %v2980
  %v4649 = vpack.c.b16 %v2985, %v2981
  %v4650 = vpack.c.b16 %v2986, %v2982
  %v4651 = vpack.c.b16 %v2991, %v2987
  %v4652 = vpack.c.b16 %v2992, %v2988
  %v4653 = vpack.c.b16 %v2993, %v2989
  %v4654 = vpack.c.b16 %v2994, %v2990
  %v4655 = vpack.c.b16 %v2999, %v2995
  %v4656 = vpack.c.b16 %v3000, %v2996
  %v4657 = vpack.c.b16 %v3001, %v2997
  %v4658 = vpack.c.b16 %v3002, %v2998
  %v4659 = vpack.c.b16 %v3007, %v3003
  %v4660 = vpack.c.b16 %v3008, %v3004
  %v4661 = vpack.c.b16 %v3009, %v3005
  %v4662 = vpack.c.b16 %v3010, %v3006
  %v4663 = vpack.c.b16 %v3015, %v3011
  %v4664 = vpack.c.b16 %v3016, %v3012
  %v4665 = vpack.c.b16 %v3017, %v3013
  %v4666 = vpack.c.b16 %v3018, %v3014
  %v4667 = vpack.c.b16 %v3023, %v3019
  %v4668 = vpack.c.b16 %v3024, %v3020
  %v4669 = vpack.c.b16 %v3025, %v3021
  %v4670 = vpack.c.b16 %v3026, %v3022
  %v4671 = vpack.c.b16 %v3031, %v3027
  %v4672 = vpack.c.b16 %v3032, %v3028
  %v4673 = vpack.c.b16 %v3033, %v3029
  %v4674 = vpack.c.b16 %v3034, %v3030
  %v4675 = vpack.c.b16 %v3039, %v3035
  %v4676 = vpack.c.b16 %v3040, %v3036
  %v4677 = vpack.c.b16 %v3041, %v3037
  %v4678 = vpack.c.b16 %v3042, %v3038
  %v4679 = vpack.c.b16 %v3047, %v3043
  %v4680 = vpack.c.b16 %v3048, %v3044
  %v4681 = vpack.c.b16 %v3049, %v3045
  %v4682 = vpack.c.b16 %v3050, %v3046
  %v4683 = vpack.c.b16 %v3055, %v3051
  %v4684 = vpack.c.b16 %v3056, %v3052
  %v4685 = vpack.c.b16 %v3057, %v3053
  %v4686 = vpack.c.b16 %v3058, %v3054
  %v4687 = vpack.c.b16 %v3063, %v3059
  %v4688 = vpack.c.b16 %v3064, %v3060
  %v4689 = vpack.c.b16 %v3065, %v3061
  %v4690 = vpack.c.b16 %v3066, %v3062
  %v4691 = vpack.c.b16 %v3071, %v3067
  %v4692 = vpack.c.b16 %v3072, %v3068
  %v4693 = vpack.c.b16 %v3073, %v3069
  %v4694 = vpack.c.b16 %v3074, %v3070
  %v4695 = vpack.c.b16 %v3079, %v3075
  %v4696 = vpack.c.b16 %v3080, %v3076
  %v4697 = vpack.c.b16 %v3081, %v3077
  %v4698 = vpack.c.b16 %v3082, %v3078
  %v4699 = vpack.c.b16 %v3087, %v3083
  %v4700 = vpack.c.b16 %v3088, %v3084
  %v4701 = vpack.c.b16 %v3089, %v3085
  %v4702 = vpack.c.b16 %v3090, %v3086
  %v4703 = vpack.c.b16 %v3095, %v3091
  %v4704 = vpack.c.b16 %v3096, %v3092
  %v4705 = vpack.c.b16 %v3097, %v3093
  %v4706 = vpack.c.b16 %v3098, %v3094
  %v4707 = vpack.c.b16 %v3103, %v3099
  %v4708 = vpack.c.b16 %v3104, %v3100
  %v4709 = vpack.c.b16 %v3105, %v3101
  %v4710 = vpack.c.b16 %v3106, %v3102
  %v4711 = vpack.c.b16 %v3111, %v3107
  %v4712 = vpack.c.b16 %v3112, %v3108
  %v4713 = vpack.c.b16 %v3113, %v3109
  %v4714 = vpack.c.b16 %v3114, %v3110
  %v4715 = vpack.c.b16 %v3119, %v3115
  %v4716 = vpack.c.b16 %v3120, %v3116
  %v4717 = vpack.c.b16 %v3121, %v3117
  %v4718 = vpack.c.b16 %v3122, %v3118
  %v4719 = vpack.c.b16 %v3127, %v3123
  %v4720 = vpack.c.b16 %v3128, %v3124
  %v4721 = vpack.c.b16 %v3129, %v3125
  %v4722 = vpack.c.b16 %v3130, %v3126
  %v4723 = vpack.c.b16 %v3135, %v3131
  %v4724 = vpack.c.b16 %v3136, %v3132
  %v4725 = vpack.c.b16 %v3137, %v3133
  %v4726 = vpack.c.b16 %v3138, %v3134
  %v4727 = vpack.c.b16 %v3143, %v3139
  %v4728 = vpack.c.b16 %v3144, %v3140
  %v4729 = vpack.c.b16 %v3145, %v3141
  %v4730 = vpack.c.b16 %v3146, %v3142
  %v4731 = vpack.c.b16 %v3151, %v3147
  %v4732 = vpack.c.b16 %v3152, %v3148
  %v4733 = vpack.c.b16 %v3153, %v3149
  %v4734 = vpack.c.b16 %v3154, %v3150
  %v4735 = vpack.c.b16 %v3159, %v3155
  %v4736 = vpack.c.b16 %v3160, %v3156
  %v4737 = vpack.c.b16 %v3161, %v3157
  %v4738 = vpack.c.b16 %v3162, %v3158
  %v4739 = vpack.c.b16 %v3167, %v3163
  %v4740 = vpack.c.b16 %v3168, %v3164
  %v4741 = vpack.c.b16 %v3169, %v3165
  %v4742 = vpack.c.b16 %v3170, %v3166
  %v4743 = vpack.c.b16 %v3175, %v3171
  %v4744 = vpack.c.b16 %v3176, %v3172
  %v4745 = vpack.c.b16 %v3177, %v3173
  %v4746 = vpack.c.b16 %v3178, %v3174
  %v4747 = vpack.c.b16 %v3183, %v3179
  %v4748 = vpack.c.b16 %v3184, %v3180
  %v4749 = vpack.c.b16 %v3185, %v3181
  %v4750 = vpack.c.b16 %v3186, %v3182
  %v4751 = vpack.c.b16 %v3191, %v3187
  %v4752 = vpack.c.b16 %v3192, %v3188
  %v4753 = vpack.c.b16 %v3193, %v3189
  %v4754 = vpack.c.b16 %v3194, %v3190
  %v4755 = vpack.c.b16 %v3199, %v3195
  %v4756 = vpack.c.b16 %v3200, %v3196
  %v4757 = vpack.c.b16 %v3201, %v3197
  %v4758 = vpack.c.b16 %v3202, %v3198
  %v4759 = vpack.c.b16 %v3207, %v3203
  %v4760 = vpack.c.b16 %v3208, %v3204
  %v4761 = vpack.c.b16 %v3209, %v3205
  %v4762 = vpack.c.b16 %v3210, %v3206
  %v4763 = vpack.c.b16 %v3215, %v3211
  %v4764 = vpack.c.b16 %v3216, %v3212
  %v4765 = vpack.c.b16 %v3217, %v3213
  %v4766 = vpack.c.b16 %v3218, %v3214
  %v4767 = vpack.c.b16 %v3223, %v3219
  %v4768 = vpack.c.b16 %v3224, %v3220
  %v4769 = vpack.c.b16 %v3225, %v3221
  %v4770 = vpack.c.b16 %v3226, %v3222
  %v4771 = vpack.c.b16 %v3231, %v3227
  %v4772 = vpack.c.b16 %v3232, %v3228
  %v4773 = vpack.c.b16 %v3233, %v3229
  %v4774 = vpack.c.b16 %v3234, %v3230
  %v4775 = vpack.c.b16 %v3239, %v3235
  %v4776 = vpack.c.b16 %v3240, %v3236
  %v4777 = vpack.c.b16 %v3241, %v3237
  %v4778 = vpack.c.b16 %v3242, %v3238
  %v4779 = vpack.c.b16 %v3247, %v3243
  %v4780 = vpack.c.b16 %v3248, %v3244
  %v4781 = vpack.c.b16 %v3249, %v3245
  %v4782 = vpack.c.b16 %v3250, %v3246
  %v4783 = vpack.c.b16 %v3255, %v3251
  %v4784 = vpack.c.b16 %v3256, %v3252
  %v4785 = vpack.c.b16 %v3257, %v3253
  %v4786 = vpack.c.b16 %v3258, %v3254
  %v4787 = vpack.c.b16 %v3263, %v3259
  %v4788 = vpack.c.b16 %v3264, %v3260
  %v4789 = vpack.c.b16 %v3265, %v3261
  %v4790 = vpack.c.b16 %v3266, %v3262
  %v4791 = vpack.c.b16 %v3271, %v3267
  %v4792 = vpack.c.b16 %v3272, %v3268
  %v4793 = vpack.c.b16 %v3273, %v3269
  %v4794 = vpack.c.b16 %v3274, %v3270
  %v4795 = vpack.c.b16 %v3279, %v3275
  %v4796 = vpack.c.b16 %v3280, %v3276
  %v4797 = vpack.c.b16 %v3281, %v3277
  %v4798 = vpack.c.b16 %v3282, %v3278
  %v4799 = vpack.c.b16 %v3287, %v3283
  %v4800 = vpack.c.b16 %v3288, %v3284
  %v4801 = vpack.c.b16 %v3289, %v3285
  %v4802 = vpack.c.b16 %v3290, %v3286
  %v4803 = vpack.c.b16 %v3295, %v3291
  %v4804 = vpack.c.b16 %v3296, %v3292
  %v4805 = vpack.c.b16 %v3297, %v3293
  %v4806 = vpack.c.b16 %v3298, %v3294
  %v4807 = vpack.c.b16 %v3303, %v3299
  %v4808 = vpack.c.b16 %v3304, %v3300
  %v4809 = vpack.c.b16 %v3305, %v3301
  %v4810 = vpack.c.b16 %v3306, %v3302
  %v4811 = vpack.c.b16 %v3311, %v3307
  %v4812 = vpack.c.b16 %v3312, %v3308
  %v4813 = vpack.c.b16 %v3313, %v3309
  %v4814 = vpack.c.b16 %v3314, %v3310
  %v4815 = vpack.c.b16 %v3319, %v3315
  %v4816 = vpack.c.b16 %v3320, %v3316
  %v4817 = vpack.c.b16 %v3321, %v3317
  %v4818 = vpack.c.b16 %v3322, %v3318
  %v4819 = vpack.c.b16 %v3327, %v3323
  %v4820 = vpack.c.b16 %v3328, %v3324
  %v4821 = vpack.c.b16 %v3329, %v3325
  %v4822 = vpack.c.b16 %v3330, %v3326
  %v4823 = vpack.c.b16 %v3335, %v3331
  %v4824 = vpack.c.b16 %v3336, %v3332
  %v4825 = vpack.c.b16 %v3337, %v3333
  %v4826 = vpack.c.b16 %v3338, %v3334
  %v4827 = vpack.c.b16 %v3343, %v3339
  %v4828 = vpack.c.b16 %v3344, %v3340
  %v4829 = vpack.c.b16 %v3345, %v3341
  %v4830 = vpack.c.b16 %v3346, %v3342
  %v4831 = vpack.c.b16 %v3351, %v3347
  %v4832 = vpack.c.b16 %v3352, %v3348
  %v4833 = vpack.c.b16 %v3353, %v3349
  %v4834 = vpack.c.b16 %v3354, %v3350
  %v4835 = vpack.c.b16 %v3359, %v3355
  %v4836 = vpack.c.b16 %v3360, %v3356
  %v4837 = vpack.c.b16 %v3361, %v3357
  %v4838 = vpack.c.b16 %v3362, %v3358
  %v4839 = vpack.c.b16 %v3367, %v3363
  %v4840 = vpack.c.b16 %v3368, %v3364
  %v4841 = vpack.c.b16 %v3369, %v3365
  %v4842 = vpack.c.b16 %v3370, %v3366
  %v4843 = vpack.c.b16 %v3375, %v3371
  %v4844 = vpack.c.b16 %v3376, %v3372
  %v4845 = vpack.c.b16 %v3377, %v3373
  %v4846 = vpack.c.b16 %v3378, %v3374
  %v4847 = vpack.c.b16 %v3383, %v3379
  %v4848 = vpack.c.b16 %v3384, %v3380
  %v4849 = vpack.c.b16 %v3385, %v3381
  %v4850 = vpack.c.b16 %v3386, %v3382
  %v4851 = vpack.c.b16 %v3391, %v3387
  %v4852 = vpack.c.b16 %v3392, %v3388
  %v4853 = vpack.c.b16 %v3393, %v3389
  %v4854 = vpack.c.b16 %v3394, %v3390
  %v4855 = vpack.c.b16 %v3399, %v3395
  %v4856 = vpack.c.b16 %v3400, %v3396
  %v4857 = vpack.c.b16 %v3401, %v3397
  %v4858 = vpack.c.b16 %v3402, %v3398
  %v4859 = vpack.c.b16 %v3407, %v3403
  %v4860 = vpack.c.b16 %v3408, %v3404
  %v4861 = vpack.c.b16 %v3409, %v3405
  %v4862 = vpack.c.b16 %v3410, %v3406
  %v4863 = vpack.c.b16 %v3415, %v3411
  %v4864 = vpack.c.b16 %v3416, %v3412
  %v4865 = vpack.c.b16 %v3417, %v3413
  %v4866 = vpack.c.b16 %v3418, %v3414
  %v4867 = vpack.c.b16 %v3423, %v3419
  %v4868 = vpack.c.b16 %v3424, %v3420
  %v4869 = vpack.c.b16 %v3425, %v3421
  %v4870 = vpack.c.b16 %v3426, %v3422
  %v4871 = vpack.c.b16 %v3431, %v3427
  %v4872 = vpack.c.b16 %v3432, %v3428
  %v4873 = vpack.c.b16 %v3433, %v3429
  %v4874 = vpack.c.b16 %v3434, %v3430
  %v4875 = vpack.c.b16 %v3439, %v3435
  %v4876 = vpack.c.b16 %v3440, %v3436
  %v4877 = vpack.c.b16 %v3441, %v3437
  %v4878 = vpack.c.b16 %v3442, %v3438
  %v4879 = vpack.c.b16 %v3447, %v3443
  %v4880 = vpack.c.b16 %v3448, %v3444
  %v4881 = vpack.c.b16 %v3449, %v3445
  %v4882 = vpack.c.b16 %v3450, %v3446
  %v4883 = vpack.c.b16 %v3455, %v3451
  %v4884 = vpack.c.b16 %v3456, %v3452
  %v4885 = vpack.c.b16 %v3457, %v3453
  %v4886 = vpack.c.b16 %v3458, %v3454
  %v4887 = vpack.c.b16 %v3463, %v3459
  %v4888 = vpack.c.b16 %v3464, %v3460
  %v4889 = vpack.c.b16 %v3465, %v3461
  %v4890 = vpack.c.b16 %v3466, %v3462
  %v4891 = vpack.c.b16 %v3471, %v3467
  %v4892 = vpack.c.b16 %v3472, %v3468
  %v4893 = vpack.c.b16 %v3473, %v3469
  %v4894 = vpack.c.b16 %v3474, %v3470
  %v4895 = vpack.c.b16 %v3479, %v3475
  %v4896 = vpack.c.b16 %v3480, %v3476
  %v4897 = vpack.c.b16 %v3481, %v3477
  %v4898 = vpack.c.b16 %v3482, %v3478
  %v4899 = vpack.c.b16 %v3487, %v3483
  %v4900 = vpack.c.b16 %v3488, %v3484
  %v4901 = vpack.c.b16 %v3489, %v3485
  %v4902 = vpack.c.b16 %v3490, %v3486
  %v4903 = vpack.c.b16 %v3495, %v3491
  %v4904 = vpack.c.b16 %v3496, %v3492
  %v4905 = vpack.c.b16 %v3497, %v3493
  %v4906 = vpack.c.b16 %v3498, %v3494
  %v4907 = vpack.c.b16 %v3503, %v3499
  %v4908 = vpack.c.b16 %v3504, %v3500
  %v4909 = vpack.c.b16 %v3505, %v3501
  %v4910 = vpack.c.b16 %v3506, %v3502
  %v4911 = vpack.c.b16 %v3511, %v3507
  %v4912 = vpack.c.b16 %v3512, %v3508
  %v4913 = vpack.c.b16 %v3513, %v3509
  %v4914 = vpack.c.b16 %v3514, %v3510
  %v4915 = vpack.c.b16 %v3519, %v3515
  %v4916 = vpack.c.b16 %v3520, %v3516
  %v4917 = vpack.c.b16 %v3521, %v3517
  %v4918 = vpack.c.b16 %v3522, %v3518
  %v4919 = vpack.c.b16 %v3527, %v3523
  %v4920 = vpack.c.b16 %v3528, %v3524
  %v4921 = vpack.c.b16 %v3529, %v3525
  %v4922 = vpack.c.b16 %v3530, %v3526
  %v4923 = vpack.c.b16 %v3535, %v3531
  %v4924 = vpack.c.b16 %v3536, %v3532
  %v4925 = vpack.c.b16 %v3537, %v3533
  %v4926 = vpack.c.b16 %v3538, %v3534
  %v4927 = vpack.c.b16 %v3543, %v3539
  %v4928 = vpack.c.b16 %v3544, %v3540
  %v4929 = vpack.c.b16 %v3545, %v3541
  %v4930 = vpack.c.b16 %v3546, %v3542
  %v4931 = vpack.c.b16 %v3551, %v3547
  %v4932 = vpack.c.b16 %v3552, %v3548
  %v4933 = vpack.c.b16 %v3553, %v3549
  %v4934 = vpack.c.b16 %v3554, %v3550
  %v4935 = vpack.c.b16 %v3559, %v3555
  %v4936 = vpack.c.b16 %v3560, %v3556
  %v4937 = vpack.c.b16 %v3561, %v3557
  %v4938 = vpack.c.b16 %v3562, %v3558
  %v4939 = vpack.c.b16 %v3567, %v3563
  %v4940 = vpack.c.b16 %v3568, %v3564
  %v4941 = vpack.c.b16 %v3569, %v3565
  %v4942 = vpack.c.b16 %v3570, %v3566
  %v4943 = vpack.c.b16 %v3575, %v3571
  %v4944 = vpack.c.b16 %v3576, %v3572
  %v4945 = vpack.c.b16 %v3577, %v3573
  %v4946 = vpack.c.b16 %v3578, %v3574
  %v4947 = vpack.c.b16 %v3583, %v3579
  %v4948 = vpack.c.b16 %v3584, %v3580
  %v4949 = vpack.c.b16 %v3585, %v3581
  %v4950 = vpack.c.b16 %v3586, %v3582
  %v4951 = vpack.c.b16 %v3591, %v3587
  %v4952 = vpack.c.b16 %v3592, %v3588
  %v4953 = vpack.c.b16 %v3593, %v3589
  %v4954 = vpack.c.b16 %v3594, %v3590
  %v4955 = vpack.c.b16 %v3599, %v3595
  %v4956 = vpack.c.b16 %v3600, %v3596
  %v4957 = vpack.c.b16 %v3601, %v3597
  %v4958 = vpack.c.b16 %v3602, %v3598
  %v4959 = vpack.c.b16 %v3607, %v3603
  %v4960 = vpack.c.b16 %v3608, %v3604
  %v4961 = vpack.c.b16 %v3609, %v3605
  %v4962 = vpack.c.b16 %v3610, %v3606
  %v4963 = vpack.c.b16 %v3615, %v3611
  %v4964 = vpack.c.b16 %v3616, %v3612
  %v4965 = vpack.c.b16 %v3617, %v3613
  %v4966 = vpack.c.b16 %v3618, %v3614
  %v4967 = vpack.c.b16 %v3623, %v3619
  %v4968 = vpack.c.b16 %v3624, %v3620
  %v4969 = vpack.c.b16 %v3625, %v3621
  %v4970 = vpack.c.b16 %v3626, %v3622
  %v4971 = vpack.c.b16 %v3631, %v3627
  %v4972 = vpack.c.b16 %v3632, %v3628
  %v4973 = vpack.c.b16 %v3633, %v3629
  %v4974 = vpack.c.b16 %v3634, %v3630
  %v4975 = vpack.c.b16 %v3639, %v3635
  %v4976 = vpack.c.b16 %v3640, %v3636
  %v4977 = vpack.c.b16 %v3641, %v3637
  %v4978 = vpack.c.b16 %v3642, %v3638
  %v4979 = vpack.c.b16 %v3647, %v3643
  %v4980 = vpack.c.b16 %v3648, %v3644
  %v4981 = vpack.c.b16 %v3649, %v3645
  %v4982 = vpack.c.b16 %v3650, %v3646
  %v4983 = vpack.c.b16 %v3655, %v3651
  %v4984 = vpack.c.b16 %v3656, %v3652
  %v4985 = vpack.c.b16 %v3657, %v3653
  %v4986 = vpack.c.b16 %v3658, %v3654
  %v4987 = vpack.c.b16 %v3663, %v3659
  %v4988 = vpack.c.b16 %v3664, %v3660
  %v4989 = vpack.c.b16 %v3665, %v3661
  %v4990 = vpack.c.b16 %v3666, %v3662
  %v4991 = vpack.c.b16 %v3671, %v3667
  %v4992 = vpack.c.b16 %v3672, %v3668
  %v4993 = vpack.c.b16 %v3673, %v3669
  %v4994 = vpack.c.b16 %v3674, %v3670
  %v4995 = vpack.c.b16 %v3679, %v3675
  %v4996 = vpack.c.b16 %v3680, %v3676
  %v4997 = vpack.c.b16 %v3681, %v3677
  %v4998 = vpack.c.b16 %v3682, %v3678
  %v4999 = vpack.c.b16 %v3687, %v3683
  %v5000 = vpack.c.b16 %v3688, %v3684
  %v5001 = vpack.c.b16 %v3689, %v3685
  %v5002 = vpack.c.b16 %v3690, %v3686
  %v5003 = vpack.c.b16 %v3695, %v3691
  %v5004 = vpack.c.b16 %v3696, %v3692
  %v5005 = vpack.c.b16 %v3697, %v3693
  %v5006 = vpack.c.b16 %v3698, %v3694
  %v5007 = vpack.c.b16 %v3703, %v3699
  %v5008 = vpack.c.b16 %v3704, %v3700
  %v5009 = vpack.c.b16 %v3705, %v3701
  %v5010 = vpack.c.b16 %v3706, %v3702
  %v5011 = vpack.c.b16 %v3711, %v3707
  %v5012 = vpack.c.b16 %v3712, %v3708
  %v5013 = vpack.c.b16 %v3713, %v3709
  %v5014 = vpack.c.b16 %v3714, %v3710
  %v5015 = vpack.c.b16 %v3719, %v3715
  %v5016 = vpack.c.b16 %v3720, %v3716
  %v5017 = vpack.c.b16 %v3721, %v3717
  %v5018 = vpack.c.b16 %v3722, %v3718
  %v5019 = vpack.c.b16 %v3727, %v3723
  %v5020 = vpack.c.b16 %v3728, %v3724
  %v5021 = vpack.c.b16 %v3729, %v3725
  %v5022 = vpack.c.b16 %v3730, %v3726
  %v5023 = vpack.c.b16 %v3735, %v3731
  %v5024 = vpack.c.b16 %v3736, %v3732
  %v5025 = vpack.c.b16 %v3737, %v3733
  %v5026 = vpack.c.b16 %v3738, %v3734
  %v5027 = vpack.c.b16 %v3743, %v3739
  %v5028 = vpack.c.b16 %v3744, %v3740
  %v5029 = vpack.c.b16 %v3745, %v3741
  %v5030 = vpack.c.b16 %v3746, %v3742
  %v5031 = vpack.c.b16 %v3751, %v3747
  %v5032 = vpack.c.b16 %v3752, %v3748
  %v5033 = vpack.c.b16 %v3753, %v3749
  %v5034 = vpack.c.b16 %v3754, %v3750
  %v5035 = vpack.c.b16 %v3759, %v3755
  %v5036 = vpack.c.b16 %v3760, %v3756
  %v5037 = vpack.c.b16 %v3761, %v3757
  %v5038 = vpack.c.b16 %v3762, %v3758
  %v5039 = vpack.c.b16 %v3767, %v3763
  %v5040 = vpack.c.b16 %v3768, %v3764
  %v5041 = vpack.c.b16 %v3769, %v3765
  %v5042 = vpack.c.b16 %v3770, %v3766
  %v5043 = vpack.c.b16 %v3775, %v3771
  %v5044 = vpack.c.b16 %v3776, %v3772
  %v5045 = vpack.c.b16 %v3777, %v3773
  %v5046 = vpack.c.b16 %v3778, %v3774
  %v5047 = vpack.c.b16 %v3783, %v3779
  %v5048 = vpack.c.b16 %v3784, %v3780
  %v5049 = vpack.c.b16 %v3785, %v3781
  %v5050 = vpack.c.b16 %v3786, %v3782
  %v5051 = vpack.c.b16 %v3791, %v3787
  %v5052 = vpack.c.b16 %v3792, %v3788
  %v5053 = vpack.c.b16 %v3793, %v3789
  %v5054 = vpack.c.b16 %v3794, %v3790
  %v5055 = vpack.c.b16 %v3799, %v3795
  %v5056 = vpack.c.b16 %v3800, %v3796
  %v5057 = vpack.c.b16 %v3801, %v3797
  %v5058 = vpack.c.b16 %v3802, %v3798
  %v5059 = vpack.c.b16 %v3807, %v3803
  %v5060 = vpack.c.b16 %v3808, %v3804
  %v5061 = vpack.c.b16 %v3809, %v3805
  %v5062 = vpack.c.b16 %v3810, %v3806
  %v5063 = vpack.c.b16 %v3815, %v3811
  %v5064 = vpack.c.b16 %v3816, %v3812
  %v5065 = vpack.c.b16 %v3817, %v3813
  %v5066 = vpack.c.b16 %v3818, %v3814
  %v5067 = vpack.c.b16 %v3823, %v3819
  %v5068 = vpack.c.b16 %v3824, %v3820
  %v5069 = vpack.c.b16 %v3825, %v3821
  %v5070 = vpack.c.b16 %v3826, %v3822
  %v5071 = vpack.c.b16 %v3831, %v3827
  %v5072 = vpack.c.b16 %v3832, %v3828
  %v5073 = vpack.c.b16 %v3833, %v3829
  %v5074 = vpack.c.b16 %v3834, %v3830
  %v5075 = vpack.c.b16 %v3839, %v3835
  %v5076 = vpack.c.b16 %v3840, %v3836
  %v5077 = vpack.c.b16 %v3841, %v3837
  %v5078 = vpack.c.b16 %v3842, %v3838
  %v5079 = vpack.c.b16 %v3847, %v3843
  %v5080 = vpack.c.b16 %v3848, %v3844
  %v5081 = vpack.c.b16 %v3849, %v3845
  %v5082 = vpack.c.b16 %v3850, %v3846
  %v5083 = vpack.c.b16 %v3855, %v3851
  %v5084 = vpack.c.b16 %v3856, %v3852
  %v5085 = vpack.c.b16 %v3857, %v3853
  %v5086 = vpack.c.b16 %v3858, %v3854
  %v5087 = vpack.c.b16 %v3863, %v3859
  %v5088 = vpack.c.b16 %v3864, %v3860
  %v5089 = vpack.c.b16 %v3865, %v3861
  %v5090 = vpack.c.b16 %v3866, %v3862
  %v5091 = vpack.c.b16 %v3871, %v3867
  %v5092 = vpack.c.b16 %v3872, %v3868
  %v5093 = vpack.c.b16 %v3873, %v3869
  %v5094 = vpack.c.b16 %v3874, %v3870
  %v5095 = vpack.c.b16 %v3879, %v3875
  %v5096 = vpack.c.b16 %v3880, %v3876
  %v5097 = vpack.c.b16 %v3881, %v3877
  %v5098 = vpack.c.b16 %v3882, %v3878
  %v5099 = vpack.c.b16 %v3887, %v3883
  %v5100 = vpack.c.b16 %v3888, %v3884
  %v5101 = vpack.c.b16 %v3889, %v3885
  %v5102 = vpack.c.b16 %v3890, %v3886
  %v5103 = vpack.c.b16 %v3895, %v3891
  %v5104 = vpack.c.b16 %v3896, %v3892
  %v5105 = vpack.c.b16 %v3897, %v3893
  %v5106 = vpack.c.b16 %v3898, %v3894
  %v5107 = vpack.c.b16 %v3903, %v3899
  %v5108 = vpack.c.b16 %v3904, %v3900
  %v5109 = vpack.c.b16 %v3905, %v3901
  %v5110 = vpack.c.b16 %v3906, %v3902
  %v5111 = vpack.c.b16 %v3911, %v3907
  %v5112 = vpack.c.b16 %v3912, %v3908
  %v5113 = vpack.c.b16 %v3913, %v3909
  %v5114 = vpack.c.b16 %v3914, %v3910
  %v5115 = vpack.c.b16 %v3919, %v3915
  %v5116 = vpack.c.b16 %v3920, %v3916
  %v5117 = vpack.c.b16 %v3921, %v3917
  %v5118 = vpack.c.b16 %v3922, %v3918
  %v5119 = vpack.c.b16 %v3927, %v3923
  %v5120 = vpack.c.b16 %v3928, %v3924
  %v5121 = vpack.c.b16 %v3929, %v3925
  %v5122 = vpack.c.b16 %v3930, %v3926
  %v5123 = vpack.c.b16 %v3935, %v3931
  %v5124 = vpack.c.b16 %v3936, %v3932
  %v5125 = vpack.c.b16 %v3937, %v3933
  %v5126 = vpack.c.b16 %v3938, %v3934
  %v5127 = vpack.c.b16 %v3943, %v3939
  %v5128 = vpack.c.b16 %v3944, %v3940
  %v5129 = vpack.c.b16 %v3945, %v3941
  %v5130 = vpack.c.b16 %v3946, %v3942
  %v5131 = vpack.c.b16 %v3951, %v3947
  %v5132 = vpack.c.b16 %v3952, %v3948
  %v5133 = vpack.c.b16 %v3953, %v3949
  %v5134 = vpack.c.b16 %v3954, %v3950
  %v5135 = vpack.c.b16 %v3959, %v3955
  %v5136 = vpack.c.b16 %v3960, %v3956
  %v5137 = vpack.c.b16 %v3961, %v3957
  %v5138 = vpack.c.b16 %v3962, %v3958
  %v5139 = vpack.c.b16 %v3967, %v3963
  %v5140 = vpack.c.b16 %v3968, %v3964
  %v5141 = vpack.c.b16 %v3969, %v3965
  %v5142 = vpack.c.b16 %v3970, %v3966
  %v5143 = vpack.c.b16 %v3975, %v3971
  %v5144 = vpack.c.b16 %v3976, %v3972
  %v5145 = vpack.c.b16 %v3977, %v3973
  %v5146 = vpack.c.b16 %v3978, %v3974
  %v5147 = vpack.c.b16 %v3983, %v3979
  %v5148 = vpack.c.b16 %v3984, %v3980
  %v5149 = vpack.c.b16 %v3985, %v3981
  %v5150 = vpack.c.b16 %v3986, %v3982
  %v5151 = vpack.c.b16 %v3991, %v3987
  %v5152 = vpack.c.b16 %v3992, %v3988
  %v5153 = vpack.c.b16 %v3993, %v3989
  %v5154 = vpack.c.b16 %v3994, %v3990
  %v5155 = vpack.c.b16 %v3999, %v3995
  %v5156 = vpack.c.b16 %v4000, %v3996
  %v5157 = vpack.c.b16 %v4001, %v3997
  %v5158 = vpack.c.b16 %v4002, %v3998
  %v5159 = vpack.c.b16 %v4007, %v4003
  %v5160 = vpack.c.b16 %v4008, %v4004
  %v5161 = vpack.c.b16 %v4009, %v4005
  %v5162 = vpack.c.b16 %v4010, %v4006
  %v5163 = vpack.c.b16 %v4015, %v4011
  %v5164 = vpack.c.b16 %v4016, %v4012
  %v5165 = vpack.c.b16 %v4017, %v4013
  %v5166 = vpack.c.b16 %v4018, %v4014
  %v5167 = vpack.c.b16 %v4023, %v4019
  %v5168 = vpack.c.b16 %v4024, %v4020
  %v5169 = vpack.c.b16 %v4025, %v4021
  %v5170 = vpack.c.b16 %v4026, %v4022
  %v5171 = vpack.c.b16 %v4031, %v4027
  %v5172 = vpack.c.b16 %v4032, %v4028
  %v5173 = vpack.c.b16 %v4033, %v4029
  %v5174 = vpack.c.b16 %v4034, %v4030
  %v5175 = vpack.c.b16 %v4039, %v4035
  %v5176 = vpack.c.b16 %v4040, %v4036
  %v5177 = vpack.c.b16 %v4041, %v4037
  %v5178 = vpack.c.b16 %v4042, %v4038
  %v5179 = vpack.c.b16 %v4047, %v4043
  %v5180 = vpack.c.b16 %v4048, %v4044
  %v5181 = vpack.c.b16 %v4049, %v4045
  %v5182 = vpack.c.b16 %v4050, %v4046
  %v5183 = vpack.c.b16 %v4055, %v4051
  %v5184 = vpack.c.b16 %v4056, %v4052
  %v5185 = vpack.c.b16 %v4057, %v4053
  %v5186 = vpack.c.b16 %v4058, %v4054
  %v5187 = vpack.c.b16 %v4063, %v4059
  %v5188 = vpack.c.b16 %v4064, %v4060
  %v5189 = vpack.c.b16 %v4065, %v4061
  %v5190 = vpack.c.b16 %v4066, %v4062
  %v5191 = vpack.c.b16 %v4071, %v4067
  %v5192 = vpack.c.b16 %v4072, %v4068
  %v5193 = vpack.c.b16 %v4073, %v4069
  %v5194 = vpack.c.b16 %v4074, %v4070
  %v5195 = vpack.c.b16 %v4079, %v4075
  %v5196 = vpack.c.b16 %v4080, %v4076
  %v5197 = vpack.c.b16 %v4081, %v4077
  %v5198 = vpack.c.b16 %v4082, %v4078
  %v5199 = vpack.c.b16 %v4087, %v4083
  %v5200 = vpack.c.b16 %v4088, %v4084
  %v5201 = vpack.c.b16 %v4089, %v4085
  %v5202 = vpack.c.b16 %v4090, %v4086
  %v5203 = vpack.c.b16 %v4095, %v4091
  %v5204 = vpack.c.b16 %v4096, %v4092
  %v5205 = vpack.c.b16 %v4097, %v4093
  %v5206 = vpack.c.b16 %v4098, %v4094
  %v5207 = vpack.c.b16 %v4103, %v4099
  %v5208 = vpack.c.b16 %v4104, %v4100
  %v5209 = vpack.c.b16 %v4105, %v4101
  %v5210 = vpack.c.b16 %v4106, %v4102
  %v5211 = vpack.c.b16 %v4111, %v4107
  %v5212 = vpack.c.b16 %v4112, %v4108
  %v5213 = vpack.c.b16 %v4113, %v4109
  %v5214 = vpack.c.b16 %v4114, %v4110
  %v5215 = vpack.c.b16 %v4119, %v4115
  %v5216 = vpack.c.b16 %v4120, %v4116
  %v5217 = vpack.c.b16 %v4121, %v4117
  %v5218 = vpack.c.b16 %v4122, %v4118
  %v5219 = vpack.c.b16 %v4127, %v4123
  %v5220 = vpack.c.b16 %v4128, %v4124
  %v5221 = vpack.c.b16 %v4129, %v4125
  %v5222 = vpack.c.b16 %v4130, %v4126
  %v5223 = vpack.c.b16 %v4135, %v4131
  %v5224 = vpack.c.b16 %v4136, %v4132
  %v5225 = vpack.c.b16 %v4137, %v4133
  %v5226 = vpack.c.b16 %v4138, %v4134
  %v5227 = vpack.c.b16 %v4143, %v4139
  %v5228 = vpack.c.b16 %v4144, %v4140
  %v5229 = vpack.c.b16 %v4145, %v4141
  %v5230 = vpack.c.b16 %v4146, %v4142
  %v5231 = vpack.c.b16 %v4151, %v4147
  %v5232 = vpack.c.b16 %v4152, %v4148
  %v5233 = vpack.c.b16 %v4153, %v4149
  %v5234 = vpack.c.b16 %v4154, %v4150
  %v5235 = vpack.c.b16 %v4159, %v4155
  %v5236 = vpack.c.b16 %v4160, %v4156
  %v5237 = vpack.c.b16 %v4161, %v4157
  %v5238 = vpack.c.b16 %v4162, %v4158
  %v5239 = vpack.c.b16 %v4167, %v4163
  %v5240 = vpack.c.b16 %v4168, %v4164
  %v5241 = vpack.c.b16 %v4169, %v4165
  %v5242 = vpack.c.b16 %v4170, %v4166
  %v5243 = vpack.c.b16 %v4175, %v4171
  %v5244 = vpack.c.b16 %v4176, %v4172
  %v5245 = vpack.c.b16 %v4177, %v4173
  %v5246 = vpack.c.b16 %v4178, %v4174
  %v5247 = vpack.c.b16 %v4183, %v4179
  %v5248 = vpack.c.b16 %v4184, %v4180
  %v5249 = vpack.c.b16 %v4185, %v4181
  %v5250 = vpack.c.b16 %v4186, %v4182
  %v5251 = vpack.c.b16 %v4191, %v4187
  %v5252 = vpack.c.b16 %v4192, %v4188
  %v5253 = vpack.c.b16 %v4193, %v4189
  %v5254 = vpack.c.b16 %v4194, %v4190
  %v5255 = vpack.c.b16 %v4199, %v4195
  %v5256 = vpack.c.b16 %v4200, %v4196
  %v5257 = vpack.c.b16 %v4201, %v4197
  %v5258 = vpack.c.b16 %v4202, %v4198
  %v5259 = vpack.c.b16 %v4207, %v4203
  %v5260 = vpack.c.b16 %v4208, %v4204
  %v5261 = vpack.c.b16 %v4209, %v4205
  %v5262 = vpack.c.b16 %v4210, %v4206
  %v5263 = vpack.c.b16 %v4215, %v4211
  %v5264 = vpack.c.b16 %v4216, %v4212
  %v5265 = vpack.c.b16 %v4217, %v4213
  %v5266 = vpack.c.b16 %v4218, %v4214
  %v5267 = vpack.c.b16 %v4223, %v4219
  %v5268 = vpack.c.b16 %v4224, %v4220
  %v5269 = vpack.c.b16 %v4225, %v4221
  %v5270 = vpack.c.b16 %v4226, %v4222
  %v5271 = vpack.c.b16 %v4231, %v4227
  %v5272 = vpack.c.b16 %v4232, %v4228
  %v5273 = vpack.c.b16 %v4233, %v4229
  %v5274 = vpack.c.b16 %v4234, %v4230
  %v5275 = vpack.c.b16 %v4239, %v4235
  %v5276 = vpack.c.b16 %v4240, %v4236
  %v5277 = vpack.c.b16 %v4241, %v4237
  %v5278 = vpack.c.b16 %v4242, %v4238
  %v5279 = vpack.c.b16 %v4247, %v4243
  %v5280 = vpack.c.b16 %v4248, %v4244
  %v5281 = vpack.c.b16 %v4249, %v4245
  %v5282 = vpack.c.b16 %v4250, %v4246
  %v5283 = vpack.c.b16 %v4255, %v4251
  %v5284 = vpack.c.b16 %v4256, %v4252
  %v5285 = vpack.c.b16 %v4257, %v4253
  %v5286 = vpack.c.b16 %v4258, %v4254
  %v5287 = vpack.c.b16 %v4263, %v4259
  %v5288 = vpack.c.b16 %v4264, %v4260
  %v5289 = vpack.c.b16 %v4265, %v4261
  %v5290 = vpack.c.b16 %v4266, %v4262
  %6315 = vmatprep.subr.bf16.mxu0 %v4268
  %6316 = vmatpush1.bf16.msra.mxu0 %v4267
  %6317 = vmatprep.subr.bf16.mxu0 %v4272
  %6318 = vmatpush1.bf16.msra.mxu0 %v4271
  %6319 = vmatprep.subr.bf16.mxu0 %v4276
  %6320 = vmatpush1.bf16.msra.mxu0 %v4275
  %6321 = vmatprep.subr.bf16.mxu0 %v4280
  %6322 = vmatpush1.bf16.msra.mxu0 %v4279
  %6323 = vmatprep.subr.bf16.mxu0 %v4284
  %6324 = vmatpush1.bf16.msra.mxu0 %v4283
  %6325 = vmatprep.subr.bf16.mxu0 %v4288
  %6326 = vmatpush1.bf16.msra.mxu0 %v4287
  %6327 = vmatprep.subr.bf16.mxu0 %v4292
  %6328 = vmatpush1.bf16.msra.mxu0 %v4291
  %6329 = vmatprep.subr.bf16.mxu0 %v4296
  %6330 = vmatpush1.bf16.msra.mxu0 %v4295
  %6331 = vmatprep.subr.bf16.mxu0 %v4300
  %6332 = vmatpush1.bf16.msra.mxu0 %v4299
  %6333 = vmatprep.subr.bf16.mxu0 %v4304
  %6334 = vmatpush1.bf16.msra.mxu0 %v4303
  %6335 = vmatprep.subr.bf16.mxu0 %v4308
  %6336 = vmatpush1.bf16.msra.mxu0 %v4307
  %6337 = vmatprep.subr.bf16.mxu0 %v4312
  %6338 = vmatpush1.bf16.msra.mxu0 %v4311
  %6339 = vmatprep.subr.bf16.mxu0 %v4316
  %6340 = vmatpush1.bf16.msra.mxu0 %v4315
  %6341 = vmatprep.subr.bf16.mxu0 %v4320
  %6342 = vmatpush1.bf16.msra.mxu0 %v4319
  %6343 = vmatprep.subr.bf16.mxu0 %v4324
  %6344 = vmatpush1.bf16.msra.mxu0 %v4323
  %6345 = vmatprep.subr.bf16.mxu0 %v4328
  %6346 = vmatpush1.bf16.msra.mxu0 %v4327
  %6347 = vmatprep.mubr.bf16.mxu0 %v1132
  %6348 = vmatmul.mubr.bf16.gmra.mrb[0].mxu0 %v1131
  %v6349 = vpop.f32.mrb[0].mxu0
  %v6350 = vadd.f32 %v1066, %v6349
  %v6351 = vpop.f32.mrb[0].mxu0
  %v6352 = vadd.f32 %v1070, %v6351
  %v6353 = vpop.f32.mrb[0].mxu0
  %v6354 = vpop.f32.mrb[0].mxu0
  %6355 = vdwg.mxu0
  %6356 = vmatprep.subr.bf16.mxu0 %v4332
  %6357 = vmatpush1.bf16.msra.mxu0 %v4331
  %6358 = vmatprep.subr.bf16.mxu0 %v4336
  %6359 = vmatpush1.bf16.msra.mxu0 %v4335
  %6360 = vmatprep.subr.bf16.mxu0 %v4340
  %6361 = vmatpush1.bf16.msra.mxu0 %v4339
  %6362 = vmatprep.subr.bf16.mxu0 %v4344
  %6363 = vmatpush1.bf16.msra.mxu0 %v4343
  %6364 = vmatprep.subr.bf16.mxu0 %v4348
  %6365 = vmatpush1.bf16.msra.mxu0 %v4347
  %6366 = vmatprep.subr.bf16.mxu0 %v4352
  %6367 = vmatpush1.bf16.msra.mxu0 %v4351
  %6368 = vmatprep.subr.bf16.mxu0 %v4356
  %6369 = vmatpush1.bf16.msra.mxu0 %v4355
  %6370 = vmatprep.subr.bf16.mxu0 %v4360
  %6371 = vmatpush1.bf16.msra.mxu0 %v4359
  %6372 = vmatprep.subr.bf16.mxu0 %v4364
  %6373 = vmatpush1.bf16.msra.mxu0 %v4363
  %6374 = vmatprep.subr.bf16.mxu0 %v4368
  %6375 = vmatpush1.bf16.msra.mxu0 %v4367
  %6376 = vmatprep.subr.bf16.mxu0 %v4372
  %6377 = vmatpush1.bf16.msra.mxu0 %v4371
  %6378 = vmatprep.subr.bf16.mxu0 %v4376
  %6379 = vmatpush1.bf16.msra.mxu0 %v4375
  %6380 = vmatprep.subr.bf16.mxu0 %v4380
  %6381 = vmatpush1.bf16.msra.mxu0 %v4379
  %6382 = vmatprep.subr.bf16.mxu0 %v4384
  %6383 = vmatpush1.bf16.msra.mxu0 %v4383
  %6384 = vmatprep.subr.bf16.mxu0 %v4388
  %6385 = vmatpush1.bf16.msra.mxu0 %v4387
  %6386 = vmatprep.subr.bf16.mxu0 %v4392
  %6387 = vmatpush1.bf16.msra.mxu0 %v4391
  %6388 = vmatprep.mubr.bf16.mxu0 %v1134
  %6389 = vmatmul.mubr.bf16.gmra.mrb[0].mxu0 %v1133
  %v6390 = vpop.f32.mrb[0].mxu0
  %v6391 = vadd.f32 %v6350, %v6390
  %v6392 = vpop.f32.mrb[0].mxu0
  %v6393 = vadd.f32 %v6352, %v6392
  %v6394 = vpop.f32.mrb[0].mxu0
  %v6395 = vpop.f32.mrb[0].mxu0
  %6396 = vdwg.mxu0
  %6397 = vmatprep.subr.bf16.mxu0 %v4396
  %6398 = vmatpush1.bf16.msra.mxu0 %v4395
  %6399 = vmatprep.subr.bf16.mxu0 %v4400
  %6400 = vmatpush1.bf16.msra.mxu0 %v4399
  %6401 = vmatprep.subr.bf16.mxu0 %v4404
  %6402 = vmatpush1.bf16.msra.mxu0 %v4403
  %6403 = vmatprep.subr.bf16.mxu0 %v4408
  %6404 = vmatpush1.bf16.msra.mxu0 %v4407
  %6405 = vmatprep.subr.bf16.mxu0 %v4412
  %6406 = vmatpush1.bf16.msra.mxu0 %v4411
  %6407 = vmatprep.subr.bf16.mxu0 %v4416
  %6408 = vmatpush1.bf16.msra.mxu0 %v4415
  %6409 = vmatprep.subr.bf16.mxu0 %v4420
  %6410 = vmatpush1.bf16.msra.mxu0 %v4419
  %6411 = vmatprep.subr.bf16.mxu0 %v4424
  %6412 = vmatpush1.bf16.msra.mxu0 %v4423
  %6413 = vmatprep.subr.bf16.mxu0 %v4428
  %6414 = vmatpush1.bf16.msra.mxu0 %v4427
  %6415 = vmatprep.subr.bf16.mxu0 %v4432
  %6416 = vmatpush1.bf16.msra.mxu0 %v4431
  %6417 = vmatprep.subr.bf16.mxu0 %v4436
  %6418 = vmatpush1.bf16.msra.mxu0 %v4435
  %6419 = vmatprep.subr.bf16.mxu0 %v4440
  %6420 = vmatpush1.bf16.msra.mxu0 %v4439
  %6421 = vmatprep.subr.bf16.mxu0 %v4444
  %6422 = vmatpush1.bf16.msra.mxu0 %v4443
  %6423 = vmatprep.subr.bf16.mxu0 %v4448
  %6424 = vmatpush1.bf16.msra.mxu0 %v4447
  %6425 = vmatprep.subr.bf16.mxu0 %v4452
  %6426 = vmatpush1.bf16.msra.mxu0 %v4451
  %6427 = vmatprep.subr.bf16.mxu0 %v4456
  %6428 = vmatpush1.bf16.msra.mxu0 %v4455
  %6429 = vmatprep.mubr.bf16.mxu0 %v1136
  %6430 = vmatmul.mubr.bf16.gmra.mrb[0].mxu0 %v1135
  %v6431 = vpop.f32.mrb[0].mxu0
  %v6432 = vadd.f32 %v6391, %v6431
  %v6433 = vpop.f32.mrb[0].mxu0
  %v6434 = vadd.f32 %v6393, %v6433
  %v6435 = vpop.f32.mrb[0].mxu0
  %v6436 = vpop.f32.mrb[0].mxu0
  %6437 = vdwg.mxu0
  %6438 = vmatprep.subr.bf16.mxu0 %v4460
  %6439 = vmatpush1.bf16.msra.mxu0 %v4459
  %6440 = vmatprep.subr.bf16.mxu0 %v4464
  %6441 = vmatpush1.bf16.msra.mxu0 %v4463
  %6442 = vmatprep.subr.bf16.mxu0 %v4468
  %6443 = vmatpush1.bf16.msra.mxu0 %v4467
  %6444 = vmatprep.subr.bf16.mxu0 %v4472
  %6445 = vmatpush1.bf16.msra.mxu0 %v4471
  %6446 = vmatprep.subr.bf16.mxu0 %v4476
  %6447 = vmatpush1.bf16.msra.mxu0 %v4475
  %6448 = vmatprep.subr.bf16.mxu0 %v4480
  %6449 = vmatpush1.bf16.msra.mxu0 %v4479
  %6450 = vmatprep.subr.bf16.mxu0 %v4484
  %6451 = vmatpush1.bf16.msra.mxu0 %v4483
  %6452 = vmatprep.subr.bf16.mxu0 %v4488
  %6453 = vmatpush1.bf16.msra.mxu0 %v4487
  %6454 = vmatprep.subr.bf16.mxu0 %v4492
  %6455 = vmatpush1.bf16.msra.mxu0 %v4491
  %6456 = vmatprep.subr.bf16.mxu0 %v4496
  %6457 = vmatpush1.bf16.msra.mxu0 %v4495
  %6458 = vmatprep.subr.bf16.mxu0 %v4500
  %6459 = vmatpush1.bf16.msra.mxu0 %v4499
  %6460 = vmatprep.subr.bf16.mxu0 %v4504
  %6461 = vmatpush1.bf16.msra.mxu0 %v4503
  %6462 = vmatprep.subr.bf16.mxu0 %v4508
  %6463 = vmatpush1.bf16.msra.mxu0 %v4507
  %6464 = vmatprep.subr.bf16.mxu0 %v4512
  %6465 = vmatpush1.bf16.msra.mxu0 %v4511
  %6466 = vmatprep.subr.bf16.mxu0 %v4516
  %6467 = vmatpush1.bf16.msra.mxu0 %v4515
  %6468 = vmatprep.subr.bf16.mxu0 %v4520
  %6469 = vmatpush1.bf16.msra.mxu0 %v4519
  %6470 = vmatprep.mubr.bf16.mxu0 %v1138
  %6471 = vmatmul.mubr.bf16.gmra.mrb[0].mxu0 %v1137
  %v6472 = vpop.f32.mrb[0].mxu0
  %v6473 = vadd.f32 %v6432, %v6472
  %v6474 = vpop.f32.mrb[0].mxu0
  %v6475 = vadd.f32 %v6434, %v6474
  %v6476 = vpop.f32.mrb[0].mxu0
  %v6477 = vpop.f32.mrb[0].mxu0
  %6478 = vdwg.mxu0
  %6479 = vmatprep.subr.bf16.mxu0 %v4524
  %6480 = vmatpush1.bf16.msra.mxu0 %v4523
  %6481 = vmatprep.subr.bf16.mxu0 %v4528
  %6482 = vmatpush1.bf16.msra.mxu0 %v4527
  %6483 = vmatprep.subr.bf16.mxu0 %v4532
  %6484 = vmatpush1.bf16.msra.mxu0 %v4531
  %6485 = vmatprep.subr.bf16.mxu0 %v4536
  %6486 = vmatpush1.bf16.msra.mxu0 %v4535
  %6487 = vmatprep.subr.bf16.mxu0 %v4540
  %6488 = vmatpush1.bf16.msra.mxu0 %v4539
  %6489 = vmatprep.subr.bf16.mxu0 %v4544
  %6490 = vmatpush1.bf16.msra.mxu0 %v4543
  %6491 = vmatprep.subr.bf16.mxu0 %v4548
  %6492 = vmatpush1.bf16.msra.mxu0 %v4547
  %6493 = vmatprep.subr.bf16.mxu0 %v4552
  %6494 = vmatpush1.bf16.msra.mxu0 %v4551
  %6495 = vmatprep.subr.bf16.mxu0 %v4556
  %6496 = vmatpush1.bf16.msra.mxu0 %v4555
  %6497 = vmatprep.subr.bf16.mxu0 %v4560
  %6498 = vmatpush1.bf16.msra.mxu0 %v4559
  %6499 = vmatprep.subr.bf16.mxu0 %v4564
  %6500 = vmatpush1.bf16.msra.mxu0 %v4563
  %6501 = vmatprep.subr.bf16.mxu0 %v4568
  %6502 = vmatpush1.bf16.msra.mxu0 %v4567
  %6503 = vmatprep.subr.bf16.mxu0 %v4572
  %6504 = vmatpush1.bf16.msra.mxu0 %v4571
  %6505 = vmatprep.subr.bf16.mxu0 %v4576
  %6506 = vmatpush1.bf16.msra.mxu0 %v4575
  %6507 = vmatprep.subr.bf16.mxu0 %v4580
  %6508 = vmatpush1.bf16.msra.mxu0 %v4579
  %6509 = vmatprep.subr.bf16.mxu0 %v4584
  %6510 = vmatpush1.bf16.msra.mxu0 %v4583
  %6511 = vmatprep.mubr.bf16.mxu0 %v1140
  %6512 = vmatmul.mubr.bf16.gmra.mrb[0].mxu0 %v1139
  %v6513 = vpop.f32.mrb[0].mxu0
  %v6514 = vadd.f32 %v6473, %v6513
  %v6515 = vpop.f32.mrb[0].mxu0
  %v6516 = vadd.f32 %v6475, %v6515
  %v6517 = vpop.f32.mrb[0].mxu0
  %v6518 = vpop.f32.mrb[0].mxu0
  %6519 = vdwg.mxu0
  %6520 = vmatprep.subr.bf16.mxu0 %v4588
  %6521 = vmatpush1.bf16.msra.mxu0 %v4587
  %6522 = vmatprep.subr.bf16.mxu0 %v4592
  %6523 = vmatpush1.bf16.msra.mxu0 %v4591
  %6524 = vmatprep.subr.bf16.mxu0 %v4596
  %6525 = vmatpush1.bf16.msra.mxu0 %v4595
  %6526 = vmatprep.subr.bf16.mxu0 %v4600
  %6527 = vmatpush1.bf16.msra.mxu0 %v4599
  %6528 = vmatprep.subr.bf16.mxu0 %v4604
  %6529 = vmatpush1.bf16.msra.mxu0 %v4603
  %6530 = vmatprep.subr.bf16.mxu0 %v4608
  %6531 = vmatpush1.bf16.msra.mxu0 %v4607
  %6532 = vmatprep.subr.bf16.mxu0 %v4612
  %6533 = vmatpush1.bf16.msra.mxu0 %v4611
  %6534 = vmatprep.subr.bf16.mxu0 %v4616
  %6535 = vmatpush1.bf16.msra.mxu0 %v4615
  %6536 = vmatprep.subr.bf16.mxu0 %v4620
  %6537 = vmatpush1.bf16.msra.mxu0 %v4619
  %6538 = vmatprep.subr.bf16.mxu0 %v4624
  %6539 = vmatpush1.bf16.msra.mxu0 %v4623
  %6540 = vmatprep.subr.bf16.mxu0 %v4628
  %6541 = vmatpush1.bf16.msra.mxu0 %v4627
  %6542 = vmatprep.subr.bf16.mxu0 %v4632
  %6543 = vmatpush1.bf16.msra.mxu0 %v4631
  %6544 = vmatprep.subr.bf16.mxu0 %v4636
  %6545 = vmatpush1.bf16.msra.mxu0 %v4635
  %6546 = vmatprep.subr.bf16.mxu0 %v4640
  %6547 = vmatpush1.bf16.msra.mxu0 %v4639
  %6548 = vmatprep.subr.bf16.mxu0 %v4644
  %6549 = vmatpush1.bf16.msra.mxu0 %v4643
  %6550 = vmatprep.subr.bf16.mxu0 %v4648
  %6551 = vmatpush1.bf16.msra.mxu0 %v4647
  %6552 = vmatprep.mubr.bf16.mxu0 %v1142
  %6553 = vmatmul.mubr.bf16.gmra.mrb[0].mxu0 %v1141
  %v6554 = vpop.f32.mrb[0].mxu0
  %v6555 = vadd.f32 %v6514, %v6554
  %v6556 = vpop.f32.mrb[0].mxu0
  %v6557 = vadd.f32 %v6516, %v6556
  %v6558 = vpop.f32.mrb[0].mxu0
  %v6559 = vpop.f32.mrb[0].mxu0
  %6560 = vdwg.mxu0
  %6561 = vmatprep.subr.bf16.mxu0 %v4652
  %6562 = vmatpush1.bf16.msra.mxu0 %v4651
  %6563 = vmatprep.subr.bf16.mxu0 %v4656
  %6564 = vmatpush1.bf16.msra.mxu0 %v4655
  %6565 = vmatprep.subr.bf16.mxu0 %v4660
  %6566 = vmatpush1.bf16.msra.mxu0 %v4659
  %6567 = vmatprep.subr.bf16.mxu0 %v4664
  %6568 = vmatpush1.bf16.msra.mxu0 %v4663
  %6569 = vmatprep.subr.bf16.mxu0 %v4668
  %6570 = vmatpush1.bf16.msra.mxu0 %v4667
  %6571 = vmatprep.subr.bf16.mxu0 %v4672
  %6572 = vmatpush1.bf16.msra.mxu0 %v4671
  %6573 = vmatprep.subr.bf16.mxu0 %v4676
  %6574 = vmatpush1.bf16.msra.mxu0 %v4675
  %6575 = vmatprep.subr.bf16.mxu0 %v4680
  %6576 = vmatpush1.bf16.msra.mxu0 %v4679
  %6577 = vmatprep.subr.bf16.mxu0 %v4684
  %6578 = vmatpush1.bf16.msra.mxu0 %v4683
  %6579 = vmatprep.subr.bf16.mxu0 %v4688
  %6580 = vmatpush1.bf16.msra.mxu0 %v4687
  %6581 = vmatprep.subr.bf16.mxu0 %v4692
  %6582 = vmatpush1.bf16.msra.mxu0 %v4691
  %6583 = vmatprep.subr.bf16.mxu0 %v4696
  %6584 = vmatpush1.bf16.msra.mxu0 %v4695
  %6585 = vmatprep.subr.bf16.mxu0 %v4700
  %6586 = vmatpush1.bf16.msra.mxu0 %v4699
  %6587 = vmatprep.subr.bf16.mxu0 %v4704
  %6588 = vmatpush1.bf16.msra.mxu0 %v4703
  %6589 = vmatprep.subr.bf16.mxu0 %v4708
  %6590 = vmatpush1.bf16.msra.mxu0 %v4707
  %6591 = vmatprep.subr.bf16.mxu0 %v4712
  %6592 = vmatpush1.bf16.msra.mxu0 %v4711
  %6593 = vmatprep.mubr.bf16.mxu0 %v1144
  %6594 = vmatmul.mubr.bf16.gmra.mrb[0].mxu0 %v1143
  %v6595 = vpop.f32.mrb[0].mxu0
  %v6596 = vadd.f32 %v6555, %v6595
  %v6597 = vpop.f32.mrb[0].mxu0
  %v6598 = vadd.f32 %v6557, %v6597
  %v6599 = vpop.f32.mrb[0].mxu0
  %v6600 = vpop.f32.mrb[0].mxu0
  %6601 = vdwg.mxu0
  %6602 = vmatprep.subr.bf16.mxu0 %v4716
  %6603 = vmatpush1.bf16.msra.mxu0 %v4715
  %6604 = vmatprep.subr.bf16.mxu0 %v4720
  %6605 = vmatpush1.bf16.msra.mxu0 %v4719
  %6606 = vmatprep.subr.bf16.mxu0 %v4724
  %6607 = vmatpush1.bf16.msra.mxu0 %v4723
  %6608 = vmatprep.subr.bf16.mxu0 %v4728
  %6609 = vmatpush1.bf16.msra.mxu0 %v4727
  %6610 = vmatprep.subr.bf16.mxu0 %v4732
  %6611 = vmatpush1.bf16.msra.mxu0 %v4731
  %6612 = vmatprep.subr.bf16.mxu0 %v4736
  %6613 = vmatpush1.bf16.msra.mxu0 %v4735
  %6614 = vmatprep.subr.bf16.mxu0 %v4740
  %6615 = vmatpush1.bf16.msra.mxu0 %v4739
  %6616 = vmatprep.subr.bf16.mxu0 %v4744
  %6617 = vmatpush1.bf16.msra.mxu0 %v4743
  %6618 = vmatprep.subr.bf16.mxu0 %v4748
  %6619 = vmatpush1.bf16.msra.mxu0 %v4747
  %6620 = vmatprep.subr.bf16.mxu0 %v4752
  %6621 = vmatpush1.bf16.msra.mxu0 %v4751
  %6622 = vmatprep.subr.bf16.mxu0 %v4756
  %6623 = vmatpush1.bf16.msra.mxu0 %v4755
  %6624 = vmatprep.subr.bf16.mxu0 %v4760
  %6625 = vmatpush1.bf16.msra.mxu0 %v4759
  %6626 = vmatprep.subr.bf16.mxu0 %v4764
  %6627 = vmatpush1.bf16.msra.mxu0 %v4763
  %6628 = vmatprep.subr.bf16.mxu0 %v4768
  %6629 = vmatpush1.bf16.msra.mxu0 %v4767
  %6630 = vmatprep.subr.bf16.mxu0 %v4772
  %6631 = vmatpush1.bf16.msra.mxu0 %v4771
  %6632 = vmatprep.subr.bf16.mxu0 %v4776
  %6633 = vmatpush1.bf16.msra.mxu0 %v4775
  %6634 = vmatprep.mubr.bf16.mxu0 %v1146
  %6635 = vmatmul.mubr.bf16.gmra.mrb[0].mxu0 %v1145
  %v6636 = vpop.f32.mrb[0].mxu0
  %v6637 = vadd.f32 %v6596, %v6636
  %v6638 = vpop.f32.mrb[0].mxu0
  %v6639 = vadd.f32 %v6598, %v6638
  %v6640 = vpop.f32.mrb[0].mxu0
  %v6641 = vpop.f32.mrb[0].mxu0
  %6642 = vdwg.mxu0
  %6643 = vmatprep.subr.bf16.mxu0 %v4780
  %6644 = vmatpush1.bf16.msra.mxu0 %v4779
  %6645 = vmatprep.subr.bf16.mxu0 %v4784
  %6646 = vmatpush1.bf16.msra.mxu0 %v4783
  %6647 = vmatprep.subr.bf16.mxu0 %v4788
  %6648 = vmatpush1.bf16.msra.mxu0 %v4787
  %6649 = vmatprep.subr.bf16.mxu0 %v4792
  %6650 = vmatpush1.bf16.msra.mxu0 %v4791
  %6651 = vmatprep.subr.bf16.mxu0 %v4796
  %6652 = vmatpush1.bf16.msra.mxu0 %v4795
  %6653 = vmatprep.subr.bf16.mxu0 %v4800
  %6654 = vmatpush1.bf16.msra.mxu0 %v4799
  %6655 = vmatprep.subr.bf16.mxu0 %v4804
  %6656 = vmatpush1.bf16.msra.mxu0 %v4803
  %6657 = vmatprep.subr.bf16.mxu0 %v4808
  %6658 = vmatpush1.bf16.msra.mxu0 %v4807
  %6659 = vmatprep.subr.bf16.mxu0 %v4812
  %6660 = vmatpush1.bf16.msra.mxu0 %v4811
  %6661 = vmatprep.subr.bf16.mxu0 %v4816
  %6662 = vmatpush1.bf16.msra.mxu0 %v4815
  %6663 = vmatprep.subr.bf16.mxu0 %v4820
  %6664 = vmatpush1.bf16.msra.mxu0 %v4819
  %6665 = vmatprep.subr.bf16.mxu0 %v4824
  %6666 = vmatpush1.bf16.msra.mxu0 %v4823
  %6667 = vmatprep.subr.bf16.mxu0 %v4828
  %6668 = vmatpush1.bf16.msra.mxu0 %v4827
  %6669 = vmatprep.subr.bf16.mxu0 %v4832
  %6670 = vmatpush1.bf16.msra.mxu0 %v4831
  %6671 = vmatprep.subr.bf16.mxu0 %v4836
  %6672 = vmatpush1.bf16.msra.mxu0 %v4835
  %6673 = vmatprep.subr.bf16.mxu0 %v4840
  %6674 = vmatpush1.bf16.msra.mxu0 %v4839
  %6675 = vmatprep.mubr.bf16.mxu0 %v1148
  %6676 = vmatmul.mubr.bf16.gmra.mrb[0].mxu0 %v1147
  %v6677 = vpop.f32.mrb[0].mxu0
  %v6678 = vadd.f32 %v6637, %v6677
  %v6679 = vpop.f32.mrb[0].mxu0
  %v6680 = vadd.f32 %v6639, %v6679
  %v6681 = vpop.f32.mrb[0].mxu0
  %v6682 = vpop.f32.mrb[0].mxu0
  %6683 = vdwg.mxu0
  %6684 = vmatprep.subr.bf16.mxu0 %v4844
  %6685 = vmatpush1.bf16.msra.mxu0 %v4843
  %6686 = vmatprep.subr.bf16.mxu0 %v4848
  %6687 = vmatpush1.bf16.msra.mxu0 %v4847
  %6688 = vmatprep.subr.bf16.mxu0 %v4852
  %6689 = vmatpush1.bf16.msra.mxu0 %v4851
  %6690 = vmatprep.subr.bf16.mxu0 %v4856
  %6691 = vmatpush1.bf16.msra.mxu0 %v4855
  %6692 = vmatprep.subr.bf16.mxu0 %v4860
  %6693 = vmatpush1.bf16.msra.mxu0 %v4859
  %6694 = vmatprep.subr.bf16.mxu0 %v4864
  %6695 = vmatpush1.bf16.msra.mxu0 %v4863
  %6696 = vmatprep.subr.bf16.mxu0 %v4868
  %6697 = vmatpush1.bf16.msra.mxu0 %v4867
  %6698 = vmatprep.subr.bf16.mxu0 %v4872
  %6699 = vmatpush1.bf16.msra.mxu0 %v4871
  %6700 = vmatprep.subr.bf16.mxu0 %v4876
  %6701 = vmatpush1.bf16.msra.mxu0 %v4875
  %6702 = vmatprep.subr.bf16.mxu0 %v4880
  %6703 = vmatpush1.bf16.msra.mxu0 %v4879
  %6704 = vmatprep.subr.bf16.mxu0 %v4884
  %6705 = vmatpush1.bf16.msra.mxu0 %v4883
  %6706 = vmatprep.subr.bf16.mxu0 %v4888
  %6707 = vmatpush1.bf16.msra.mxu0 %v4887
  %6708 = vmatprep.subr.bf16.mxu0 %v4892
  %6709 = vmatpush1.bf16.msra.mxu0 %v4891
  %6710 = vmatprep.subr.bf16.mxu0 %v4896
  %6711 = vmatpush1.bf16.msra.mxu0 %v4895
  %6712 = vmatprep.subr.bf16.mxu0 %v4900
  %6713 = vmatpush1.bf16.msra.mxu0 %v4899
  %6714 = vmatprep.subr.bf16.mxu0 %v4904
  %6715 = vmatpush1.bf16.msra.mxu0 %v4903
  %6716 = vmatprep.mubr.bf16.mxu0 %v1150
  %6717 = vmatmul.mubr.bf16.gmra.mrb[0].mxu0 %v1149
  %v6718 = vpop.f32.mrb[0].mxu0
  %v6719 = vadd.f32 %v6678, %v6718
  %v6720 = vpop.f32.mrb[0].mxu0
  %v6721 = vadd.f32 %v6680, %v6720
  %v6722 = vpop.f32.mrb[0].mxu0
  %v6723 = vpop.f32.mrb[0].mxu0
  %6724 = vdwg.mxu0
  %6725 = vmatprep.subr.bf16.mxu0 %v4908
  %6726 = vmatpush1.bf16.msra.mxu0 %v4907
  %6727 = vmatprep.subr.bf16.mxu0 %v4912
  %6728 = vmatpush1.bf16.msra.mxu0 %v4911
  %6729 = vmatprep.subr.bf16.mxu0 %v4916
  %6730 = vmatpush1.bf16.msra.mxu0 %v4915
  %6731 = vmatprep.subr.bf16.mxu0 %v4920
  %6732 = vmatpush1.bf16.msra.mxu0 %v4919
  %6733 = vmatprep.subr.bf16.mxu0 %v4924
  %6734 = vmatpush1.bf16.msra.mxu0 %v4923
  %6735 = vmatprep.subr.bf16.mxu0 %v4928
  %6736 = vmatpush1.bf16.msra.mxu0 %v4927
  %6737 = vmatprep.subr.bf16.mxu0 %v4932
  %6738 = vmatpush1.bf16.msra.mxu0 %v4931
  %6739 = vmatprep.subr.bf16.mxu0 %v4936
  %6740 = vmatpush1.bf16.msra.mxu0 %v4935
  %6741 = vmatprep.subr.bf16.mxu0 %v4940
  %6742 = vmatpush1.bf16.msra.mxu0 %v4939
  %6743 = vmatprep.subr.bf16.mxu0 %v4944
  %6744 = vmatpush1.bf16.msra.mxu0 %v4943
  %6745 = vmatprep.subr.bf16.mxu0 %v4948
  %6746 = vmatpush1.bf16.msra.mxu0 %v4947
  %6747 = vmatprep.subr.bf16.mxu0 %v4952
  %6748 = vmatpush1.bf16.msra.mxu0 %v4951
  %6749 = vmatprep.subr.bf16.mxu0 %v4956
  %6750 = vmatpush1.bf16.msra.mxu0 %v4955
  %6751 = vmatprep.subr.bf16.mxu0 %v4960
  %6752 = vmatpush1.bf16.msra.mxu0 %v4959
  %6753 = vmatprep.subr.bf16.mxu0 %v4964
  %6754 = vmatpush1.bf16.msra.mxu0 %v4963
  %6755 = vmatprep.subr.bf16.mxu0 %v4968
  %6756 = vmatpush1.bf16.msra.mxu0 %v4967
  %6757 = vmatprep.mubr.bf16.mxu0 %v1152
  %6758 = vmatmul.mubr.bf16.gmra.mrb[0].mxu0 %v1151
  %v6759 = vpop.f32.mrb[0].mxu0
  %v6760 = vadd.f32 %v6719, %v6759
  %v6761 = vpop.f32.mrb[0].mxu0
  %v6762 = vadd.f32 %v6721, %v6761
  %v6763 = vpop.f32.mrb[0].mxu0
  %v6764 = vpop.f32.mrb[0].mxu0
  %6765 = vdwg.mxu0
  %6766 = vmatprep.subr.bf16.mxu0 %v4972
  %6767 = vmatpush1.bf16.msra.mxu0 %v4971
  %6768 = vmatprep.subr.bf16.mxu0 %v4976
  %6769 = vmatpush1.bf16.msra.mxu0 %v4975
  %6770 = vmatprep.subr.bf16.mxu0 %v4980
  %6771 = vmatpush1.bf16.msra.mxu0 %v4979
  %6772 = vmatprep.subr.bf16.mxu0 %v4984
  %6773 = vmatpush1.bf16.msra.mxu0 %v4983
  %6774 = vmatprep.subr.bf16.mxu0 %v4988
  %6775 = vmatpush1.bf16.msra.mxu0 %v4987
  %6776 = vmatprep.subr.bf16.mxu0 %v4992
  %6777 = vmatpush1.bf16.msra.mxu0 %v4991
  %6778 = vmatprep.subr.bf16.mxu0 %v4996
  %6779 = vmatpush1.bf16.msra.mxu0 %v4995
  %6780 = vmatprep.subr.bf16.mxu0 %v5000
  %6781 = vmatpush1.bf16.msra.mxu0 %v4999
  %6782 = vmatprep.subr.bf16.mxu0 %v5004
  %6783 = vmatpush1.bf16.msra.mxu0 %v5003
  %6784 = vmatprep.subr.bf16.mxu0 %v5008
  %6785 = vmatpush1.bf16.msra.mxu0 %v5007
  %6786 = vmatprep.subr.bf16.mxu0 %v5012
  %6787 = vmatpush1.bf16.msra.mxu0 %v5011
  %6788 = vmatprep.subr.bf16.mxu0 %v5016
  %6789 = vmatpush1.bf16.msra.mxu0 %v5015
  %6790 = vmatprep.subr.bf16.mxu0 %v5020
  %6791 = vmatpush1.bf16.msra.mxu0 %v5019
  %6792 = vmatprep.subr.bf16.mxu0 %v5024
  %6793 = vmatpush1.bf16.msra.mxu0 %v5023
  %6794 = vmatprep.subr.bf16.mxu0 %v5028
  %6795 = vmatpush1.bf16.msra.mxu0 %v5027
  %6796 = vmatprep.subr.bf16.mxu0 %v5032
  %6797 = vmatpush1.bf16.msra.mxu0 %v5031
  %6798 = vmatprep.mubr.bf16.mxu0 %v1154
  %6799 = vmatmul.mubr.bf16.gmra.mrb[0].mxu0 %v1153
  %v6800 = vpop.f32.mrb[0].mxu0
  %v6801 = vadd.f32 %v6760, %v6800
  %v6802 = vpop.f32.mrb[0].mxu0
  %v6803 = vadd.f32 %v6762, %v6802
  %v6804 = vpop.f32.mrb[0].mxu0
  %v6805 = vpop.f32.mrb[0].mxu0
  %6806 = vdwg.mxu0
  %6807 = vmatprep.subr.bf16.mxu0 %v5036
  %6808 = vmatpush1.bf16.msra.mxu0 %v5035
  %6809 = vmatprep.subr.bf16.mxu0 %v5040
  %6810 = vmatpush1.bf16.msra.mxu0 %v5039
  %6811 = vmatprep.subr.bf16.mxu0 %v5044
  %6812 = vmatpush1.bf16.msra.mxu0 %v5043
  %6813 = vmatprep.subr.bf16.mxu0 %v5048
  %6814 = vmatpush1.bf16.msra.mxu0 %v5047
  %6815 = vmatprep.subr.bf16.mxu0 %v5052
  %6816 = vmatpush1.bf16.msra.mxu0 %v5051
  %6817 = vmatprep.subr.bf16.mxu0 %v5056
  %6818 = vmatpush1.bf16.msra.mxu0 %v5055
  %6819 = vmatprep.subr.bf16.mxu0 %v5060
  %6820 = vmatpush1.bf16.msra.mxu0 %v5059
  %6821 = vmatprep.subr.bf16.mxu0 %v5064
  %6822 = vmatpush1.bf16.msra.mxu0 %v5063
  %6823 = vmatprep.subr.bf16.mxu0 %v5068
  %6824 = vmatpush1.bf16.msra.mxu0 %v5067
  %6825 = vmatprep.subr.bf16.mxu0 %v5072
  %6826 = vmatpush1.bf16.msra.mxu0 %v5071
  %6827 = vmatprep.subr.bf16.mxu0 %v5076
  %6828 = vmatpush1.bf16.msra.mxu0 %v5075
  %6829 = vmatprep.subr.bf16.mxu0 %v5080
  %6830 = vmatpush1.bf16.msra.mxu0 %v5079
  %6831 = vmatprep.subr.bf16.mxu0 %v5084
  %6832 = vmatpush1.bf16.msra.mxu0 %v5083
  %6833 = vmatprep.subr.bf16.mxu0 %v5088
  %6834 = vmatpush1.bf16.msra.mxu0 %v5087
  %6835 = vmatprep.subr.bf16.mxu0 %v5092
  %6836 = vmatpush1.bf16.msra.mxu0 %v5091
  %6837 = vmatprep.subr.bf16.mxu0 %v5096
  %6838 = vmatpush1.bf16.msra.mxu0 %v5095
  %6839 = vmatprep.mubr.bf16.mxu0 %v1156
  %6840 = vmatmul.mubr.bf16.gmra.mrb[0].mxu0 %v1155
  %v6841 = vpop.f32.mrb[0].mxu0
  %v6842 = vadd.f32 %v6801, %v6841
  %v6843 = vpop.f32.mrb[0].mxu0
  %v6844 = vadd.f32 %v6803, %v6843
  %v6845 = vpop.f32.mrb[0].mxu0
  %v6846 = vpop.f32.mrb[0].mxu0
  %6847 = vdwg.mxu0
  %6848 = vmatprep.subr.bf16.mxu0 %v5100
  %6849 = vmatpush1.bf16.msra.mxu0 %v5099
  %6850 = vmatprep.subr.bf16.mxu0 %v5104
  %6851 = vmatpush1.bf16.msra.mxu0 %v5103
  %6852 = vmatprep.subr.bf16.mxu0 %v5108
  %6853 = vmatpush1.bf16.msra.mxu0 %v5107
  %6854 = vmatprep.subr.bf16.mxu0 %v5112
  %6855 = vmatpush1.bf16.msra.mxu0 %v5111
  %6856 = vmatprep.subr.bf16.mxu0 %v5116
  %6857 = vmatpush1.bf16.msra.mxu0 %v5115
  %6858 = vmatprep.subr.bf16.mxu0 %v5120
  %6859 = vmatpush1.bf16.msra.mxu0 %v5119
  %6860 = vmatprep.subr.bf16.mxu0 %v5124
  %6861 = vmatpush1.bf16.msra.mxu0 %v5123
  %6862 = vmatprep.subr.bf16.mxu0 %v5128
  %6863 = vmatpush1.bf16.msra.mxu0 %v5127
  %6864 = vmatprep.subr.bf16.mxu0 %v5132
  %6865 = vmatpush1.bf16.msra.mxu0 %v5131
  %6866 = vmatprep.subr.bf16.mxu0 %v5136
  %6867 = vmatpush1.bf16.msra.mxu0 %v5135
  %6868 = vmatprep.subr.bf16.mxu0 %v5140
  %6869 = vmatpush1.bf16.msra.mxu0 %v5139
  %6870 = vmatprep.subr.bf16.mxu0 %v5144
  %6871 = vmatpush1.bf16.msra.mxu0 %v5143
  %6872 = vmatprep.subr.bf16.mxu0 %v5148
  %6873 = vmatpush1.bf16.msra.mxu0 %v5147
  %6874 = vmatprep.subr.bf16.mxu0 %v5152
  %6875 = vmatpush1.bf16.msra.mxu0 %v5151
  %6876 = vmatprep.subr.bf16.mxu0 %v5156
  %6877 = vmatpush1.bf16.msra.mxu0 %v5155
  %6878 = vmatprep.subr.bf16.mxu0 %v5160
  %6879 = vmatpush1.bf16.msra.mxu0 %v5159
  %6880 = vmatprep.mubr.bf16.mxu0 %v1158
  %6881 = vmatmul.mubr.bf16.gmra.mrb[0].mxu0 %v1157
  %v6882 = vpop.f32.mrb[0].mxu0
  %v6883 = vadd.f32 %v6842, %v6882
  %v6884 = vpop.f32.mrb[0].mxu0
  %v6885 = vadd.f32 %v6844, %v6884
  %v6886 = vpop.f32.mrb[0].mxu0
  %v6887 = vpop.f32.mrb[0].mxu0
  %6888 = vdwg.mxu0
  %6889 = vmatprep.subr.bf16.mxu0 %v5164
  %6890 = vmatpush1.bf16.msra.mxu0 %v5163
  %6891 = vmatprep.subr.bf16.mxu0 %v5168
  %6892 = vmatpush1.bf16.msra.mxu0 %v5167
  %6893 = vmatprep.subr.bf16.mxu0 %v5172
  %6894 = vmatpush1.bf16.msra.mxu0 %v5171
  %6895 = vmatprep.subr.bf16.mxu0 %v5176
  %6896 = vmatpush1.bf16.msra.mxu0 %v5175
  %6897 = vmatprep.subr.bf16.mxu0 %v5180
  %6898 = vmatpush1.bf16.msra.mxu0 %v5179
  %6899 = vmatprep.subr.bf16.mxu0 %v5184
  %6900 = vmatpush1.bf16.msra.mxu0 %v5183
  %6901 = vmatprep.subr.bf16.mxu0 %v5188
  %6902 = vmatpush1.bf16.msra.mxu0 %v5187
  %6903 = vmatprep.subr.bf16.mxu0 %v5192
  %6904 = vmatpush1.bf16.msra.mxu0 %v5191
  %6905 = vmatprep.subr.bf16.mxu0 %v5196
  %6906 = vmatpush1.bf16.msra.mxu0 %v5195
  %6907 = vmatprep.subr.bf16.mxu0 %v5200
  %6908 = vmatpush1.bf16.msra.mxu0 %v5199
  %6909 = vmatprep.subr.bf16.mxu0 %v5204
  %6910 = vmatpush1.bf16.msra.mxu0 %v5203
  %6911 = vmatprep.subr.bf16.mxu0 %v5208
  %6912 = vmatpush1.bf16.msra.mxu0 %v5207
  %6913 = vmatprep.subr.bf16.mxu0 %v5212
  %6914 = vmatpush1.bf16.msra.mxu0 %v5211
  %6915 = vmatprep.subr.bf16.mxu0 %v5216
  %6916 = vmatpush1.bf16.msra.mxu0 %v5215
  %6917 = vmatprep.subr.bf16.mxu0 %v5220
  %6918 = vmatpush1.bf16.msra.mxu0 %v5219
  %6919 = vmatprep.subr.bf16.mxu0 %v5224
  %6920 = vmatpush1.bf16.msra.mxu0 %v5223
  %6921 = vmatprep.mubr.bf16.mxu0 %v1160
  %6922 = vmatmul.mubr.bf16.gmra.mrb[0].mxu0 %v1159
  %v6923 = vpop.f32.mrb[0].mxu0
  %v6924 = vadd.f32 %v6883, %v6923
  %v6925 = vpop.f32.mrb[0].mxu0
  %v6926 = vadd.f32 %v6885, %v6925
  %v6927 = vpop.f32.mrb[0].mxu0
  %v6928 = vpop.f32.mrb[0].mxu0
  %6929 = vdwg.mxu0
  %6930 = vmatprep.subr.bf16.mxu0 %v5228
  %6931 = vmatpush1.bf16.msra.mxu0 %v5227
  %6932 = vmatprep.subr.bf16.mxu0 %v5232
  %6933 = vmatpush1.bf16.msra.mxu0 %v5231
  %6934 = vmatprep.subr.bf16.mxu0 %v5236
  %6935 = vmatpush1.bf16.msra.mxu0 %v5235
  %6936 = vmatprep.subr.bf16.mxu0 %v5240
  %6937 = vmatpush1.bf16.msra.mxu0 %v5239
  %6938 = vmatprep.subr.bf16.mxu0 %v5244
  %6939 = vmatpush1.bf16.msra.mxu0 %v5243
  %6940 = vmatprep.subr.bf16.mxu0 %v5248
  %6941 = vmatpush1.bf16.msra.mxu0 %v5247
  %6942 = vmatprep.subr.bf16.mxu0 %v5252
  %6943 = vmatpush1.bf16.msra.mxu0 %v5251
  %6944 = vmatprep.subr.bf16.mxu0 %v5256
  %6945 = vmatpush1.bf16.msra.mxu0 %v5255
  %6946 = vmatprep.subr.bf16.mxu0 %v5260
  %6947 = vmatpush1.bf16.msra.mxu0 %v5259
  %6948 = vmatprep.subr.bf16.mxu0 %v5264
  %6949 = vmatpush1.bf16.msra.mxu0 %v5263
  %6950 = vmatprep.subr.bf16.mxu0 %v5268
  %6951 = vmatpush1.bf16.msra.mxu0 %v5267
  %6952 = vmatprep.subr.bf16.mxu0 %v5272
  %6953 = vmatpush1.bf16.msra.mxu0 %v5271
  %6954 = vmatprep.subr.bf16.mxu0 %v5276
  %6955 = vmatpush1.bf16.msra.mxu0 %v5275
  %6956 = vmatprep.subr.bf16.mxu0 %v5280
  %6957 = vmatpush1.bf16.msra.mxu0 %v5279
  %6958 = vmatprep.subr.bf16.mxu0 %v5284
  %6959 = vmatpush1.bf16.msra.mxu0 %v5283
  %6960 = vmatprep.subr.bf16.mxu0 %v5288
  %6961 = vmatpush1.bf16.msra.mxu0 %v5287
  %6962 = vmatprep.mubr.bf16.mxu0 %v1162
  %6963 = vmatmul.mubr.bf16.gmra.mrb[0].mxu0 %v1161
  %v6964 = vpop.f32.mrb[0].mxu0
  %v6965 = vadd.f32 %v6924, %v6964
  %v6966 = vpop.f32.mrb[0].mxu0
  %v6967 = vadd.f32 %v6926, %v6966
  %v6968 = vpop.f32.mrb[0].mxu0
  %v6969 = vpop.f32.mrb[0].mxu0
  %6970 = vdwg.mxu0
  %6971 = vmatprep.subr.bf16.mxu0 %v4270
  %6972 = vmatpush1.bf16.msra.mxu0 %v4269
  %6973 = vmatprep.subr.bf16.mxu0 %v4274
  %6974 = vmatpush1.bf16.msra.mxu0 %v4273
  %6975 = vmatprep.subr.bf16.mxu0 %v4278
  %6976 = vmatpush1.bf16.msra.mxu0 %v4277
  %6977 = vmatprep.subr.bf16.mxu0 %v4282
  %6978 = vmatpush1.bf16.msra.mxu0 %v4281
  %6979 = vmatprep.subr.bf16.mxu0 %v4286
  %6980 = vmatpush1.bf16.msra.mxu0 %v4285
  %6981 = vmatprep.subr.bf16.mxu0 %v4290
  %6982 = vmatpush1.bf16.msra.mxu0 %v4289
  %6983 = vmatprep.subr.bf16.mxu0 %v4294
  %6984 = vmatpush1.bf16.msra.mxu0 %v4293
  %6985 = vmatprep.subr.bf16.mxu0 %v4298
  %6986 = vmatpush1.bf16.msra.mxu0 %v4297
  %6987 = vmatprep.subr.bf16.mxu0 %v4302
  %6988 = vmatpush1.bf16.msra.mxu0 %v4301
  %6989 = vmatprep.subr.bf16.mxu0 %v4306
  %6990 = vmatpush1.bf16.msra.mxu0 %v4305
  %6991 = vmatprep.subr.bf16.mxu0 %v4310
  %6992 = vmatpush1.bf16.msra.mxu0 %v4309
  %6993 = vmatprep.subr.bf16.mxu0 %v4314
  %6994 = vmatpush1.bf16.msra.mxu0 %v4313
  %6995 = vmatprep.subr.bf16.mxu0 %v4318
  %6996 = vmatpush1.bf16.msra.mxu0 %v4317
  %6997 = vmatprep.subr.bf16.mxu0 %v4322
  %6998 = vmatpush1.bf16.msra.mxu0 %v4321
  %6999 = vmatprep.subr.bf16.mxu0 %v4326
  %7000 = vmatpush1.bf16.msra.mxu0 %v4325
  %7001 = vmatprep.subr.bf16.mxu0 %v4330
  %7002 = vmatpush1.bf16.msra.mxu0 %v4329
  %7003 = vmatprep.mubr.bf16.mxu0 %v1132
  %7004 = vmatmul.mubr.bf16.gmra.mrb[0].mxu0 %v1131
  %v7005 = vpop.f32.mrb[0].mxu0
  %v7006 = vadd.f32 %v1074, %v7005
  %v7007 = vpop.f32.mrb[0].mxu0
  %v7008 = vadd.f32 %v1078, %v7007
  %v7009 = vpop.f32.mrb[0].mxu0
  %v7010 = vpop.f32.mrb[0].mxu0
  %7011 = vdwg.mxu0
  %7012 = vmatprep.subr.bf16.mxu0 %v4334
  %7013 = vmatpush1.bf16.msra.mxu0 %v4333
  %7014 = vmatprep.subr.bf16.mxu0 %v4338
  %7015 = vmatpush1.bf16.msra.mxu0 %v4337
  %7016 = vmatprep.subr.bf16.mxu0 %v4342
  %7017 = vmatpush1.bf16.msra.mxu0 %v4341
  %7018 = vmatprep.subr.bf16.mxu0 %v4346
  %7019 = vmatpush1.bf16.msra.mxu0 %v4345
  %7020 = vmatprep.subr.bf16.mxu0 %v4350
  %7021 = vmatpush1.bf16.msra.mxu0 %v4349
  %7022 = vmatprep.subr.bf16.mxu0 %v4354
  %7023 = vmatpush1.bf16.msra.mxu0 %v4353
  %7024 = vmatprep.subr.bf16.mxu0 %v4358
  %7025 = vmatpush1.bf16.msra.mxu0 %v4357
  %7026 = vmatprep.subr.bf16.mxu0 %v4362
  %7027 = vmatpush1.bf16.msra.mxu0 %v4361
  %7028 = vmatprep.subr.bf16.mxu0 %v4366
  %7029 = vmatpush1.bf16.msra.mxu0 %v4365
  %7030 = vmatprep.subr.bf16.mxu0 %v4370
  %7031 = vmatpush1.bf16.msra.mxu0 %v4369
  %7032 = vmatprep.subr.bf16.mxu0 %v4374
  %7033 = vmatpush1.bf16.msra.mxu0 %v4373
  %7034 = vmatprep.subr.bf16.mxu0 %v4378
  %7035 = vmatpush1.bf16.msra.mxu0 %v4377
  %7036 = vmatprep.subr.bf16.mxu0 %v4382
  %7037 = vmatpush1.bf16.msra.mxu0 %v4381
  %7038 = vmatprep.subr.bf16.mxu0 %v4386
  %7039 = vmatpush1.bf16.msra.mxu0 %v4385
  %7040 = vmatprep.subr.bf16.mxu0 %v4390
  %7041 = vmatpush1.bf16.msra.mxu0 %v4389
  %7042 = vmatprep.subr.bf16.mxu0 %v4394
  %7043 = vmatpush1.bf16.msra.mxu0 %v4393
  %7044 = vmatprep.mubr.bf16.mxu0 %v1134
  %7045 = vmatmul.mubr.bf16.gmra.mrb[0].mxu0 %v1133
  %v7046 = vpop.f32.mrb[0].mxu0
  %v7047 = vadd.f32 %v7006, %v7046
  %v7048 = vpop.f32.mrb[0].mxu0
  %v7049 = vadd.f32 %v7008, %v7048
  %v7050 = vpop.f32.mrb[0].mxu0
  %v7051 = vpop.f32.mrb[0].mxu0
  %7052 = vdwg.mxu0
  %7053 = vmatprep.subr.bf16.mxu0 %v4398
  %7054 = vmatpush1.bf16.msra.mxu0 %v4397
  %7055 = vmatprep.subr.bf16.mxu0 %v4402
  %7056 = vmatpush1.bf16.msra.mxu0 %v4401
  %7057 = vmatprep.subr.bf16.mxu0 %v4406
  %7058 = vmatpush1.bf16.msra.mxu0 %v4405
  %7059 = vmatprep.subr.bf16.mxu0 %v4410
  %7060 = vmatpush1.bf16.msra.mxu0 %v4409
  %7061 = vmatprep.subr.bf16.mxu0 %v4414
  %7062 = vmatpush1.bf16.msra.mxu0 %v4413
  %7063 = vmatprep.subr.bf16.mxu0 %v4418
  %7064 = vmatpush1.bf16.msra.mxu0 %v4417
  %7065 = vmatprep.subr.bf16.mxu0 %v4422
  %7066 = vmatpush1.bf16.msra.mxu0 %v4421
  %7067 = vmatprep.subr.bf16.mxu0 %v4426
  %7068 = vmatpush1.bf16.msra.mxu0 %v4425
  %7069 = vmatprep.subr.bf16.mxu0 %v4430
  %7070 = vmatpush1.bf16.msra.mxu0 %v4429
  %7071 = vmatprep.subr.bf16.mxu0 %v4434
  %7072 = vmatpush1.bf16.msra.mxu0 %v4433
  %7073 = vmatprep.subr.bf16.mxu0 %v4438
  %7074 = vmatpush1.bf16.msra.mxu0 %v4437
  %7075 = vmatprep.subr.bf16.mxu0 %v4442
  %7076 = vmatpush1.bf16.msra.mxu0 %v4441
  %7077 = vmatprep.subr.bf16.mxu0 %v4446
  %7078 = vmatpush1.bf16.msra.mxu0 %v4445
  %7079 = vmatprep.subr.bf16.mxu0 %v4450
  %7080 = vmatpush1.bf16.msra.mxu0 %v4449
  %7081 = vmatprep.subr.bf16.mxu0 %v4454
  %7082 = vmatpush1.bf16.msra.mxu0 %v4453
  %7083 = vmatprep.subr.bf16.mxu0 %v4458
  %7084 = vmatpush1.bf16.msra.mxu0 %v4457
  %7085 = vmatprep.mubr.bf16.mxu0 %v1136
  %7086 = vmatmul.mubr.bf16.gmra.mrb[0].mxu0 %v1135
  %v7087 = vpop.f32.mrb[0].mxu0
  %v7088 = vadd.f32 %v7047, %v7087
  %v7089 = vpop.f32.mrb[0].mxu0
  %v7090 = vadd.f32 %v7049, %v7089
  %v7091 = vpop.f32.mrb[0].mxu0
  %v7092 = vpop.f32.mrb[0].mxu0
  %7093 = vdwg.mxu0
  %7094 = vmatprep.subr.bf16.mxu0 %v4462
  %7095 = vmatpush1.bf16.msra.mxu0 %v4461
  %7096 = vmatprep.subr.bf16.mxu0 %v4466
  %7097 = vmatpush1.bf16.msra.mxu0 %v4465
  %7098 = vmatprep.subr.bf16.mxu0 %v4470
  %7099 = vmatpush1.bf16.msra.mxu0 %v4469
  %7100 = vmatprep.subr.bf16.mxu0 %v4474
  %7101 = vmatpush1.bf16.msra.mxu0 %v4473
  %7102 = vmatprep.subr.bf16.mxu0 %v4478
  %7103 = vmatpush1.bf16.msra.mxu0 %v4477
  %7104 = vmatprep.subr.bf16.mxu0 %v4482
  %7105 = vmatpush1.bf16.msra.mxu0 %v4481
  %7106 = vmatprep.subr.bf16.mxu0 %v4486
  %7107 = vmatpush1.bf16.msra.mxu0 %v4485
  %7108 = vmatprep.subr.bf16.mxu0 %v4490
  %7109 = vmatpush1.bf16.msra.mxu0 %v4489
  %7110 = vmatprep.subr.bf16.mxu0 %v4494
  %7111 = vmatpush1.bf16.msra.mxu0 %v4493
  %7112 = vmatprep.subr.bf16.mxu0 %v4498
  %7113 = vmatpush1.bf16.msra.mxu0 %v4497
  %7114 = vmatprep.subr.bf16.mxu0 %v4502
  %7115 = vmatpush1.bf16.msra.mxu0 %v4501
  %7116 = vmatprep.subr.bf16.mxu0 %v4506
  %7117 = vmatpush1.bf16.msra.mxu0 %v4505
  %7118 = vmatprep.subr.bf16.mxu0 %v4510
  %7119 = vmatpush1.bf16.msra.mxu0 %v4509
  %7120 = vmatprep.subr.bf16.mxu0 %v4514
  %7121 = vmatpush1.bf16.msra.mxu0 %v4513
  %7122 = vmatprep.subr.bf16.mxu0 %v4518
  %7123 = vmatpush1.bf16.msra.mxu0 %v4517
  %7124 = vmatprep.subr.bf16.mxu0 %v4522
  %7125 = vmatpush1.bf16.msra.mxu0 %v4521
  %7126 = vmatprep.mubr.bf16.mxu0 %v1138
  %7127 = vmatmul.mubr.bf16.gmra.mrb[0].mxu0 %v1137
  %v7128 = vpop.f32.mrb[0].mxu0
  %v7129 = vadd.f32 %v7088, %v7128
  %v7130 = vpop.f32.mrb[0].mxu0
  %v7131 = vadd.f32 %v7090, %v7130
  %v7132 = vpop.f32.mrb[0].mxu0
  %v7133 = vpop.f32.mrb[0].mxu0
  %7134 = vdwg.mxu0
  %7135 = vmatprep.subr.bf16.mxu0 %v4526
  %7136 = vmatpush1.bf16.msra.mxu0 %v4525
  %7137 = vmatprep.subr.bf16.mxu0 %v4530
  %7138 = vmatpush1.bf16.msra.mxu0 %v4529
  %7139 = vmatprep.subr.bf16.mxu0 %v4534
  %7140 = vmatpush1.bf16.msra.mxu0 %v4533
  %7141 = vmatprep.subr.bf16.mxu0 %v4538
  %7142 = vmatpush1.bf16.msra.mxu0 %v4537
  %7143 = vmatprep.subr.bf16.mxu0 %v4542
  %7144 = vmatpush1.bf16.msra.mxu0 %v4541
  %7145 = vmatprep.subr.bf16.mxu0 %v4546
  %7146 = vmatpush1.bf16.msra.mxu0 %v4545
  %7147 = vmatprep.subr.bf16.mxu0 %v4550
  %7148 = vmatpush1.bf16.msra.mxu0 %v4549
  %7149 = vmatprep.subr.bf16.mxu0 %v4554
  %7150 = vmatpush1.bf16.msra.mxu0 %v4553
  %7151 = vmatprep.subr.bf16.mxu0 %v4558
  %7152 = vmatpush1.bf16.msra.mxu0 %v4557
  %7153 = vmatprep.subr.bf16.mxu0 %v4562
  %7154 = vmatpush1.bf16.msra.mxu0 %v4561
  %7155 = vmatprep.subr.bf16.mxu0 %v4566
  %7156 = vmatpush1.bf16.msra.mxu0 %v4565
  %7157 = vmatprep.subr.bf16.mxu0 %v4570
  %7158 = vmatpush1.bf16.msra.mxu0 %v4569
  %7159 = vmatprep.subr.bf16.mxu0 %v4574
  %7160 = vmatpush1.bf16.msra.mxu0 %v4573
  %7161 = vmatprep.subr.bf16.mxu0 %v4578
  %7162 = vmatpush1.bf16.msra.mxu0 %v4577
  %7163 = vmatprep.subr.bf16.mxu0 %v4582
  %7164 = vmatpush1.bf16.msra.mxu0 %v4581
  %7165 = vmatprep.subr.bf16.mxu0 %v4586
  %7166 = vmatpush1.bf16.msra.mxu0 %v4585
  %7167 = vmatprep.mubr.bf16.mxu0 %v1140
  %7168 = vmatmul.mubr.bf16.gmra.mrb[0].mxu0 %v1139
  %v7169 = vpop.f32.mrb[0].mxu0
  %v7170 = vadd.f32 %v7129, %v7169
  %v7171 = vpop.f32.mrb[0].mxu0
  %v7172 = vadd.f32 %v7131, %v7171
  %v7173 = vpop.f32.mrb[0].mxu0
  %v7174 = vpop.f32.mrb[0].mxu0
  %7175 = vdwg.mxu0
  %7176 = vmatprep.subr.bf16.mxu0 %v4590
  %7177 = vmatpush1.bf16.msra.mxu0 %v4589
  %7178 = vmatprep.subr.bf16.mxu0 %v4594
  %7179 = vmatpush1.bf16.msra.mxu0 %v4593
  %7180 = vmatprep.subr.bf16.mxu0 %v4598
  %7181 = vmatpush1.bf16.msra.mxu0 %v4597
  %7182 = vmatprep.subr.bf16.mxu0 %v4602
  %7183 = vmatpush1.bf16.msra.mxu0 %v4601
  %7184 = vmatprep.subr.bf16.mxu0 %v4606
  %7185 = vmatpush1.bf16.msra.mxu0 %v4605
  %7186 = vmatprep.subr.bf16.mxu0 %v4610
  %7187 = vmatpush1.bf16.msra.mxu0 %v4609
  %7188 = vmatprep.subr.bf16.mxu0 %v4614
  %7189 = vmatpush1.bf16.msra.mxu0 %v4613
  %7190 = vmatprep.subr.bf16.mxu0 %v4618
  %7191 = vmatpush1.bf16.msra.mxu0 %v4617
  %7192 = vmatprep.subr.bf16.mxu0 %v4622
  %7193 = vmatpush1.bf16.msra.mxu0 %v4621
  %7194 = vmatprep.subr.bf16.mxu0 %v4626
  %7195 = vmatpush1.bf16.msra.mxu0 %v4625
  %7196 = vmatprep.subr.bf16.mxu0 %v4630
  %7197 = vmatpush1.bf16.msra.mxu0 %v4629
  %7198 = vmatprep.subr.bf16.mxu0 %v4634
  %7199 = vmatpush1.bf16.msra.mxu0 %v4633
  %7200 = vmatprep.subr.bf16.mxu0 %v4638
  %7201 = vmatpush1.bf16.msra.mxu0 %v4637
  %7202 = vmatprep.subr.bf16.mxu0 %v4642
  %7203 = vmatpush1.bf16.msra.mxu0 %v4641
  %7204 = vmatprep.subr.bf16.mxu0 %v4646
  %7205 = vmatpush1.bf16.msra.mxu0 %v4645
  %7206 = vmatprep.subr.bf16.mxu0 %v4650
  %7207 = vmatpush1.bf16.msra.mxu0 %v4649
  %7208 = vmatprep.mubr.bf16.mxu0 %v1142
  %7209 = vmatmul.mubr.bf16.gmra.mrb[0].mxu0 %v1141
  %v7210 = vpop.f32.mrb[0].mxu0
  %v7211 = vadd.f32 %v7170, %v7210
  %v7212 = vpop.f32.mrb[0].mxu0
  %v7213 = vadd.f32 %v7172, %v7212
  %v7214 = vpop.f32.mrb[0].mxu0
  %v7215 = vpop.f32.mrb[0].mxu0
  %7216 = vdwg.mxu0
  %7217 = vmatprep.subr.bf16.mxu0 %v4654
  %7218 = vmatpush1.bf16.msra.mxu0 %v4653
  %7219 = vmatprep.subr.bf16.mxu0 %v4658
  %7220 = vmatpush1.bf16.msra.mxu0 %v4657
  %7221 = vmatprep.subr.bf16.mxu0 %v4662
  %7222 = vmatpush1.bf16.msra.mxu0 %v4661
  %7223 = vmatprep.subr.bf16.mxu0 %v4666
  %7224 = vmatpush1.bf16.msra.mxu0 %v4665
  %7225 = vmatprep.subr.bf16.mxu0 %v4670
  %7226 = vmatpush1.bf16.msra.mxu0 %v4669
  %7227 = vmatprep.subr.bf16.mxu0 %v4674
  %7228 = vmatpush1.bf16.msra.mxu0 %v4673
  %7229 = vmatprep.subr.bf16.mxu0 %v4678
  %7230 = vmatpush1.bf16.msra.mxu0 %v4677
  %7231 = vmatprep.subr.bf16.mxu0 %v4682
  %7232 = vmatpush1.bf16.msra.mxu0 %v4681
  %7233 = vmatprep.subr.bf16.mxu0 %v4686
  %7234 = vmatpush1.bf16.msra.mxu0 %v4685
  %7235 = vmatprep.subr.bf16.mxu0 %v4690
  %7236 = vmatpush1.bf16.msra.mxu0 %v4689
  %7237 = vmatprep.subr.bf16.mxu0 %v4694
  %7238 = vmatpush1.bf16.msra.mxu0 %v4693
  %7239 = vmatprep.subr.bf16.mxu0 %v4698
  %7240 = vmatpush1.bf16.msra.mxu0 %v4697
  %7241 = vmatprep.subr.bf16.mxu0 %v4702
  %7242 = vmatpush1.bf16.msra.mxu0 %v4701
  %7243 = vmatprep.subr.bf16.mxu0 %v4706
  %7244 = vmatpush1.bf16.msra.mxu0 %v4705
  %7245 = vmatprep.subr.bf16.mxu0 %v4710
  %7246 = vmatpush1.bf16.msra.mxu0 %v4709
  %7247 = vmatprep.subr.bf16.mxu0 %v4714
  %7248 = vmatpush1.bf16.msra.mxu0 %v4713
  %7249 = vmatprep.mubr.bf16.mxu0 %v1144
  %7250 = vmatmul.mubr.bf16.gmra.mrb[0].mxu0 %v1143
  %v7251 = vpop.f32.mrb[0].mxu0
  %v7252 = vadd.f32 %v7211, %v7251
  %v7253 = vpop.f32.mrb[0].mxu0
  %v7254 = vadd.f32 %v7213, %v7253
  %v7255 = vpop.f32.mrb[0].mxu0
  %v7256 = vpop.f32.mrb[0].mxu0
  %7257 = vdwg.mxu0
  %7258 = vmatprep.subr.bf16.mxu0 %v4718
  %7259 = vmatpush1.bf16.msra.mxu0 %v4717
  %7260 = vmatprep.subr.bf16.mxu0 %v4722
  %7261 = vmatpush1.bf16.msra.mxu0 %v4721
  %7262 = vmatprep.subr.bf16.mxu0 %v4726
  %7263 = vmatpush1.bf16.msra.mxu0 %v4725
  %7264 = vmatprep.subr.bf16.mxu0 %v4730
  %7265 = vmatpush1.bf16.msra.mxu0 %v4729
  %7266 = vmatprep.subr.bf16.mxu0 %v4734
  %7267 = vmatpush1.bf16.msra.mxu0 %v4733
  %7268 = vmatprep.subr.bf16.mxu0 %v4738
  %7269 = vmatpush1.bf16.msra.mxu0 %v4737
  %7270 = vmatprep.subr.bf16.mxu0 %v4742
  %7271 = vmatpush1.bf16.msra.mxu0 %v4741
  %7272 = vmatprep.subr.bf16.mxu0 %v4746
  %7273 = vmatpush1.bf16.msra.mxu0 %v4745
  %7274 = vmatprep.subr.bf16.mxu0 %v4750
  %7275 = vmatpush1.bf16.msra.mxu0 %v4749
  %7276 = vmatprep.subr.bf16.mxu0 %v4754
  %7277 = vmatpush1.bf16.msra.mxu0 %v4753
  %7278 = vmatprep.subr.bf16.mxu0 %v4758
  %7279 = vmatpush1.bf16.msra.mxu0 %v4757
  %7280 = vmatprep.subr.bf16.mxu0 %v4762
  %7281 = vmatpush1.bf16.msra.mxu0 %v4761
  %7282 = vmatprep.subr.bf16.mxu0 %v4766
  %7283 = vmatpush1.bf16.msra.mxu0 %v4765
  %7284 = vmatprep.subr.bf16.mxu0 %v4770
  %7285 = vmatpush1.bf16.msra.mxu0 %v4769
  %7286 = vmatprep.subr.bf16.mxu0 %v4774
  %7287 = vmatpush1.bf16.msra.mxu0 %v4773
  %7288 = vmatprep.subr.bf16.mxu0 %v4778
  %7289 = vmatpush1.bf16.msra.mxu0 %v4777
  %7290 = vmatprep.mubr.bf16.mxu0 %v1146
  %7291 = vmatmul.mubr.bf16.gmra.mrb[0].mxu0 %v1145
  %v7292 = vpop.f32.mrb[0].mxu0
  %v7293 = vadd.f32 %v7252, %v7292
  %v7294 = vpop.f32.mrb[0].mxu0
  %v7295 = vadd.f32 %v7254, %v7294
  %v7296 = vpop.f32.mrb[0].mxu0
  %v7297 = vpop.f32.mrb[0].mxu0
  %7298 = vdwg.mxu0
  %7299 = vmatprep.subr.bf16.mxu0 %v4782
  %7300 = vmatpush1.bf16.msra.mxu0 %v4781
  %7301 = vmatprep.subr.bf16.mxu0 %v4786
  %7302 = vmatpush1.bf16.msra.mxu0 %v4785
  %7303 = vmatprep.subr.bf16.mxu0 %v4790
  %7304 = vmatpush1.bf16.msra.mxu0 %v4789
  %7305 = vmatprep.subr.bf16.mxu0 %v4794
  %7306 = vmatpush1.bf16.msra.mxu0 %v4793
  %7307 = vmatprep.subr.bf16.mxu0 %v4798
  %7308 = vmatpush1.bf16.msra.mxu0 %v4797
  %7309 = vmatprep.subr.bf16.mxu0 %v4802
  %7310 = vmatpush1.bf16.msra.mxu0 %v4801
  %7311 = vmatprep.subr.bf16.mxu0 %v4806
  %7312 = vmatpush1.bf16.msra.mxu0 %v4805
  %7313 = vmatprep.subr.bf16.mxu0 %v4810
  %7314 = vmatpush1.bf16.msra.mxu0 %v4809
  %7315 = vmatprep.subr.bf16.mxu0 %v4814
  %7316 = vmatpush1.bf16.msra.mxu0 %v4813
  %7317 = vmatprep.subr.bf16.mxu0 %v4818
  %7318 = vmatpush1.bf16.msra.mxu0 %v4817
  %7319 = vmatprep.subr.bf16.mxu0 %v4822
  %7320 = vmatpush1.bf16.msra.mxu0 %v4821
  %7321 = vmatprep.subr.bf16.mxu0 %v4826
  %7322 = vmatpush1.bf16.msra.mxu0 %v4825
  %7323 = vmatprep.subr.bf16.mxu0 %v4830
  %7324 = vmatpush1.bf16.msra.mxu0 %v4829
  %7325 = vmatprep.subr.bf16.mxu0 %v4834
  %7326 = vmatpush1.bf16.msra.mxu0 %v4833
  %7327 = vmatprep.subr.bf16.mxu0 %v4838
  %7328 = vmatpush1.bf16.msra.mxu0 %v4837
  %7329 = vmatprep.subr.bf16.mxu0 %v4842
  %7330 = vmatpush1.bf16.msra.mxu0 %v4841
  %7331 = vmatprep.mubr.bf16.mxu0 %v1148
  %7332 = vmatmul.mubr.bf16.gmra.mrb[0].mxu0 %v1147
  %v7333 = vpop.f32.mrb[0].mxu0
  %v7334 = vadd.f32 %v7293, %v7333
  %v7335 = vpop.f32.mrb[0].mxu0
  %v7336 = vadd.f32 %v7295, %v7335
  %v7337 = vpop.f32.mrb[0].mxu0
  %v7338 = vpop.f32.mrb[0].mxu0
  %7339 = vdwg.mxu0
  %7340 = vmatprep.subr.bf16.mxu0 %v4846
  %7341 = vmatpush1.bf16.msra.mxu0 %v4845
  %7342 = vmatprep.subr.bf16.mxu0 %v4850
  %7343 = vmatpush1.bf16.msra.mxu0 %v4849
  %7344 = vmatprep.subr.bf16.mxu0 %v4854
  %7345 = vmatpush1.bf16.msra.mxu0 %v4853
  %7346 = vmatprep.subr.bf16.mxu0 %v4858
  %7347 = vmatpush1.bf16.msra.mxu0 %v4857
  %7348 = vmatprep.subr.bf16.mxu0 %v4862
  %7349 = vmatpush1.bf16.msra.mxu0 %v4861
  %7350 = vmatprep.subr.bf16.mxu0 %v4866
  %7351 = vmatpush1.bf16.msra.mxu0 %v4865
  %7352 = vmatprep.subr.bf16.mxu0 %v4870
  %7353 = vmatpush1.bf16.msra.mxu0 %v4869
  %7354 = vmatprep.subr.bf16.mxu0 %v4874
  %7355 = vmatpush1.bf16.msra.mxu0 %v4873
  %7356 = vmatprep.subr.bf16.mxu0 %v4878
  %7357 = vmatpush1.bf16.msra.mxu0 %v4877
  %7358 = vmatprep.subr.bf16.mxu0 %v4882
  %7359 = vmatpush1.bf16.msra.mxu0 %v4881
  %7360 = vmatprep.subr.bf16.mxu0 %v4886
  %7361 = vmatpush1.bf16.msra.mxu0 %v4885
  %7362 = vmatprep.subr.bf16.mxu0 %v4890
  %7363 = vmatpush1.bf16.msra.mxu0 %v4889
  %7364 = vmatprep.subr.bf16.mxu0 %v4894
  %7365 = vmatpush1.bf16.msra.mxu0 %v4893
  %7366 = vmatprep.subr.bf16.mxu0 %v4898
  %7367 = vmatpush1.bf16.msra.mxu0 %v4897
  %7368 = vmatprep.subr.bf16.mxu0 %v4902
  %7369 = vmatpush1.bf16.msra.mxu0 %v4901
  %7370 = vmatprep.subr.bf16.mxu0 %v4906
  %7371 = vmatpush1.bf16.msra.mxu0 %v4905
  %7372 = vmatprep.mubr.bf16.mxu0 %v1150
  %7373 = vmatmul.mubr.bf16.gmra.mrb[0].mxu0 %v1149
  %v7374 = vpop.f32.mrb[0].mxu0
  %v7375 = vadd.f32 %v7334, %v7374
  %v7376 = vpop.f32.mrb[0].mxu0
  %v7377 = vadd.f32 %v7336, %v7376
  %v7378 = vpop.f32.mrb[0].mxu0
  %v7379 = vpop.f32.mrb[0].mxu0
  %7380 = vdwg.mxu0
  %7381 = vmatprep.subr.bf16.mxu0 %v4910
  %7382 = vmatpush1.bf16.msra.mxu0 %v4909
  %7383 = vmatprep.subr.bf16.mxu0 %v4914
  %7384 = vmatpush1.bf16.msra.mxu0 %v4913
  %7385 = vmatprep.subr.bf16.mxu0 %v4918
  %7386 = vmatpush1.bf16.msra.mxu0 %v4917
  %7387 = vmatprep.subr.bf16.mxu0 %v4922
  %7388 = vmatpush1.bf16.msra.mxu0 %v4921
  %7389 = vmatprep.subr.bf16.mxu0 %v4926
  %7390 = vmatpush1.bf16.msra.mxu0 %v4925
  %7391 = vmatprep.subr.bf16.mxu0 %v4930
  %7392 = vmatpush1.bf16.msra.mxu0 %v4929
  %7393 = vmatprep.subr.bf16.mxu0 %v4934
  %7394 = vmatpush1.bf16.msra.mxu0 %v4933
  %7395 = vmatprep.subr.bf16.mxu0 %v4938
  %7396 = vmatpush1.bf16.msra.mxu0 %v4937
  %7397 = vmatprep.subr.bf16.mxu0 %v4942
  %7398 = vmatpush1.bf16.msra.mxu0 %v4941
  %7399 = vmatprep.subr.bf16.mxu0 %v4946
  %7400 = vmatpush1.bf16.msra.mxu0 %v4945
  %7401 = vmatprep.subr.bf16.mxu0 %v4950
  %7402 = vmatpush1.bf16.msra.mxu0 %v4949
  %7403 = vmatprep.subr.bf16.mxu0 %v4954
  %7404 = vmatpush1.bf16.msra.mxu0 %v4953
  %7405 = vmatprep.subr.bf16.mxu0 %v4958
  %7406 = vmatpush1.bf16.msra.mxu0 %v4957
  %7407 = vmatprep.subr.bf16.mxu0 %v4962
  %7408 = vmatpush1.bf16.msra.mxu0 %v4961
  %7409 = vmatprep.subr.bf16.mxu0 %v4966
  %7410 = vmatpush1.bf16.msra.mxu0 %v4965
  %7411 = vmatprep.subr.bf16.mxu0 %v4970
  %7412 = vmatpush1.bf16.msra.mxu0 %v4969
  %7413 = vmatprep.mubr.bf16.mxu0 %v1152
  %7414 = vmatmul.mubr.bf16.gmra.mrb[0].mxu0 %v1151
  %v7415 = vpop.f32.mrb[0].mxu0
  %v7416 = vadd.f32 %v7375, %v7415
  %v7417 = vpop.f32.mrb[0].mxu0
  %v7418 = vadd.f32 %v7377, %v7417
  %v7419 = vpop.f32.mrb[0].mxu0
  %v7420 = vpop.f32.mrb[0].mxu0
  %7421 = vdwg.mxu0
  %7422 = vmatprep.subr.bf16.mxu0 %v4974
  %7423 = vmatpush1.bf16.msra.mxu0 %v4973
  %7424 = vmatprep.subr.bf16.mxu0 %v4978
  %7425 = vmatpush1.bf16.msra.mxu0 %v4977
  %7426 = vmatprep.subr.bf16.mxu0 %v4982
  %7427 = vmatpush1.bf16.msra.mxu0 %v4981
  %7428 = vmatprep.subr.bf16.mxu0 %v4986
  %7429 = vmatpush1.bf16.msra.mxu0 %v4985
  %7430 = vmatprep.subr.bf16.mxu0 %v4990
  %7431 = vmatpush1.bf16.msra.mxu0 %v4989
  %7432 = vmatprep.subr.bf16.mxu0 %v4994
  %7433 = vmatpush1.bf16.msra.mxu0 %v4993
  %7434 = vmatprep.subr.bf16.mxu0 %v4998
  %7435 = vmatpush1.bf16.msra.mxu0 %v4997
  %7436 = vmatprep.subr.bf16.mxu0 %v5002
  %7437 = vmatpush1.bf16.msra.mxu0 %v5001
  %7438 = vmatprep.subr.bf16.mxu0 %v5006
  %7439 = vmatpush1.bf16.msra.mxu0 %v5005
  %7440 = vmatprep.subr.bf16.mxu0 %v5010
  %7441 = vmatpush1.bf16.msra.mxu0 %v5009
  %7442 = vmatprep.subr.bf16.mxu0 %v5014
  %7443 = vmatpush1.bf16.msra.mxu0 %v5013
  %7444 = vmatprep.subr.bf16.mxu0 %v5018
  %7445 = vmatpush1.bf16.msra.mxu0 %v5017
  %7446 = vmatprep.subr.bf16.mxu0 %v5022
  %7447 = vmatpush1.bf16.msra.mxu0 %v5021
  %7448 = vmatprep.subr.bf16.mxu0 %v5026
  %7449 = vmatpush1.bf16.msra.mxu0 %v5025
  %7450 = vmatprep.subr.bf16.mxu0 %v5030
  %7451 = vmatpush1.bf16.msra.mxu0 %v5029
  %7452 = vmatprep.subr.bf16.mxu0 %v5034
  %7453 = vmatpush1.bf16.msra.mxu0 %v5033
  %7454 = vmatprep.mubr.bf16.mxu0 %v1154
  %7455 = vmatmul.mubr.bf16.gmra.mrb[0].mxu0 %v1153
  %v7456 = vpop.f32.mrb[0].mxu0
  %v7457 = vadd.f32 %v7416, %v7456
  %v7458 = vpop.f32.mrb[0].mxu0
  %v7459 = vadd.f32 %v7418, %v7458
  %v7460 = vpop.f32.mrb[0].mxu0
  %v7461 = vpop.f32.mrb[0].mxu0
  %7462 = vdwg.mxu0
  %7463 = vmatprep.subr.bf16.mxu0 %v5038
  %7464 = vmatpush1.bf16.msra.mxu0 %v5037
  %7465 = vmatprep.subr.bf16.mxu0 %v5042
  %7466 = vmatpush1.bf16.msra.mxu0 %v5041
  %7467 = vmatprep.subr.bf16.mxu0 %v5046
  %7468 = vmatpush1.bf16.msra.mxu0 %v5045
  %7469 = vmatprep.subr.bf16.mxu0 %v5050
  %7470 = vmatpush1.bf16.msra.mxu0 %v5049
  %7471 = vmatprep.subr.bf16.mxu0 %v5054
  %7472 = vmatpush1.bf16.msra.mxu0 %v5053
  %7473 = vmatprep.subr.bf16.mxu0 %v5058
  %7474 = vmatpush1.bf16.msra.mxu0 %v5057
  %7475 = vmatprep.subr.bf16.mxu0 %v5062
  %7476 = vmatpush1.bf16.msra.mxu0 %v5061
  %7477 = vmatprep.subr.bf16.mxu0 %v5066
  %7478 = vmatpush1.bf16.msra.mxu0 %v5065
  %7479 = vmatprep.subr.bf16.mxu0 %v5070
  %7480 = vmatpush1.bf16.msra.mxu0 %v5069
  %7481 = vmatprep.subr.bf16.mxu0 %v5074
  %7482 = vmatpush1.bf16.msra.mxu0 %v5073
  %7483 = vmatprep.subr.bf16.mxu0 %v5078
  %7484 = vmatpush1.bf16.msra.mxu0 %v5077
  %7485 = vmatprep.subr.bf16.mxu0 %v5082
  %7486 = vmatpush1.bf16.msra.mxu0 %v5081
  %7487 = vmatprep.subr.bf16.mxu0 %v5086
  %7488 = vmatpush1.bf16.msra.mxu0 %v5085
  %7489 = vmatprep.subr.bf16.mxu0 %v5090
  %7490 = vmatpush1.bf16.msra.mxu0 %v5089
  %7491 = vmatprep.subr.bf16.mxu0 %v5094
  %7492 = vmatpush1.bf16.msra.mxu0 %v5093
  %7493 = vmatprep.subr.bf16.mxu0 %v5098
  %7494 = vmatpush1.bf16.msra.mxu0 %v5097
  %7495 = vmatprep.mubr.bf16.mxu0 %v1156
  %7496 = vmatmul.mubr.bf16.gmra.mrb[0].mxu0 %v1155
  %v7497 = vpop.f32.mrb[0].mxu0
  %v7498 = vadd.f32 %v7457, %v7497
  %v7499 = vpop.f32.mrb[0].mxu0
  %v7500 = vadd.f32 %v7459, %v7499
  %v7501 = vpop.f32.mrb[0].mxu0
  %v7502 = vpop.f32.mrb[0].mxu0
  %7503 = vdwg.mxu0
  %7504 = vmatprep.subr.bf16.mxu0 %v5102
  %7505 = vmatpush1.bf16.msra.mxu0 %v5101
  %7506 = vmatprep.subr.bf16.mxu0 %v5106
  %7507 = vmatpush1.bf16.msra.mxu0 %v5105
  %7508 = vmatprep.subr.bf16.mxu0 %v5110
  %7509 = vmatpush1.bf16.msra.mxu0 %v5109
  %7510 = vmatprep.subr.bf16.mxu0 %v5114
  %7511 = vmatpush1.bf16.msra.mxu0 %v5113
  %7512 = vmatprep.subr.bf16.mxu0 %v5118
  %7513 = vmatpush1.bf16.msra.mxu0 %v5117
  %7514 = vmatprep.subr.bf16.mxu0 %v5122
  %7515 = vmatpush1.bf16.msra.mxu0 %v5121
  %7516 = vmatprep.subr.bf16.mxu0 %v5126
  %7517 = vmatpush1.bf16.msra.mxu0 %v5125
  %7518 = vmatprep.subr.bf16.mxu0 %v5130
  %7519 = vmatpush1.bf16.msra.mxu0 %v5129
  %7520 = vmatprep.subr.bf16.mxu0 %v5134
  %7521 = vmatpush1.bf16.msra.mxu0 %v5133
  %7522 = vmatprep.subr.bf16.mxu0 %v5138
  %7523 = vmatpush1.bf16.msra.mxu0 %v5137
  %7524 = vmatprep.subr.bf16.mxu0 %v5142
  %7525 = vmatpush1.bf16.msra.mxu0 %v5141
  %7526 = vmatprep.subr.bf16.mxu0 %v5146
  %7527 = vmatpush1.bf16.msra.mxu0 %v5145
  %7528 = vmatprep.subr.bf16.mxu0 %v5150
  %7529 = vmatpush1.bf16.msra.mxu0 %v5149
  %7530 = vmatprep.subr.bf16.mxu0 %v5154
  %7531 = vmatpush1.bf16.msra.mxu0 %v5153
  %7532 = vmatprep.subr.bf16.mxu0 %v5158
  %7533 = vmatpush1.bf16.msra.mxu0 %v5157
  %7534 = vmatprep.subr.bf16.mxu0 %v5162
  %7535 = vmatpush1.bf16.msra.mxu0 %v5161
  %7536 = vmatprep.mubr.bf16.mxu0 %v1158
  %7537 = vmatmul.mubr.bf16.gmra.mrb[0].mxu0 %v1157
  %v7538 = vpop.f32.mrb[0].mxu0
  %v7539 = vadd.f32 %v7498, %v7538
  %v7540 = vpop.f32.mrb[0].mxu0
  %v7541 = vadd.f32 %v7500, %v7540
  %v7542 = vpop.f32.mrb[0].mxu0
  %v7543 = vpop.f32.mrb[0].mxu0
  %7544 = vdwg.mxu0
  %7545 = vmatprep.subr.bf16.mxu0 %v5166
  %7546 = vmatpush1.bf16.msra.mxu0 %v5165
  %7547 = vmatprep.subr.bf16.mxu0 %v5170
  %7548 = vmatpush1.bf16.msra.mxu0 %v5169
  %7549 = vmatprep.subr.bf16.mxu0 %v5174
  %7550 = vmatpush1.bf16.msra.mxu0 %v5173
  %7551 = vmatprep.subr.bf16.mxu0 %v5178
  %7552 = vmatpush1.bf16.msra.mxu0 %v5177
  %7553 = vmatprep.subr.bf16.mxu0 %v5182
  %7554 = vmatpush1.bf16.msra.mxu0 %v5181
  %7555 = vmatprep.subr.bf16.mxu0 %v5186
  %7556 = vmatpush1.bf16.msra.mxu0 %v5185
  %7557 = vmatprep.subr.bf16.mxu0 %v5190
  %7558 = vmatpush1.bf16.msra.mxu0 %v5189
  %7559 = vmatprep.subr.bf16.mxu0 %v5194
  %7560 = vmatpush1.bf16.msra.mxu0 %v5193
  %7561 = vmatprep.subr.bf16.mxu0 %v5198
  %7562 = vmatpush1.bf16.msra.mxu0 %v5197
  %7563 = vmatprep.subr.bf16.mxu0 %v5202
  %7564 = vmatpush1.bf16.msra.mxu0 %v5201
  %7565 = vmatprep.subr.bf16.mxu0 %v5206
  %7566 = vmatpush1.bf16.msra.mxu0 %v5205
  %7567 = vmatprep.subr.bf16.mxu0 %v5210
  %7568 = vmatpush1.bf16.msra.mxu0 %v5209
  %7569 = vmatprep.subr.bf16.mxu0 %v5214
  %7570 = vmatpush1.bf16.msra.mxu0 %v5213
  %7571 = vmatprep.subr.bf16.mxu0 %v5218
  %7572 = vmatpush1.bf16.msra.mxu0 %v5217
  %7573 = vmatprep.subr.bf16.mxu0 %v5222
  %7574 = vmatpush1.bf16.msra.mxu0 %v5221
  %7575 = vmatprep.subr.bf16.mxu0 %v5226
  %7576 = vmatpush1.bf16.msra.mxu0 %v5225
  %7577 = vmatprep.mubr.bf16.mxu0 %v1160
  %7578 = vmatmul.mubr.bf16.gmra.mrb[0].mxu0 %v1159
  %v7579 = vpop.f32.mrb[0].mxu0
  %v7580 = vadd.f32 %v7539, %v7579
  %v7581 = vpop.f32.mrb[0].mxu0
  %v7582 = vadd.f32 %v7541, %v7581
  %v7583 = vpop.f32.mrb[0].mxu0
  %v7584 = vpop.f32.mrb[0].mxu0
  %7585 = vdwg.mxu0
  %7586 = vmatprep.subr.bf16.mxu0 %v5230
  %7587 = vmatpush1.bf16.msra.mxu0 %v5229
  %7588 = vmatprep.subr.bf16.mxu0 %v5234
  %7589 = vmatpush1.bf16.msra.mxu0 %v5233
  %7590 = vmatprep.subr.bf16.mxu0 %v5238
  %7591 = vmatpush1.bf16.msra.mxu0 %v5237
  %7592 = vmatprep.subr.bf16.mxu0 %v5242
  %7593 = vmatpush1.bf16.msra.mxu0 %v5241
  %7594 = vmatprep.subr.bf16.mxu0 %v5246
  %7595 = vmatpush1.bf16.msra.mxu0 %v5245
  %7596 = vmatprep.subr.bf16.mxu0 %v5250
  %7597 = vmatpush1.bf16.msra.mxu0 %v5249
  %7598 = vmatprep.subr.bf16.mxu0 %v5254
  %7599 = vmatpush1.bf16.msra.mxu0 %v5253
  %7600 = vmatprep.subr.bf16.mxu0 %v5258
  %7601 = vmatpush1.bf16.msra.mxu0 %v5257
  %7602 = vmatprep.subr.bf16.mxu0 %v5262
  %7603 = vmatpush1.bf16.msra.mxu0 %v5261
  %7604 = vmatprep.subr.bf16.mxu0 %v5266
  %7605 = vmatpush1.bf16.msra.mxu0 %v5265
  %7606 = vmatprep.subr.bf16.mxu0 %v5270
  %7607 = vmatpush1.bf16.msra.mxu0 %v5269
  %7608 = vmatprep.subr.bf16.mxu0 %v5274
  %7609 = vmatpush1.bf16.msra.mxu0 %v5273
  %7610 = vmatprep.subr.bf16.mxu0 %v5278
  %7611 = vmatpush1.bf16.msra.mxu0 %v5277
  %7612 = vmatprep.subr.bf16.mxu0 %v5282
  %7613 = vmatpush1.bf16.msra.mxu0 %v5281
  %7614 = vmatprep.subr.bf16.mxu0 %v5286
  %7615 = vmatpush1.bf16.msra.mxu0 %v5285
  %7616 = vmatprep.subr.bf16.mxu0 %v5290
  %7617 = vmatpush1.bf16.msra.mxu0 %v5289
  %7618 = vmatprep.mubr.bf16.mxu0 %v1162
  %7619 = vmatmul.mubr.bf16.gmra.mrb[0].mxu0 %v1161
  %v7620 = vpop.f32.mrb[0].mxu0
  %v7621 = vadd.f32 %v7580, %v7620
  %v7622 = vpop.f32.mrb[0].mxu0
  %v7623 = vadd.f32 %v7582, %v7622
  %v7624 = vpop.f32.mrb[0].mxu0
  %v7625 = vpop.f32.mrb[0].mxu0
  %7626 = vdwg.mxu0
  %v7627 = vmax.f32 %v6965, 0.0
  %v7628 = vmax.f32 %v6967, 0.0
  %v7629 = vmax.f32 %v7621, 0.0
  %v7630 = vmax.f32 %v7623, 0.0
  %v7631 = vpack.c.bf16 %v7627, %v7627
  %v7632 = vpack.c.bf16 %v7628, %v7628
  %v7633 = vpack.c.bf16 %v7629, %v7629
  %v7634 = vpack.c.bf16 %v7630, %v7630
  %v7635 = vld [vmem:[%s3] sm:$0xf]
  %v7636 = vld [vmem:[%s3 + $0x4] sm:$0xf]
  %v7637 = vld [vmem:[%s3 + $0x8] sm:$0xf]
  %v7638 = vld [vmem:[%s3 + $0xc] sm:$0xf]
  %v7639 = vld [vmem:[%s3 + $0x10] sm:$0xf]
  %v7640 = vld [vmem:[%s3 + $0x14] sm:$0xf]
  %v7641 = vld [vmem:[%s3 + $0x18] sm:$0xf]
  %v7642 = vld [vmem:[%s3 + $0x1c] sm:$0xf]
  %v7643 = vld [vmem:[%s3 + $0x20] sm:$0xf]
  %v7644 = vld [vmem:[%s3 + $0x24] sm:$0xf]
  %v7645 = vld [vmem:[%s3 + $0x28] sm:$0xf]
  %v7646 = vld [vmem:[%s3 + $0x2c] sm:$0xf]
  %v7647 = vld [vmem:[%s3 + $0x30] sm:$0xf]
  %v7648 = vld [vmem:[%s3 + $0x34] sm:$0xf]
  %v7649 = vld [vmem:[%s3 + $0x38] sm:$0xf]
  %v7650 = vld [vmem:[%s3 + $0x3c] sm:$0xf]
  %v7651 = vld [vmem:[%s3 + $0x40] sm:$0xf]
  %v7652 = vld [vmem:[%s3 + $0x44] sm:$0xf]
  %v7653 = vld [vmem:[%s3 + $0x48] sm:$0xf]
  %v7654 = vld [vmem:[%s3 + $0x4c] sm:$0xf]
  %v7655 = vld [vmem:[%s3 + $0x50] sm:$0xf]
  %v7656 = vld [vmem:[%s3 + $0x54] sm:$0xf]
  %v7657 = vld [vmem:[%s3 + $0x58] sm:$0xf]
  %v7658 = vld [vmem:[%s3 + $0x5c] sm:$0xf]
  %v7659 = vld [vmem:[%s3 + $0x60] sm:$0xf]
  %v7660 = vld [vmem:[%s3 + $0x64] sm:$0xf]
  %v7661 = vld [vmem:[%s3 + $0x68] sm:$0xf]
  %v7662 = vld [vmem:[%s3 + $0x6c] sm:$0xf]
  %v7663 = vld [vmem:[%s3 + $0x70] sm:$0xf]
  %v7664 = vld [vmem:[%s3 + $0x74] sm:$0xf]
  %v7665 = vld [vmem:[%s3 + $0x78] sm:$0xf]
  %v7666 = vld [vmem:[%s3 + $0x7c] sm:$0xf]
  %v7667 = vld [vmem:[%s3 + $0x80] sm:$0xf]
  %v7668 = vld [vmem:[%s3 + $0x84] sm:$0xf]
  %v7669 = vld [vmem:[%s3 + $0x88] sm:$0xf]
  %v7670 = vld [vmem:[%s3 + $0x8c] sm:$0xf]
  %v7671 = vld [vmem:[%s3 + $0x90] sm:$0xf]
  %v7672 = vld [vmem:[%s3 + $0x94] sm:$0xf]
  %v7673 = vld [vmem:[%s3 + $0x98] sm:$0xf]
  %v7674 = vld [vmem:[%s3 + $0x9c] sm:$0xf]
  %v7675 = vld [vmem:[%s3 + $0xa0] sm:$0xf]
  %v7676 = vld [vmem:[%s3 + $0xa4] sm:$0xf]
  %v7677 = vld [vmem:[%s3 + $0xa8] sm:$0xf]
  %v7678 = vld [vmem:[%s3 + $0xac] sm:$0xf]
  %v7679 = vld [vmem:[%s3 + $0xb0] sm:$0xf]
  %v7680 = vld [vmem:[%s3 + $0xb4] sm:$0xf]
  %v7681 = vld [vmem:[%s3 + $0xb8] sm:$0xf]
  %v7682 = vld [vmem:[%s3 + $0xbc] sm:$0xf]
  %v7683 = vld [vmem:[%s3 + $0xc0] sm:$0xf]
  %v7684 = vld [vmem:[%s3 + $0xc4] sm:$0xf]
  %v7685 = vld [vmem:[%s3 + $0xc8] sm:$0xf]
  %v7686 = vld [vmem:[%s3 + $0xcc] sm:$0xf]
  %v7687 = vld [vmem:[%s3 + $0xd0] sm:$0xf]
  %v7688 = vld [vmem:[%s3 + $0xd4] sm:$0xf]
  %v7689 = vld [vmem:[%s3 + $0xd8] sm:$0xf]
  %v7690 = vld [vmem:[%s3 + $0xdc] sm:$0xf]
  %v7691 = vld [vmem:[%s3 + $0xe0] sm:$0xf]
  %v7692 = vld [vmem:[%s3 + $0xe4] sm:$0xf]
  %v7693 = vld [vmem:[%s3 + $0xe8] sm:$0xf]
  %v7694 = vld [vmem:[%s3 + $0xec] sm:$0xf]
  %v7695 = vld [vmem:[%s3 + $0xf0] sm:$0xf]
  %v7696 = vld [vmem:[%s3 + $0xf4] sm:$0xf]
  %v7697 = vld [vmem:[%s3 + $0xf8] sm:$0xf]
  %v7698 = vld [vmem:[%s3 + $0xfc] sm:$0xf]
  %v7699 = vld [vmem:[%s4] sm:$0x1]
  %v7701 = vlaneseq
  %v7702 = vshrl.u32 %v7701, 7
  %v7703 = vsub.s32 0, %v7702
  %v7704 = vrot.slane %v7699, %v7703
  %v7770 = vunpack.c.l.b16 %v7635
  %v7771 = vunpack.c.l.b16 %v7636
  %v7772 = vunpack.c.l.b16 %v7637
  %v7773 = vunpack.c.l.b16 %v7638
  %v7774 = vunpack.c.l.b16 %v7639
  %v7775 = vunpack.c.l.b16 %v7640
  %v7776 = vunpack.c.l.b16 %v7641
  %v7777 = vunpack.c.l.b16 %v7642
  %v7778 = vunpack.c.l.b16 %v7643
  %v7779 = vunpack.c.l.b16 %v7644
  %v7780 = vunpack.c.l.b16 %v7645
  %v7781 = vunpack.c.l.b16 %v7646
  %v7782 = vunpack.c.l.b16 %v7647
  %v7783 = vunpack.c.l.b16 %v7648
  %v7784 = vunpack.c.l.b16 %v7649
  %v7785 = vunpack.c.l.b16 %v7650
  %v7786 = vunpack.c.l.b16 %v7651
  %v7787 = vunpack.c.l.b16 %v7652
  %v7788 = vunpack.c.l.b16 %v7653
  %v7789 = vunpack.c.l.b16 %v7654
  %v7790 = vunpack.c.l.b16 %v7655
  %v7791 = vunpack.c.l.b16 %v7656
  %v7792 = vunpack.c.l.b16 %v7657
  %v7793 = vunpack.c.l.b16 %v7658
  %v7794 = vunpack.c.l.b16 %v7659
  %v7795 = vunpack.c.l.b16 %v7660
  %v7796 = vunpack.c.l.b16 %v7661
  %v7797 = vunpack.c.l.b16 %v7662
  %v7798 = vunpack.c.l.b16 %v7663
  %v7799 = vunpack.c.l.b16 %v7664
  %v7800 = vunpack.c.l.b16 %v7665
  %v7801 = vunpack.c.l.b16 %v7666
  %v7802 = vunpack.c.l.b16 %v7667
  %v7803 = vunpack.c.l.b16 %v7668
  %v7804 = vunpack.c.l.b16 %v7669
  %v7805 = vunpack.c.l.b16 %v7670
  %v7806 = vunpack.c.l.b16 %v7671
  %v7807 = vunpack.c.l.b16 %v7672
  %v7808 = vunpack.c.l.b16 %v7673
  %v7809 = vunpack.c.l.b16 %v7674
  %v7810 = vunpack.c.l.b16 %v7675
  %v7811 = vunpack.c.l.b16 %v7676
  %v7812 = vunpack.c.l.b16 %v7677
  %v7813 = vunpack.c.l.b16 %v7678
  %v7814 = vunpack.c.l.b16 %v7679
  %v7815 = vunpack.c.l.b16 %v7680
  %v7816 = vunpack.c.l.b16 %v7681
  %v7817 = vunpack.c.l.b16 %v7682
  %v7818 = vunpack.c.l.b16 %v7683
  %v7819 = vunpack.c.l.b16 %v7684
  %v7820 = vunpack.c.l.b16 %v7685
  %v7821 = vunpack.c.l.b16 %v7686
  %v7822 = vunpack.c.l.b16 %v7687
  %v7823 = vunpack.c.l.b16 %v7688
  %v7824 = vunpack.c.l.b16 %v7689
  %v7825 = vunpack.c.l.b16 %v7690
  %v7826 = vunpack.c.l.b16 %v7691
  %v7827 = vunpack.c.l.b16 %v7692
  %v7828 = vunpack.c.l.b16 %v7693
  %v7829 = vunpack.c.l.b16 %v7694
  %v7830 = vunpack.c.l.b16 %v7695
  %v7831 = vunpack.c.l.b16 %v7696
  %v7832 = vunpack.c.l.b16 %v7697
  %v7833 = vunpack.c.l.b16 %v7698
  %v7834 = vpack.c.b16 %v7771, %v7770
  %v7835 = vpack.c.b16 %v7773, %v7772
  %v7836 = vpack.c.b16 %v7775, %v7774
  %v7837 = vpack.c.b16 %v7777, %v7776
  %v7838 = vpack.c.b16 %v7779, %v7778
  %v7839 = vpack.c.b16 %v7781, %v7780
  %v7840 = vpack.c.b16 %v7783, %v7782
  %v7841 = vpack.c.b16 %v7785, %v7784
  %v7842 = vpack.c.b16 %v7787, %v7786
  %v7843 = vpack.c.b16 %v7789, %v7788
  %v7844 = vpack.c.b16 %v7791, %v7790
  %v7845 = vpack.c.b16 %v7793, %v7792
  %v7846 = vpack.c.b16 %v7795, %v7794
  %v7847 = vpack.c.b16 %v7797, %v7796
  %v7848 = vpack.c.b16 %v7799, %v7798
  %v7849 = vpack.c.b16 %v7801, %v7800
  %v7850 = vpack.c.b16 %v7803, %v7802
  %v7851 = vpack.c.b16 %v7805, %v7804
  %v7852 = vpack.c.b16 %v7807, %v7806
  %v7853 = vpack.c.b16 %v7809, %v7808
  %v7854 = vpack.c.b16 %v7811, %v7810
  %v7855 = vpack.c.b16 %v7813, %v7812
  %v7856 = vpack.c.b16 %v7815, %v7814
  %v7857 = vpack.c.b16 %v7817, %v7816
  %v7858 = vpack.c.b16 %v7819, %v7818
  %v7859 = vpack.c.b16 %v7821, %v7820
  %v7860 = vpack.c.b16 %v7823, %v7822
  %v7861 = vpack.c.b16 %v7825, %v7824
  %v7862 = vpack.c.b16 %v7827, %v7826
  %v7863 = vpack.c.b16 %v7829, %v7828
  %v7864 = vpack.c.b16 %v7831, %v7830
  %v7865 = vpack.c.b16 %v7833, %v7832
  %7898 = vmatprep.subr.bf16.mxu0 0
  %7899 = vmatpush1.bf16.msra.mxu0 %v7834
  %7900 = vmatprep.subr.bf16.mxu0 0
  %7901 = vmatpush1.bf16.msra.mxu0 %v7835
  %7902 = vmatprep.subr.bf16.mxu0 0
  %7903 = vmatpush1.bf16.msra.mxu0 %v7836
  %7904 = vmatprep.subr.bf16.mxu0 0
  %7905 = vmatpush1.bf16.msra.mxu0 %v7837
  %7906 = vmatprep.subr.bf16.mxu0 0
  %7907 = vmatpush1.bf16.msra.mxu0 %v7838
  %7908 = vmatprep.subr.bf16.mxu0 0
  %7909 = vmatpush1.bf16.msra.mxu0 %v7839
  %7910 = vmatprep.subr.bf16.mxu0 0
  %7911 = vmatpush1.bf16.msra.mxu0 %v7840
  %7912 = vmatprep.subr.bf16.mxu0 0
  %7913 = vmatpush1.bf16.msra.mxu0 %v7841
  %7914 = vmatprep.subr.bf16.mxu0 0
  %7915 = vmatpush1.bf16.msra.mxu0 %v7842
  %7916 = vmatprep.subr.bf16.mxu0 0
  %7917 = vmatpush1.bf16.msra.mxu0 %v7843
  %7918 = vmatprep.subr.bf16.mxu0 0
  %7919 = vmatpush1.bf16.msra.mxu0 %v7844
  %7920 = vmatprep.subr.bf16.mxu0 0
  %7921 = vmatpush1.bf16.msra.mxu0 %v7845
  %7922 = vmatprep.subr.bf16.mxu0 0
  %7923 = vmatpush1.bf16.msra.mxu0 %v7846
  %7924 = vmatprep.subr.bf16.mxu0 0
  %7925 = vmatpush1.bf16.msra.mxu0 %v7847
  %7926 = vmatprep.subr.bf16.mxu0 0
  %7927 = vmatpush1.bf16.msra.mxu0 %v7848
  %7928 = vmatprep.subr.bf16.mxu0 0
  %7929 = vmatpush1.bf16.msra.mxu0 %v7849
  %7930 = vmatprep.mubr.bf16.mxu0 %v7632
  %7931 = vmatmul.mubr.bf16.gmra.mrb[0].mxu0 %v7631
  %v7932 = vpop.f32.mrb[0].mxu0
  %v7933 = vadd.f32 %v7704, %v7932
  %v7934 = vpop.f32.mrb[0].mxu0
  %v7935 = vpop.f32.mrb[0].mxu0
  %v7936 = vpop.f32.mrb[0].mxu0
  %7937 = vdwg.mxu0
  %7938 = vmatprep.subr.bf16.mxu0 0
  %7939 = vmatpush1.bf16.msra.mxu0 %v7850
  %7940 = vmatprep.subr.bf16.mxu0 0
  %7941 = vmatpush1.bf16.msra.mxu0 %v7851
  %7942 = vmatprep.subr.bf16.mxu0 0
  %7943 = vmatpush1.bf16.msra.mxu0 %v7852
  %7944 = vmatprep.subr.bf16.mxu0 0
  %7945 = vmatpush1.bf16.msra.mxu0 %v7853
  %7946 = vmatprep.subr.bf16.mxu0 0
  %7947 = vmatpush1.bf16.msra.mxu0 %v7854
  %7948 = vmatprep.subr.bf16.mxu0 0
  %7949 = vmatpush1.bf16.msra.mxu0 %v7855
  %7950 = vmatprep.subr.bf16.mxu0 0
  %7951 = vmatpush1.bf16.msra.mxu0 %v7856
  %7952 = vmatprep.subr.bf16.mxu0 0
  %7953 = vmatpush1.bf16.msra.mxu0 %v7857
  %7954 = vmatprep.subr.bf16.mxu0 0
  %7955 = vmatpush1.bf16.msra.mxu0 %v7858
  %7956 = vmatprep.subr.bf16.mxu0 0
  %7957 = vmatpush1.bf16.msra.mxu0 %v7859
  %7958 = vmatprep.subr.bf16.mxu0 0
  %7959 = vmatpush1.bf16.msra.mxu0 %v7860
  %7960 = vmatprep.subr.bf16.mxu0 0
  %7961 = vmatpush1.bf16.msra.mxu0 %v7861
  %7962 = vmatprep.subr.bf16.mxu0 0
  %7963 = vmatpush1.bf16.msra.mxu0 %v7862
  %7964 = vmatprep.subr.bf16.mxu0 0
  %7965 = vmatpush1.bf16.msra.mxu0 %v7863
  %7966 = vmatprep.subr.bf16.mxu0 0
  %7967 = vmatpush1.bf16.msra.mxu0 %v7864
  %7968 = vmatprep.subr.bf16.mxu0 0
  %7969 = vmatpush1.bf16.msra.mxu0 %v7865
  %7970 = vmatprep.mubr.bf16.mxu0 %v7634
  %7971 = vmatmul.mubr.bf16.gmra.mrb[0].mxu0 %v7633
  %v7972 = vpop.f32.mrb[0].mxu0
  %v7973 = vadd.f32 %v7933, %v7972
  %v7974 = vpop.f32.mrb[0].mxu0
  %v7975 = vpop.f32.mrb[0].mxu0
  %v7976 = vpop.f32.mrb[0].mxu0
  %7977 = vdwg.mxu0
  %7978 = vst [vmem:[%s5] sm:$0xff] %v7973
  // Predicated region
  $region22: #{_lambda_.7} parent=0 // pred_check
    _
  $region23: #{_lambda_.7} parent=0 // pred_check_branch
    %7980 = sbr.rel (0) target = $region25
  $region24: #{_lambda_.7} parent=0 // pred_region
    _
  $region25: #{_lambda_.7} parent=0 // pred_fallthru
    _
  // Predicated region
  $region26: #{_lambda_.7} parent=0 // pred_check
    _
  $region27: #{_lambda_.7} parent=0 // pred_check_branch
    %7982 = sbr.rel (0) target = $region29
  $region28: #{_lambda_.7} parent=0 // pred_region
    _
  $region29: #{_lambda_.7} parent=0 // pred_fallthru
    _

</llo_original>
